<compile_context>
chip_gen: v7x
topology: tpu7x:2x2x1
jax: 0.10.0
libtpu: 0.0.40
codegen_flags: <defaults>
</compile_context>

<pallas_src>
import jax
import jax.numpy as jnp
from jax.experimental import pallas as pl
from jax.experimental.pallas import tpu as pltpu

FEAT_DIM = 512
N_OFFENCE = 4
N_ACTION = 8
CLS_PAD = 128     # lane-dense padded width for the fused classifier output
TN = 256          # output-column tile: 2 N blocks -> each v7x TensorCore takes one
TK_MAX = 4096     # large K tile: amortizes ~0.35 us/step overhead, fits v5e scoped VMEM
TM_MAX = 256      # keep a single M tile for typical B*V so the weight streams exactly once


def _round_up(x, m):
    return (x + m - 1) // m * m


def _k_tiling(fin):
    """Return (TK, K_pad): TK multiple of 128, <= TK_MAX, preferring a divisor of fin."""
    k_aligned = _round_up(fin, 128)
    if k_aligned <= TK_MAX:
        return k_aligned, k_aligned
    for tk in range(TK_MAX, 2048 - 128, -128):   # search 4096 .. 2048
        if k_aligned % tk == 0:
            return tk, k_aligned
    return TK_MAX, _round_up(k_aligned, TK_MAX)


def _layernorm(x, g, b, eps=1e-5):
    mu = jnp.mean(x, axis=-1, keepdims=True)
    var = jnp.mean((x - mu) ** 2, axis=-1, keepdims=True)
    return (x - mu) * jax.lax.rsqrt(var + eps) * g + b


# ------------- backbone stand-in: tiled, pipelined (M, N, K) projection -------------
def _backbone_kernel(x_ref, wb_ref, bb_ref, feats_ref, acc_ref):
    k = pl.program_id(2)

    @pl.when(k == 0)
    def _():
        acc_ref[...] = jnp.zeros_like(acc_ref)

    # Cast the activation tile to bf16 in-kernel (input stays in its HBM dtype);
    # the weight tile is already bf16.  Accumulate in f32 on the MXU.
    acc_ref[...] += jnp.dot(x_ref[...].astype(jnp.bfloat16), wb_ref[...],
                            preferred_element_type=jnp.float32)

    @pl.when(k == pl.num_programs(2) - 1)
    def _():
        feats_ref[...] = acc_ref[...] + bb_ref[...]


# ------------------ aggregation head: fully batched over B ------------------
def _head_kernel(feat_ref,
                 gi_ref, bi_ref, wi1_ref, bi1_ref, wi2_ref, bi2_ref,
                 ga_ref, ba_ref, wa1_ref, ba1_ref,
                 go_ref, bo_ref, wo1_ref, bo1_ref,
                 wcls_ref, bcls_ref, out_ref):
    # Max over the view axis, vectorized over the whole batch.
    pooled = jnp.max(feat_ref[...], axis=1)                                   # (B, 512)

    # inter = Linear(Linear(LayerNorm(pooled)))   (bf16 weights, f32 accumulate)
    h = _layernorm(pooled, gi_ref[...], bi_ref[...])
    h = jnp.dot(h.astype(jnp.bfloat16), wi1_ref[...],
                preferred_element_type=jnp.float32) + bi1_ref[...]
    inter = jnp.dot(h.astype(jnp.bfloat16), wi2_ref[...],
                    preferred_element_type=jnp.float32) + bi2_ref[...]

    # fc_action / fc_offence first layers.
    ha = _layernorm(inter, ga_ref[...], ba_ref[...])
    ha = jnp.dot(ha.astype(jnp.bfloat16), wa1_ref[...],
                 preferred_element_type=jnp.float32) + ba1_ref[...]
    ho = _layernorm(inter, go_ref[...], bo_ref[...])
    ho = jnp.dot(ho.astype(jnp.bfloat16), wo1_ref[...],
                 preferred_element_type=jnp.float32) + bo1_ref[...]

    # Fused classifier: stack both head activations along rows and multiply by a single
    # lane-dense (512, 128) weight.  Rows [0,B) cols [0,8) = action logits,
    # rows [B,2B) cols [8,12) = offence logits; the rest is sliced away in the wrapper.
    hs = jnp.concatenate([ha, ho], axis=0).astype(jnp.bfloat16)               # (2B, 512)
    out_ref[...] = (jnp.dot(hs, wcls_ref[...], preferred_element_type=jnp.float32)
                    + bcls_ref[...])


def init_params(key, fin, feat=FEAT_DIM):
    ks = jax.random.split(key, 8)
    w = lambda k, shape: (0.02 * jax.random.normal(k, shape)).astype(jnp.float32)
    zeros = lambda n: jnp.zeros((1, n), jnp.float32)
    ones = lambda n: jnp.ones((1, n), jnp.float32)

    # Backbone stand-in projection: stored bf16 and PRE-PADDED to K_pad once here,
    # so the jitted forward never re-pads the big weight (no extra HBM pass per call).
    _, K_pad = _k_tiling(fin)
    wb = w(ks[0], (fin, feat)).astype(jnp.bfloat16)
    if K_pad != fin:
        wb = jnp.pad(wb, ((0, K_pad - fin), (0, 0)))

    wa2 = w(ks[4], (feat, N_ACTION))
    ba2 = zeros(N_ACTION)
    wo2 = w(ks[6], (feat, N_OFFENCE))
    bo2 = zeros(N_OFFENCE)

    # Fused lane-dense classifier weight/bias: cols [0:8]=action, [8:12]=offence.
    wcls = jnp.zeros((feat, CLS_PAD), jnp.float32)
    wcls = wcls.at[:, :N_ACTION].set(wa2)
    wcls = wcls.at[:, N_ACTION:N_ACTION + N_OFFENCE].set(wo2)
    bcls = jnp.zeros((1, CLS_PAD), jnp.float32)
    bcls = bcls.at[:, :N_ACTION].set(ba2)
    bcls = bcls.at[:, N_ACTION:N_ACTION + N_OFFENCE].set(bo2)

    return {
        "wb": wb, "bb": zeros(feat),
        # inter: LayerNorm -> Linear(feat,feat) -> Linear(feat,feat)   (bf16 weights)
        "gi": ones(feat), "bi": zeros(feat),
        "wi1": w(ks[1], (feat, feat)).astype(jnp.bfloat16), "bi1": zeros(feat),
        "wi2": w(ks[2], (feat, feat)).astype(jnp.bfloat16), "bi2": zeros(feat),
        # fc_action: LayerNorm -> Linear(feat,feat) -> Linear(feat,8)
        "ga": ones(feat), "ba": zeros(feat),
        "wa1": w(ks[3], (feat, feat)).astype(jnp.bfloat16), "ba1": zeros(feat),
        "wa2": wa2, "ba2": ba2,
        # fc_offence: LayerNorm -> Linear(feat,feat) -> Linear(feat,4)
        "go": ones(feat), "bo": zeros(feat),
        "wo1": w(ks[5], (feat, feat)).astype(jnp.bfloat16), "bo1": zeros(feat),
        "wo2": wo2, "bo2": bo2,
        # fused classifier (prebuilt once)
        "wcls": wcls.astype(jnp.bfloat16), "bcls": bcls,
    }


@jax.jit
def mv_network_forward(mvimages, params):
    B, V, C, T, H, W = mvimages.shape
    M = B * V
    fin = C * T * H * W

    # ---- tile sizes / padding (all static under jit) ----
    TK, K_pad = _k_tiling(fin)
    TM = min(TM_MAX, _round_up(M, 8))
    M_pad = _round_up(M, TM)

    # Flatten each view's volume; keep the producer dtype (f32 or bf16) —
    # the kernel casts per tile to bf16 on the way to the MXU.
    x = mvimages.reshape(M, fin)
    if M_pad != M or K_pad != fin:
        x = jnp.pad(x, ((0, M_pad - M), (0, K_pad - fin)))

    wb = params["wb"]   # pre-padded bf16 (K_pad, 512)

    # ---- backbone projection: (M_pad, K_pad) @ (K_pad, 512), N split for megacore ----
    feats_full = pl.pallas_call(
        _backbone_kernel,
        out_shape=jax.ShapeDtypeStruct((M_pad, FEAT_DIM), jnp.float32),
        grid_spec=pltpu.PrefetchScalarGridSpec(
            num_scalar_prefetch=0,
            grid=(M_pad // TM, FEAT_DIM // TN, K_pad // TK),
            in_specs=[
                pl.BlockSpec((TM, TK), lambda m, n, k: (m, k)),
                pl.BlockSpec((TK, TN), lambda m, n, k: (k, n)),
                pl.BlockSpec((1, TN), lambda m, n, k: (0, n)),
            ],
            out_specs=pl.BlockSpec((TM, TN), lambda m, n, k: (m, n)),
            scratch_shapes=[pltpu.VMEM((TM, TN), jnp.float32)],
        ),
        compiler_params=pltpu.CompilerParams(
            dimension_semantics=("parallel", "parallel", "arbitrary"),
            vmem_limit_bytes=32 << 20),   # lifts v5e's 16 MiB default; no-op on v6e/v7x
    )(x, wb, params["bb"])

    aux = feats_full[:M].reshape(B, V, FEAT_DIM)   # "attention" output

    # ---- aggregation head: single small kernel, everything resident in VMEM ----
    vmem = pl.BlockSpec(memory_space=pltpu.MemorySpace.VMEM)
    head = pl.pallas_call(
        _head_kernel,
        out_shape=jax.ShapeDtypeStruct((2 * B, CLS_PAD), jnp.float32),
        in_specs=[vmem] * 17,
        out_specs=vmem,
    )(aux,
      params["gi"], params["bi"], params["wi1"], params["bi1"],
      params["wi2"], params["bi2"],
      params["ga"], params["ba"], params["wa1"], params["ba1"],
      params["go"], params["bo"], params["wo1"], params["bo1"],
      params["wcls"], params["bcls"])

    act = head[:B, :N_ACTION]
    off = head[B:2 * B, N_ACTION:N_ACTION + N_OFFENCE]

    # Matches MVAggregate: (pred_offence_severity, pred_action, attention)
    return off, act, aux


def _reference(mvimages, p):
    B, V = mvimages.shape[:2]
    x = mvimages.reshape(B * V, -1).astype(jnp.float32)
    fin = x.shape[1]
    feats = x @ p["wb"].astype(jnp.float32)[:fin] + p["bb"]
    aux = feats.reshape(B, V, FEAT_DIM)
    pooled = jnp.max(aux, axis=1)

    def ln(v, g, b, eps=1e-5):
        mu = jnp.mean(v, axis=-1, keepdims=True)
        var = jnp.mean((v - mu) ** 2, axis=-1, keepdims=True)
        return (v - mu) * jax.lax.rsqrt(var + eps) * g + b

    f32 = lambda a: a.astype(jnp.float32)
    inter = ln(pooled, p["gi"], p["bi"]) @ f32(p["wi1"]) + p["bi1"]
    inter = inter @ f32(p["wi2"]) + p["bi2"]
    act = (ln(inter, p["ga"], p["ba"]) @ f32(p["wa1"]) + p["ba1"]) @ p["wa2"] + p["ba2"]
    off = (ln(inter, p["go"], p["bo"]) @ f32(p["wo1"]) + p["bo1"]) @ p["wo2"] + p["bo2"]
    return off, act, aux


if __name__ == "__main__":
    key = jax.random.PRNGKey(0)
    k_x, k_p = jax.random.split(key)

    # Small multi-view video batch: B=2 clips, V=2 views, C=3, T=4 frames, 16x16 spatial.
    B, V, C, T, H, W = 2, 2, 3, 4, 16, 16
    mvimages = jax.random.normal(k_x, (B, V, C, T, H, W), jnp.float32)

    params = init_params(k_p, fin=C * T * H * W)

    off, act, attn = mv_network_forward(mvimages, params)
    jax.block_until_ready((off, act, attn))

    # Sanity-check against a plain-JAX reference.
    off_r, act_r, attn_r = _reference(mvimages, params)
    assert off.shape == (B, N_OFFENCE) and act.shape == (B, N_ACTION)
    assert attn.shape == (B, V, FEAT_DIM)
    assert jnp.allclose(attn, attn_r, rtol=2e-2, atol=2e-2)
    assert jnp.allclose(act, act_r, rtol=2e-2, atol=2e-2)
    assert jnp.allclose(off, off_r, rtol=2e-2, atol=2e-2)

    print("KERNEL_OK")
</pallas_src>

<mosaic_0001>
module attributes {stable_mosaic.version = 11 : i64} {
  func.func @_backbone_kernel(%arg0: i32, %arg1: i32, %arg2: i32, %arg3: memref<8x3072xf32, #tpu.memory_space<vmem>>, %arg4: memref<3072x256xbf16, #tpu.memory_space<vmem>>, %arg5: memref<1x256xf32, #tpu.memory_space<vmem>>, %arg6: memref<8x256xf32, #tpu.memory_space<vmem>>, %arg7: memref<8x256xf32, #tpu.memory_space<vmem>>) attributes {dimension_semantics = [#tpu.dimension_semantics<parallel>, #tpu.dimension_semantics<parallel>, #tpu.dimension_semantics<arbitrary>], iteration_bounds = array<i64: 1, 2, 1>, scalar_prefetch = 0 : i64, scratch_operands = 1 : i64, tpu.core_type = #tpu.core_type<tc>, window_params = [{transform_indices = @transform_0, window_bounds = array<i64: 8, 3072>}, {transform_indices = @transform_1, window_bounds = array<i64: 3072, 256>}, {transform_indices = @transform_2, window_bounds = array<i64: 1, 256>}, {transform_indices = @transform_3, window_bounds = array<i64: 8, 256>}]} {
    %c0_i32 = arith.constant 0 : i32
    %0 = arith.cmpi eq, %arg2, %c0_i32 : i32
    %1 = arith.extui %0 : i1 to i32
    %c0_i32_0 = arith.constant 0 : i32
    %2 = arith.cmpi ne, %1, %c0_i32_0 : i32
    scf.if %2 {
      %cst_10 = arith.constant 0.000000e+00 : f32
      %13 = vector.broadcast %cst_10 : f32 to vector<8x256xf32>
      %c0_11 = arith.constant 0 : index
      %c0_12 = arith.constant 0 : index
      %14 = vector.load %arg7[%c0_11, %c0_12] : memref<8x256xf32, #tpu.memory_space<vmem>>, vector<8x256xf32>
      tpu.vector_store %arg7[%c0_11, %c0_12], %13 {strides = array<i32>} : memref<8x256xf32, #tpu.memory_space<vmem>>, vector<8x256xf32>,
    } else {
    }
    %c0 = arith.constant 0 : index
    %c0_1 = arith.constant 0 : index
    %3 = vector.load %arg7[%c0, %c0_1] : memref<8x256xf32, #tpu.memory_space<vmem>>, vector<8x256xf32>
    %c0_2 = arith.constant 0 : index
    %c0_3 = arith.constant 0 : index
    %4 = vector.load %arg3[%c0_2, %c0_3] : memref<8x3072xf32, #tpu.memory_space<vmem>>, vector<8x3072xf32>
    %5 = arith.truncf %4 : vector<8x3072xf32> to vector<8x3072xbf16>
    %c0_4 = arith.constant 0 : index
    %c0_5 = arith.constant 0 : index
    %6 = vector.load %arg4[%c0_4, %c0_5] : memref<3072x256xbf16, #tpu.memory_space<vmem>>, vector<3072x256xbf16>
    %cst = arith.constant dense<0.000000e+00> : vector<8x256xf32>
    %7 = tpu.matmul %5, %6, %cst {dimension_numbers = #tpu.dot_dimension_numbers<[1], [0], [0], [1], [0, 0, 1, 1], [], []>} : vector<8x3072xbf16>, vector<3072x256xbf16>, vector<8x256xf32> -> vector<8x256xf32>
    %8 = arith.addf %3, %7 : vector<8x256xf32>
    %c0_6 = arith.constant 0 : index
    %c0_7 = arith.constant 0 : index
    %9 = vector.load %arg7[%c0_6, %c0_7] : memref<8x256xf32, #tpu.memory_space<vmem>>, vector<8x256xf32>
    tpu.vector_store %arg7[%c0_6, %c0_7], %8 {strides = array<i32>} : memref<8x256xf32, #tpu.memory_space<vmem>>, vector<8x256xf32>,
    %c0_i32_8 = arith.constant 0 : i32
    %10 = arith.cmpi eq, %arg2, %c0_i32_8 : i32
    %11 = arith.extui %10 : i1 to i32
    %c0_i32_9 = arith.constant 0 : i32
    %12 = arith.cmpi ne, %11, %c0_i32_9 : i32
    scf.if %12 {
      %c0_10 = arith.constant 0 : index
      %c0_11 = arith.constant 0 : index
      %13 = vector.load %arg7[%c0_10, %c0_11] : memref<8x256xf32, #tpu.memory_space<vmem>>, vector<8x256xf32>
      %c0_12 = arith.constant 0 : index
      %c0_13 = arith.constant 0 : index
      %14 = vector.load %arg5[%c0_12, %c0_13] : memref<1x256xf32, #tpu.memory_space<vmem>>, vector<1x256xf32>
      %15 = vector.broadcast %14 : vector<1x256xf32> to vector<8x256xf32>
      %16 = arith.addf %13, %15 : vector<8x256xf32>
      %c0_14 = arith.constant 0 : index
      %c0_15 = arith.constant 0 : index
      %17 = vector.load %arg6[%c0_14, %c0_15] : memref<8x256xf32, #tpu.memory_space<vmem>>, vector<8x256xf32>
      tpu.vector_store %arg6[%c0_14, %c0_15], %16 {strides = array<i32>} : memref<8x256xf32, #tpu.memory_space<vmem>>, vector<8x256xf32>,
    } else {
    }
    return
  }
  func.func @transform_0(%arg0: i32, %arg1: i32, %arg2: i32) -> (i32, i32) {
    %c0_i32 = arith.constant 0 : i32
    return %arg0, %arg2 : i32, i32
  }
  func.func @transform_1(%arg0: i32, %arg1: i32, %arg2: i32) -> (i32, i32) {
    %c0_i32 = arith.constant 0 : i32
    return %arg2, %arg1 : i32, i32
  }
  func.func @transform_2(%arg0: i32, %arg1: i32, %arg2: i32) -> (i32, i32) {
    %c0_i32 = arith.constant 0 : i32
    %c0_i32_0 = arith.constant 0 : i32
    return %c0_i32, %arg1 : i32, i32
  }
  func.func @transform_3(%arg0: i32, %arg1: i32, %arg2: i32) -> (i32, i32) {
    %c0_i32 = arith.constant 0 : i32
    return %arg0, %arg1 : i32, i32
  }
}

module attributes {stable_mosaic.version = 11 : i64} {
  func.func @_head_kernel(%arg0: memref<2x2x512xf32, #tpu.memory_space<vmem>>, %arg1: memref<1x512xf32, #tpu.memory_space<vmem>>, %arg2: memref<1x512xf32, #tpu.memory_space<vmem>>, %arg3: memref<512x512xbf16, #tpu.memory_space<vmem>>, %arg4: memref<1x512xf32, #tpu.memory_space<vmem>>, %arg5: memref<512x512xbf16, #tpu.memory_space<vmem>>, %arg6: memref<1x512xf32, #tpu.memory_space<vmem>>, %arg7: memref<1x512xf32, #tpu.memory_space<vmem>>, %arg8: memref<1x512xf32, #tpu.memory_space<vmem>>, %arg9: memref<512x512xbf16, #tpu.memory_space<vmem>>, %arg10: memref<1x512xf32, #tpu.memory_space<vmem>>, %arg11: memref<1x512xf32, #tpu.memory_space<vmem>>, %arg12: memref<1x512xf32, #tpu.memory_space<vmem>>, %arg13: memref<512x512xbf16, #tpu.memory_space<vmem>>, %arg14: memref<1x512xf32, #tpu.memory_space<vmem>>, %arg15: memref<512x128xbf16, #tpu.memory_space<vmem>>, %arg16: memref<1x128xf32, #tpu.memory_space<vmem>>, %arg17: memref<4x128xf32, #tpu.memory_space<vmem>>) attributes {dimension_semantics = [], scalar_prefetch = 0 : i64, scratch_operands = 0 : i64, tpu.core_type = #tpu.core_type<tc>} {
    %c0 = arith.constant 0 : index
    %c0_0 = arith.constant 0 : index
    %c0_1 = arith.constant 0 : index
    %0 = vector.load %arg0[%c0, %c0_0, %c0_1] : memref<2x2x512xf32, #tpu.memory_space<vmem>>, vector<2x2x512xf32>
    %cst = arith.constant dense<0xFF800000> : vector<2x512xf32>
    %1 = vector.multi_reduction <maximumf>, %0, %cst [1] : vector<2x2x512xf32> to vector<2x512xf32>
    %c0_2 = arith.constant 0 : index
    %c0_3 = arith.constant 0 : index
    %2 = vector.load %arg1[%c0_2, %c0_3] : memref<1x512xf32, #tpu.memory_space<vmem>>, vector<1x512xf32>
    %c0_4 = arith.constant 0 : index
    %c0_5 = arith.constant 0 : index
    %3 = vector.load %arg2[%c0_4, %c0_5] : memref<1x512xf32, #tpu.memory_space<vmem>>, vector<1x512xf32>
    %cst_6 = arith.constant dense<0.000000e+00> : vector<2xf32>
    %4 = vector.multi_reduction <add>, %1, %cst_6 [1] : vector<2x512xf32> to vector<2xf32>
    %5 = vector.shape_cast %4 : vector<2xf32> to vector<2x1xf32>
    %cst_7 = arith.constant 5.120000e+02 : f32
    %6 = vector.broadcast %cst_7 : f32 to vector<2x1xf32>
    %7 = arith.divf %5, %6 : vector<2x1xf32>
    %8 = vector.broadcast %7 : vector<2x1xf32> to vector<2x512xf32>
    %9 = arith.subf %1, %8 : vector<2x512xf32>
    %10 = arith.mulf %9, %9 : vector<2x512xf32>
    %cst_8 = arith.constant dense<0.000000e+00> : vector<2xf32>
    %11 = vector.multi_reduction <add>, %10, %cst_8 [1] : vector<2x512xf32> to vector<2xf32>
    %12 = vector.shape_cast %11 : vector<2xf32> to vector<2x1xf32>
    %cst_9 = arith.constant 5.120000e+02 : f32
    %13 = vector.broadcast %cst_9 : f32 to vector<2x1xf32>
    %14 = arith.divf %12, %13 : vector<2x1xf32>
    %15 = vector.broadcast %7 : vector<2x1xf32> to vector<2x512xf32>
    %16 = arith.subf %1, %15 : vector<2x512xf32>
    %cst_10 = arith.constant 9.99999974E-6 : f32
    %17 = vector.broadcast %cst_10 : f32 to vector<2x1xf32>
    %18 = arith.addf %14, %17 : vector<2x1xf32>
    %19 = math.rsqrt %18 : vector<2x1xf32>
    %20 = vector.broadcast %19 : vector<2x1xf32> to vector<2x512xf32>
    %21 = arith.mulf %16, %20 : vector<2x512xf32>
    %22 = vector.broadcast %2 : vector<1x512xf32> to vector<2x512xf32>
    %23 = arith.mulf %21, %22 : vector<2x512xf32>
    %24 = vector.broadcast %3 : vector<1x512xf32> to vector<2x512xf32>
    %25 = arith.addf %23, %24 : vector<2x512xf32>
    %26 = arith.truncf %25 : vector<2x512xf32> to vector<2x512xbf16>
    %c0_11 = arith.constant 0 : index
    %c0_12 = arith.constant 0 : index
    %27 = vector.load %arg3[%c0_11, %c0_12] : memref<512x512xbf16, #tpu.memory_space<vmem>>, vector<512x512xbf16>
    %cst_13 = arith.constant dense<0.000000e+00> : vector<2x512xf32>
    %28 = tpu.matmul %26, %27, %cst_13 {dimension_numbers = #tpu.dot_dimension_numbers<[1], [0], [0], [1], [0, 0, 1, 1], [], []>} : vector<2x512xbf16>, vector<512x512xbf16>, vector<2x512xf32> -> vector<2x512xf32>
    %c0_14 = arith.constant 0 : index
    %c0_15 = arith.constant 0 : index
    %29 = vector.load %arg4[%c0_14, %c0_15] : memref<1x512xf32, #tpu.memory_space<vmem>>, vector<1x512xf32>
    %30 = vector.broadcast %29 : vector<1x512xf32> to vector<2x512xf32>
    %31 = arith.addf %28, %30 : vector<2x512xf32>
    %32 = arith.truncf %31 : vector<2x512xf32> to vector<2x512xbf16>
    %c0_16 = arith.constant 0 : index
    %c0_17 = arith.constant 0 : index
    %33 = vector.load %arg5[%c0_16, %c0_17] : memref<512x512xbf16, #tpu.memory_space<vmem>>, vector<512x512xbf16>
    %cst_18 = arith.constant dense<0.000000e+00> : vector<2x512xf32>
    %34 = tpu.matmul %32, %33, %cst_18 {dimension_numbers = #tpu.dot_dimension_numbers<[1], [0], [0], [1], [0, 0, 1, 1], [], []>} : vector<2x512xbf16>, vector<512x512xbf16>, vector<2x512xf32> -> vector<2x512xf32>
    %c0_19 = arith.constant 0 : index
    %c0_20 = arith.constant 0 : index
    %35 = vector.load %arg6[%c0_19, %c0_20] : memref<1x512xf32, #tpu.memory_space<vmem>>, vector<1x512xf32>
    %36 = vector.broadcast %35 : vector<1x512xf32> to vector<2x512xf32>
    %37 = arith.addf %34, %36 : vector<2x512xf32>
    %c0_21 = arith.constant 0 : index
    %c0_22 = arith.constant 0 : index
    %38 = vector.load %arg7[%c0_21, %c0_22] : memref<1x512xf32, #tpu.memory_space<vmem>>, vector<1x512xf32>
    %c0_23 = arith.constant 0 : index
    %c0_24 = arith.constant 0 : index
    %39 = vector.load %arg8[%c0_23, %c0_24] : memref<1x512xf32, #tpu.memory_space<vmem>>, vector<1x512xf32>
    %cst_25 = arith.constant dense<0.000000e+00> : vector<2xf32>
    %40 = vector.multi_reduction <add>, %37, %cst_25 [1] : vector<2x512xf32> to vector<2xf32>
    %41 = vector.shape_cast %40 : vector<2xf32> to vector<2x1xf32>
    %cst_26 = arith.constant 5.120000e+02 : f32
    %42 = vector.broadcast %cst_26 : f32 to vector<2x1xf32>
    %43 = arith.divf %41, %42 : vector<2x1xf32>
    %44 = vector.broadcast %43 : vector<2x1xf32> to vector<2x512xf32>
    %45 = arith.subf %37, %44 : vector<2x512xf32>
    %46 = arith.mulf %45, %45 : vector<2x512xf32>
    %cst_27 = arith.constant dense<0.000000e+00> : vector<2xf32>
    %47 = vector.multi_reduction <add>, %46, %cst_27 [1] : vector<2x512xf32> to vector<2xf32>
    %48 = vector.shape_cast %47 : vector<2xf32> to vector<2x1xf32>
    %cst_28 = arith.constant 5.120000e+02 : f32
    %49 = vector.broadcast %cst_28 : f32 to vector<2x1xf32>
    %50 = arith.divf %48, %49 : vector<2x1xf32>
    %51 = vector.broadcast %43 : vector<2x1xf32> to vector<2x512xf32>
    %52 = arith.subf %37, %51 : vector<2x512xf32>
    %cst_29 = arith.constant 9.99999974E-6 : f32
    %53 = vector.broadcast %cst_29 : f32 to vector<2x1xf32>
    %54 = arith.addf %50, %53 : vector<2x1xf32>
    %55 = math.rsqrt %54 : vector<2x1xf32>
    %56 = vector.broadcast %55 : vector<2x1xf32> to vector<2x512xf32>
    %57 = arith.mulf %52, %56 : vector<2x512xf32>
    %58 = vector.broadcast %38 : vector<1x512xf32> to vector<2x512xf32>
    %59 = arith.mulf %57, %58 : vector<2x512xf32>
    %60 = vector.broadcast %39 : vector<1x512xf32> to vector<2x512xf32>
    %61 = arith.addf %59, %60 : vector<2x512xf32>
    %62 = arith.truncf %61 : vector<2x512xf32> to vector<2x512xbf16>
    %c0_30 = arith.constant 0 : index
    %c0_31 = arith.constant 0 : index
    %63 = vector.load %arg9[%c0_30, %c0_31] : memref<512x512xbf16, #tpu.memory_space<vmem>>, vector<512x512xbf16>
    %cst_32 = arith.constant dense<0.000000e+00> : vector<2x512xf32>
    %64 = tpu.matmul %62, %63, %cst_32 {dimension_numbers = #tpu.dot_dimension_numbers<[1], [0], [0], [1], [0, 0, 1, 1], [], []>} : vector<2x512xbf16>, vector<512x512xbf16>, vector<2x512xf32> -> vector<2x512xf32>
    %c0_33 = arith.constant 0 : index
    %c0_34 = arith.constant 0 : index
    %65 = vector.load %arg10[%c0_33, %c0_34] : memref<1x512xf32, #tpu.memory_space<vmem>>, vector<1x512xf32>
    %66 = vector.broadcast %65 : vector<1x512xf32> to vector<2x512xf32>
    %67 = arith.addf %64, %66 : vector<2x512xf32>
    %c0_35 = arith.constant 0 : index
    %c0_36 = arith.constant 0 : index
    %68 = vector.load %arg11[%c0_35, %c0_36] : memref<1x512xf32, #tpu.memory_space<vmem>>, vector<1x512xf32>
    %c0_37 = arith.constant 0 : index
    %c0_38 = arith.constant 0 : index
    %69 = vector.load %arg12[%c0_37, %c0_38] : memref<1x512xf32, #tpu.memory_space<vmem>>, vector<1x512xf32>
    %cst_39 = arith.constant dense<0.000000e+00> : vector<2xf32>
    %70 = vector.multi_reduction <add>, %37, %cst_39 [1] : vector<2x512xf32> to vector<2xf32>
    %71 = vector.shape_cast %70 : vector<2xf32> to vector<2x1xf32>
    %cst_40 = arith.constant 5.120000e+02 : f32
    %72 = vector.broadcast %cst_40 : f32 to vector<2x1xf32>
    %73 = arith.divf %71, %72 : vector<2x1xf32>
    %74 = vector.broadcast %73 : vector<2x1xf32> to vector<2x512xf32>
    %75 = arith.subf %37, %74 : vector<2x512xf32>
    %76 = arith.mulf %75, %75 : vector<2x512xf32>
    %cst_41 = arith.constant dense<0.000000e+00> : vector<2xf32>
    %77 = vector.multi_reduction <add>, %76, %cst_41 [1] : vector<2x512xf32> to vector<2xf32>
    %78 = vector.shape_cast %77 : vector<2xf32> to vector<2x1xf32>
    %cst_42 = arith.constant 5.120000e+02 : f32
    %79 = vector.broadcast %cst_42 : f32 to vector<2x1xf32>
    %80 = arith.divf %78, %79 : vector<2x1xf32>
    %81 = vector.broadcast %73 : vector<2x1xf32> to vector<2x512xf32>
    %82 = arith.subf %37, %81 : vector<2x512xf32>
    %cst_43 = arith.constant 9.99999974E-6 : f32
    %83 = vector.broadcast %cst_43 : f32 to vector<2x1xf32>
    %84 = arith.addf %80, %83 : vector<2x1xf32>
    %85 = math.rsqrt %84 : vector<2x1xf32>
    %86 = vector.broadcast %85 : vector<2x1xf32> to vector<2x512xf32>
    %87 = arith.mulf %82, %86 : vector<2x512xf32>
    %88 = vector.broadcast %68 : vector<1x512xf32> to vector<2x512xf32>
    %89 = arith.mulf %87, %88 : vector<2x512xf32>
    %90 = vector.broadcast %69 : vector<1x512xf32> to vector<2x512xf32>
    %91 = arith.addf %89, %90 : vector<2x512xf32>
    %92 = arith.truncf %91 : vector<2x512xf32> to vector<2x512xbf16>
    %c0_44 = arith.constant 0 : index
    %c0_45 = arith.constant 0 : index
    %93 = vector.load %arg13[%c0_44, %c0_45] : memref<512x512xbf16, #tpu.memory_space<vmem>>, vector<512x512xbf16>
    %cst_46 = arith.constant dense<0.000000e+00> : vector<2x512xf32>
    %94 = tpu.matmul %92, %93, %cst_46 {dimension_numbers = #tpu.dot_dimension_numbers<[1], [0], [0], [1], [0, 0, 1, 1], [], []>} : vector<2x512xbf16>, vector<512x512xbf16>, vector<2x512xf32> -> vector<2x512xf32>
    %c0_47 = arith.constant 0 : index
    %c0_48 = arith.constant 0 : index
    %95 = vector.load %arg14[%c0_47, %c0_48] : memref<1x512xf32, #tpu.memory_space<vmem>>, vector<1x512xf32>
    %96 = vector.broadcast %95 : vector<1x512xf32> to vector<2x512xf32>
    %97 = arith.addf %94, %96 : vector<2x512xf32>
    %98 = tpu.concatenate %67, %97 in 0 : vector<2x512xf32>, vector<2x512xf32> -> vector<4x512xf32>
    %99 = arith.truncf %98 : vector<4x512xf32> to vector<4x512xbf16>
    %c0_49 = arith.constant 0 : index
    %c0_50 = arith.constant 0 : index
    %100 = vector.load %arg15[%c0_49, %c0_50] : memref<512x128xbf16, #tpu.memory_space<vmem>>, vector<512x128xbf16>
    %cst_51 = arith.constant dense<0.000000e+00> : vector<4x128xf32>
    %101 = tpu.matmul %99, %100, %cst_51 {dimension_numbers = #tpu.dot_dimension_numbers<[1], [0], [0], [1], [0, 0, 1, 1], [], []>} : vector<4x512xbf16>, vector<512x128xbf16>, vector<4x128xf32> -> vector<4x128xf32>
    %c0_52 = arith.constant 0 : index
    %c0_53 = arith.constant 0 : index
    %102 = vector.load %arg16[%c0_52, %c0_53] : memref<1x128xf32, #tpu.memory_space<vmem>>, vector<1x128xf32>
    %103 = vector.broadcast %102 : vector<1x128xf32> to vector<4x128xf32>
    %104 = arith.addf %101, %103 : vector<4x128xf32>
    %c0_54 = arith.constant 0 : index
    %c0_55 = arith.constant 0 : index
    %105 = vector.load %arg17[%c0_54, %c0_55] : memref<4x128xf32, #tpu.memory_space<vmem>>, vector<4x128xf32>
    tpu.vector_store %arg17[%c0_54, %c0_55], %104 {strides = array<i32>} : memref<4x128xf32, #tpu.memory_space<vmem>>, vector<4x128xf32>,
    return
  }
}

</mosaic_0001>

<llo_original>
// kernel: mv_network_forward.2
$region0: #{mv_network_forward.2}
  #allocation0 [shape = 'u32[]', space=smem, size = 0x4, offset = 0x4, fixed_abs, tag = 'smem constant byte address 0x4 - core index']
  #allocation1 [shape = 'u32[144,128]{1,0:T(1,128)}', space=vmem, size = 0x12000, scoped, tag = 'internal scratch']
  #allocation2 [shape = 'f32[8,256]{1,0:T(8,128)}', space=vmem, size = 0x2000, scoped, tag = 'scratch operand']
  %s0 = inlined_call_operand.vmem [shape: f32[8,3072], index: 0, kind: input, shape index: {}]
  %s1 = inlined_call_operand.hbm [shape: bf16[3072,512], index: 1, kind: input, shape index: {}]
  %s2 = inlined_call_operand.hbm [shape: f32[1,512], index: 2, kind: input, shape index: {}]
  %s3 = inlined_call_operand.vmem [shape: f32[8,512], index: 3, kind: output, shape index: {}]
  %s4 = sld [smem:[#allocation0]]
  $region61: #{mv_network_forward.2} parent=0
    _
  %s6 = ssub.s32 1, %s4
  %s7 = scalar_select 0, %s6, %s4
  $region1: #{mv_network_forward.2} parent=0
    #allocation3 [shape = 'u8[3145728]{0}', space=vmem, size = 0x300000, scoped, tag = 'input window, operand 1']
    #allocation4 [shape = 's32[2]{0}', space=sflag, size = 0x8, scoped, tag = 'scoped memory for mv_network_forward.2']
    #allocation5 [shape = 'u8[2048]{0}', space=vmem, size = 0x800, scoped, tag = 'input window, operand 2']
    #allocation6 [shape = 's32[2]{0}', space=sflag, size = 0x8, scoped, tag = 'scoped memory for mv_network_forward.2']
    %8 = vsyncpa [#allocation4], 0
    %s9 = scalar_lea.sflag [#allocation4], 1
    %10 = vsyncpa %s9, 0
    %11 = vsyncpa [#allocation6], 0
    %s12 = scalar_lea.sflag [#allocation6], 1
    %13 = vsyncpa %s12, 0
    loop: start=0, step=1, limit=4
    $region2: #{mv_network_forward.2} parent=1 // loop_pre_header
      _
    $region3: #{mv_network_forward.2} parent=1 // loop_header
      %s15 = sphi 0, %s19
      %p16 = scmp.ge.s32.totalorder %s15, 4
      %s22 = sphi 0, %s41
      %s23 = sphi 0, %s37
      %s24 = sphi 0, %s33
      %s25 = sphi 0, %s22
      %s26 = sphi 0, %s23
      %s27 = sphi 0, %s24
      %s28 = sphi 0, %s25
      %s29 = sphi 0, %s26
      %s30 = sphi 0, %s27
      %s46 = sphi 0, %s48
      %s49 = sphi 0, %s46
      %s50 = sphi 0, %s49
      %s66 = sphi 0, %s50
      %s74 = sphi 0, %s76
      %s77 = sphi 0, %s74
      %s78 = sphi 0, %s77
      %s94 = sphi 0, %s78
      %s100 = sphi 0, %s102
      %s103 = sphi 0, %s100
      %s104 = sphi 0, %s103
      %s120 = sphi 0, %s104
      %s128 = sphi 0, %s130
      %s131 = sphi 0, %s128
      %s132 = sphi 0, %s131
      %s148 = sphi 0, %s132
    $region4: #{mv_network_forward.2} parent=1 // loop_header_branch
      %18 = sbr.rel (%p16) target = $region8
    $region5: #{mv_network_forward.2} parent=1 // loop_body
      %s20 = ssub.s32 %s15, 1
      %s21 = ssub.s32 %s15, 2
      %s31 = sadd.s32 1, %s24
      %p32 = scmp.ge.s32.totalorder %s31, 1
      %s33 = scalar_select %p32, 0, %s31
      %s34 = sadd.s32 1, %s23
      %s35 = scalar_select %p32, %s34, %s23
      %p36 = scmp.ge.s32.totalorder %s35, 2
      %s37 = scalar_select %p36, 0, %s35
      %s38 = sadd.s32 1, %s22
      %s39 = scalar_select %p36, %s38, %s22
      %p40 = scmp.ge.s32.totalorder %s39, 1
      %s41 = scalar_select %p40, 0, %s39
      %s42 = ssub.s32 %s22, %s41
      %s43 = ssub.s32 %s24, %s33
      %s44 = sor.u32 %s42, %s43
      %p45 = scmp.eq.s32.totalorder %s44, 0
      %s47 = sadd.s32 %s46, 1
      %s48 = scalar_select %p45, %s46, %s47
      %p51 = pneg %p45
      %p52 = scmp.eq.s32.totalorder %s15, 1
      %p53 = por %p51, %p52
      %p54 = scmp.ne.s32.totalorder %s46, %s49
      %p55 = scmp.eq.s32.totalorder %s15, 0
      %p56 = por %p54, %p55
      %p57 = scmp.ne.s32.totalorder %s46, %s49
      %p58 = scmp.eq.s32.totalorder %s20, 1
      %p59 = por %p57, %p58
      %p60 = scmp.ne.s32.totalorder %s49, %s50
      %p61 = scmp.eq.s32.totalorder %s20, 0
      %p62 = por %p60, %p61
      %p63 = scmp.ne.s32.totalorder %s49, %s50
      %p64 = scmp.eq.s32.totalorder %s21, 1
      %p65 = por %p63, %p64
      %p67 = scmp.ne.s32.totalorder %s50, %s66
      %p68 = scmp.eq.s32.totalorder %s21, 0
      %p69 = por %p67, %p68
      %s70 = ssub.s32 %s24, %s33
      %s71 = ssub.s32 %s23, %s37
      %s72 = sor.u32 %s70, %s71
      %p73 = scmp.eq.s32.totalorder %s72, 0
      %s75 = sadd.s32 %s74, 1
      %s76 = scalar_select %p73, %s74, %s75
      %p79 = pneg %p73
      %p80 = scmp.eq.s32.totalorder %s15, 1
      %p81 = por %p79, %p80
      %p82 = scmp.ne.s32.totalorder %s74, %s77
      %p83 = scmp.eq.s32.totalorder %s15, 0
      %p84 = por %p82, %p83
      %p85 = scmp.ne.s32.totalorder %s74, %s77
      %p86 = scmp.eq.s32.totalorder %s20, 1
      %p87 = por %p85, %p86
      %p88 = scmp.ne.s32.totalorder %s77, %s78
      %p89 = scmp.eq.s32.totalorder %s20, 0
      %p90 = por %p88, %p89
      %p91 = scmp.ne.s32.totalorder %s77, %s78
      %p92 = scmp.eq.s32.totalorder %s21, 1
      %p93 = por %p91, %p92
      %p95 = scmp.ne.s32.totalorder %s78, %s94
      %p96 = scmp.eq.s32.totalorder %s21, 0
      %p97 = por %p95, %p96
      %s98 = ssub.s32 %s23, %s37
      %p99 = scmp.eq.s32.totalorder %s98, 0
      %s101 = sadd.s32 %s100, 1
      %s102 = scalar_select %p99, %s100, %s101
      %p105 = pneg %p99
      %p106 = scmp.eq.s32.totalorder %s15, 1
      %p107 = por %p105, %p106
      %p108 = scmp.ne.s32.totalorder %s100, %s103
      %p109 = scmp.eq.s32.totalorder %s15, 0
      %p110 = por %p108, %p109
      %p111 = scmp.ne.s32.totalorder %s100, %s103
      %p112 = scmp.eq.s32.totalorder %s20, 1
      %p113 = por %p111, %p112
      %p114 = scmp.ne.s32.totalorder %s103, %s104
      %p115 = scmp.eq.s32.totalorder %s20, 0
      %p116 = por %p114, %p115
      %p117 = scmp.ne.s32.totalorder %s103, %s104
      %p118 = scmp.eq.s32.totalorder %s21, 1
      %p119 = por %p117, %p118
      %p121 = scmp.ne.s32.totalorder %s104, %s120
      %p122 = scmp.eq.s32.totalorder %s21, 0
      %p123 = por %p121, %p122
      %s124 = ssub.s32 %s22, %s41
      %s125 = ssub.s32 %s23, %s37
      %s126 = sor.u32 %s124, %s125
      %p127 = scmp.eq.s32.totalorder %s126, 0
      %s129 = sadd.s32 %s128, 1
      %s130 = scalar_select %p127, %s128, %s129
      %p133 = pneg %p127
      %p134 = scmp.eq.s32.totalorder %s15, 1
      %p135 = por %p133, %p134
      %p136 = scmp.ne.s32.totalorder %s128, %s131
      %p137 = scmp.eq.s32.totalorder %s15, 0
      %p138 = por %p136, %p137
      %p139 = scmp.ne.s32.totalorder %s128, %s131
      %p140 = scmp.eq.s32.totalorder %s20, 1
      %p141 = por %p139, %p140
      %p142 = scmp.ne.s32.totalorder %s131, %s132
      %p143 = scmp.eq.s32.totalorder %s20, 0
      %p144 = por %p142, %p143
      %p145 = scmp.ne.s32.totalorder %s131, %s132
      %p146 = scmp.eq.s32.totalorder %s21, 1
      %p147 = por %p145, %p146
      %p149 = scmp.ne.s32.totalorder %s132, %s148
      %p150 = scmp.eq.s32.totalorder %s21, 0
      %p151 = por %p149, %p150
      %p152 = scmp.le.s32.totalorder 1, %s15
      %p153 = scmp.lt.s32.totalorder %s15, 3
      %p154 = pnand %p152, %p153
      %p155 = pneg %p154
      // Predicated region
      $region9: #{mv_network_forward.2} parent=5 // pred_check
        _
      $region10: #{mv_network_forward.2} parent=5 // pred_check_branch
        %157 = sbr.rel (%p154) target = $region12
      $region11: #{mv_network_forward.2} parent=5 // pred_region
        %s158 = ssub.s32 %s15, 1
        // Predicated region
        $region13: #{mv_network_forward.2} parent=11 // pred_check
          %p159 = pneg %p62
        $region14: #{mv_network_forward.2} parent=11 // pred_check_branch
          %161 = sbr.rel (%p159) target = $region16
        $region15: #{mv_network_forward.2} parent=11 // pred_region
          %s162 = smul.u32 24, %s27
          %p163 = scmp.lt.s32.totalorder %s25, 0
          %s164 = scalar_select %p163, %s25, 0
          %p165 = scmp.lt.s32.totalorder %s162, 23
          %s166 = scalar_select %p165, %s162, 23
          %s167 = smul.addr %s164, 24
          %s168 = sadd.s32 %s166, %s167
          %s169 = smul.addr %s168, 8
          %s170 = scalar_lea.vmem %s0, %s169
          %s171 = smul.u32 24, %s27
        $region16: #{mv_network_forward.2} parent=11 // pred_fallthru
          _
      $region12: #{mv_network_forward.2} parent=5 // pred_fallthru
        _
      %p172 = scmp.lt.s32.totalorder %s15, 2
      // Predicated region
      $region17: #{mv_network_forward.2} parent=5 // pred_check
        %p173 = pneg %p172
      $region18: #{mv_network_forward.2} parent=5 // pred_check_branch
        %175 = sbr.rel (%p173) target = $region20
      $region19: #{mv_network_forward.2} parent=5 // pred_region
        // Predicated region
        $region21: #{mv_network_forward.2} parent=19 // pred_check
          %p176 = pneg %p84
        $region22: #{mv_network_forward.2} parent=19 // pred_check_branch
          %178 = sbr.rel (%p176) target = $region24
        $region23: #{mv_network_forward.2} parent=19 // pred_region
          %s179 = sand.u32 %s74, 1
          %s180 = scalar_lea.sflag [#allocation4], %s179
          %s181 = sand.u32 %s74, 1
          %s182 = smul.addr %s181, 3072
          %s183 = scalar_lea.vmem [#allocation3], %s182
          %s184 = smul.u32 384, %s24
          %s185 = smul.u32 2, %s23
          %s187 = ssub.s32 49152, 49152
          %188 = vsyncadd %s180, %s187
          %s189 = smul.addr %s184, 4
          %s190 = sadd.s32 %s185, %s189
          %s191 = smul.addr %s190, 64
          %s192 = scalar_lea.hbm %s1, %s191
          %s193 = sshll.u32 %s183, 4
          %s194 = int_to_ptr.vmem [resolvable:$true] %s193
          %199 = dma.hbm_to_vmem [thread:$0]  %s192, 49152, %s194, %s180, 256, 128, 8
        $region24: #{mv_network_forward.2} parent=19 // pred_fallthru
          _
        // Predicated region
        $region25: #{mv_network_forward.2} parent=19 // pred_check
          %p200 = pneg %p110
        $region26: #{mv_network_forward.2} parent=19 // pred_check_branch
          %202 = sbr.rel (%p200) target = $region28
        $region27: #{mv_network_forward.2} parent=19 // pred_region
          %s203 = sand.u32 %s100, 1
          %s204 = scalar_lea.sflag [#allocation6], %s203
          %s205 = sand.u32 %s100, 1
          %s206 = smul.addr %s205, 2
          %s207 = scalar_lea.vmem [#allocation5], %s206
          %s208 = smul.u32 2, %s23
          %s210 = ssub.s32 32, 32
          %211 = vsyncadd %s204, %s210
          %s212 = smul.addr %s208, 16
          %s213 = scalar_lea.hbm %s2, %s212
          %s215 = sshll.u32 %s207, 4
          %s216 = int_to_ptr.vmem [resolvable:$true] %s215
          %218 = dma.hbm_to_vmem [thread:$0]  %s213, 32, %s216, %s204
        $region28: #{mv_network_forward.2} parent=19 // pred_fallthru
          _
      $region20: #{mv_network_forward.2} parent=5 // pred_fallthru
        _
      %p219 = scmp.le.s32.totalorder 1, %s15
      %p220 = scmp.lt.s32.totalorder %s15, 3
      %p221 = pnand %p219, %p220
      %p222 = pneg %p221
      // Predicated region
      $region29: #{mv_network_forward.2} parent=5 // pred_check
        _
      $region30: #{mv_network_forward.2} parent=5 // pred_check_branch
        %224 = sbr.rel (%p221) target = $region32
      $region31: #{mv_network_forward.2} parent=5 // pred_region
        %s225 = ssub.s32 %s15, 1
        %s226 = sand.u32 %s77, 1
        %s227 = scalar_lea.sflag [#allocation4], %s226
        %s228 = sand.u32 %s77, 1
        %s229 = smul.addr %s228, 3072
        %s230 = scalar_lea.vmem [#allocation3], %s229
        // Predicated region
        $region33: #{mv_network_forward.2} parent=31 // pred_check
          %p231 = pneg %p90
        $region34: #{mv_network_forward.2} parent=31 // pred_check_branch
          %233 = sbr.rel (%p231) target = $region36
        $region35: #{mv_network_forward.2} parent=31 // pred_region
          %234 = dma.done %s227, 49152
        $region36: #{mv_network_forward.2} parent=31 // pred_fallthru
          _
        %s235 = sand.u32 %s103, 1
        %s236 = scalar_lea.sflag [#allocation6], %s235
        %s237 = sand.u32 %s103, 1
        %s238 = smul.addr %s237, 2
        %s239 = scalar_lea.vmem [#allocation5], %s238
        // Predicated region
        $region37: #{mv_network_forward.2} parent=31 // pred_check
          %p240 = pneg %p116
        $region38: #{mv_network_forward.2} parent=31 // pred_check_branch
          %242 = sbr.rel (%p240) target = $region40
        $region39: #{mv_network_forward.2} parent=31 // pred_region
          %243 = dma.done %s236, 32
        $region40: #{mv_network_forward.2} parent=31 // pred_fallthru
          _
        %s244 = smul.u32 24, %s27
        %p245 = scmp.lt.s32.totalorder %s25, 0
        %s246 = scalar_select %p245, %s25, 0
        %p247 = scmp.lt.s32.totalorder %s244, 23
        %s248 = scalar_select %p247, %s244, 23
        %s249 = smul.addr %s246, 24
        %s250 = sadd.s32 %s248, %s249
        %s251 = smul.addr %s250, 8
        %s252 = scalar_lea.vmem %s0, %s251
        %p253 = pneg %p62
        %p254 = pneg %p59
        %s255 = sand.u32 %s77, 1
        %s256 = scalar_lea.sflag [#allocation4], %s255
        %s257 = sand.u32 %s77, 1
        %s258 = smul.addr %s257, 3072
        %s259 = scalar_lea.vmem [#allocation3], %s258
        %p260 = pneg %p90
        %p261 = pneg %p87
        %s262 = sand.u32 %s103, 1
        %s263 = scalar_lea.sflag [#allocation6], %s262
        %s264 = sand.u32 %s103, 1
        %s265 = smul.addr %s264, 2
        %s266 = scalar_lea.vmem [#allocation5], %s265
        %p267 = pneg %p116
        %p268 = pneg %p113
        %p269 = pneg %p144
        %p270 = pneg %p141
        %s271 = smul.u32 2, %s26
        %p272 = scmp.lt.s32.totalorder %s25, 0
        %s273 = scalar_select %p272, %s25, 0
        %p274 = scmp.lt.s32.totalorder %s271, 3
        %s275 = scalar_select %p274, %s271, 3
        %s276 = smul.addr %s273, 4
        %s277 = sadd.s32 %s275, %s276
        %s278 = smul.addr %s277, 8
        %s279 = scalar_lea.vmem %s3, %s278
        %s280 = smul.u32 24, %s27
        %p281 = scmp.lt.s32.totalorder %s25, 0
        %s282 = scalar_select %p281, %s25, 0
        %p283 = scmp.lt.s32.totalorder %s280, 23
        %s284 = scalar_select %p283, %s280, 23
        %s285 = smul.addr %s282, 24
        %s286 = sadd.s32 %s284, %s285
        %s287 = smul.addr %s286, 8
        %s288 = scalar_lea.vmem %s0, %s287
        %s289 = smul.u32 24, %s27
        %s290 = smul.u32 384, %s27
        %s291 = smul.u32 2, %s26
        %s292 = smul.u32 2, %s26
        %s293 = smul.u32 2, %s26
        %p294 = scmp.lt.s32.totalorder %s25, 0
        %s295 = scalar_select %p294, %s25, 0
        %p296 = scmp.lt.s32.totalorder %s293, 3
        %s297 = scalar_select %p296, %s293, 3
        %s298 = smul.addr %s295, 4
        %s299 = sadd.s32 %s297, %s298
        %s300 = smul.addr %s299, 8
        %s301 = scalar_lea.vmem %s3, %s300
        %s302 = smul.u32 2, %s26
        %p303 = scmp.eq.s32.totalorder %s27, 0
        // Predicated region
        $region41: #{mv_network_forward.2} parent=31 // pred_check
          %p304 = pneg %p303
        $region42: #{mv_network_forward.2} parent=31 // pred_check_branch
          %306 = sbr.rel (%p304) target = $region44
        $region43: #{mv_network_forward.2} parent=31 // pred_region
          %307 = vst [vmem:[#allocation2] sm:$0xff] 0.0
          %308 = vst [vmem:[#allocation2 + $0x8] sm:$0xff] 0.0
        $region44: #{mv_network_forward.2} parent=31 // pred_fallthru
          _
        %v309 = vld [vmem:[#allocation2] sm:$0xff]
        %v310 = vld [vmem:[#allocation2 + $0x8] sm:$0xff]
        %v311 = vld [vmem:[%s288] sm:$0xff]
        %v312 = vld [vmem:[%s288 + $0x8] sm:$0xff]
        %v313 = vld [vmem:[%s288 + $0x10] sm:$0xff]
        %v314 = vld [vmem:[%s288 + $0x18] sm:$0xff]
        %v315 = vld [vmem:[%s288 + $0x20] sm:$0xff]
        %v316 = vld [vmem:[%s288 + $0x28] sm:$0xff]
        %v317 = vld [vmem:[%s288 + $0x30] sm:$0xff]
        %v318 = vld [vmem:[%s288 + $0x38] sm:$0xff]
        %v319 = vld [vmem:[%s288 + $0x40] sm:$0xff]
        %v320 = vld [vmem:[%s288 + $0x48] sm:$0xff]
        %v321 = vld [vmem:[%s288 + $0x50] sm:$0xff]
        %v322 = vld [vmem:[%s288 + $0x58] sm:$0xff]
        %v323 = vld [vmem:[%s288 + $0x60] sm:$0xff]
        %v324 = vld [vmem:[%s288 + $0x68] sm:$0xff]
        %v325 = vld [vmem:[%s288 + $0x70] sm:$0xff]
        %v326 = vld [vmem:[%s288 + $0x78] sm:$0xff]
        %v327 = vld [vmem:[%s288 + $0x80] sm:$0xff]
        %v328 = vld [vmem:[%s288 + $0x88] sm:$0xff]
        %v329 = vld [vmem:[%s288 + $0x90] sm:$0xff]
        %v330 = vld [vmem:[%s288 + $0x98] sm:$0xff]
        %v331 = vld [vmem:[%s288 + $0xa0] sm:$0xff]
        %v332 = vld [vmem:[%s288 + $0xa8] sm:$0xff]
        %v333 = vld [vmem:[%s288 + $0xb0] sm:$0xff]
        %v334 = vld [vmem:[%s288 + $0xb8] sm:$0xff]
        %v335 = vpack.c.bf16 %v311, %v311
        %v336 = vpack.c.bf16 %v312, %v312
        %v337 = vpack.c.bf16 %v313, %v313
        %v338 = vpack.c.bf16 %v314, %v314
        %v339 = vpack.c.bf16 %v315, %v315
        %v340 = vpack.c.bf16 %v316, %v316
        %v341 = vpack.c.bf16 %v317, %v317
        %v342 = vpack.c.bf16 %v318, %v318
        %v343 = vpack.c.bf16 %v319, %v319
        %v344 = vpack.c.bf16 %v320, %v320
        %v345 = vpack.c.bf16 %v321, %v321
        %v346 = vpack.c.bf16 %v322, %v322
        %v347 = vpack.c.bf16 %v323, %v323
        %v348 = vpack.c.bf16 %v324, %v324
        %v349 = vpack.c.bf16 %v325, %v325
        %v350 = vpack.c.bf16 %v326, %v326
        %v351 = vpack.c.bf16 %v327, %v327
        %v352 = vpack.c.bf16 %v328, %v328
        %v353 = vpack.c.bf16 %v329, %v329
        %v354 = vpack.c.bf16 %v330, %v330
        %v355 = vpack.c.bf16 %v331, %v331
        %v356 = vpack.c.bf16 %v332, %v332
        %v357 = vpack.c.bf16 %v333, %v333
        %v358 = vpack.c.bf16 %v334, %v334
        %v359 = vld [vmem:[%s230] sm:$0xff]
        %v360 = vld [vmem:[%s230 + $0x8] sm:$0xff]
        %v361 = vld [vmem:[%s230 + $0x10] sm:$0xff]
        %v362 = vld [vmem:[%s230 + $0x18] sm:$0xff]
        %v363 = vld [vmem:[%s230 + $0x20] sm:$0xff]
        %v364 = vld [vmem:[%s230 + $0x28] sm:$0xff]
        %v365 = vld [vmem:[%s230 + $0x30] sm:$0xff]
        %v366 = vld [vmem:[%s230 + $0x38] sm:$0xff]
        %v367 = vld [vmem:[%s230 + $0x40] sm:$0xff]
        %v368 = vld [vmem:[%s230 + $0x48] sm:$0xff]
        %v369 = vld [vmem:[%s230 + $0x50] sm:$0xff]
        %v370 = vld [vmem:[%s230 + $0x58] sm:$0xff]
        %v371 = vld [vmem:[%s230 + $0x60] sm:$0xff]
        %v372 = vld [vmem:[%s230 + $0x68] sm:$0xff]
        %v373 = vld [vmem:[%s230 + $0x70] sm:$0xff]
        %v374 = vld [vmem:[%s230 + $0x78] sm:$0xff]
        %v375 = vld [vmem:[%s230 + $0x80] sm:$0xff]
        %v376 = vld [vmem:[%s230 + $0x88] sm:$0xff]
        %v377 = vld [vmem:[%s230 + $0x90] sm:$0xff]
        %v378 = vld [vmem:[%s230 + $0x98] sm:$0xff]
        %v379 = vld [vmem:[%s230 + $0xa0] sm:$0xff]
        %v380 = vld [vmem:[%s230 + $0xa8] sm:$0xff]
        %v381 = vld [vmem:[%s230 + $0xb0] sm:$0xff]
        %v382 = vld [vmem:[%s230 + $0xb8] sm:$0xff]
        %v383 = vld [vmem:[%s230 + $0xc0] sm:$0xff]
        %v384 = vld [vmem:[%s230 + $0xc8] sm:$0xff]
        %v385 = vld [vmem:[%s230 + $0xd0] sm:$0xff]
        %v386 = vld [vmem:[%s230 + $0xd8] sm:$0xff]
        %v387 = vld [vmem:[%s230 + $0xe0] sm:$0xff]
        %v388 = vld [vmem:[%s230 + $0xe8] sm:$0xff]
        %v389 = vld [vmem:[%s230 + $0xf0] sm:$0xff]
        %v390 = vld [vmem:[%s230 + $0xf8] sm:$0xff]
        %v391 = vld [vmem:[%s230 + $0x100] sm:$0xff]
        %v392 = vld [vmem:[%s230 + $0x108] sm:$0xff]
        %v393 = vld [vmem:[%s230 + $0x110] sm:$0xff]
        %v394 = vld [vmem:[%s230 + $0x118] sm:$0xff]
        %v395 = vld [vmem:[%s230 + $0x120] sm:$0xff]
        %v396 = vld [vmem:[%s230 + $0x128] sm:$0xff]
        %v397 = vld [vmem:[%s230 + $0x130] sm:$0xff]
        %v398 = vld [vmem:[%s230 + $0x138] sm:$0xff]
        %v399 = vld [vmem:[%s230 + $0x140] sm:$0xff]
        %v400 = vld [vmem:[%s230 + $0x148] sm:$0xff]
        %v401 = vld [vmem:[%s230 + $0x150] sm:$0xff]
        %v402 = vld [vmem:[%s230 + $0x158] sm:$0xff]
        %v403 = vld [vmem:[%s230 + $0x160] sm:$0xff]
        %v404 = vld [vmem:[%s230 + $0x168] sm:$0xff]
        %v405 = vld [vmem:[%s230 + $0x170] sm:$0xff]
        %v406 = vld [vmem:[%s230 + $0x178] sm:$0xff]
        %v407 = vld [vmem:[%s230 + $0x180] sm:$0xff]
        %v408 = vld [vmem:[%s230 + $0x188] sm:$0xff]
        %v409 = vld [vmem:[%s230 + $0x190] sm:$0xff]
        %v410 = vld [vmem:[%s230 + $0x198] sm:$0xff]
        %v411 = vld [vmem:[%s230 + $0x1a0] sm:$0xff]
        %v412 = vld [vmem:[%s230 + $0x1a8] sm:$0xff]
        %v413 = vld [vmem:[%s230 + $0x1b0] sm:$0xff]
        %v414 = vld [vmem:[%s230 + $0x1b8] sm:$0xff]
        %v415 = vld [vmem:[%s230 + $0x1c0] sm:$0xff]
        %v416 = vld [vmem:[%s230 + $0x1c8] sm:$0xff]
        %v417 = vld [vmem:[%s230 + $0x1d0] sm:$0xff]
        %v418 = vld [vmem:[%s230 + $0x1d8] sm:$0xff]
        %v419 = vld [vmem:[%s230 + $0x1e0] sm:$0xff]
        %v420 = vld [vmem:[%s230 + $0x1e8] sm:$0xff]
        %v421 = vld [vmem:[%s230 + $0x1f0] sm:$0xff]
        %v422 = vld [vmem:[%s230 + $0x1f8] sm:$0xff]
        %v423 = vld [vmem:[%s230 + $0x200] sm:$0xff]
        %v424 = vld [vmem:[%s230 + $0x208] sm:$0xff]
        %v425 = vld [vmem:[%s230 + $0x210] sm:$0xff]
        %v426 = vld [vmem:[%s230 + $0x218] sm:$0xff]
        %v427 = vld [vmem:[%s230 + $0x220] sm:$0xff]
        %v428 = vld [vmem:[%s230 + $0x228] sm:$0xff]
        %v429 = vld [vmem:[%s230 + $0x230] sm:$0xff]
        %v430 = vld [vmem:[%s230 + $0x238] sm:$0xff]
        %v431 = vld [vmem:[%s230 + $0x240] sm:$0xff]
        %v432 = vld [vmem:[%s230 + $0x248] sm:$0xff]
        %v433 = vld [vmem:[%s230 + $0x250] sm:$0xff]
        %v434 = vld [vmem:[%s230 + $0x258] sm:$0xff]
        %v435 = vld [vmem:[%s230 + $0x260] sm:$0xff]
        %v436 = vld [vmem:[%s230 + $0x268] sm:$0xff]
        %v437 = vld [vmem:[%s230 + $0x270] sm:$0xff]
        %v438 = vld [vmem:[%s230 + $0x278] sm:$0xff]
        %v439 = vld [vmem:[%s230 + $0x280] sm:$0xff]
        %v440 = vld [vmem:[%s230 + $0x288] sm:$0xff]
        %v441 = vld [vmem:[%s230 + $0x290] sm:$0xff]
        %v442 = vld [vmem:[%s230 + $0x298] sm:$0xff]
        %v443 = vld [vmem:[%s230 + $0x2a0] sm:$0xff]
        %v444 = vld [vmem:[%s230 + $0x2a8] sm:$0xff]
        %v445 = vld [vmem:[%s230 + $0x2b0] sm:$0xff]
        %v446 = vld [vmem:[%s230 + $0x2b8] sm:$0xff]
        %v447 = vld [vmem:[%s230 + $0x2c0] sm:$0xff]
        %v448 = vld [vmem:[%s230 + $0x2c8] sm:$0xff]
        %v449 = vld [vmem:[%s230 + $0x2d0] sm:$0xff]
        %v450 = vld [vmem:[%s230 + $0x2d8] sm:$0xff]
        %v451 = vld [vmem:[%s230 + $0x2e0] sm:$0xff]
        %v452 = vld [vmem:[%s230 + $0x2e8] sm:$0xff]
        %v453 = vld [vmem:[%s230 + $0x2f0] sm:$0xff]
        %v454 = vld [vmem:[%s230 + $0x2f8] sm:$0xff]
        %v455 = vld [vmem:[%s230 + $0x300] sm:$0xff]
        %v456 = vld [vmem:[%s230 + $0x308] sm:$0xff]
        %v457 = vld [vmem:[%s230 + $0x310] sm:$0xff]
        %v458 = vld [vmem:[%s230 + $0x318] sm:$0xff]
        %v459 = vld [vmem:[%s230 + $0x320] sm:$0xff]
        %v460 = vld [vmem:[%s230 + $0x328] sm:$0xff]
        %v461 = vld [vmem:[%s230 + $0x330] sm:$0xff]
        %v462 = vld [vmem:[%s230 + $0x338] sm:$0xff]
        %v463 = vld [vmem:[%s230 + $0x340] sm:$0xff]
        %v464 = vld [vmem:[%s230 + $0x348] sm:$0xff]
        %v465 = vld [vmem:[%s230 + $0x350] sm:$0xff]
        %v466 = vld [vmem:[%s230 + $0x358] sm:$0xff]
        %v467 = vld [vmem:[%s230 + $0x360] sm:$0xff]
        %v468 = vld [vmem:[%s230 + $0x368] sm:$0xff]
        %v469 = vld [vmem:[%s230 + $0x370] sm:$0xff]
        %v470 = vld [vmem:[%s230 + $0x378] sm:$0xff]
        %v471 = vld [vmem:[%s230 + $0x380] sm:$0xff]
        %v472 = vld [vmem:[%s230 + $0x388] sm:$0xff]
        %v473 = vld [vmem:[%s230 + $0x390] sm:$0xff]
        %v474 = vld [vmem:[%s230 + $0x398] sm:$0xff]
        %v475 = vld [vmem:[%s230 + $0x3a0] sm:$0xff]
        %v476 = vld [vmem:[%s230 + $0x3a8] sm:$0xff]
        %v477 = vld [vmem:[%s230 + $0x3b0] sm:$0xff]
        %v478 = vld [vmem:[%s230 + $0x3b8] sm:$0xff]
        %v479 = vld [vmem:[%s230 + $0x3c0] sm:$0xff]
        %v480 = vld [vmem:[%s230 + $0x3c8] sm:$0xff]
        %v481 = vld [vmem:[%s230 + $0x3d0] sm:$0xff]
        %v482 = vld [vmem:[%s230 + $0x3d8] sm:$0xff]
        %v483 = vld [vmem:[%s230 + $0x3e0] sm:$0xff]
        %v484 = vld [vmem:[%s230 + $0x3e8] sm:$0xff]
        %v485 = vld [vmem:[%s230 + $0x3f0] sm:$0xff]
        %v486 = vld [vmem:[%s230 + $0x3f8] sm:$0xff]
        %v487 = vld [vmem:[%s230 + $0x400] sm:$0xff]
        %v488 = vld [vmem:[%s230 + $0x408] sm:$0xff]
        %v489 = vld [vmem:[%s230 + $0x410] sm:$0xff]
        %v490 = vld [vmem:[%s230 + $0x418] sm:$0xff]
        %v491 = vld [vmem:[%s230 + $0x420] sm:$0xff]
        %v492 = vld [vmem:[%s230 + $0x428] sm:$0xff]
        %v493 = vld [vmem:[%s230 + $0x430] sm:$0xff]
        %v494 = vld [vmem:[%s230 + $0x438] sm:$0xff]
        %v495 = vld [vmem:[%s230 + $0x440] sm:$0xff]
        %v496 = vld [vmem:[%s230 + $0x448] sm:$0xff]
        %v497 = vld [vmem:[%s230 + $0x450] sm:$0xff]
        %v498 = vld [vmem:[%s230 + $0x458] sm:$0xff]
        %v499 = vld [vmem:[%s230 + $0x460] sm:$0xff]
        %v500 = vld [vmem:[%s230 + $0x468] sm:$0xff]
        %v501 = vld [vmem:[%s230 + $0x470] sm:$0xff]
        %v502 = vld [vmem:[%s230 + $0x478] sm:$0xff]
        %v503 = vld [vmem:[%s230 + $0x480] sm:$0xff]
        %v504 = vld [vmem:[%s230 + $0x488] sm:$0xff]
        %v505 = vld [vmem:[%s230 + $0x490] sm:$0xff]
        %v506 = vld [vmem:[%s230 + $0x498] sm:$0xff]
        %v507 = vld [vmem:[%s230 + $0x4a0] sm:$0xff]
        %v508 = vld [vmem:[%s230 + $0x4a8] sm:$0xff]
        %v509 = vld [vmem:[%s230 + $0x4b0] sm:$0xff]
        %v510 = vld [vmem:[%s230 + $0x4b8] sm:$0xff]
        %v511 = vld [vmem:[%s230 + $0x4c0] sm:$0xff]
        %v512 = vld [vmem:[%s230 + $0x4c8] sm:$0xff]
        %v513 = vld [vmem:[%s230 + $0x4d0] sm:$0xff]
        %v514 = vld [vmem:[%s230 + $0x4d8] sm:$0xff]
        %v515 = vld [vmem:[%s230 + $0x4e0] sm:$0xff]
        %v516 = vld [vmem:[%s230 + $0x4e8] sm:$0xff]
        %v517 = vld [vmem:[%s230 + $0x4f0] sm:$0xff]
        %v518 = vld [vmem:[%s230 + $0x4f8] sm:$0xff]
        %v519 = vld [vmem:[%s230 + $0x500] sm:$0xff]
        %v520 = vld [vmem:[%s230 + $0x508] sm:$0xff]
        %v521 = vld [vmem:[%s230 + $0x510] sm:$0xff]
        %v522 = vld [vmem:[%s230 + $0x518] sm:$0xff]
        %v523 = vld [vmem:[%s230 + $0x520] sm:$0xff]
        %v524 = vld [vmem:[%s230 + $0x528] sm:$0xff]
        %v525 = vld [vmem:[%s230 + $0x530] sm:$0xff]
        %v526 = vld [vmem:[%s230 + $0x538] sm:$0xff]
        %v527 = vld [vmem:[%s230 + $0x540] sm:$0xff]
        %v528 = vld [vmem:[%s230 + $0x548] sm:$0xff]
        %v529 = vld [vmem:[%s230 + $0x550] sm:$0xff]
        %v530 = vld [vmem:[%s230 + $0x558] sm:$0xff]
        %v531 = vld [vmem:[%s230 + $0x560] sm:$0xff]
        %v532 = vld [vmem:[%s230 + $0x568] sm:$0xff]
        %v533 = vld [vmem:[%s230 + $0x570] sm:$0xff]
        %v534 = vld [vmem:[%s230 + $0x578] sm:$0xff]
        %v535 = vld [vmem:[%s230 + $0x580] sm:$0xff]
        %v536 = vld [vmem:[%s230 + $0x588] sm:$0xff]
        %v537 = vld [vmem:[%s230 + $0x590] sm:$0xff]
        %v538 = vld [vmem:[%s230 + $0x598] sm:$0xff]
        %v539 = vld [vmem:[%s230 + $0x5a0] sm:$0xff]
        %v540 = vld [vmem:[%s230 + $0x5a8] sm:$0xff]
        %v541 = vld [vmem:[%s230 + $0x5b0] sm:$0xff]
        %v542 = vld [vmem:[%s230 + $0x5b8] sm:$0xff]
        %v543 = vld [vmem:[%s230 + $0x5c0] sm:$0xff]
        %v544 = vld [vmem:[%s230 + $0x5c8] sm:$0xff]
        %v545 = vld [vmem:[%s230 + $0x5d0] sm:$0xff]
        %v546 = vld [vmem:[%s230 + $0x5d8] sm:$0xff]
        %v547 = vld [vmem:[%s230 + $0x5e0] sm:$0xff]
        %v548 = vld [vmem:[%s230 + $0x5e8] sm:$0xff]
        %v549 = vld [vmem:[%s230 + $0x5f0] sm:$0xff]
        %v550 = vld [vmem:[%s230 + $0x5f8] sm:$0xff]
        %v551 = vld [vmem:[%s230 + $0x600] sm:$0xff]
        %v552 = vld [vmem:[%s230 + $0x608] sm:$0xff]
        %v553 = vld [vmem:[%s230 + $0x610] sm:$0xff]
        %v554 = vld [vmem:[%s230 + $0x618] sm:$0xff]
        %v555 = vld [vmem:[%s230 + $0x620] sm:$0xff]
        %v556 = vld [vmem:[%s230 + $0x628] sm:$0xff]
        %v557 = vld [vmem:[%s230 + $0x630] sm:$0xff]
        %v558 = vld [vmem:[%s230 + $0x638] sm:$0xff]
        %v559 = vld [vmem:[%s230 + $0x640] sm:$0xff]
        %v560 = vld [vmem:[%s230 + $0x648] sm:$0xff]
        %v561 = vld [vmem:[%s230 + $0x650] sm:$0xff]
        %v562 = vld [vmem:[%s230 + $0x658] sm:$0xff]
        %v563 = vld [vmem:[%s230 + $0x660] sm:$0xff]
        %v564 = vld [vmem:[%s230 + $0x668] sm:$0xff]
        %v565 = vld [vmem:[%s230 + $0x670] sm:$0xff]
        %v566 = vld [vmem:[%s230 + $0x678] sm:$0xff]
        %v567 = vld [vmem:[%s230 + $0x680] sm:$0xff]
        %v568 = vld [vmem:[%s230 + $0x688] sm:$0xff]
        %v569 = vld [vmem:[%s230 + $0x690] sm:$0xff]
        %v570 = vld [vmem:[%s230 + $0x698] sm:$0xff]
        %v571 = vld [vmem:[%s230 + $0x6a0] sm:$0xff]
        %v572 = vld [vmem:[%s230 + $0x6a8] sm:$0xff]
        %v573 = vld [vmem:[%s230 + $0x6b0] sm:$0xff]
        %v574 = vld [vmem:[%s230 + $0x6b8] sm:$0xff]
        %v575 = vld [vmem:[%s230 + $0x6c0] sm:$0xff]
        %v576 = vld [vmem:[%s230 + $0x6c8] sm:$0xff]
        %v577 = vld [vmem:[%s230 + $0x6d0] sm:$0xff]
        %v578 = vld [vmem:[%s230 + $0x6d8] sm:$0xff]
        %v579 = vld [vmem:[%s230 + $0x6e0] sm:$0xff]
        %v580 = vld [vmem:[%s230 + $0x6e8] sm:$0xff]
        %v581 = vld [vmem:[%s230 + $0x6f0] sm:$0xff]
        %v582 = vld [vmem:[%s230 + $0x6f8] sm:$0xff]
        %v583 = vld [vmem:[%s230 + $0x700] sm:$0xff]
        %v584 = vld [vmem:[%s230 + $0x708] sm:$0xff]
        %v585 = vld [vmem:[%s230 + $0x710] sm:$0xff]
        %v586 = vld [vmem:[%s230 + $0x718] sm:$0xff]
        %v587 = vld [vmem:[%s230 + $0x720] sm:$0xff]
        %v588 = vld [vmem:[%s230 + $0x728] sm:$0xff]
        %v589 = vld [vmem:[%s230 + $0x730] sm:$0xff]
        %v590 = vld [vmem:[%s230 + $0x738] sm:$0xff]
        %v591 = vld [vmem:[%s230 + $0x740] sm:$0xff]
        %v592 = vld [vmem:[%s230 + $0x748] sm:$0xff]
        %v593 = vld [vmem:[%s230 + $0x750] sm:$0xff]
        %v594 = vld [vmem:[%s230 + $0x758] sm:$0xff]
        %v595 = vld [vmem:[%s230 + $0x760] sm:$0xff]
        %v596 = vld [vmem:[%s230 + $0x768] sm:$0xff]
        %v597 = vld [vmem:[%s230 + $0x770] sm:$0xff]
        %v598 = vld [vmem:[%s230 + $0x778] sm:$0xff]
        %v599 = vld [vmem:[%s230 + $0x780] sm:$0xff]
        %v600 = vld [vmem:[%s230 + $0x788] sm:$0xff]
        %v601 = vld [vmem:[%s230 + $0x790] sm:$0xff]
        %v602 = vld [vmem:[%s230 + $0x798] sm:$0xff]
        %v603 = vld [vmem:[%s230 + $0x7a0] sm:$0xff]
        %v604 = vld [vmem:[%s230 + $0x7a8] sm:$0xff]
        %v605 = vld [vmem:[%s230 + $0x7b0] sm:$0xff]
        %v606 = vld [vmem:[%s230 + $0x7b8] sm:$0xff]
        %v607 = vld [vmem:[%s230 + $0x7c0] sm:$0xff]
        %v608 = vld [vmem:[%s230 + $0x7c8] sm:$0xff]
        %v609 = vld [vmem:[%s230 + $0x7d0] sm:$0xff]
        %v610 = vld [vmem:[%s230 + $0x7d8] sm:$0xff]
        %v611 = vld [vmem:[%s230 + $0x7e0] sm:$0xff]
        %v612 = vld [vmem:[%s230 + $0x7e8] sm:$0xff]
        %v613 = vld [vmem:[%s230 + $0x7f0] sm:$0xff]
        %v614 = vld [vmem:[%s230 + $0x7f8] sm:$0xff]
        %v615 = vld [vmem:[%s230 + $0x800] sm:$0xff]
        %v616 = vld [vmem:[%s230 + $0x808] sm:$0xff]
        %v617 = vld [vmem:[%s230 + $0x810] sm:$0xff]
        %v618 = vld [vmem:[%s230 + $0x818] sm:$0xff]
        %v619 = vld [vmem:[%s230 + $0x820] sm:$0xff]
        %v620 = vld [vmem:[%s230 + $0x828] sm:$0xff]
        %v621 = vld [vmem:[%s230 + $0x830] sm:$0xff]
        %v622 = vld [vmem:[%s230 + $0x838] sm:$0xff]
        %v623 = vld [vmem:[%s230 + $0x840] sm:$0xff]
        %v624 = vld [vmem:[%s230 + $0x848] sm:$0xff]
        %v625 = vld [vmem:[%s230 + $0x850] sm:$0xff]
        %v626 = vld [vmem:[%s230 + $0x858] sm:$0xff]
        %v627 = vld [vmem:[%s230 + $0x860] sm:$0xff]
        %v628 = vld [vmem:[%s230 + $0x868] sm:$0xff]
        %v629 = vld [vmem:[%s230 + $0x870] sm:$0xff]
        %v630 = vld [vmem:[%s230 + $0x878] sm:$0xff]
        %v631 = vld [vmem:[%s230 + $0x880] sm:$0xff]
        %v632 = vld [vmem:[%s230 + $0x888] sm:$0xff]
        %v633 = vld [vmem:[%s230 + $0x890] sm:$0xff]
        %v634 = vld [vmem:[%s230 + $0x898] sm:$0xff]
        %v635 = vld [vmem:[%s230 + $0x8a0] sm:$0xff]
        %v636 = vld [vmem:[%s230 + $0x8a8] sm:$0xff]
        %v637 = vld [vmem:[%s230 + $0x8b0] sm:$0xff]
        %v638 = vld [vmem:[%s230 + $0x8b8] sm:$0xff]
        %v639 = vld [vmem:[%s230 + $0x8c0] sm:$0xff]
        %v640 = vld [vmem:[%s230 + $0x8c8] sm:$0xff]
        %v641 = vld [vmem:[%s230 + $0x8d0] sm:$0xff]
        %v642 = vld [vmem:[%s230 + $0x8d8] sm:$0xff]
        %v643 = vld [vmem:[%s230 + $0x8e0] sm:$0xff]
        %v644 = vld [vmem:[%s230 + $0x8e8] sm:$0xff]
        %v645 = vld [vmem:[%s230 + $0x8f0] sm:$0xff]
        %v646 = vld [vmem:[%s230 + $0x8f8] sm:$0xff]
        %v647 = vld [vmem:[%s230 + $0x900] sm:$0xff]
        %v648 = vld [vmem:[%s230 + $0x908] sm:$0xff]
        %v649 = vld [vmem:[%s230 + $0x910] sm:$0xff]
        %v650 = vld [vmem:[%s230 + $0x918] sm:$0xff]
        %v651 = vld [vmem:[%s230 + $0x920] sm:$0xff]
        %v652 = vld [vmem:[%s230 + $0x928] sm:$0xff]
        %v653 = vld [vmem:[%s230 + $0x930] sm:$0xff]
        %v654 = vld [vmem:[%s230 + $0x938] sm:$0xff]
        %v655 = vld [vmem:[%s230 + $0x940] sm:$0xff]
        %v656 = vld [vmem:[%s230 + $0x948] sm:$0xff]
        %v657 = vld [vmem:[%s230 + $0x950] sm:$0xff]
        %v658 = vld [vmem:[%s230 + $0x958] sm:$0xff]
        %v659 = vld [vmem:[%s230 + $0x960] sm:$0xff]
        %v660 = vld [vmem:[%s230 + $0x968] sm:$0xff]
        %v661 = vld [vmem:[%s230 + $0x970] sm:$0xff]
        %v662 = vld [vmem:[%s230 + $0x978] sm:$0xff]
        %v663 = vld [vmem:[%s230 + $0x980] sm:$0xff]
        %v664 = vld [vmem:[%s230 + $0x988] sm:$0xff]
        %v665 = vld [vmem:[%s230 + $0x990] sm:$0xff]
        %v666 = vld [vmem:[%s230 + $0x998] sm:$0xff]
        %v667 = vld [vmem:[%s230 + $0x9a0] sm:$0xff]
        %v668 = vld [vmem:[%s230 + $0x9a8] sm:$0xff]
        %v669 = vld [vmem:[%s230 + $0x9b0] sm:$0xff]
        %v670 = vld [vmem:[%s230 + $0x9b8] sm:$0xff]
        %v671 = vld [vmem:[%s230 + $0x9c0] sm:$0xff]
        %v672 = vld [vmem:[%s230 + $0x9c8] sm:$0xff]
        %v673 = vld [vmem:[%s230 + $0x9d0] sm:$0xff]
        %v674 = vld [vmem:[%s230 + $0x9d8] sm:$0xff]
        %v675 = vld [vmem:[%s230 + $0x9e0] sm:$0xff]
        %v676 = vld [vmem:[%s230 + $0x9e8] sm:$0xff]
        %v677 = vld [vmem:[%s230 + $0x9f0] sm:$0xff]
        %v678 = vld [vmem:[%s230 + $0x9f8] sm:$0xff]
        %v679 = vld [vmem:[%s230 + $0xa00] sm:$0xff]
        %v680 = vld [vmem:[%s230 + $0xa08] sm:$0xff]
        %v681 = vld [vmem:[%s230 + $0xa10] sm:$0xff]
        %v682 = vld [vmem:[%s230 + $0xa18] sm:$0xff]
        %v683 = vld [vmem:[%s230 + $0xa20] sm:$0xff]
        %v684 = vld [vmem:[%s230 + $0xa28] sm:$0xff]
        %v685 = vld [vmem:[%s230 + $0xa30] sm:$0xff]
        %v686 = vld [vmem:[%s230 + $0xa38] sm:$0xff]
        %v687 = vld [vmem:[%s230 + $0xa40] sm:$0xff]
        %v688 = vld [vmem:[%s230 + $0xa48] sm:$0xff]
        %v689 = vld [vmem:[%s230 + $0xa50] sm:$0xff]
        %v690 = vld [vmem:[%s230 + $0xa58] sm:$0xff]
        %v691 = vld [vmem:[%s230 + $0xa60] sm:$0xff]
        %v692 = vld [vmem:[%s230 + $0xa68] sm:$0xff]
        %v693 = vld [vmem:[%s230 + $0xa70] sm:$0xff]
        %v694 = vld [vmem:[%s230 + $0xa78] sm:$0xff]
        %v695 = vld [vmem:[%s230 + $0xa80] sm:$0xff]
        %v696 = vld [vmem:[%s230 + $0xa88] sm:$0xff]
        %v697 = vld [vmem:[%s230 + $0xa90] sm:$0xff]
        %v698 = vld [vmem:[%s230 + $0xa98] sm:$0xff]
        %v699 = vld [vmem:[%s230 + $0xaa0] sm:$0xff]
        %v700 = vld [vmem:[%s230 + $0xaa8] sm:$0xff]
        %v701 = vld [vmem:[%s230 + $0xab0] sm:$0xff]
        %v702 = vld [vmem:[%s230 + $0xab8] sm:$0xff]
        %v703 = vld [vmem:[%s230 + $0xac0] sm:$0xff]
        %v704 = vld [vmem:[%s230 + $0xac8] sm:$0xff]
        %v705 = vld [vmem:[%s230 + $0xad0] sm:$0xff]
        %v706 = vld [vmem:[%s230 + $0xad8] sm:$0xff]
        %v707 = vld [vmem:[%s230 + $0xae0] sm:$0xff]
        %v708 = vld [vmem:[%s230 + $0xae8] sm:$0xff]
        %v709 = vld [vmem:[%s230 + $0xaf0] sm:$0xff]
        %v710 = vld [vmem:[%s230 + $0xaf8] sm:$0xff]
        %v711 = vld [vmem:[%s230 + $0xb00] sm:$0xff]
        %v712 = vld [vmem:[%s230 + $0xb08] sm:$0xff]
        %v713 = vld [vmem:[%s230 + $0xb10] sm:$0xff]
        %v714 = vld [vmem:[%s230 + $0xb18] sm:$0xff]
        %v715 = vld [vmem:[%s230 + $0xb20] sm:$0xff]
        %v716 = vld [vmem:[%s230 + $0xb28] sm:$0xff]
        %v717 = vld [vmem:[%s230 + $0xb30] sm:$0xff]
        %v718 = vld [vmem:[%s230 + $0xb38] sm:$0xff]
        %v719 = vld [vmem:[%s230 + $0xb40] sm:$0xff]
        %v720 = vld [vmem:[%s230 + $0xb48] sm:$0xff]
        %v721 = vld [vmem:[%s230 + $0xb50] sm:$0xff]
        %v722 = vld [vmem:[%s230 + $0xb58] sm:$0xff]
        %v723 = vld [vmem:[%s230 + $0xb60] sm:$0xff]
        %v724 = vld [vmem:[%s230 + $0xb68] sm:$0xff]
        %v725 = vld [vmem:[%s230 + $0xb70] sm:$0xff]
        %v726 = vld [vmem:[%s230 + $0xb78] sm:$0xff]
        %v727 = vld [vmem:[%s230 + $0xb80] sm:$0xff]
        %v728 = vld [vmem:[%s230 + $0xb88] sm:$0xff]
        %v729 = vld [vmem:[%s230 + $0xb90] sm:$0xff]
        %v730 = vld [vmem:[%s230 + $0xb98] sm:$0xff]
        %v731 = vld [vmem:[%s230 + $0xba0] sm:$0xff]
        %v732 = vld [vmem:[%s230 + $0xba8] sm:$0xff]
        %v733 = vld [vmem:[%s230 + $0xbb0] sm:$0xff]
        %v734 = vld [vmem:[%s230 + $0xbb8] sm:$0xff]
        %v735 = vld [vmem:[%s230 + $0xbc0] sm:$0xff]
        %v736 = vld [vmem:[%s230 + $0xbc8] sm:$0xff]
        %v737 = vld [vmem:[%s230 + $0xbd0] sm:$0xff]
        %v738 = vld [vmem:[%s230 + $0xbd8] sm:$0xff]
        %v739 = vld [vmem:[%s230 + $0xbe0] sm:$0xff]
        %v740 = vld [vmem:[%s230 + $0xbe8] sm:$0xff]
        %v741 = vld [vmem:[%s230 + $0xbf0] sm:$0xff]
        %v742 = vld [vmem:[%s230 + $0xbf8] sm:$0xff]
        %v1127 = vunpack.c.l.b16 %v359
        %v1128 = vunpack.c.h.b16 %v359
        %v1129 = vunpack.c.l.b16 %v360
        %v1130 = vunpack.c.h.b16 %v360
        %v1131 = vunpack.c.l.b16 %v361
        %v1132 = vunpack.c.h.b16 %v361
        %v1133 = vunpack.c.l.b16 %v362
        %v1134 = vunpack.c.h.b16 %v362
        %v1135 = vunpack.c.l.b16 %v363
        %v1136 = vunpack.c.h.b16 %v363
        %v1137 = vunpack.c.l.b16 %v364
        %v1138 = vunpack.c.h.b16 %v364
        %v1139 = vunpack.c.l.b16 %v365
        %v1140 = vunpack.c.h.b16 %v365
        %v1141 = vunpack.c.l.b16 %v366
        %v1142 = vunpack.c.h.b16 %v366
        %v1143 = vunpack.c.l.b16 %v367
        %v1144 = vunpack.c.h.b16 %v367
        %v1145 = vunpack.c.l.b16 %v368
        %v1146 = vunpack.c.h.b16 %v368
        %v1147 = vunpack.c.l.b16 %v369
        %v1148 = vunpack.c.h.b16 %v369
        %v1149 = vunpack.c.l.b16 %v370
        %v1150 = vunpack.c.h.b16 %v370
        %v1151 = vunpack.c.l.b16 %v371
        %v1152 = vunpack.c.h.b16 %v371
        %v1153 = vunpack.c.l.b16 %v372
        %v1154 = vunpack.c.h.b16 %v372
        %v1155 = vunpack.c.l.b16 %v373
        %v1156 = vunpack.c.h.b16 %v373
        %v1157 = vunpack.c.l.b16 %v374
        %v1158 = vunpack.c.h.b16 %v374
        %v1159 = vunpack.c.l.b16 %v375
        %v1160 = vunpack.c.h.b16 %v375
        %v1161 = vunpack.c.l.b16 %v376
        %v1162 = vunpack.c.h.b16 %v376
        %v1163 = vunpack.c.l.b16 %v377
        %v1164 = vunpack.c.h.b16 %v377
        %v1165 = vunpack.c.l.b16 %v378
        %v1166 = vunpack.c.h.b16 %v378
        %v1167 = vunpack.c.l.b16 %v379
        %v1168 = vunpack.c.h.b16 %v379
        %v1169 = vunpack.c.l.b16 %v380
        %v1170 = vunpack.c.h.b16 %v380
        %v1171 = vunpack.c.l.b16 %v381
        %v1172 = vunpack.c.h.b16 %v381
        %v1173 = vunpack.c.l.b16 %v382
        %v1174 = vunpack.c.h.b16 %v382
        %v1175 = vunpack.c.l.b16 %v383
        %v1176 = vunpack.c.h.b16 %v383
        %v1177 = vunpack.c.l.b16 %v384
        %v1178 = vunpack.c.h.b16 %v384
        %v1179 = vunpack.c.l.b16 %v385
        %v1180 = vunpack.c.h.b16 %v385
        %v1181 = vunpack.c.l.b16 %v386
        %v1182 = vunpack.c.h.b16 %v386
        %v1183 = vunpack.c.l.b16 %v387
        %v1184 = vunpack.c.h.b16 %v387
        %v1185 = vunpack.c.l.b16 %v388
        %v1186 = vunpack.c.h.b16 %v388
        %v1187 = vunpack.c.l.b16 %v389
        %v1188 = vunpack.c.h.b16 %v389
        %v1189 = vunpack.c.l.b16 %v390
        %v1190 = vunpack.c.h.b16 %v390
        %v1191 = vunpack.c.l.b16 %v391
        %v1192 = vunpack.c.h.b16 %v391
        %v1193 = vunpack.c.l.b16 %v392
        %v1194 = vunpack.c.h.b16 %v392
        %v1195 = vunpack.c.l.b16 %v393
        %v1196 = vunpack.c.h.b16 %v393
        %v1197 = vunpack.c.l.b16 %v394
        %v1198 = vunpack.c.h.b16 %v394
        %v1199 = vunpack.c.l.b16 %v395
        %v1200 = vunpack.c.h.b16 %v395
        %v1201 = vunpack.c.l.b16 %v396
        %v1202 = vunpack.c.h.b16 %v396
        %v1203 = vunpack.c.l.b16 %v397
        %v1204 = vunpack.c.h.b16 %v397
        %v1205 = vunpack.c.l.b16 %v398
        %v1206 = vunpack.c.h.b16 %v398
        %v1207 = vunpack.c.l.b16 %v399
        %v1208 = vunpack.c.h.b16 %v399
        %v1209 = vunpack.c.l.b16 %v400
        %v1210 = vunpack.c.h.b16 %v400
        %v1211 = vunpack.c.l.b16 %v401
        %v1212 = vunpack.c.h.b16 %v401
        %v1213 = vunpack.c.l.b16 %v402
        %v1214 = vunpack.c.h.b16 %v402
        %v1215 = vunpack.c.l.b16 %v403
        %v1216 = vunpack.c.h.b16 %v403
        %v1217 = vunpack.c.l.b16 %v404
        %v1218 = vunpack.c.h.b16 %v404
        %v1219 = vunpack.c.l.b16 %v405
        %v1220 = vunpack.c.h.b16 %v405
        %v1221 = vunpack.c.l.b16 %v406
        %v1222 = vunpack.c.h.b16 %v406
        %v1223 = vunpack.c.l.b16 %v407
        %v1224 = vunpack.c.h.b16 %v407
        %v1225 = vunpack.c.l.b16 %v408
        %v1226 = vunpack.c.h.b16 %v408
        %v1227 = vunpack.c.l.b16 %v409
        %v1228 = vunpack.c.h.b16 %v409
        %v1229 = vunpack.c.l.b16 %v410
        %v1230 = vunpack.c.h.b16 %v410
        %v1231 = vunpack.c.l.b16 %v411
        %v1232 = vunpack.c.h.b16 %v411
        %v1233 = vunpack.c.l.b16 %v412
        %v1234 = vunpack.c.h.b16 %v412
        %v1235 = vunpack.c.l.b16 %v413
        %v1236 = vunpack.c.h.b16 %v413
        %v1237 = vunpack.c.l.b16 %v414
        %v1238 = vunpack.c.h.b16 %v414
        %v1239 = vunpack.c.l.b16 %v415
        %v1240 = vunpack.c.h.b16 %v415
        %v1241 = vunpack.c.l.b16 %v416
        %v1242 = vunpack.c.h.b16 %v416
        %v1243 = vunpack.c.l.b16 %v417
        %v1244 = vunpack.c.h.b16 %v417
        %v1245 = vunpack.c.l.b16 %v418
        %v1246 = vunpack.c.h.b16 %v418
        %v1247 = vunpack.c.l.b16 %v419
        %v1248 = vunpack.c.h.b16 %v419
        %v1249 = vunpack.c.l.b16 %v420
        %v1250 = vunpack.c.h.b16 %v420
        %v1251 = vunpack.c.l.b16 %v421
        %v1252 = vunpack.c.h.b16 %v421
        %v1253 = vunpack.c.l.b16 %v422
        %v1254 = vunpack.c.h.b16 %v422
        %v1255 = vunpack.c.l.b16 %v423
        %v1256 = vunpack.c.h.b16 %v423
        %v1257 = vunpack.c.l.b16 %v424
        %v1258 = vunpack.c.h.b16 %v424
        %v1259 = vunpack.c.l.b16 %v425
        %v1260 = vunpack.c.h.b16 %v425
        %v1261 = vunpack.c.l.b16 %v426
        %v1262 = vunpack.c.h.b16 %v426
        %v1263 = vunpack.c.l.b16 %v427
        %v1264 = vunpack.c.h.b16 %v427
        %v1265 = vunpack.c.l.b16 %v428
        %v1266 = vunpack.c.h.b16 %v428
        %v1267 = vunpack.c.l.b16 %v429
        %v1268 = vunpack.c.h.b16 %v429
        %v1269 = vunpack.c.l.b16 %v430
        %v1270 = vunpack.c.h.b16 %v430
        %v1271 = vunpack.c.l.b16 %v431
        %v1272 = vunpack.c.h.b16 %v431
        %v1273 = vunpack.c.l.b16 %v432
        %v1274 = vunpack.c.h.b16 %v432
        %v1275 = vunpack.c.l.b16 %v433
        %v1276 = vunpack.c.h.b16 %v433
        %v1277 = vunpack.c.l.b16 %v434
        %v1278 = vunpack.c.h.b16 %v434
        %v1279 = vunpack.c.l.b16 %v435
        %v1280 = vunpack.c.h.b16 %v435
        %v1281 = vunpack.c.l.b16 %v436
        %v1282 = vunpack.c.h.b16 %v436
        %v1283 = vunpack.c.l.b16 %v437
        %v1284 = vunpack.c.h.b16 %v437
        %v1285 = vunpack.c.l.b16 %v438
        %v1286 = vunpack.c.h.b16 %v438
        %v1287 = vunpack.c.l.b16 %v439
        %v1288 = vunpack.c.h.b16 %v439
        %v1289 = vunpack.c.l.b16 %v440
        %v1290 = vunpack.c.h.b16 %v440
        %v1291 = vunpack.c.l.b16 %v441
        %v1292 = vunpack.c.h.b16 %v441
        %v1293 = vunpack.c.l.b16 %v442
        %v1294 = vunpack.c.h.b16 %v442
        %v1295 = vunpack.c.l.b16 %v443
        %v1296 = vunpack.c.h.b16 %v443
        %v1297 = vunpack.c.l.b16 %v444
        %v1298 = vunpack.c.h.b16 %v444
        %v1299 = vunpack.c.l.b16 %v445
        %v1300 = vunpack.c.h.b16 %v445
        %v1301 = vunpack.c.l.b16 %v446
        %v1302 = vunpack.c.h.b16 %v446
        %v1303 = vunpack.c.l.b16 %v447
        %v1304 = vunpack.c.h.b16 %v447
        %v1305 = vunpack.c.l.b16 %v448
        %v1306 = vunpack.c.h.b16 %v448
        %v1307 = vunpack.c.l.b16 %v449
        %v1308 = vunpack.c.h.b16 %v449
        %v1309 = vunpack.c.l.b16 %v450
        %v1310 = vunpack.c.h.b16 %v450
        %v1311 = vunpack.c.l.b16 %v451
        %v1312 = vunpack.c.h.b16 %v451
        %v1313 = vunpack.c.l.b16 %v452
        %v1314 = vunpack.c.h.b16 %v452
        %v1315 = vunpack.c.l.b16 %v453
        %v1316 = vunpack.c.h.b16 %v453
        %v1317 = vunpack.c.l.b16 %v454
        %v1318 = vunpack.c.h.b16 %v454
        %v1319 = vunpack.c.l.b16 %v455
        %v1320 = vunpack.c.h.b16 %v455
        %v1321 = vunpack.c.l.b16 %v456
        %v1322 = vunpack.c.h.b16 %v456
        %v1323 = vunpack.c.l.b16 %v457
        %v1324 = vunpack.c.h.b16 %v457
        %v1325 = vunpack.c.l.b16 %v458
        %v1326 = vunpack.c.h.b16 %v458
        %v1327 = vunpack.c.l.b16 %v459
        %v1328 = vunpack.c.h.b16 %v459
        %v1329 = vunpack.c.l.b16 %v460
        %v1330 = vunpack.c.h.b16 %v460
        %v1331 = vunpack.c.l.b16 %v461
        %v1332 = vunpack.c.h.b16 %v461
        %v1333 = vunpack.c.l.b16 %v462
        %v1334 = vunpack.c.h.b16 %v462
        %v1335 = vunpack.c.l.b16 %v463
        %v1336 = vunpack.c.h.b16 %v463
        %v1337 = vunpack.c.l.b16 %v464
        %v1338 = vunpack.c.h.b16 %v464
        %v1339 = vunpack.c.l.b16 %v465
        %v1340 = vunpack.c.h.b16 %v465
        %v1341 = vunpack.c.l.b16 %v466
        %v1342 = vunpack.c.h.b16 %v466
        %v1343 = vunpack.c.l.b16 %v467
        %v1344 = vunpack.c.h.b16 %v467
        %v1345 = vunpack.c.l.b16 %v468
        %v1346 = vunpack.c.h.b16 %v468
        %v1347 = vunpack.c.l.b16 %v469
        %v1348 = vunpack.c.h.b16 %v469
        %v1349 = vunpack.c.l.b16 %v470
        %v1350 = vunpack.c.h.b16 %v470
        %v1351 = vunpack.c.l.b16 %v471
        %v1352 = vunpack.c.h.b16 %v471
        %v1353 = vunpack.c.l.b16 %v472
        %v1354 = vunpack.c.h.b16 %v472
        %v1355 = vunpack.c.l.b16 %v473
        %v1356 = vunpack.c.h.b16 %v473
        %v1357 = vunpack.c.l.b16 %v474
        %v1358 = vunpack.c.h.b16 %v474
        %v1359 = vunpack.c.l.b16 %v475
        %v1360 = vunpack.c.h.b16 %v475
        %v1361 = vunpack.c.l.b16 %v476
        %v1362 = vunpack.c.h.b16 %v476
        %v1363 = vunpack.c.l.b16 %v477
        %v1364 = vunpack.c.h.b16 %v477
        %v1365 = vunpack.c.l.b16 %v478
        %v1366 = vunpack.c.h.b16 %v478
        %v1367 = vunpack.c.l.b16 %v479
        %v1368 = vunpack.c.h.b16 %v479
        %v1369 = vunpack.c.l.b16 %v480
        %v1370 = vunpack.c.h.b16 %v480
        %v1371 = vunpack.c.l.b16 %v481
        %v1372 = vunpack.c.h.b16 %v481
        %v1373 = vunpack.c.l.b16 %v482
        %v1374 = vunpack.c.h.b16 %v482
        %v1375 = vunpack.c.l.b16 %v483
        %v1376 = vunpack.c.h.b16 %v483
        %v1377 = vunpack.c.l.b16 %v484
        %v1378 = vunpack.c.h.b16 %v484
        %v1379 = vunpack.c.l.b16 %v485
        %v1380 = vunpack.c.h.b16 %v485
        %v1381 = vunpack.c.l.b16 %v486
        %v1382 = vunpack.c.h.b16 %v486
        %v1383 = vunpack.c.l.b16 %v487
        %v1384 = vunpack.c.h.b16 %v487
        %v1385 = vunpack.c.l.b16 %v488
        %v1386 = vunpack.c.h.b16 %v488
        %v1387 = vunpack.c.l.b16 %v489
        %v1388 = vunpack.c.h.b16 %v489
        %v1389 = vunpack.c.l.b16 %v490
        %v1390 = vunpack.c.h.b16 %v490
        %v1391 = vunpack.c.l.b16 %v491
        %v1392 = vunpack.c.h.b16 %v491
        %v1393 = vunpack.c.l.b16 %v492
        %v1394 = vunpack.c.h.b16 %v492
        %v1395 = vunpack.c.l.b16 %v493
        %v1396 = vunpack.c.h.b16 %v493
        %v1397 = vunpack.c.l.b16 %v494
        %v1398 = vunpack.c.h.b16 %v494
        %v1399 = vunpack.c.l.b16 %v495
        %v1400 = vunpack.c.h.b16 %v495
        %v1401 = vunpack.c.l.b16 %v496
        %v1402 = vunpack.c.h.b16 %v496
        %v1403 = vunpack.c.l.b16 %v497
        %v1404 = vunpack.c.h.b16 %v497
        %v1405 = vunpack.c.l.b16 %v498
        %v1406 = vunpack.c.h.b16 %v498
        %v1407 = vunpack.c.l.b16 %v499
        %v1408 = vunpack.c.h.b16 %v499
        %v1409 = vunpack.c.l.b16 %v500
        %v1410 = vunpack.c.h.b16 %v500
        %v1411 = vunpack.c.l.b16 %v501
        %v1412 = vunpack.c.h.b16 %v501
        %v1413 = vunpack.c.l.b16 %v502
        %v1414 = vunpack.c.h.b16 %v502
        %v1415 = vunpack.c.l.b16 %v503
        %v1416 = vunpack.c.h.b16 %v503
        %v1417 = vunpack.c.l.b16 %v504
        %v1418 = vunpack.c.h.b16 %v504
        %v1419 = vunpack.c.l.b16 %v505
        %v1420 = vunpack.c.h.b16 %v505
        %v1421 = vunpack.c.l.b16 %v506
        %v1422 = vunpack.c.h.b16 %v506
        %v1423 = vunpack.c.l.b16 %v507
        %v1424 = vunpack.c.h.b16 %v507
        %v1425 = vunpack.c.l.b16 %v508
        %v1426 = vunpack.c.h.b16 %v508
        %v1427 = vunpack.c.l.b16 %v509
        %v1428 = vunpack.c.h.b16 %v509
        %v1429 = vunpack.c.l.b16 %v510
        %v1430 = vunpack.c.h.b16 %v510
        %v1431 = vunpack.c.l.b16 %v511
        %v1432 = vunpack.c.h.b16 %v511
        %v1433 = vunpack.c.l.b16 %v512
        %v1434 = vunpack.c.h.b16 %v512
        %v1435 = vunpack.c.l.b16 %v513
        %v1436 = vunpack.c.h.b16 %v513
        %v1437 = vunpack.c.l.b16 %v514
        %v1438 = vunpack.c.h.b16 %v514
        %v1439 = vunpack.c.l.b16 %v515
        %v1440 = vunpack.c.h.b16 %v515
        %v1441 = vunpack.c.l.b16 %v516
        %v1442 = vunpack.c.h.b16 %v516
        %v1443 = vunpack.c.l.b16 %v517
        %v1444 = vunpack.c.h.b16 %v517
        %v1445 = vunpack.c.l.b16 %v518
        %v1446 = vunpack.c.h.b16 %v518
        %v1447 = vunpack.c.l.b16 %v519
        %v1448 = vunpack.c.h.b16 %v519
        %v1449 = vunpack.c.l.b16 %v520
        %v1450 = vunpack.c.h.b16 %v520
        %v1451 = vunpack.c.l.b16 %v521
        %v1452 = vunpack.c.h.b16 %v521
        %v1453 = vunpack.c.l.b16 %v522
        %v1454 = vunpack.c.h.b16 %v522
        %v1455 = vunpack.c.l.b16 %v523
        %v1456 = vunpack.c.h.b16 %v523
        %v1457 = vunpack.c.l.b16 %v524
        %v1458 = vunpack.c.h.b16 %v524
        %v1459 = vunpack.c.l.b16 %v525
        %v1460 = vunpack.c.h.b16 %v525
        %v1461 = vunpack.c.l.b16 %v526
        %v1462 = vunpack.c.h.b16 %v526
        %v1463 = vunpack.c.l.b16 %v527
        %v1464 = vunpack.c.h.b16 %v527
        %v1465 = vunpack.c.l.b16 %v528
        %v1466 = vunpack.c.h.b16 %v528
        %v1467 = vunpack.c.l.b16 %v529
        %v1468 = vunpack.c.h.b16 %v529
        %v1469 = vunpack.c.l.b16 %v530
        %v1470 = vunpack.c.h.b16 %v530
        %v1471 = vunpack.c.l.b16 %v531
        %v1472 = vunpack.c.h.b16 %v531
        %v1473 = vunpack.c.l.b16 %v532
        %v1474 = vunpack.c.h.b16 %v532
        %v1475 = vunpack.c.l.b16 %v533
        %v1476 = vunpack.c.h.b16 %v533
        %v1477 = vunpack.c.l.b16 %v534
        %v1478 = vunpack.c.h.b16 %v534
        %v1479 = vunpack.c.l.b16 %v535
        %v1480 = vunpack.c.h.b16 %v535
        %v1481 = vunpack.c.l.b16 %v536
        %v1482 = vunpack.c.h.b16 %v536
        %v1483 = vunpack.c.l.b16 %v537
        %v1484 = vunpack.c.h.b16 %v537
        %v1485 = vunpack.c.l.b16 %v538
        %v1486 = vunpack.c.h.b16 %v538
        %v1487 = vunpack.c.l.b16 %v539
        %v1488 = vunpack.c.h.b16 %v539
        %v1489 = vunpack.c.l.b16 %v540
        %v1490 = vunpack.c.h.b16 %v540
        %v1491 = vunpack.c.l.b16 %v541
        %v1492 = vunpack.c.h.b16 %v541
        %v1493 = vunpack.c.l.b16 %v542
        %v1494 = vunpack.c.h.b16 %v542
        %v1495 = vunpack.c.l.b16 %v543
        %v1496 = vunpack.c.h.b16 %v543
        %v1497 = vunpack.c.l.b16 %v544
        %v1498 = vunpack.c.h.b16 %v544
        %v1499 = vunpack.c.l.b16 %v545
        %v1500 = vunpack.c.h.b16 %v545
        %v1501 = vunpack.c.l.b16 %v546
        %v1502 = vunpack.c.h.b16 %v546
        %v1503 = vunpack.c.l.b16 %v547
        %v1504 = vunpack.c.h.b16 %v547
        %v1505 = vunpack.c.l.b16 %v548
        %v1506 = vunpack.c.h.b16 %v548
        %v1507 = vunpack.c.l.b16 %v549
        %v1508 = vunpack.c.h.b16 %v549
        %v1509 = vunpack.c.l.b16 %v550
        %v1510 = vunpack.c.h.b16 %v550
        %v1511 = vunpack.c.l.b16 %v551
        %v1512 = vunpack.c.h.b16 %v551
        %v1513 = vunpack.c.l.b16 %v552
        %v1514 = vunpack.c.h.b16 %v552
        %v1515 = vunpack.c.l.b16 %v553
        %v1516 = vunpack.c.h.b16 %v553
        %v1517 = vunpack.c.l.b16 %v554
        %v1518 = vunpack.c.h.b16 %v554
        %v1519 = vunpack.c.l.b16 %v555
        %v1520 = vunpack.c.h.b16 %v555
        %v1521 = vunpack.c.l.b16 %v556
        %v1522 = vunpack.c.h.b16 %v556
        %v1523 = vunpack.c.l.b16 %v557
        %v1524 = vunpack.c.h.b16 %v557
        %v1525 = vunpack.c.l.b16 %v558
        %v1526 = vunpack.c.h.b16 %v558
        %v1527 = vunpack.c.l.b16 %v559
        %v1528 = vunpack.c.h.b16 %v559
        %v1529 = vunpack.c.l.b16 %v560
        %v1530 = vunpack.c.h.b16 %v560
        %v1531 = vunpack.c.l.b16 %v561
        %v1532 = vunpack.c.h.b16 %v561
        %v1533 = vunpack.c.l.b16 %v562
        %v1534 = vunpack.c.h.b16 %v562
        %v1535 = vunpack.c.l.b16 %v563
        %v1536 = vunpack.c.h.b16 %v563
        %v1537 = vunpack.c.l.b16 %v564
        %v1538 = vunpack.c.h.b16 %v564
        %v1539 = vunpack.c.l.b16 %v565
        %v1540 = vunpack.c.h.b16 %v565
        %v1541 = vunpack.c.l.b16 %v566
        %v1542 = vunpack.c.h.b16 %v566
        %v1543 = vunpack.c.l.b16 %v567
        %v1544 = vunpack.c.h.b16 %v567
        %v1545 = vunpack.c.l.b16 %v568
        %v1546 = vunpack.c.h.b16 %v568
        %v1547 = vunpack.c.l.b16 %v569
        %v1548 = vunpack.c.h.b16 %v569
        %v1549 = vunpack.c.l.b16 %v570
        %v1550 = vunpack.c.h.b16 %v570
        %v1551 = vunpack.c.l.b16 %v571
        %v1552 = vunpack.c.h.b16 %v571
        %v1553 = vunpack.c.l.b16 %v572
        %v1554 = vunpack.c.h.b16 %v572
        %v1555 = vunpack.c.l.b16 %v573
        %v1556 = vunpack.c.h.b16 %v573
        %v1557 = vunpack.c.l.b16 %v574
        %v1558 = vunpack.c.h.b16 %v574
        %v1559 = vunpack.c.l.b16 %v575
        %v1560 = vunpack.c.h.b16 %v575
        %v1561 = vunpack.c.l.b16 %v576
        %v1562 = vunpack.c.h.b16 %v576
        %v1563 = vunpack.c.l.b16 %v577
        %v1564 = vunpack.c.h.b16 %v577
        %v1565 = vunpack.c.l.b16 %v578
        %v1566 = vunpack.c.h.b16 %v578
        %v1567 = vunpack.c.l.b16 %v579
        %v1568 = vunpack.c.h.b16 %v579
        %v1569 = vunpack.c.l.b16 %v580
        %v1570 = vunpack.c.h.b16 %v580
        %v1571 = vunpack.c.l.b16 %v581
        %v1572 = vunpack.c.h.b16 %v581
        %v1573 = vunpack.c.l.b16 %v582
        %v1574 = vunpack.c.h.b16 %v582
        %v1575 = vunpack.c.l.b16 %v583
        %v1576 = vunpack.c.h.b16 %v583
        %v1577 = vunpack.c.l.b16 %v584
        %v1578 = vunpack.c.h.b16 %v584
        %v1579 = vunpack.c.l.b16 %v585
        %v1580 = vunpack.c.h.b16 %v585
        %v1581 = vunpack.c.l.b16 %v586
        %v1582 = vunpack.c.h.b16 %v586
        %v1583 = vunpack.c.l.b16 %v587
        %v1584 = vunpack.c.h.b16 %v587
        %v1585 = vunpack.c.l.b16 %v588
        %v1586 = vunpack.c.h.b16 %v588
        %v1587 = vunpack.c.l.b16 %v589
        %v1588 = vunpack.c.h.b16 %v589
        %v1589 = vunpack.c.l.b16 %v590
        %v1590 = vunpack.c.h.b16 %v590
        %v1591 = vunpack.c.l.b16 %v591
        %v1592 = vunpack.c.h.b16 %v591
        %v1593 = vunpack.c.l.b16 %v592
        %v1594 = vunpack.c.h.b16 %v592
        %v1595 = vunpack.c.l.b16 %v593
        %v1596 = vunpack.c.h.b16 %v593
        %v1597 = vunpack.c.l.b16 %v594
        %v1598 = vunpack.c.h.b16 %v594
        %v1599 = vunpack.c.l.b16 %v595
        %v1600 = vunpack.c.h.b16 %v595
        %v1601 = vunpack.c.l.b16 %v596
        %v1602 = vunpack.c.h.b16 %v596
        %v1603 = vunpack.c.l.b16 %v597
        %v1604 = vunpack.c.h.b16 %v597
        %v1605 = vunpack.c.l.b16 %v598
        %v1606 = vunpack.c.h.b16 %v598
        %v1607 = vunpack.c.l.b16 %v599
        %v1608 = vunpack.c.h.b16 %v599
        %v1609 = vunpack.c.l.b16 %v600
        %v1610 = vunpack.c.h.b16 %v600
        %v1611 = vunpack.c.l.b16 %v601
        %v1612 = vunpack.c.h.b16 %v601
        %v1613 = vunpack.c.l.b16 %v602
        %v1614 = vunpack.c.h.b16 %v602
        %v1615 = vunpack.c.l.b16 %v603
        %v1616 = vunpack.c.h.b16 %v603
        %v1617 = vunpack.c.l.b16 %v604
        %v1618 = vunpack.c.h.b16 %v604
        %v1619 = vunpack.c.l.b16 %v605
        %v1620 = vunpack.c.h.b16 %v605
        %v1621 = vunpack.c.l.b16 %v606
        %v1622 = vunpack.c.h.b16 %v606
        %v1623 = vunpack.c.l.b16 %v607
        %v1624 = vunpack.c.h.b16 %v607
        %v1625 = vunpack.c.l.b16 %v608
        %v1626 = vunpack.c.h.b16 %v608
        %v1627 = vunpack.c.l.b16 %v609
        %v1628 = vunpack.c.h.b16 %v609
        %v1629 = vunpack.c.l.b16 %v610
        %v1630 = vunpack.c.h.b16 %v610
        %v1631 = vunpack.c.l.b16 %v611
        %v1632 = vunpack.c.h.b16 %v611
        %v1633 = vunpack.c.l.b16 %v612
        %v1634 = vunpack.c.h.b16 %v612
        %v1635 = vunpack.c.l.b16 %v613
        %v1636 = vunpack.c.h.b16 %v613
        %v1637 = vunpack.c.l.b16 %v614
        %v1638 = vunpack.c.h.b16 %v614
        %v1639 = vunpack.c.l.b16 %v615
        %v1640 = vunpack.c.h.b16 %v615
        %v1641 = vunpack.c.l.b16 %v616
        %v1642 = vunpack.c.h.b16 %v616
        %v1643 = vunpack.c.l.b16 %v617
        %v1644 = vunpack.c.h.b16 %v617
        %v1645 = vunpack.c.l.b16 %v618
        %v1646 = vunpack.c.h.b16 %v618
        %v1647 = vunpack.c.l.b16 %v619
        %v1648 = vunpack.c.h.b16 %v619
        %v1649 = vunpack.c.l.b16 %v620
        %v1650 = vunpack.c.h.b16 %v620
        %v1651 = vunpack.c.l.b16 %v621
        %v1652 = vunpack.c.h.b16 %v621
        %v1653 = vunpack.c.l.b16 %v622
        %v1654 = vunpack.c.h.b16 %v622
        %v1655 = vunpack.c.l.b16 %v623
        %v1656 = vunpack.c.h.b16 %v623
        %v1657 = vunpack.c.l.b16 %v624
        %v1658 = vunpack.c.h.b16 %v624
        %v1659 = vunpack.c.l.b16 %v625
        %v1660 = vunpack.c.h.b16 %v625
        %v1661 = vunpack.c.l.b16 %v626
        %v1662 = vunpack.c.h.b16 %v626
        %v1663 = vunpack.c.l.b16 %v627
        %v1664 = vunpack.c.h.b16 %v627
        %v1665 = vunpack.c.l.b16 %v628
        %v1666 = vunpack.c.h.b16 %v628
        %v1667 = vunpack.c.l.b16 %v629
        %v1668 = vunpack.c.h.b16 %v629
        %v1669 = vunpack.c.l.b16 %v630
        %v1670 = vunpack.c.h.b16 %v630
        %v1671 = vunpack.c.l.b16 %v631
        %v1672 = vunpack.c.h.b16 %v631
        %v1673 = vunpack.c.l.b16 %v632
        %v1674 = vunpack.c.h.b16 %v632
        %v1675 = vunpack.c.l.b16 %v633
        %v1676 = vunpack.c.h.b16 %v633
        %v1677 = vunpack.c.l.b16 %v634
        %v1678 = vunpack.c.h.b16 %v634
        %v1679 = vunpack.c.l.b16 %v635
        %v1680 = vunpack.c.h.b16 %v635
        %v1681 = vunpack.c.l.b16 %v636
        %v1682 = vunpack.c.h.b16 %v636
        %v1683 = vunpack.c.l.b16 %v637
        %v1684 = vunpack.c.h.b16 %v637
        %v1685 = vunpack.c.l.b16 %v638
        %v1686 = vunpack.c.h.b16 %v638
        %v1687 = vunpack.c.l.b16 %v639
        %v1688 = vunpack.c.h.b16 %v639
        %v1689 = vunpack.c.l.b16 %v640
        %v1690 = vunpack.c.h.b16 %v640
        %v1691 = vunpack.c.l.b16 %v641
        %v1692 = vunpack.c.h.b16 %v641
        %v1693 = vunpack.c.l.b16 %v642
        %v1694 = vunpack.c.h.b16 %v642
        %v1695 = vunpack.c.l.b16 %v643
        %v1696 = vunpack.c.h.b16 %v643
        %v1697 = vunpack.c.l.b16 %v644
        %v1698 = vunpack.c.h.b16 %v644
        %v1699 = vunpack.c.l.b16 %v645
        %v1700 = vunpack.c.h.b16 %v645
        %v1701 = vunpack.c.l.b16 %v646
        %v1702 = vunpack.c.h.b16 %v646
        %v1703 = vunpack.c.l.b16 %v647
        %v1704 = vunpack.c.h.b16 %v647
        %v1705 = vunpack.c.l.b16 %v648
        %v1706 = vunpack.c.h.b16 %v648
        %v1707 = vunpack.c.l.b16 %v649
        %v1708 = vunpack.c.h.b16 %v649
        %v1709 = vunpack.c.l.b16 %v650
        %v1710 = vunpack.c.h.b16 %v650
        %v1711 = vunpack.c.l.b16 %v651
        %v1712 = vunpack.c.h.b16 %v651
        %v1713 = vunpack.c.l.b16 %v652
        %v1714 = vunpack.c.h.b16 %v652
        %v1715 = vunpack.c.l.b16 %v653
        %v1716 = vunpack.c.h.b16 %v653
        %v1717 = vunpack.c.l.b16 %v654
        %v1718 = vunpack.c.h.b16 %v654
        %v1719 = vunpack.c.l.b16 %v655
        %v1720 = vunpack.c.h.b16 %v655
        %v1721 = vunpack.c.l.b16 %v656
        %v1722 = vunpack.c.h.b16 %v656
        %v1723 = vunpack.c.l.b16 %v657
        %v1724 = vunpack.c.h.b16 %v657
        %v1725 = vunpack.c.l.b16 %v658
        %v1726 = vunpack.c.h.b16 %v658
        %v1727 = vunpack.c.l.b16 %v659
        %v1728 = vunpack.c.h.b16 %v659
        %v1729 = vunpack.c.l.b16 %v660
        %v1730 = vunpack.c.h.b16 %v660
        %v1731 = vunpack.c.l.b16 %v661
        %v1732 = vunpack.c.h.b16 %v661
        %v1733 = vunpack.c.l.b16 %v662
        %v1734 = vunpack.c.h.b16 %v662
        %v1735 = vunpack.c.l.b16 %v663
        %v1736 = vunpack.c.h.b16 %v663
        %v1737 = vunpack.c.l.b16 %v664
        %v1738 = vunpack.c.h.b16 %v664
        %v1739 = vunpack.c.l.b16 %v665
        %v1740 = vunpack.c.h.b16 %v665
        %v1741 = vunpack.c.l.b16 %v666
        %v1742 = vunpack.c.h.b16 %v666
        %v1743 = vunpack.c.l.b16 %v667
        %v1744 = vunpack.c.h.b16 %v667
        %v1745 = vunpack.c.l.b16 %v668
        %v1746 = vunpack.c.h.b16 %v668
        %v1747 = vunpack.c.l.b16 %v669
        %v1748 = vunpack.c.h.b16 %v669
        %v1749 = vunpack.c.l.b16 %v670
        %v1750 = vunpack.c.h.b16 %v670
        %v1751 = vunpack.c.l.b16 %v671
        %v1752 = vunpack.c.h.b16 %v671
        %v1753 = vunpack.c.l.b16 %v672
        %v1754 = vunpack.c.h.b16 %v672
        %v1755 = vunpack.c.l.b16 %v673
        %v1756 = vunpack.c.h.b16 %v673
        %v1757 = vunpack.c.l.b16 %v674
        %v1758 = vunpack.c.h.b16 %v674
        %v1759 = vunpack.c.l.b16 %v675
        %v1760 = vunpack.c.h.b16 %v675
        %v1761 = vunpack.c.l.b16 %v676
        %v1762 = vunpack.c.h.b16 %v676
        %v1763 = vunpack.c.l.b16 %v677
        %v1764 = vunpack.c.h.b16 %v677
        %v1765 = vunpack.c.l.b16 %v678
        %v1766 = vunpack.c.h.b16 %v678
        %v1767 = vunpack.c.l.b16 %v679
        %v1768 = vunpack.c.h.b16 %v679
        %v1769 = vunpack.c.l.b16 %v680
        %v1770 = vunpack.c.h.b16 %v680
        %v1771 = vunpack.c.l.b16 %v681
        %v1772 = vunpack.c.h.b16 %v681
        %v1773 = vunpack.c.l.b16 %v682
        %v1774 = vunpack.c.h.b16 %v682
        %v1775 = vunpack.c.l.b16 %v683
        %v1776 = vunpack.c.h.b16 %v683
        %v1777 = vunpack.c.l.b16 %v684
        %v1778 = vunpack.c.h.b16 %v684
        %v1779 = vunpack.c.l.b16 %v685
        %v1780 = vunpack.c.h.b16 %v685
        %v1781 = vunpack.c.l.b16 %v686
        %v1782 = vunpack.c.h.b16 %v686
        %v1783 = vunpack.c.l.b16 %v687
        %v1784 = vunpack.c.h.b16 %v687
        %v1785 = vunpack.c.l.b16 %v688
        %v1786 = vunpack.c.h.b16 %v688
        %v1787 = vunpack.c.l.b16 %v689
        %v1788 = vunpack.c.h.b16 %v689
        %v1789 = vunpack.c.l.b16 %v690
        %v1790 = vunpack.c.h.b16 %v690
        %v1791 = vunpack.c.l.b16 %v691
        %v1792 = vunpack.c.h.b16 %v691
        %v1793 = vunpack.c.l.b16 %v692
        %v1794 = vunpack.c.h.b16 %v692
        %v1795 = vunpack.c.l.b16 %v693
        %v1796 = vunpack.c.h.b16 %v693
        %v1797 = vunpack.c.l.b16 %v694
        %v1798 = vunpack.c.h.b16 %v694
        %v1799 = vunpack.c.l.b16 %v695
        %v1800 = vunpack.c.h.b16 %v695
        %v1801 = vunpack.c.l.b16 %v696
        %v1802 = vunpack.c.h.b16 %v696
        %v1803 = vunpack.c.l.b16 %v697
        %v1804 = vunpack.c.h.b16 %v697
        %v1805 = vunpack.c.l.b16 %v698
        %v1806 = vunpack.c.h.b16 %v698
        %v1807 = vunpack.c.l.b16 %v699
        %v1808 = vunpack.c.h.b16 %v699
        %v1809 = vunpack.c.l.b16 %v700
        %v1810 = vunpack.c.h.b16 %v700
        %v1811 = vunpack.c.l.b16 %v701
        %v1812 = vunpack.c.h.b16 %v701
        %v1813 = vunpack.c.l.b16 %v702
        %v1814 = vunpack.c.h.b16 %v702
        %v1815 = vunpack.c.l.b16 %v703
        %v1816 = vunpack.c.h.b16 %v703
        %v1817 = vunpack.c.l.b16 %v704
        %v1818 = vunpack.c.h.b16 %v704
        %v1819 = vunpack.c.l.b16 %v705
        %v1820 = vunpack.c.h.b16 %v705
        %v1821 = vunpack.c.l.b16 %v706
        %v1822 = vunpack.c.h.b16 %v706
        %v1823 = vunpack.c.l.b16 %v707
        %v1824 = vunpack.c.h.b16 %v707
        %v1825 = vunpack.c.l.b16 %v708
        %v1826 = vunpack.c.h.b16 %v708
        %v1827 = vunpack.c.l.b16 %v709
        %v1828 = vunpack.c.h.b16 %v709
        %v1829 = vunpack.c.l.b16 %v710
        %v1830 = vunpack.c.h.b16 %v710
        %v1831 = vunpack.c.l.b16 %v711
        %v1832 = vunpack.c.h.b16 %v711
        %v1833 = vunpack.c.l.b16 %v712
        %v1834 = vunpack.c.h.b16 %v712
        %v1835 = vunpack.c.l.b16 %v713
        %v1836 = vunpack.c.h.b16 %v713
        %v1837 = vunpack.c.l.b16 %v714
        %v1838 = vunpack.c.h.b16 %v714
        %v1839 = vunpack.c.l.b16 %v715
        %v1840 = vunpack.c.h.b16 %v715
        %v1841 = vunpack.c.l.b16 %v716
        %v1842 = vunpack.c.h.b16 %v716
        %v1843 = vunpack.c.l.b16 %v717
        %v1844 = vunpack.c.h.b16 %v717
        %v1845 = vunpack.c.l.b16 %v718
        %v1846 = vunpack.c.h.b16 %v718
        %v1847 = vunpack.c.l.b16 %v719
        %v1848 = vunpack.c.h.b16 %v719
        %v1849 = vunpack.c.l.b16 %v720
        %v1850 = vunpack.c.h.b16 %v720
        %v1851 = vunpack.c.l.b16 %v721
        %v1852 = vunpack.c.h.b16 %v721
        %v1853 = vunpack.c.l.b16 %v722
        %v1854 = vunpack.c.h.b16 %v722
        %v1855 = vunpack.c.l.b16 %v723
        %v1856 = vunpack.c.h.b16 %v723
        %v1857 = vunpack.c.l.b16 %v724
        %v1858 = vunpack.c.h.b16 %v724
        %v1859 = vunpack.c.l.b16 %v725
        %v1860 = vunpack.c.h.b16 %v725
        %v1861 = vunpack.c.l.b16 %v726
        %v1862 = vunpack.c.h.b16 %v726
        %v1863 = vunpack.c.l.b16 %v727
        %v1864 = vunpack.c.h.b16 %v727
        %v1865 = vunpack.c.l.b16 %v728
        %v1866 = vunpack.c.h.b16 %v728
        %v1867 = vunpack.c.l.b16 %v729
        %v1868 = vunpack.c.h.b16 %v729
        %v1869 = vunpack.c.l.b16 %v730
        %v1870 = vunpack.c.h.b16 %v730
        %v1871 = vunpack.c.l.b16 %v731
        %v1872 = vunpack.c.h.b16 %v731
        %v1873 = vunpack.c.l.b16 %v732
        %v1874 = vunpack.c.h.b16 %v732
        %v1875 = vunpack.c.l.b16 %v733
        %v1876 = vunpack.c.h.b16 %v733
        %v1877 = vunpack.c.l.b16 %v734
        %v1878 = vunpack.c.h.b16 %v734
        %v1879 = vunpack.c.l.b16 %v735
        %v1880 = vunpack.c.h.b16 %v735
        %v1881 = vunpack.c.l.b16 %v736
        %v1882 = vunpack.c.h.b16 %v736
        %v1883 = vunpack.c.l.b16 %v737
        %v1884 = vunpack.c.h.b16 %v737
        %v1885 = vunpack.c.l.b16 %v738
        %v1886 = vunpack.c.h.b16 %v738
        %v1887 = vunpack.c.l.b16 %v739
        %v1888 = vunpack.c.h.b16 %v739
        %v1889 = vunpack.c.l.b16 %v740
        %v1890 = vunpack.c.h.b16 %v740
        %v1891 = vunpack.c.l.b16 %v741
        %v1892 = vunpack.c.h.b16 %v741
        %v1893 = vunpack.c.l.b16 %v742
        %v1894 = vunpack.c.h.b16 %v742
        %v1895 = vpack.c.b16 %v1129, %v1127
        %v1896 = vpack.c.b16 %v1130, %v1128
        %v1897 = vpack.c.b16 %v1133, %v1131
        %v1898 = vpack.c.b16 %v1134, %v1132
        %v1899 = vpack.c.b16 %v1137, %v1135
        %v1900 = vpack.c.b16 %v1138, %v1136
        %v1901 = vpack.c.b16 %v1141, %v1139
        %v1902 = vpack.c.b16 %v1142, %v1140
        %v1903 = vpack.c.b16 %v1145, %v1143
        %v1904 = vpack.c.b16 %v1146, %v1144
        %v1905 = vpack.c.b16 %v1149, %v1147
        %v1906 = vpack.c.b16 %v1150, %v1148
        %v1907 = vpack.c.b16 %v1153, %v1151
        %v1908 = vpack.c.b16 %v1154, %v1152
        %v1909 = vpack.c.b16 %v1157, %v1155
        %v1910 = vpack.c.b16 %v1158, %v1156
        %v1911 = vpack.c.b16 %v1161, %v1159
        %v1912 = vpack.c.b16 %v1162, %v1160
        %v1913 = vpack.c.b16 %v1165, %v1163
        %v1914 = vpack.c.b16 %v1166, %v1164
        %v1915 = vpack.c.b16 %v1169, %v1167
        %v1916 = vpack.c.b16 %v1170, %v1168
        %v1917 = vpack.c.b16 %v1173, %v1171
        %v1918 = vpack.c.b16 %v1174, %v1172
        %v1919 = vpack.c.b16 %v1177, %v1175
        %v1920 = vpack.c.b16 %v1178, %v1176
        %v1921 = vpack.c.b16 %v1181, %v1179
        %v1922 = vpack.c.b16 %v1182, %v1180
        %v1923 = vpack.c.b16 %v1185, %v1183
        %v1924 = vpack.c.b16 %v1186, %v1184
        %v1925 = vpack.c.b16 %v1189, %v1187
        %v1926 = vpack.c.b16 %v1190, %v1188
        %v1927 = vpack.c.b16 %v1193, %v1191
        %v1928 = vpack.c.b16 %v1194, %v1192
        %v1929 = vpack.c.b16 %v1197, %v1195
        %v1930 = vpack.c.b16 %v1198, %v1196
        %v1931 = vpack.c.b16 %v1201, %v1199
        %v1932 = vpack.c.b16 %v1202, %v1200
        %v1933 = vpack.c.b16 %v1205, %v1203
        %v1934 = vpack.c.b16 %v1206, %v1204
        %v1935 = vpack.c.b16 %v1209, %v1207
        %v1936 = vpack.c.b16 %v1210, %v1208
        %v1937 = vpack.c.b16 %v1213, %v1211
        %v1938 = vpack.c.b16 %v1214, %v1212
        %v1939 = vpack.c.b16 %v1217, %v1215
        %v1940 = vpack.c.b16 %v1218, %v1216
        %v1941 = vpack.c.b16 %v1221, %v1219
        %v1942 = vpack.c.b16 %v1222, %v1220
        %v1943 = vpack.c.b16 %v1225, %v1223
        %v1944 = vpack.c.b16 %v1226, %v1224
        %v1945 = vpack.c.b16 %v1229, %v1227
        %v1946 = vpack.c.b16 %v1230, %v1228
        %v1947 = vpack.c.b16 %v1233, %v1231
        %v1948 = vpack.c.b16 %v1234, %v1232
        %v1949 = vpack.c.b16 %v1237, %v1235
        %v1950 = vpack.c.b16 %v1238, %v1236
        %v1951 = vpack.c.b16 %v1241, %v1239
        %v1952 = vpack.c.b16 %v1242, %v1240
        %v1953 = vpack.c.b16 %v1245, %v1243
        %v1954 = vpack.c.b16 %v1246, %v1244
        %v1955 = vpack.c.b16 %v1249, %v1247
        %v1956 = vpack.c.b16 %v1250, %v1248
        %v1957 = vpack.c.b16 %v1253, %v1251
        %v1958 = vpack.c.b16 %v1254, %v1252
        %v1959 = vpack.c.b16 %v1257, %v1255
        %v1960 = vpack.c.b16 %v1258, %v1256
        %v1961 = vpack.c.b16 %v1261, %v1259
        %v1962 = vpack.c.b16 %v1262, %v1260
        %v1963 = vpack.c.b16 %v1265, %v1263
        %v1964 = vpack.c.b16 %v1266, %v1264
        %v1965 = vpack.c.b16 %v1269, %v1267
        %v1966 = vpack.c.b16 %v1270, %v1268
        %v1967 = vpack.c.b16 %v1273, %v1271
        %v1968 = vpack.c.b16 %v1274, %v1272
        %v1969 = vpack.c.b16 %v1277, %v1275
        %v1970 = vpack.c.b16 %v1278, %v1276
        %v1971 = vpack.c.b16 %v1281, %v1279
        %v1972 = vpack.c.b16 %v1282, %v1280
        %v1973 = vpack.c.b16 %v1285, %v1283
        %v1974 = vpack.c.b16 %v1286, %v1284
        %v1975 = vpack.c.b16 %v1289, %v1287
        %v1976 = vpack.c.b16 %v1290, %v1288
        %v1977 = vpack.c.b16 %v1293, %v1291
        %v1978 = vpack.c.b16 %v1294, %v1292
        %v1979 = vpack.c.b16 %v1297, %v1295
        %v1980 = vpack.c.b16 %v1298, %v1296
        %v1981 = vpack.c.b16 %v1301, %v1299
        %v1982 = vpack.c.b16 %v1302, %v1300
        %v1983 = vpack.c.b16 %v1305, %v1303
        %v1984 = vpack.c.b16 %v1306, %v1304
        %v1985 = vpack.c.b16 %v1309, %v1307
        %v1986 = vpack.c.b16 %v1310, %v1308
        %v1987 = vpack.c.b16 %v1313, %v1311
        %v1988 = vpack.c.b16 %v1314, %v1312
        %v1989 = vpack.c.b16 %v1317, %v1315
        %v1990 = vpack.c.b16 %v1318, %v1316
        %v1991 = vpack.c.b16 %v1321, %v1319
        %v1992 = vpack.c.b16 %v1322, %v1320
        %v1993 = vpack.c.b16 %v1325, %v1323
        %v1994 = vpack.c.b16 %v1326, %v1324
        %v1995 = vpack.c.b16 %v1329, %v1327
        %v1996 = vpack.c.b16 %v1330, %v1328
        %v1997 = vpack.c.b16 %v1333, %v1331
        %v1998 = vpack.c.b16 %v1334, %v1332
        %v1999 = vpack.c.b16 %v1337, %v1335
        %v2000 = vpack.c.b16 %v1338, %v1336
        %v2001 = vpack.c.b16 %v1341, %v1339
        %v2002 = vpack.c.b16 %v1342, %v1340
        %v2003 = vpack.c.b16 %v1345, %v1343
        %v2004 = vpack.c.b16 %v1346, %v1344
        %v2005 = vpack.c.b16 %v1349, %v1347
        %v2006 = vpack.c.b16 %v1350, %v1348
        %v2007 = vpack.c.b16 %v1353, %v1351
        %v2008 = vpack.c.b16 %v1354, %v1352
        %v2009 = vpack.c.b16 %v1357, %v1355
        %v2010 = vpack.c.b16 %v1358, %v1356
        %v2011 = vpack.c.b16 %v1361, %v1359
        %v2012 = vpack.c.b16 %v1362, %v1360
        %v2013 = vpack.c.b16 %v1365, %v1363
        %v2014 = vpack.c.b16 %v1366, %v1364
        %v2015 = vpack.c.b16 %v1369, %v1367
        %v2016 = vpack.c.b16 %v1370, %v1368
        %v2017 = vpack.c.b16 %v1373, %v1371
        %v2018 = vpack.c.b16 %v1374, %v1372
        %v2019 = vpack.c.b16 %v1377, %v1375
        %v2020 = vpack.c.b16 %v1378, %v1376
        %v2021 = vpack.c.b16 %v1381, %v1379
        %v2022 = vpack.c.b16 %v1382, %v1380
        %v2023 = vpack.c.b16 %v1385, %v1383
        %v2024 = vpack.c.b16 %v1386, %v1384
        %v2025 = vpack.c.b16 %v1389, %v1387
        %v2026 = vpack.c.b16 %v1390, %v1388
        %v2027 = vpack.c.b16 %v1393, %v1391
        %v2028 = vpack.c.b16 %v1394, %v1392
        %v2029 = vpack.c.b16 %v1397, %v1395
        %v2030 = vpack.c.b16 %v1398, %v1396
        %v2031 = vpack.c.b16 %v1401, %v1399
        %v2032 = vpack.c.b16 %v1402, %v1400
        %v2033 = vpack.c.b16 %v1405, %v1403
        %v2034 = vpack.c.b16 %v1406, %v1404
        %v2035 = vpack.c.b16 %v1409, %v1407
        %v2036 = vpack.c.b16 %v1410, %v1408
        %v2037 = vpack.c.b16 %v1413, %v1411
        %v2038 = vpack.c.b16 %v1414, %v1412
        %v2039 = vpack.c.b16 %v1417, %v1415
        %v2040 = vpack.c.b16 %v1418, %v1416
        %v2041 = vpack.c.b16 %v1421, %v1419
        %v2042 = vpack.c.b16 %v1422, %v1420
        %v2043 = vpack.c.b16 %v1425, %v1423
        %v2044 = vpack.c.b16 %v1426, %v1424
        %v2045 = vpack.c.b16 %v1429, %v1427
        %v2046 = vpack.c.b16 %v1430, %v1428
        %v2047 = vpack.c.b16 %v1433, %v1431
        %v2048 = vpack.c.b16 %v1434, %v1432
        %v2049 = vpack.c.b16 %v1437, %v1435
        %v2050 = vpack.c.b16 %v1438, %v1436
        %v2051 = vpack.c.b16 %v1441, %v1439
        %v2052 = vpack.c.b16 %v1442, %v1440
        %v2053 = vpack.c.b16 %v1445, %v1443
        %v2054 = vpack.c.b16 %v1446, %v1444
        %v2055 = vpack.c.b16 %v1449, %v1447
        %v2056 = vpack.c.b16 %v1450, %v1448
        %v2057 = vpack.c.b16 %v1453, %v1451
        %v2058 = vpack.c.b16 %v1454, %v1452
        %v2059 = vpack.c.b16 %v1457, %v1455
        %v2060 = vpack.c.b16 %v1458, %v1456
        %v2061 = vpack.c.b16 %v1461, %v1459
        %v2062 = vpack.c.b16 %v1462, %v1460
        %v2063 = vpack.c.b16 %v1465, %v1463
        %v2064 = vpack.c.b16 %v1466, %v1464
        %v2065 = vpack.c.b16 %v1469, %v1467
        %v2066 = vpack.c.b16 %v1470, %v1468
        %v2067 = vpack.c.b16 %v1473, %v1471
        %v2068 = vpack.c.b16 %v1474, %v1472
        %v2069 = vpack.c.b16 %v1477, %v1475
        %v2070 = vpack.c.b16 %v1478, %v1476
        %v2071 = vpack.c.b16 %v1481, %v1479
        %v2072 = vpack.c.b16 %v1482, %v1480
        %v2073 = vpack.c.b16 %v1485, %v1483
        %v2074 = vpack.c.b16 %v1486, %v1484
        %v2075 = vpack.c.b16 %v1489, %v1487
        %v2076 = vpack.c.b16 %v1490, %v1488
        %v2077 = vpack.c.b16 %v1493, %v1491
        %v2078 = vpack.c.b16 %v1494, %v1492
        %v2079 = vpack.c.b16 %v1497, %v1495
        %v2080 = vpack.c.b16 %v1498, %v1496
        %v2081 = vpack.c.b16 %v1501, %v1499
        %v2082 = vpack.c.b16 %v1502, %v1500
        %v2083 = vpack.c.b16 %v1505, %v1503
        %v2084 = vpack.c.b16 %v1506, %v1504
        %v2085 = vpack.c.b16 %v1509, %v1507
        %v2086 = vpack.c.b16 %v1510, %v1508
        %v2087 = vpack.c.b16 %v1513, %v1511
        %v2088 = vpack.c.b16 %v1514, %v1512
        %v2089 = vpack.c.b16 %v1517, %v1515
        %v2090 = vpack.c.b16 %v1518, %v1516
        %v2091 = vpack.c.b16 %v1521, %v1519
        %v2092 = vpack.c.b16 %v1522, %v1520
        %v2093 = vpack.c.b16 %v1525, %v1523
        %v2094 = vpack.c.b16 %v1526, %v1524
        %v2095 = vpack.c.b16 %v1529, %v1527
        %v2096 = vpack.c.b16 %v1530, %v1528
        %v2097 = vpack.c.b16 %v1533, %v1531
        %v2098 = vpack.c.b16 %v1534, %v1532
        %v2099 = vpack.c.b16 %v1537, %v1535
        %v2100 = vpack.c.b16 %v1538, %v1536
        %v2101 = vpack.c.b16 %v1541, %v1539
        %v2102 = vpack.c.b16 %v1542, %v1540
        %v2103 = vpack.c.b16 %v1545, %v1543
        %v2104 = vpack.c.b16 %v1546, %v1544
        %v2105 = vpack.c.b16 %v1549, %v1547
        %v2106 = vpack.c.b16 %v1550, %v1548
        %v2107 = vpack.c.b16 %v1553, %v1551
        %v2108 = vpack.c.b16 %v1554, %v1552
        %v2109 = vpack.c.b16 %v1557, %v1555
        %v2110 = vpack.c.b16 %v1558, %v1556
        %v2111 = vpack.c.b16 %v1561, %v1559
        %v2112 = vpack.c.b16 %v1562, %v1560
        %v2113 = vpack.c.b16 %v1565, %v1563
        %v2114 = vpack.c.b16 %v1566, %v1564
        %v2115 = vpack.c.b16 %v1569, %v1567
        %v2116 = vpack.c.b16 %v1570, %v1568
        %v2117 = vpack.c.b16 %v1573, %v1571
        %v2118 = vpack.c.b16 %v1574, %v1572
        %v2119 = vpack.c.b16 %v1577, %v1575
        %v2120 = vpack.c.b16 %v1578, %v1576
        %v2121 = vpack.c.b16 %v1581, %v1579
        %v2122 = vpack.c.b16 %v1582, %v1580
        %v2123 = vpack.c.b16 %v1585, %v1583
        %v2124 = vpack.c.b16 %v1586, %v1584
        %v2125 = vpack.c.b16 %v1589, %v1587
        %v2126 = vpack.c.b16 %v1590, %v1588
        %v2127 = vpack.c.b16 %v1593, %v1591
        %v2128 = vpack.c.b16 %v1594, %v1592
        %v2129 = vpack.c.b16 %v1597, %v1595
        %v2130 = vpack.c.b16 %v1598, %v1596
        %v2131 = vpack.c.b16 %v1601, %v1599
        %v2132 = vpack.c.b16 %v1602, %v1600
        %v2133 = vpack.c.b16 %v1605, %v1603
        %v2134 = vpack.c.b16 %v1606, %v1604
        %v2135 = vpack.c.b16 %v1609, %v1607
        %v2136 = vpack.c.b16 %v1610, %v1608
        %v2137 = vpack.c.b16 %v1613, %v1611
        %v2138 = vpack.c.b16 %v1614, %v1612
        %v2139 = vpack.c.b16 %v1617, %v1615
        %v2140 = vpack.c.b16 %v1618, %v1616
        %v2141 = vpack.c.b16 %v1621, %v1619
        %v2142 = vpack.c.b16 %v1622, %v1620
        %v2143 = vpack.c.b16 %v1625, %v1623
        %v2144 = vpack.c.b16 %v1626, %v1624
        %v2145 = vpack.c.b16 %v1629, %v1627
        %v2146 = vpack.c.b16 %v1630, %v1628
        %v2147 = vpack.c.b16 %v1633, %v1631
        %v2148 = vpack.c.b16 %v1634, %v1632
        %v2149 = vpack.c.b16 %v1637, %v1635
        %v2150 = vpack.c.b16 %v1638, %v1636
        %v2151 = vpack.c.b16 %v1641, %v1639
        %v2152 = vpack.c.b16 %v1642, %v1640
        %v2153 = vpack.c.b16 %v1645, %v1643
        %v2154 = vpack.c.b16 %v1646, %v1644
        %v2155 = vpack.c.b16 %v1649, %v1647
        %v2156 = vpack.c.b16 %v1650, %v1648
        %v2157 = vpack.c.b16 %v1653, %v1651
        %v2158 = vpack.c.b16 %v1654, %v1652
        %v2159 = vpack.c.b16 %v1657, %v1655
        %v2160 = vpack.c.b16 %v1658, %v1656
        %v2161 = vpack.c.b16 %v1661, %v1659
        %v2162 = vpack.c.b16 %v1662, %v1660
        %v2163 = vpack.c.b16 %v1665, %v1663
        %v2164 = vpack.c.b16 %v1666, %v1664
        %v2165 = vpack.c.b16 %v1669, %v1667
        %v2166 = vpack.c.b16 %v1670, %v1668
        %v2167 = vpack.c.b16 %v1673, %v1671
        %v2168 = vpack.c.b16 %v1674, %v1672
        %v2169 = vpack.c.b16 %v1677, %v1675
        %v2170 = vpack.c.b16 %v1678, %v1676
        %v2171 = vpack.c.b16 %v1681, %v1679
        %v2172 = vpack.c.b16 %v1682, %v1680
        %v2173 = vpack.c.b16 %v1685, %v1683
        %v2174 = vpack.c.b16 %v1686, %v1684
        %v2175 = vpack.c.b16 %v1689, %v1687
        %v2176 = vpack.c.b16 %v1690, %v1688
        %v2177 = vpack.c.b16 %v1693, %v1691
        %v2178 = vpack.c.b16 %v1694, %v1692
        %v2179 = vpack.c.b16 %v1697, %v1695
        %v2180 = vpack.c.b16 %v1698, %v1696
        %v2181 = vpack.c.b16 %v1701, %v1699
        %v2182 = vpack.c.b16 %v1702, %v1700
        %v2183 = vpack.c.b16 %v1705, %v1703
        %v2184 = vpack.c.b16 %v1706, %v1704
        %v2185 = vpack.c.b16 %v1709, %v1707
        %v2186 = vpack.c.b16 %v1710, %v1708
        %v2187 = vpack.c.b16 %v1713, %v1711
        %v2188 = vpack.c.b16 %v1714, %v1712
        %v2189 = vpack.c.b16 %v1717, %v1715
        %v2190 = vpack.c.b16 %v1718, %v1716
        %v2191 = vpack.c.b16 %v1721, %v1719
        %v2192 = vpack.c.b16 %v1722, %v1720
        %v2193 = vpack.c.b16 %v1725, %v1723
        %v2194 = vpack.c.b16 %v1726, %v1724
        %v2195 = vpack.c.b16 %v1729, %v1727
        %v2196 = vpack.c.b16 %v1730, %v1728
        %v2197 = vpack.c.b16 %v1733, %v1731
        %v2198 = vpack.c.b16 %v1734, %v1732
        %v2199 = vpack.c.b16 %v1737, %v1735
        %v2200 = vpack.c.b16 %v1738, %v1736
        %v2201 = vpack.c.b16 %v1741, %v1739
        %v2202 = vpack.c.b16 %v1742, %v1740
        %v2203 = vpack.c.b16 %v1745, %v1743
        %v2204 = vpack.c.b16 %v1746, %v1744
        %v2205 = vpack.c.b16 %v1749, %v1747
        %v2206 = vpack.c.b16 %v1750, %v1748
        %v2207 = vpack.c.b16 %v1753, %v1751
        %v2208 = vpack.c.b16 %v1754, %v1752
        %v2209 = vpack.c.b16 %v1757, %v1755
        %v2210 = vpack.c.b16 %v1758, %v1756
        %v2211 = vpack.c.b16 %v1761, %v1759
        %v2212 = vpack.c.b16 %v1762, %v1760
        %v2213 = vpack.c.b16 %v1765, %v1763
        %v2214 = vpack.c.b16 %v1766, %v1764
        %v2215 = vpack.c.b16 %v1769, %v1767
        %v2216 = vpack.c.b16 %v1770, %v1768
        %v2217 = vpack.c.b16 %v1773, %v1771
        %v2218 = vpack.c.b16 %v1774, %v1772
        %v2219 = vpack.c.b16 %v1777, %v1775
        %v2220 = vpack.c.b16 %v1778, %v1776
        %v2221 = vpack.c.b16 %v1781, %v1779
        %v2222 = vpack.c.b16 %v1782, %v1780
        %v2223 = vpack.c.b16 %v1785, %v1783
        %v2224 = vpack.c.b16 %v1786, %v1784
        %v2225 = vpack.c.b16 %v1789, %v1787
        %v2226 = vpack.c.b16 %v1790, %v1788
        %v2227 = vpack.c.b16 %v1793, %v1791
        %v2228 = vpack.c.b16 %v1794, %v1792
        %v2229 = vpack.c.b16 %v1797, %v1795
        %v2230 = vpack.c.b16 %v1798, %v1796
        %v2231 = vpack.c.b16 %v1801, %v1799
        %v2232 = vpack.c.b16 %v1802, %v1800
        %v2233 = vpack.c.b16 %v1805, %v1803
        %v2234 = vpack.c.b16 %v1806, %v1804
        %v2235 = vpack.c.b16 %v1809, %v1807
        %v2236 = vpack.c.b16 %v1810, %v1808
        %v2237 = vpack.c.b16 %v1813, %v1811
        %v2238 = vpack.c.b16 %v1814, %v1812
        %v2239 = vpack.c.b16 %v1817, %v1815
        %v2240 = vpack.c.b16 %v1818, %v1816
        %v2241 = vpack.c.b16 %v1821, %v1819
        %v2242 = vpack.c.b16 %v1822, %v1820
        %v2243 = vpack.c.b16 %v1825, %v1823
        %v2244 = vpack.c.b16 %v1826, %v1824
        %v2245 = vpack.c.b16 %v1829, %v1827
        %v2246 = vpack.c.b16 %v1830, %v1828
        %v2247 = vpack.c.b16 %v1833, %v1831
        %v2248 = vpack.c.b16 %v1834, %v1832
        %v2249 = vpack.c.b16 %v1837, %v1835
        %v2250 = vpack.c.b16 %v1838, %v1836
        %v2251 = vpack.c.b16 %v1841, %v1839
        %v2252 = vpack.c.b16 %v1842, %v1840
        %v2253 = vpack.c.b16 %v1845, %v1843
        %v2254 = vpack.c.b16 %v1846, %v1844
        %v2255 = vpack.c.b16 %v1849, %v1847
        %v2256 = vpack.c.b16 %v1850, %v1848
        %v2257 = vpack.c.b16 %v1853, %v1851
        %v2258 = vpack.c.b16 %v1854, %v1852
        %v2259 = vpack.c.b16 %v1857, %v1855
        %v2260 = vpack.c.b16 %v1858, %v1856
        %v2261 = vpack.c.b16 %v1861, %v1859
        %v2262 = vpack.c.b16 %v1862, %v1860
        %v2263 = vpack.c.b16 %v1865, %v1863
        %v2264 = vpack.c.b16 %v1866, %v1864
        %v2265 = vpack.c.b16 %v1869, %v1867
        %v2266 = vpack.c.b16 %v1870, %v1868
        %v2267 = vpack.c.b16 %v1873, %v1871
        %v2268 = vpack.c.b16 %v1874, %v1872
        %v2269 = vpack.c.b16 %v1877, %v1875
        %v2270 = vpack.c.b16 %v1878, %v1876
        %v2271 = vpack.c.b16 %v1881, %v1879
        %v2272 = vpack.c.b16 %v1882, %v1880
        %v2273 = vpack.c.b16 %v1885, %v1883
        %v2274 = vpack.c.b16 %v1886, %v1884
        %v2275 = vpack.c.b16 %v1889, %v1887
        %v2276 = vpack.c.b16 %v1890, %v1888
        %v2277 = vpack.c.b16 %v1893, %v1891
        %v2278 = vpack.c.b16 %v1894, %v1892
        %2663 = vmatprep.subr.bf16.mxu0 %v1896
        %2664 = vmatpush1.bf16.msra.mxu0 %v1895
        %2665 = vmatprep.subr.bf16.mxu0 %v1898
        %2666 = vmatpush1.bf16.msra.mxu0 %v1897
        %2667 = vmatprep.subr.bf16.mxu0 %v1900
        %2668 = vmatpush1.bf16.msra.mxu0 %v1899
        %2669 = vmatprep.subr.bf16.mxu0 %v1902
        %2670 = vmatpush1.bf16.msra.mxu0 %v1901
        %2671 = vmatprep.subr.bf16.mxu0 %v1904
        %2672 = vmatpush1.bf16.msra.mxu0 %v1903
        %2673 = vmatprep.subr.bf16.mxu0 %v1906
        %2674 = vmatpush1.bf16.msra.mxu0 %v1905
        %2675 = vmatprep.subr.bf16.mxu0 %v1908
        %2676 = vmatpush1.bf16.msra.mxu0 %v1907
        %2677 = vmatprep.subr.bf16.mxu0 %v1910
        %2678 = vmatpush1.bf16.msra.mxu0 %v1909
        %2679 = vmatprep.subr.bf16.mxu0 %v1912
        %2680 = vmatpush1.bf16.msra.mxu0 %v1911
        %2681 = vmatprep.subr.bf16.mxu0 %v1914
        %2682 = vmatpush1.bf16.msra.mxu0 %v1913
        %2683 = vmatprep.subr.bf16.mxu0 %v1916
        %2684 = vmatpush1.bf16.msra.mxu0 %v1915
        %2685 = vmatprep.subr.bf16.mxu0 %v1918
        %2686 = vmatpush1.bf16.msra.mxu0 %v1917
        %2687 = vmatprep.subr.bf16.mxu0 %v1920
        %2688 = vmatpush1.bf16.msra.mxu0 %v1919
        %2689 = vmatprep.subr.bf16.mxu0 %v1922
        %2690 = vmatpush1.bf16.msra.mxu0 %v1921
        %2691 = vmatprep.subr.bf16.mxu0 %v1924
        %2692 = vmatpush1.bf16.msra.mxu0 %v1923
        %2693 = vmatprep.subr.bf16.mxu0 %v1926
        %2694 = vmatpush1.bf16.msra.mxu0 %v1925
        %2695 = vmatprep.mubr.bf16.mxu0 %v336
        %2696 = vmatmul.mubr.bf16.gmra.mrb[0].mxu0 %v335
        %v2697 = vpop.f32.mrb[0].mxu0
        %v2698 = vadd.f32 0.0, %v2697
        %v2699 = vpop.f32.mrb[0].mxu0
        %v2700 = vadd.f32 0.0, %v2699
        %v2701 = vpop.f32.mrb[0].mxu0
        %v2702 = vpop.f32.mrb[0].mxu0
        %2703 = vdwg.mxu0
        %2704 = vmatprep.subr.bf16.mxu0 %v1928
        %2705 = vmatpush1.bf16.msra.mxu0 %v1927
        %2706 = vmatprep.subr.bf16.mxu0 %v1930
        %2707 = vmatpush1.bf16.msra.mxu0 %v1929
        %2708 = vmatprep.subr.bf16.mxu0 %v1932
        %2709 = vmatpush1.bf16.msra.mxu0 %v1931
        %2710 = vmatprep.subr.bf16.mxu0 %v1934
        %2711 = vmatpush1.bf16.msra.mxu0 %v1933
        %2712 = vmatprep.subr.bf16.mxu0 %v1936
        %2713 = vmatpush1.bf16.msra.mxu0 %v1935
        %2714 = vmatprep.subr.bf16.mxu0 %v1938
        %2715 = vmatpush1.bf16.msra.mxu0 %v1937
        %2716 = vmatprep.subr.bf16.mxu0 %v1940
        %2717 = vmatpush1.bf16.msra.mxu0 %v1939
        %2718 = vmatprep.subr.bf16.mxu0 %v1942
        %2719 = vmatpush1.bf16.msra.mxu0 %v1941
        %2720 = vmatprep.subr.bf16.mxu0 %v1944
        %2721 = vmatpush1.bf16.msra.mxu0 %v1943
        %2722 = vmatprep.subr.bf16.mxu0 %v1946
        %2723 = vmatpush1.bf16.msra.mxu0 %v1945
        %2724 = vmatprep.subr.bf16.mxu0 %v1948
        %2725 = vmatpush1.bf16.msra.mxu0 %v1947
        %2726 = vmatprep.subr.bf16.mxu0 %v1950
        %2727 = vmatpush1.bf16.msra.mxu0 %v1949
        %2728 = vmatprep.subr.bf16.mxu0 %v1952
        %2729 = vmatpush1.bf16.msra.mxu0 %v1951
        %2730 = vmatprep.subr.bf16.mxu0 %v1954
        %2731 = vmatpush1.bf16.msra.mxu0 %v1953
        %2732 = vmatprep.subr.bf16.mxu0 %v1956
        %2733 = vmatpush1.bf16.msra.mxu0 %v1955
        %2734 = vmatprep.subr.bf16.mxu0 %v1958
        %2735 = vmatpush1.bf16.msra.mxu0 %v1957
        %2736 = vmatprep.mubr.bf16.mxu0 %v338
        %2737 = vmatmul.mubr.bf16.gmra.mrb[0].mxu0 %v337
        %v2738 = vpop.f32.mrb[0].mxu0
        %v2739 = vadd.f32 %v2698, %v2738
        %v2740 = vpop.f32.mrb[0].mxu0
        %v2741 = vadd.f32 %v2700, %v2740
        %v2742 = vpop.f32.mrb[0].mxu0
        %v2743 = vpop.f32.mrb[0].mxu0
        %2744 = vdwg.mxu0
        %2745 = vmatprep.subr.bf16.mxu0 %v1960
        %2746 = vmatpush1.bf16.msra.mxu0 %v1959
        %2747 = vmatprep.subr.bf16.mxu0 %v1962
        %2748 = vmatpush1.bf16.msra.mxu0 %v1961
        %2749 = vmatprep.subr.bf16.mxu0 %v1964
        %2750 = vmatpush1.bf16.msra.mxu0 %v1963
        %2751 = vmatprep.subr.bf16.mxu0 %v1966
        %2752 = vmatpush1.bf16.msra.mxu0 %v1965
        %2753 = vmatprep.subr.bf16.mxu0 %v1968
        %2754 = vmatpush1.bf16.msra.mxu0 %v1967
        %2755 = vmatprep.subr.bf16.mxu0 %v1970
        %2756 = vmatpush1.bf16.msra.mxu0 %v1969
        %2757 = vmatprep.subr.bf16.mxu0 %v1972
        %2758 = vmatpush1.bf16.msra.mxu0 %v1971
        %2759 = vmatprep.subr.bf16.mxu0 %v1974
        %2760 = vmatpush1.bf16.msra.mxu0 %v1973
        %2761 = vmatprep.subr.bf16.mxu0 %v1976
        %2762 = vmatpush1.bf16.msra.mxu0 %v1975
        %2763 = vmatprep.subr.bf16.mxu0 %v1978
        %2764 = vmatpush1.bf16.msra.mxu0 %v1977
        %2765 = vmatprep.subr.bf16.mxu0 %v1980
        %2766 = vmatpush1.bf16.msra.mxu0 %v1979
        %2767 = vmatprep.subr.bf16.mxu0 %v1982
        %2768 = vmatpush1.bf16.msra.mxu0 %v1981
        %2769 = vmatprep.subr.bf16.mxu0 %v1984
        %2770 = vmatpush1.bf16.msra.mxu0 %v1983
        %2771 = vmatprep.subr.bf16.mxu0 %v1986
        %2772 = vmatpush1.bf16.msra.mxu0 %v1985
        %2773 = vmatprep.subr.bf16.mxu0 %v1988
        %2774 = vmatpush1.bf16.msra.mxu0 %v1987
        %2775 = vmatprep.subr.bf16.mxu0 %v1990
        %2776 = vmatpush1.bf16.msra.mxu0 %v1989
        %2777 = vmatprep.mubr.bf16.mxu0 %v340
        %2778 = vmatmul.mubr.bf16.gmra.mrb[0].mxu0 %v339
        %v2779 = vpop.f32.mrb[0].mxu0
        %v2780 = vadd.f32 %v2739, %v2779
        %v2781 = vpop.f32.mrb[0].mxu0
        %v2782 = vadd.f32 %v2741, %v2781
        %v2783 = vpop.f32.mrb[0].mxu0
        %v2784 = vpop.f32.mrb[0].mxu0
        %2785 = vdwg.mxu0
        %2786 = vmatprep.subr.bf16.mxu0 %v1992
        %2787 = vmatpush1.bf16.msra.mxu0 %v1991
        %2788 = vmatprep.subr.bf16.mxu0 %v1994
        %2789 = vmatpush1.bf16.msra.mxu0 %v1993
        %2790 = vmatprep.subr.bf16.mxu0 %v1996
        %2791 = vmatpush1.bf16.msra.mxu0 %v1995
        %2792 = vmatprep.subr.bf16.mxu0 %v1998
        %2793 = vmatpush1.bf16.msra.mxu0 %v1997
        %2794 = vmatprep.subr.bf16.mxu0 %v2000
        %2795 = vmatpush1.bf16.msra.mxu0 %v1999
        %2796 = vmatprep.subr.bf16.mxu0 %v2002
        %2797 = vmatpush1.bf16.msra.mxu0 %v2001
        %2798 = vmatprep.subr.bf16.mxu0 %v2004
        %2799 = vmatpush1.bf16.msra.mxu0 %v2003
        %2800 = vmatprep.subr.bf16.mxu0 %v2006
        %2801 = vmatpush1.bf16.msra.mxu0 %v2005
        %2802 = vmatprep.subr.bf16.mxu0 %v2008
        %2803 = vmatpush1.bf16.msra.mxu0 %v2007
        %2804 = vmatprep.subr.bf16.mxu0 %v2010
        %2805 = vmatpush1.bf16.msra.mxu0 %v2009
        %2806 = vmatprep.subr.bf16.mxu0 %v2012
        %2807 = vmatpush1.bf16.msra.mxu0 %v2011
        %2808 = vmatprep.subr.bf16.mxu0 %v2014
        %2809 = vmatpush1.bf16.msra.mxu0 %v2013
        %2810 = vmatprep.subr.bf16.mxu0 %v2016
        %2811 = vmatpush1.bf16.msra.mxu0 %v2015
        %2812 = vmatprep.subr.bf16.mxu0 %v2018
        %2813 = vmatpush1.bf16.msra.mxu0 %v2017
        %2814 = vmatprep.subr.bf16.mxu0 %v2020
        %2815 = vmatpush1.bf16.msra.mxu0 %v2019
        %2816 = vmatprep.subr.bf16.mxu0 %v2022
        %2817 = vmatpush1.bf16.msra.mxu0 %v2021
        %2818 = vmatprep.mubr.bf16.mxu0 %v342
        %2819 = vmatmul.mubr.bf16.gmra.mrb[0].mxu0 %v341
        %v2820 = vpop.f32.mrb[0].mxu0
        %v2821 = vadd.f32 %v2780, %v2820
        %v2822 = vpop.f32.mrb[0].mxu0
        %v2823 = vadd.f32 %v2782, %v2822
        %v2824 = vpop.f32.mrb[0].mxu0
        %v2825 = vpop.f32.mrb[0].mxu0
        %2826 = vdwg.mxu0
        %2827 = vmatprep.subr.bf16.mxu0 %v2024
        %2828 = vmatpush1.bf16.msra.mxu0 %v2023
        %2829 = vmatprep.subr.bf16.mxu0 %v2026
        %2830 = vmatpush1.bf16.msra.mxu0 %v2025
        %2831 = vmatprep.subr.bf16.mxu0 %v2028
        %2832 = vmatpush1.bf16.msra.mxu0 %v2027
        %2833 = vmatprep.subr.bf16.mxu0 %v2030
        %2834 = vmatpush1.bf16.msra.mxu0 %v2029
        %2835 = vmatprep.subr.bf16.mxu0 %v2032
        %2836 = vmatpush1.bf16.msra.mxu0 %v2031
        %2837 = vmatprep.subr.bf16.mxu0 %v2034
        %2838 = vmatpush1.bf16.msra.mxu0 %v2033
        %2839 = vmatprep.subr.bf16.mxu0 %v2036
        %2840 = vmatpush1.bf16.msra.mxu0 %v2035
        %2841 = vmatprep.subr.bf16.mxu0 %v2038
        %2842 = vmatpush1.bf16.msra.mxu0 %v2037
        %2843 = vmatprep.subr.bf16.mxu0 %v2040
        %2844 = vmatpush1.bf16.msra.mxu0 %v2039
        %2845 = vmatprep.subr.bf16.mxu0 %v2042
        %2846 = vmatpush1.bf16.msra.mxu0 %v2041
        %2847 = vmatprep.subr.bf16.mxu0 %v2044
        %2848 = vmatpush1.bf16.msra.mxu0 %v2043
        %2849 = vmatprep.subr.bf16.mxu0 %v2046
        %2850 = vmatpush1.bf16.msra.mxu0 %v2045
        %2851 = vmatprep.subr.bf16.mxu0 %v2048
        %2852 = vmatpush1.bf16.msra.mxu0 %v2047
        %2853 = vmatprep.subr.bf16.mxu0 %v2050
        %2854 = vmatpush1.bf16.msra.mxu0 %v2049
        %2855 = vmatprep.subr.bf16.mxu0 %v2052
        %2856 = vmatpush1.bf16.msra.mxu0 %v2051
        %2857 = vmatprep.subr.bf16.mxu0 %v2054
        %2858 = vmatpush1.bf16.msra.mxu0 %v2053
        %2859 = vmatprep.mubr.bf16.mxu0 %v344
        %2860 = vmatmul.mubr.bf16.gmra.mrb[0].mxu0 %v343
        %v2861 = vpop.f32.mrb[0].mxu0
        %v2862 = vadd.f32 %v2821, %v2861
        %v2863 = vpop.f32.mrb[0].mxu0
        %v2864 = vadd.f32 %v2823, %v2863
        %v2865 = vpop.f32.mrb[0].mxu0
        %v2866 = vpop.f32.mrb[0].mxu0
        %2867 = vdwg.mxu0
        %2868 = vmatprep.subr.bf16.mxu0 %v2056
        %2869 = vmatpush1.bf16.msra.mxu0 %v2055
        %2870 = vmatprep.subr.bf16.mxu0 %v2058
        %2871 = vmatpush1.bf16.msra.mxu0 %v2057
        %2872 = vmatprep.subr.bf16.mxu0 %v2060
        %2873 = vmatpush1.bf16.msra.mxu0 %v2059
        %2874 = vmatprep.subr.bf16.mxu0 %v2062
        %2875 = vmatpush1.bf16.msra.mxu0 %v2061
        %2876 = vmatprep.subr.bf16.mxu0 %v2064
        %2877 = vmatpush1.bf16.msra.mxu0 %v2063
        %2878 = vmatprep.subr.bf16.mxu0 %v2066
        %2879 = vmatpush1.bf16.msra.mxu0 %v2065
        %2880 = vmatprep.subr.bf16.mxu0 %v2068
        %2881 = vmatpush1.bf16.msra.mxu0 %v2067
        %2882 = vmatprep.subr.bf16.mxu0 %v2070
        %2883 = vmatpush1.bf16.msra.mxu0 %v2069
        %2884 = vmatprep.subr.bf16.mxu0 %v2072
        %2885 = vmatpush1.bf16.msra.mxu0 %v2071
        %2886 = vmatprep.subr.bf16.mxu0 %v2074
        %2887 = vmatpush1.bf16.msra.mxu0 %v2073
        %2888 = vmatprep.subr.bf16.mxu0 %v2076
        %2889 = vmatpush1.bf16.msra.mxu0 %v2075
        %2890 = vmatprep.subr.bf16.mxu0 %v2078
        %2891 = vmatpush1.bf16.msra.mxu0 %v2077
        %2892 = vmatprep.subr.bf16.mxu0 %v2080
        %2893 = vmatpush1.bf16.msra.mxu0 %v2079
        %2894 = vmatprep.subr.bf16.mxu0 %v2082
        %2895 = vmatpush1.bf16.msra.mxu0 %v2081
        %2896 = vmatprep.subr.bf16.mxu0 %v2084
        %2897 = vmatpush1.bf16.msra.mxu0 %v2083
        %2898 = vmatprep.subr.bf16.mxu0 %v2086
        %2899 = vmatpush1.bf16.msra.mxu0 %v2085
        %2900 = vmatprep.mubr.bf16.mxu0 %v346
        %2901 = vmatmul.mubr.bf16.gmra.mrb[0].mxu0 %v345
        %v2902 = vpop.f32.mrb[0].mxu0
        %v2903 = vadd.f32 %v2862, %v2902
        %v2904 = vpop.f32.mrb[0].mxu0
        %v2905 = vadd.f32 %v2864, %v2904
        %v2906 = vpop.f32.mrb[0].mxu0
        %v2907 = vpop.f32.mrb[0].mxu0
        %2908 = vdwg.mxu0
        %2909 = vmatprep.subr.bf16.mxu0 %v2088
        %2910 = vmatpush1.bf16.msra.mxu0 %v2087
        %2911 = vmatprep.subr.bf16.mxu0 %v2090
        %2912 = vmatpush1.bf16.msra.mxu0 %v2089
        %2913 = vmatprep.subr.bf16.mxu0 %v2092
        %2914 = vmatpush1.bf16.msra.mxu0 %v2091
        %2915 = vmatprep.subr.bf16.mxu0 %v2094
        %2916 = vmatpush1.bf16.msra.mxu0 %v2093
        %2917 = vmatprep.subr.bf16.mxu0 %v2096
        %2918 = vmatpush1.bf16.msra.mxu0 %v2095
        %2919 = vmatprep.subr.bf16.mxu0 %v2098
        %2920 = vmatpush1.bf16.msra.mxu0 %v2097
        %2921 = vmatprep.subr.bf16.mxu0 %v2100
        %2922 = vmatpush1.bf16.msra.mxu0 %v2099
        %2923 = vmatprep.subr.bf16.mxu0 %v2102
        %2924 = vmatpush1.bf16.msra.mxu0 %v2101
        %2925 = vmatprep.subr.bf16.mxu0 %v2104
        %2926 = vmatpush1.bf16.msra.mxu0 %v2103
        %2927 = vmatprep.subr.bf16.mxu0 %v2106
        %2928 = vmatpush1.bf16.msra.mxu0 %v2105
        %2929 = vmatprep.subr.bf16.mxu0 %v2108
        %2930 = vmatpush1.bf16.msra.mxu0 %v2107
        %2931 = vmatprep.subr.bf16.mxu0 %v2110
        %2932 = vmatpush1.bf16.msra.mxu0 %v2109
        %2933 = vmatprep.subr.bf16.mxu0 %v2112
        %2934 = vmatpush1.bf16.msra.mxu0 %v2111
        %2935 = vmatprep.subr.bf16.mxu0 %v2114
        %2936 = vmatpush1.bf16.msra.mxu0 %v2113
        %2937 = vmatprep.subr.bf16.mxu0 %v2116
        %2938 = vmatpush1.bf16.msra.mxu0 %v2115
        %2939 = vmatprep.subr.bf16.mxu0 %v2118
        %2940 = vmatpush1.bf16.msra.mxu0 %v2117
        %2941 = vmatprep.mubr.bf16.mxu0 %v348
        %2942 = vmatmul.mubr.bf16.gmra.mrb[0].mxu0 %v347
        %v2943 = vpop.f32.mrb[0].mxu0
        %v2944 = vadd.f32 %v2903, %v2943
        %v2945 = vpop.f32.mrb[0].mxu0
        %v2946 = vadd.f32 %v2905, %v2945
        %v2947 = vpop.f32.mrb[0].mxu0
        %v2948 = vpop.f32.mrb[0].mxu0
        %2949 = vdwg.mxu0
        %2950 = vmatprep.subr.bf16.mxu0 %v2120
        %2951 = vmatpush1.bf16.msra.mxu0 %v2119
        %2952 = vmatprep.subr.bf16.mxu0 %v2122
        %2953 = vmatpush1.bf16.msra.mxu0 %v2121
        %2954 = vmatprep.subr.bf16.mxu0 %v2124
        %2955 = vmatpush1.bf16.msra.mxu0 %v2123
        %2956 = vmatprep.subr.bf16.mxu0 %v2126
        %2957 = vmatpush1.bf16.msra.mxu0 %v2125
        %2958 = vmatprep.subr.bf16.mxu0 %v2128
        %2959 = vmatpush1.bf16.msra.mxu0 %v2127
        %2960 = vmatprep.subr.bf16.mxu0 %v2130
        %2961 = vmatpush1.bf16.msra.mxu0 %v2129
        %2962 = vmatprep.subr.bf16.mxu0 %v2132
        %2963 = vmatpush1.bf16.msra.mxu0 %v2131
        %2964 = vmatprep.subr.bf16.mxu0 %v2134
        %2965 = vmatpush1.bf16.msra.mxu0 %v2133
        %2966 = vmatprep.subr.bf16.mxu0 %v2136
        %2967 = vmatpush1.bf16.msra.mxu0 %v2135
        %2968 = vmatprep.subr.bf16.mxu0 %v2138
        %2969 = vmatpush1.bf16.msra.mxu0 %v2137
        %2970 = vmatprep.subr.bf16.mxu0 %v2140
        %2971 = vmatpush1.bf16.msra.mxu0 %v2139
        %2972 = vmatprep.subr.bf16.mxu0 %v2142
        %2973 = vmatpush1.bf16.msra.mxu0 %v2141
        %2974 = vmatprep.subr.bf16.mxu0 %v2144
        %2975 = vmatpush1.bf16.msra.mxu0 %v2143
        %2976 = vmatprep.subr.bf16.mxu0 %v2146
        %2977 = vmatpush1.bf16.msra.mxu0 %v2145
        %2978 = vmatprep.subr.bf16.mxu0 %v2148
        %2979 = vmatpush1.bf16.msra.mxu0 %v2147
        %2980 = vmatprep.subr.bf16.mxu0 %v2150
        %2981 = vmatpush1.bf16.msra.mxu0 %v2149
        %2982 = vmatprep.mubr.bf16.mxu0 %v350
        %2983 = vmatmul.mubr.bf16.gmra.mrb[0].mxu0 %v349
        %v2984 = vpop.f32.mrb[0].mxu0
        %v2985 = vadd.f32 %v2944, %v2984
        %v2986 = vpop.f32.mrb[0].mxu0
        %v2987 = vadd.f32 %v2946, %v2986
        %v2988 = vpop.f32.mrb[0].mxu0
        %v2989 = vpop.f32.mrb[0].mxu0
        %2990 = vdwg.mxu0
        %2991 = vmatprep.subr.bf16.mxu0 %v2152
        %2992 = vmatpush1.bf16.msra.mxu0 %v2151
        %2993 = vmatprep.subr.bf16.mxu0 %v2154
        %2994 = vmatpush1.bf16.msra.mxu0 %v2153
        %2995 = vmatprep.subr.bf16.mxu0 %v2156
        %2996 = vmatpush1.bf16.msra.mxu0 %v2155
        %2997 = vmatprep.subr.bf16.mxu0 %v2158
        %2998 = vmatpush1.bf16.msra.mxu0 %v2157
        %2999 = vmatprep.subr.bf16.mxu0 %v2160
        %3000 = vmatpush1.bf16.msra.mxu0 %v2159
        %3001 = vmatprep.subr.bf16.mxu0 %v2162
        %3002 = vmatpush1.bf16.msra.mxu0 %v2161
        %3003 = vmatprep.subr.bf16.mxu0 %v2164
        %3004 = vmatpush1.bf16.msra.mxu0 %v2163
        %3005 = vmatprep.subr.bf16.mxu0 %v2166
        %3006 = vmatpush1.bf16.msra.mxu0 %v2165
        %3007 = vmatprep.subr.bf16.mxu0 %v2168
        %3008 = vmatpush1.bf16.msra.mxu0 %v2167
        %3009 = vmatprep.subr.bf16.mxu0 %v2170
        %3010 = vmatpush1.bf16.msra.mxu0 %v2169
        %3011 = vmatprep.subr.bf16.mxu0 %v2172
        %3012 = vmatpush1.bf16.msra.mxu0 %v2171
        %3013 = vmatprep.subr.bf16.mxu0 %v2174
        %3014 = vmatpush1.bf16.msra.mxu0 %v2173
        %3015 = vmatprep.subr.bf16.mxu0 %v2176
        %3016 = vmatpush1.bf16.msra.mxu0 %v2175
        %3017 = vmatprep.subr.bf16.mxu0 %v2178
        %3018 = vmatpush1.bf16.msra.mxu0 %v2177
        %3019 = vmatprep.subr.bf16.mxu0 %v2180
        %3020 = vmatpush1.bf16.msra.mxu0 %v2179
        %3021 = vmatprep.subr.bf16.mxu0 %v2182
        %3022 = vmatpush1.bf16.msra.mxu0 %v2181
        %3023 = vmatprep.mubr.bf16.mxu0 %v352
        %3024 = vmatmul.mubr.bf16.gmra.mrb[0].mxu0 %v351
        %v3025 = vpop.f32.mrb[0].mxu0
        %v3026 = vadd.f32 %v2985, %v3025
        %v3027 = vpop.f32.mrb[0].mxu0
        %v3028 = vadd.f32 %v2987, %v3027
        %v3029 = vpop.f32.mrb[0].mxu0
        %v3030 = vpop.f32.mrb[0].mxu0
        %3031 = vdwg.mxu0
        %3032 = vmatprep.subr.bf16.mxu0 %v2184
        %3033 = vmatpush1.bf16.msra.mxu0 %v2183
        %3034 = vmatprep.subr.bf16.mxu0 %v2186
        %3035 = vmatpush1.bf16.msra.mxu0 %v2185
        %3036 = vmatprep.subr.bf16.mxu0 %v2188
        %3037 = vmatpush1.bf16.msra.mxu0 %v2187
        %3038 = vmatprep.subr.bf16.mxu0 %v2190
        %3039 = vmatpush1.bf16.msra.mxu0 %v2189
        %3040 = vmatprep.subr.bf16.mxu0 %v2192
        %3041 = vmatpush1.bf16.msra.mxu0 %v2191
        %3042 = vmatprep.subr.bf16.mxu0 %v2194
        %3043 = vmatpush1.bf16.msra.mxu0 %v2193
        %3044 = vmatprep.subr.bf16.mxu0 %v2196
        %3045 = vmatpush1.bf16.msra.mxu0 %v2195
        %3046 = vmatprep.subr.bf16.mxu0 %v2198
        %3047 = vmatpush1.bf16.msra.mxu0 %v2197
        %3048 = vmatprep.subr.bf16.mxu0 %v2200
        %3049 = vmatpush1.bf16.msra.mxu0 %v2199
        %3050 = vmatprep.subr.bf16.mxu0 %v2202
        %3051 = vmatpush1.bf16.msra.mxu0 %v2201
        %3052 = vmatprep.subr.bf16.mxu0 %v2204
        %3053 = vmatpush1.bf16.msra.mxu0 %v2203
        %3054 = vmatprep.subr.bf16.mxu0 %v2206
        %3055 = vmatpush1.bf16.msra.mxu0 %v2205
        %3056 = vmatprep.subr.bf16.mxu0 %v2208
        %3057 = vmatpush1.bf16.msra.mxu0 %v2207
        %3058 = vmatprep.subr.bf16.mxu0 %v2210
        %3059 = vmatpush1.bf16.msra.mxu0 %v2209
        %3060 = vmatprep.subr.bf16.mxu0 %v2212
        %3061 = vmatpush1.bf16.msra.mxu0 %v2211
        %3062 = vmatprep.subr.bf16.mxu0 %v2214
        %3063 = vmatpush1.bf16.msra.mxu0 %v2213
        %3064 = vmatprep.mubr.bf16.mxu0 %v354
        %3065 = vmatmul.mubr.bf16.gmra.mrb[0].mxu0 %v353
        %v3066 = vpop.f32.mrb[0].mxu0
        %v3067 = vadd.f32 %v3026, %v3066
        %v3068 = vpop.f32.mrb[0].mxu0
        %v3069 = vadd.f32 %v3028, %v3068
        %v3070 = vpop.f32.mrb[0].mxu0
        %v3071 = vpop.f32.mrb[0].mxu0
        %3072 = vdwg.mxu0
        %3073 = vmatprep.subr.bf16.mxu0 %v2216
        %3074 = vmatpush1.bf16.msra.mxu0 %v2215
        %3075 = vmatprep.subr.bf16.mxu0 %v2218
        %3076 = vmatpush1.bf16.msra.mxu0 %v2217
        %3077 = vmatprep.subr.bf16.mxu0 %v2220
        %3078 = vmatpush1.bf16.msra.mxu0 %v2219
        %3079 = vmatprep.subr.bf16.mxu0 %v2222
        %3080 = vmatpush1.bf16.msra.mxu0 %v2221
        %3081 = vmatprep.subr.bf16.mxu0 %v2224
        %3082 = vmatpush1.bf16.msra.mxu0 %v2223
        %3083 = vmatprep.subr.bf16.mxu0 %v2226
        %3084 = vmatpush1.bf16.msra.mxu0 %v2225
        %3085 = vmatprep.subr.bf16.mxu0 %v2228
        %3086 = vmatpush1.bf16.msra.mxu0 %v2227
        %3087 = vmatprep.subr.bf16.mxu0 %v2230
        %3088 = vmatpush1.bf16.msra.mxu0 %v2229
        %3089 = vmatprep.subr.bf16.mxu0 %v2232
        %3090 = vmatpush1.bf16.msra.mxu0 %v2231
        %3091 = vmatprep.subr.bf16.mxu0 %v2234
        %3092 = vmatpush1.bf16.msra.mxu0 %v2233
        %3093 = vmatprep.subr.bf16.mxu0 %v2236
        %3094 = vmatpush1.bf16.msra.mxu0 %v2235
        %3095 = vmatprep.subr.bf16.mxu0 %v2238
        %3096 = vmatpush1.bf16.msra.mxu0 %v2237
        %3097 = vmatprep.subr.bf16.mxu0 %v2240
        %3098 = vmatpush1.bf16.msra.mxu0 %v2239
        %3099 = vmatprep.subr.bf16.mxu0 %v2242
        %3100 = vmatpush1.bf16.msra.mxu0 %v2241
        %3101 = vmatprep.subr.bf16.mxu0 %v2244
        %3102 = vmatpush1.bf16.msra.mxu0 %v2243
        %3103 = vmatprep.subr.bf16.mxu0 %v2246
        %3104 = vmatpush1.bf16.msra.mxu0 %v2245
        %3105 = vmatprep.mubr.bf16.mxu0 %v356
        %3106 = vmatmul.mubr.bf16.gmra.mrb[0].mxu0 %v355
        %v3107 = vpop.f32.mrb[0].mxu0
        %v3108 = vadd.f32 %v3067, %v3107
        %v3109 = vpop.f32.mrb[0].mxu0
        %v3110 = vadd.f32 %v3069, %v3109
        %v3111 = vpop.f32.mrb[0].mxu0
        %v3112 = vpop.f32.mrb[0].mxu0
        %3113 = vdwg.mxu0
        %3114 = vmatprep.subr.bf16.mxu0 %v2248
        %3115 = vmatpush1.bf16.msra.mxu0 %v2247
        %3116 = vmatprep.subr.bf16.mxu0 %v2250
        %3117 = vmatpush1.bf16.msra.mxu0 %v2249
        %3118 = vmatprep.subr.bf16.mxu0 %v2252
        %3119 = vmatpush1.bf16.msra.mxu0 %v2251
        %3120 = vmatprep.subr.bf16.mxu0 %v2254
        %3121 = vmatpush1.bf16.msra.mxu0 %v2253
        %3122 = vmatprep.subr.bf16.mxu0 %v2256
        %3123 = vmatpush1.bf16.msra.mxu0 %v2255
        %3124 = vmatprep.subr.bf16.mxu0 %v2258
        %3125 = vmatpush1.bf16.msra.mxu0 %v2257
        %3126 = vmatprep.subr.bf16.mxu0 %v2260
        %3127 = vmatpush1.bf16.msra.mxu0 %v2259
        %3128 = vmatprep.subr.bf16.mxu0 %v2262
        %3129 = vmatpush1.bf16.msra.mxu0 %v2261
        %3130 = vmatprep.subr.bf16.mxu0 %v2264
        %3131 = vmatpush1.bf16.msra.mxu0 %v2263
        %3132 = vmatprep.subr.bf16.mxu0 %v2266
        %3133 = vmatpush1.bf16.msra.mxu0 %v2265
        %3134 = vmatprep.subr.bf16.mxu0 %v2268
        %3135 = vmatpush1.bf16.msra.mxu0 %v2267
        %3136 = vmatprep.subr.bf16.mxu0 %v2270
        %3137 = vmatpush1.bf16.msra.mxu0 %v2269
        %3138 = vmatprep.subr.bf16.mxu0 %v2272
        %3139 = vmatpush1.bf16.msra.mxu0 %v2271
        %3140 = vmatprep.subr.bf16.mxu0 %v2274
        %3141 = vmatpush1.bf16.msra.mxu0 %v2273
        %3142 = vmatprep.subr.bf16.mxu0 %v2276
        %3143 = vmatpush1.bf16.msra.mxu0 %v2275
        %3144 = vmatprep.subr.bf16.mxu0 %v2278
        %3145 = vmatpush1.bf16.msra.mxu0 %v2277
        %3146 = vmatprep.mubr.bf16.mxu0 %v358
        %3147 = vmatmul.mubr.bf16.gmra.mrb[0].mxu0 %v357
        %v3148 = vpop.f32.mrb[0].mxu0
        %v3149 = vadd.f32 %v3108, %v3148
        %v3150 = vpop.f32.mrb[0].mxu0
        %v3151 = vadd.f32 %v3110, %v3150
        %v3152 = vpop.f32.mrb[0].mxu0
        %v3153 = vpop.f32.mrb[0].mxu0
        %3154 = vdwg.mxu0
        %v3155 = vadd.f32 %v309, %v3149
        %v3156 = vadd.f32 %v310, %v3151
        %3157 = vst [vmem:[#allocation2] sm:$0xff] %v3155
        %3158 = vst [vmem:[#allocation2 + $0x8] sm:$0xff] %v3156
        // Predicated region
        $region45: #{mv_network_forward.2} parent=31 // pred_check
          %p3159 = pneg %p303
        $region46: #{mv_network_forward.2} parent=31 // pred_check_branch
          %3161 = sbr.rel (%p3159) target = $region48
        $region47: #{mv_network_forward.2} parent=31 // pred_region
          %v3162 = vld [vmem:[#allocation2] sm:$0xff]
          %v3163 = vld [vmem:[#allocation2 + $0x8] sm:$0xff]
          %v3164 = vld [vmem:[%s239] sm:$0x3]
          %v3166 = vlaneseq
          %v3167 = vshrl.u32 %v3166, 7
          %v3168 = vsub.s32 0, %v3167
          %v3169 = vrot.slane %v3164, %v3168
          %v3170 = vlaneseq
          %v3171 = vshrl.u32 %v3170, 7
          %v3172 = vsub.s32 1, %v3171
          %v3173 = vrot.slane %v3164, %v3172
          %v3176 = vadd.f32 %v3162, %v3169
          %v3177 = vadd.f32 %v3163, %v3173
          %3178 = vst [vmem:[%s301] sm:$0xff] %v3176
          %3179 = vst [vmem:[%s301 + $0x8] sm:$0xff] %v3177
        $region48: #{mv_network_forward.2} parent=31 // pred_fallthru
          _
        %s3180 = smul.u32 2, %s26
        %p3181 = scmp.lt.s32.totalorder %s25, 0
        %s3182 = scalar_select %p3181, %s25, 0
        %p3183 = scmp.lt.s32.totalorder %s3180, 3
        %s3184 = scalar_select %p3183, %s3180, 3
        %s3185 = smul.addr %s3182, 4
        %s3186 = sadd.s32 %s3184, %s3185
        %s3187 = smul.addr %s3186, 8
        %s3188 = scalar_lea.vmem %s3, %s3187
        // Predicated region
        $region49: #{mv_network_forward.2} parent=31 // pred_check
          %p3189 = pneg %p141
        $region50: #{mv_network_forward.2} parent=31 // pred_check_branch
          %3191 = sbr.rel (%p3189) target = $region52
        $region51: #{mv_network_forward.2} parent=31 // pred_region
          %s3192 = smul.u32 2, %s26
        $region52: #{mv_network_forward.2} parent=31 // pred_fallthru
          _
      $region32: #{mv_network_forward.2} parent=5 // pred_fallthru
        _
      %p3193 = scmp.le.s32.totalorder 2, %s15
      // Predicated region
      $region53: #{mv_network_forward.2} parent=5 // pred_check
        %p3194 = pneg %p3193
      $region54: #{mv_network_forward.2} parent=5 // pred_check_branch
        %3196 = sbr.rel (%p3194) target = $region56
      $region55: #{mv_network_forward.2} parent=5 // pred_region
        %s3197 = ssub.s32 %s15, 2
        // Predicated region
        $region57: #{mv_network_forward.2} parent=55 // pred_check
          %p3198 = pneg %p147
        $region58: #{mv_network_forward.2} parent=55 // pred_check_branch
          %3200 = sbr.rel (%p3198) target = $region60
        $region59: #{mv_network_forward.2} parent=55 // pred_region
          %s3201 = smul.u32 2, %s29
          %p3202 = scmp.lt.s32.totalorder %s28, 0
          %s3203 = scalar_select %p3202, %s28, 0
          %p3204 = scmp.lt.s32.totalorder %s3201, 3
          %s3205 = scalar_select %p3204, %s3201, 3
          %s3206 = smul.addr %s3203, 4
          %s3207 = sadd.s32 %s3205, %s3206
          %s3208 = smul.addr %s3207, 8
          %s3209 = scalar_lea.vmem %s3, %s3208
        $region60: #{mv_network_forward.2} parent=55 // pred_fallthru
          _
      $region56: #{mv_network_forward.2} parent=5 // pred_fallthru
        _
    $region6: #{mv_network_forward.2} parent=1 // loop_footer
      %s19 = sadd.s32 1, %s15
    $region7: #{mv_network_forward.2} parent=1 // loop_footer_branch
      %14 = sbr.rel target = $region3
    $region8: #{mv_network_forward.2} parent=1 // loop_exit
      _
    %3210 = vsyncpa [#allocation4], 1
    %s3211 = scalar_lea.sflag [#allocation4], 1
    %3212 = vsyncpa %s3211, 1
    %3213 = vsyncpa [#allocation6], 1
    %s3214 = scalar_lea.sflag [#allocation6], 1
    %3215 = vsyncpa %s3214, 1

// kernel: mv_network_forward.3
$region0: #{mv_network_forward.3}
  #allocation0 [shape = 'u32[]', space=smem, size = 0x4, offset = 0x4, fixed_abs, tag = 'smem constant byte address 0x4 - core index']
  #allocation1 [shape = 'u32[144,128]{1,0:T(1,128)}', space=vmem, size = 0x12000, scoped, tag = 'internal scratch']
  %s0 = inlined_call_operand.vmem [shape: f32[2,2,512], index: 0, kind: input, shape index: {}]
  %s1 = inlined_call_operand.vmem [shape: f32[1,512], index: 1, kind: input, shape index: {}]
  %s2 = inlined_call_operand.vmem [shape: f32[1,512], index: 2, kind: input, shape index: {}]
  %s3 = inlined_call_operand.vmem [shape: bf16[512,512], index: 3, kind: input, shape index: {}]
  %s4 = inlined_call_operand.vmem [shape: f32[1,512], index: 4, kind: input, shape index: {}]
  %s5 = inlined_call_operand.vmem [shape: bf16[512,512], index: 5, kind: input, shape index: {}]
  %s6 = inlined_call_operand.vmem [shape: f32[1,512], index: 6, kind: input, shape index: {}]
  %s7 = inlined_call_operand.vmem [shape: f32[1,512], index: 7, kind: input, shape index: {}]
  %s8 = inlined_call_operand.vmem [shape: f32[1,512], index: 8, kind: input, shape index: {}]
  %s9 = inlined_call_operand.vmem [shape: bf16[512,512], index: 9, kind: input, shape index: {}]
  %s10 = inlined_call_operand.vmem [shape: f32[1,512], index: 10, kind: input, shape index: {}]
  %s11 = inlined_call_operand.vmem [shape: f32[1,512], index: 11, kind: input, shape index: {}]
  %s12 = inlined_call_operand.vmem [shape: f32[1,512], index: 12, kind: input, shape index: {}]
  %s13 = inlined_call_operand.vmem [shape: bf16[512,512], index: 13, kind: input, shape index: {}]
  %s14 = inlined_call_operand.vmem [shape: f32[1,512], index: 14, kind: input, shape index: {}]
  %s15 = inlined_call_operand.vmem [shape: bf16[512,128], index: 15, kind: input, shape index: {}]
  %s16 = inlined_call_operand.vmem [shape: f32[1,128], index: 16, kind: input, shape index: {}]
  %s17 = inlined_call_operand.vmem [shape: f32[4,128], index: 17, kind: output, shape index: {}]
  %s18 = sld [smem:[#allocation0]]
  $region78: #{mv_network_forward.3} parent=0
    _
  %s20 = ssub.s32 1, %s18
  %s21 = scalar_select 0, %s20, %s18
  // Predicated region
  $region2: #{mv_network_forward.3} parent=0 // pred_check
    _
  $region3: #{mv_network_forward.3} parent=0 // pred_check_branch
    %23 = sbr.rel (0) target = $region5
  $region4: #{mv_network_forward.3} parent=0 // pred_region
    _
  $region5: #{mv_network_forward.3} parent=0 // pred_fallthru
    _
  // Predicated region
  $region6: #{mv_network_forward.3} parent=0 // pred_check
    _
  $region7: #{mv_network_forward.3} parent=0 // pred_check_branch
    %25 = sbr.rel (0) target = $region9
  $region8: #{mv_network_forward.3} parent=0 // pred_region
    _
  $region9: #{mv_network_forward.3} parent=0 // pred_fallthru
    _
  // Predicated region
  $region10: #{mv_network_forward.3} parent=0 // pred_check
    _
  $region11: #{mv_network_forward.3} parent=0 // pred_check_branch
    %27 = sbr.rel (0) target = $region13
  $region12: #{mv_network_forward.3} parent=0 // pred_region
    _
  $region13: #{mv_network_forward.3} parent=0 // pred_fallthru
    _
  // Predicated region
  $region14: #{mv_network_forward.3} parent=0 // pred_check
    _
  $region15: #{mv_network_forward.3} parent=0 // pred_check_branch
    %29 = sbr.rel (0) target = $region17
  $region16: #{mv_network_forward.3} parent=0 // pred_region
    _
  $region17: #{mv_network_forward.3} parent=0 // pred_fallthru
    _
  // Predicated region
  $region18: #{mv_network_forward.3} parent=0 // pred_check
    _
  $region19: #{mv_network_forward.3} parent=0 // pred_check_branch
    %31 = sbr.rel (0) target = $region21
  $region20: #{mv_network_forward.3} parent=0 // pred_region
    _
  $region21: #{mv_network_forward.3} parent=0 // pred_fallthru
    _
  // Predicated region
  $region22: #{mv_network_forward.3} parent=0 // pred_check
    _
  $region23: #{mv_network_forward.3} parent=0 // pred_check_branch
    %33 = sbr.rel (0) target = $region25
  $region24: #{mv_network_forward.3} parent=0 // pred_region
    _
  $region25: #{mv_network_forward.3} parent=0 // pred_fallthru
    _
  // Predicated region
  $region26: #{mv_network_forward.3} parent=0 // pred_check
    _
  $region27: #{mv_network_forward.3} parent=0 // pred_check_branch
    %35 = sbr.rel (0) target = $region29
  $region28: #{mv_network_forward.3} parent=0 // pred_region
    _
  $region29: #{mv_network_forward.3} parent=0 // pred_fallthru
    _
  // Predicated region
  $region30: #{mv_network_forward.3} parent=0 // pred_check
    _
  $region31: #{mv_network_forward.3} parent=0 // pred_check_branch
    %37 = sbr.rel (0) target = $region33
  $region32: #{mv_network_forward.3} parent=0 // pred_region
    _
  $region33: #{mv_network_forward.3} parent=0 // pred_fallthru
    _
  // Predicated region
  $region34: #{mv_network_forward.3} parent=0 // pred_check
    _
  $region35: #{mv_network_forward.3} parent=0 // pred_check_branch
    %39 = sbr.rel (0) target = $region37
  $region36: #{mv_network_forward.3} parent=0 // pred_region
    _
  $region37: #{mv_network_forward.3} parent=0 // pred_fallthru
    _
  // Predicated region
  $region38: #{mv_network_forward.3} parent=0 // pred_check
    _
  $region39: #{mv_network_forward.3} parent=0 // pred_check_branch
    %41 = sbr.rel (0) target = $region41
  $region40: #{mv_network_forward.3} parent=0 // pred_region
    _
  $region41: #{mv_network_forward.3} parent=0 // pred_fallthru
    _
  // Predicated region
  $region42: #{mv_network_forward.3} parent=0 // pred_check
    _
  $region43: #{mv_network_forward.3} parent=0 // pred_check_branch
    %43 = sbr.rel (0) target = $region45
  $region44: #{mv_network_forward.3} parent=0 // pred_region
    _
  $region45: #{mv_network_forward.3} parent=0 // pred_fallthru
    _
  // Predicated region
  $region46: #{mv_network_forward.3} parent=0 // pred_check
    _
  $region47: #{mv_network_forward.3} parent=0 // pred_check_branch
    %45 = sbr.rel (0) target = $region49
  $region48: #{mv_network_forward.3} parent=0 // pred_region
    _
  $region49: #{mv_network_forward.3} parent=0 // pred_fallthru
    _
  // Predicated region
  $region50: #{mv_network_forward.3} parent=0 // pred_check
    _
  $region51: #{mv_network_forward.3} parent=0 // pred_check_branch
    %47 = sbr.rel (0) target = $region53
  $region52: #{mv_network_forward.3} parent=0 // pred_region
    _
  $region53: #{mv_network_forward.3} parent=0 // pred_fallthru
    _
  // Predicated region
  $region54: #{mv_network_forward.3} parent=0 // pred_check
    _
  $region55: #{mv_network_forward.3} parent=0 // pred_check_branch
    %49 = sbr.rel (0) target = $region57
  $region56: #{mv_network_forward.3} parent=0 // pred_region
    _
  $region57: #{mv_network_forward.3} parent=0 // pred_fallthru
    _
  // Predicated region
  $region58: #{mv_network_forward.3} parent=0 // pred_check
    _
  $region59: #{mv_network_forward.3} parent=0 // pred_check_branch
    %51 = sbr.rel (0) target = $region61
  $region60: #{mv_network_forward.3} parent=0 // pred_region
    _
  $region61: #{mv_network_forward.3} parent=0 // pred_fallthru
    _
  // Predicated region
  $region62: #{mv_network_forward.3} parent=0 // pred_check
    _
  $region63: #{mv_network_forward.3} parent=0 // pred_check_branch
    %53 = sbr.rel (0) target = $region65
  $region64: #{mv_network_forward.3} parent=0 // pred_region
    _
  $region65: #{mv_network_forward.3} parent=0 // pred_fallthru
    _
  // Predicated region
  $region66: #{mv_network_forward.3} parent=0 // pred_check
    _
  $region67: #{mv_network_forward.3} parent=0 // pred_check_branch
    %55 = sbr.rel (0) target = $region69
  $region68: #{mv_network_forward.3} parent=0 // pred_region
    _
  $region69: #{mv_network_forward.3} parent=0 // pred_fallthru
    _
  %v57 = vld [vmem:[%s0] sm:$0xff]
  %v58 = vld [vmem:[%s0 + $0x8] sm:$0xff]
  %v61 = vcombine.high %v57, %v57
  %v63 = vunpack.c.l.s4 1983009808
  %v64 = vunpack.c.0.s8 %v63
  %v65 = vlaneseq
  %v66 = vshrl.u32 %v65, 7
  %v67 = vsub.s32 %v64, %v66
  %v68 = vrot.slane %v57, %v67
  %v70 = vunpack.c.l.s4 1983009808
  %v71 = vunpack.c.0.s8 %v70
  %v72 = vlaneseq
  %v73 = vshrl.u32 %v72, 7
  %v74 = vsub.s32 %v71, %v73
  %v75 = vrot.slane %v61, %v74
  %v76 = vcombine.high %v68, %v68
  %v77 = vcombine.high %v75, %v75
  %v78 = vcombine.high %v58, %v58
  %v80 = vunpack.c.l.s4 1983009808
  %v81 = vunpack.c.0.s8 %v80
  %v82 = vlaneseq
  %v83 = vshrl.u32 %v82, 7
  %v84 = vsub.s32 %v81, %v83
  %v85 = vrot.slane %v58, %v84
  %v87 = vunpack.c.l.s4 1983009808
  %v88 = vunpack.c.0.s8 %v87
  %v89 = vlaneseq
  %v90 = vshrl.u32 %v89, 7
  %v91 = vsub.s32 %v88, %v90
  %v92 = vrot.slane %v78, %v91
  %v93 = vcombine.high %v85, %v85
  %v94 = vcombine.high %v92, %v92
  %vm103 = vcmask 1041408
  %v104 = vsel %vm103, %v68, -inf
  %v105 = vrot.slane %v104, 4
  %v106 = vmax.f32 %v104, %v105
  %v107 = vrot.slane %v106, 2
  %v108 = vmax.f32 %v106, %v107
  %v109 = vrot.slane %v108, 1
  %v110 = vmax.f32 %v108, %v109
  %v111 = vsel %vm103, %v76, -inf
  %v112 = vrot.slane %v111, 4
  %v113 = vmax.f32 %v111, %v112
  %v114 = vrot.slane %v113, 2
  %v115 = vmax.f32 %v113, %v114
  %v116 = vrot.slane %v115, 1
  %v117 = vmax.f32 %v115, %v116
  %v118 = vsel %vm103, %v75, -inf
  %v119 = vrot.slane %v118, 4
  %v120 = vmax.f32 %v118, %v119
  %v121 = vrot.slane %v120, 2
  %v122 = vmax.f32 %v120, %v121
  %v123 = vrot.slane %v122, 1
  %v124 = vmax.f32 %v122, %v123
  %v125 = vsel %vm103, %v77, -inf
  %v126 = vrot.slane %v125, 4
  %v127 = vmax.f32 %v125, %v126
  %v128 = vrot.slane %v127, 2
  %v129 = vmax.f32 %v127, %v128
  %v130 = vrot.slane %v129, 1
  %v131 = vmax.f32 %v129, %v130
  %v132 = vsel %vm103, %v85, -inf
  %v133 = vrot.slane %v132, 4
  %v134 = vmax.f32 %v132, %v133
  %v135 = vrot.slane %v134, 2
  %v136 = vmax.f32 %v134, %v135
  %v137 = vrot.slane %v136, 1
  %v138 = vmax.f32 %v136, %v137
  %v139 = vsel %vm103, %v93, -inf
  %v140 = vrot.slane %v139, 4
  %v141 = vmax.f32 %v139, %v140
  %v142 = vrot.slane %v141, 2
  %v143 = vmax.f32 %v141, %v142
  %v144 = vrot.slane %v143, 1
  %v145 = vmax.f32 %v143, %v144
  %v146 = vsel %vm103, %v92, -inf
  %v147 = vrot.slane %v146, 4
  %v148 = vmax.f32 %v146, %v147
  %v149 = vrot.slane %v148, 2
  %v150 = vmax.f32 %v148, %v149
  %v151 = vrot.slane %v150, 1
  %v152 = vmax.f32 %v150, %v151
  %v153 = vsel %vm103, %v94, -inf
  %v154 = vrot.slane %v153, 4
  %v155 = vmax.f32 %v153, %v154
  %v156 = vrot.slane %v155, 2
  %v157 = vmax.f32 %v155, %v156
  %v158 = vrot.slane %v157, 1
  %v159 = vmax.f32 %v157, %v158
  %v160 = vld [vmem:[%s1] sm:$0xf]
  %v161 = vld [vmem:[%s2] sm:$0xf]
  %vm170 = vcmask 1041409
  %v171 = vsel %vm170, %v138, %v110
  %v172 = vsel %vm170, %v145, %v117
  %v173 = vsel %vm170, %v152, %v124
  %v174 = vsel %vm170, %v159, %v131
  %v179 = vsel %vm103, %v171, 0.0
  %v180 = vsel %vm103, %v172, 0.0
  %v181 = vadd.f32 %v179, %v180
  %v182 = vsel %vm103, %v173, 0.0
  %v183 = vadd.f32 %v181, %v182
  %v184 = vsel %vm103, %v174, 0.0
  %v185 = vadd.f32 %v183, %v184
  %186 = vadd.xlane.f32.xlu0 %v185
  %v187 = vpop.xlane.xlu0 %186
  %v188 = vrcp.pop 512.0
  %v189 = vmul.f32 %v187, %v188
  %v191 = vrot.slane %v189, 1
  %v194 = vsub.f32 %v110, %v189
  %v195 = vsub.f32 %v117, %v189
  %v196 = vsub.f32 %v124, %v189
  %v197 = vsub.f32 %v131, %v189
  %v198 = vsub.f32 %v138, %v191
  %v199 = vsub.f32 %v145, %v191
  %v200 = vsub.f32 %v152, %v191
  %v201 = vsub.f32 %v159, %v191
  %v202 = vmul.f32 %v194, %v194
  %v203 = vmul.f32 %v195, %v195
  %v204 = vmul.f32 %v196, %v196
  %v205 = vmul.f32 %v197, %v197
  %v206 = vmul.f32 %v198, %v198
  %v207 = vmul.f32 %v199, %v199
  %v208 = vmul.f32 %v200, %v200
  %v209 = vmul.f32 %v201, %v201
  %v218 = vrot.slane %v206, 7
  %v219 = vsel %vm170, %v218, %v202
  %v220 = vrot.slane %v207, 7
  %v221 = vsel %vm170, %v220, %v203
  %v222 = vrot.slane %v208, 7
  %v223 = vsel %vm170, %v222, %v204
  %v224 = vrot.slane %v209, 7
  %v225 = vsel %vm170, %v224, %v205
  %v230 = vsel %vm103, %v219, 0.0
  %v231 = vsel %vm103, %v221, 0.0
  %v232 = vadd.f32 %v230, %v231
  %v233 = vsel %vm103, %v223, 0.0
  %v234 = vadd.f32 %v232, %v233
  %v235 = vsel %vm103, %v225, 0.0
  %v236 = vadd.f32 %v234, %v235
  %237 = vadd.xlane.f32.xlu0 %v236
  %v238 = vpop.xlane.xlu0 %237
  %v239 = vmul.f32 %v238, %v188
  %v240 = vadd.f32 %v239, 1e-05
  %v241 = vrsqrt.pop %v240
  %v243 = vrot.slane %v241, 1
  %v246 = vmul.f32 %v194, %v241
  %v247 = vmul.f32 %v195, %v241
  %v248 = vmul.f32 %v196, %v241
  %v249 = vmul.f32 %v197, %v241
  %v250 = vmul.f32 %v198, %v243
  %v251 = vmul.f32 %v199, %v243
  %v252 = vmul.f32 %v200, %v243
  %v253 = vmul.f32 %v201, %v243
  %v255 = vlaneseq
  %v256 = vshrl.u32 %v255, 7
  %v257 = vsub.s32 0, %v256
  %v258 = vrot.slane %v160, %v257
  %v259 = vlaneseq
  %v260 = vshrl.u32 %v259, 7
  %v261 = vsub.s32 1, %v260
  %v262 = vrot.slane %v160, %v261
  %v263 = vlaneseq
  %v264 = vshrl.u32 %v263, 7
  %v265 = vsub.s32 2, %v264
  %v266 = vrot.slane %v160, %v265
  %v267 = vlaneseq
  %v268 = vshrl.u32 %v267, 7
  %v269 = vsub.s32 3, %v268
  %v270 = vrot.slane %v160, %v269
  %v275 = vmul.f32 %v246, %v258
  %v276 = vmul.f32 %v247, %v262
  %v277 = vmul.f32 %v248, %v266
  %v278 = vmul.f32 %v249, %v270
  %v279 = vmul.f32 %v250, %v258
  %v280 = vmul.f32 %v251, %v262
  %v281 = vmul.f32 %v252, %v266
  %v282 = vmul.f32 %v253, %v270
  %v284 = vlaneseq
  %v285 = vshrl.u32 %v284, 7
  %v286 = vsub.s32 0, %v285
  %v287 = vrot.slane %v161, %v286
  %v288 = vlaneseq
  %v289 = vshrl.u32 %v288, 7
  %v290 = vsub.s32 1, %v289
  %v291 = vrot.slane %v161, %v290
  %v292 = vlaneseq
  %v293 = vshrl.u32 %v292, 7
  %v294 = vsub.s32 2, %v293
  %v295 = vrot.slane %v161, %v294
  %v296 = vlaneseq
  %v297 = vshrl.u32 %v296, 7
  %v298 = vsub.s32 3, %v297
  %v299 = vrot.slane %v161, %v298
  %v304 = vadd.f32 %v275, %v287
  %v305 = vadd.f32 %v276, %v291
  %v306 = vadd.f32 %v277, %v295
  %v307 = vadd.f32 %v278, %v299
  %v308 = vadd.f32 %v279, %v287
  %v309 = vadd.f32 %v280, %v291
  %v310 = vadd.f32 %v281, %v295
  %v311 = vadd.f32 %v282, %v299
  %v312 = vpack.c.bf16 %v304, %v304
  %v313 = vpack.c.bf16 %v305, %v305
  %v314 = vpack.c.bf16 %v306, %v306
  %v315 = vpack.c.bf16 %v307, %v307
  %v316 = vpack.c.bf16 %v308, %v308
  %v317 = vpack.c.bf16 %v309, %v309
  %v318 = vpack.c.bf16 %v310, %v310
  %v319 = vpack.c.bf16 %v311, %v311
  %v320 = vld [vmem:[%s3] sm:$0xff]
  %v321 = vld [vmem:[%s3 + $0x8] sm:$0xff]
  %v322 = vld [vmem:[%s3 + $0x10] sm:$0xff]
  %v323 = vld [vmem:[%s3 + $0x18] sm:$0xff]
  %v324 = vld [vmem:[%s3 + $0x20] sm:$0xff]
  %v325 = vld [vmem:[%s3 + $0x28] sm:$0xff]
  %v326 = vld [vmem:[%s3 + $0x30] sm:$0xff]
  %v327 = vld [vmem:[%s3 + $0x38] sm:$0xff]
  %v328 = vld [vmem:[%s3 + $0x40] sm:$0xff]
  %v329 = vld [vmem:[%s3 + $0x48] sm:$0xff]
  %v330 = vld [vmem:[%s3 + $0x50] sm:$0xff]
  %v331 = vld [vmem:[%s3 + $0x58] sm:$0xff]
  %v332 = vld [vmem:[%s3 + $0x60] sm:$0xff]
  %v333 = vld [vmem:[%s3 + $0x68] sm:$0xff]
  %v334 = vld [vmem:[%s3 + $0x70] sm:$0xff]
  %v335 = vld [vmem:[%s3 + $0x78] sm:$0xff]
  %v336 = vld [vmem:[%s3 + $0x80] sm:$0xff]
  %v337 = vld [vmem:[%s3 + $0x88] sm:$0xff]
  %v338 = vld [vmem:[%s3 + $0x90] sm:$0xff]
  %v339 = vld [vmem:[%s3 + $0x98] sm:$0xff]
  %v340 = vld [vmem:[%s3 + $0xa0] sm:$0xff]
  %v341 = vld [vmem:[%s3 + $0xa8] sm:$0xff]
  %v342 = vld [vmem:[%s3 + $0xb0] sm:$0xff]
  %v343 = vld [vmem:[%s3 + $0xb8] sm:$0xff]
  %v344 = vld [vmem:[%s3 + $0xc0] sm:$0xff]
  %v345 = vld [vmem:[%s3 + $0xc8] sm:$0xff]
  %v346 = vld [vmem:[%s3 + $0xd0] sm:$0xff]
  %v347 = vld [vmem:[%s3 + $0xd8] sm:$0xff]
  %v348 = vld [vmem:[%s3 + $0xe0] sm:$0xff]
  %v349 = vld [vmem:[%s3 + $0xe8] sm:$0xff]
  %v350 = vld [vmem:[%s3 + $0xf0] sm:$0xff]
  %v351 = vld [vmem:[%s3 + $0xf8] sm:$0xff]
  %v352 = vld [vmem:[%s3 + $0x100] sm:$0xff]
  %v353 = vld [vmem:[%s3 + $0x108] sm:$0xff]
  %v354 = vld [vmem:[%s3 + $0x110] sm:$0xff]
  %v355 = vld [vmem:[%s3 + $0x118] sm:$0xff]
  %v356 = vld [vmem:[%s3 + $0x120] sm:$0xff]
  %v357 = vld [vmem:[%s3 + $0x128] sm:$0xff]
  %v358 = vld [vmem:[%s3 + $0x130] sm:$0xff]
  %v359 = vld [vmem:[%s3 + $0x138] sm:$0xff]
  %v360 = vld [vmem:[%s3 + $0x140] sm:$0xff]
  %v361 = vld [vmem:[%s3 + $0x148] sm:$0xff]
  %v362 = vld [vmem:[%s3 + $0x150] sm:$0xff]
  %v363 = vld [vmem:[%s3 + $0x158] sm:$0xff]
  %v364 = vld [vmem:[%s3 + $0x160] sm:$0xff]
  %v365 = vld [vmem:[%s3 + $0x168] sm:$0xff]
  %v366 = vld [vmem:[%s3 + $0x170] sm:$0xff]
  %v367 = vld [vmem:[%s3 + $0x178] sm:$0xff]
  %v368 = vld [vmem:[%s3 + $0x180] sm:$0xff]
  %v369 = vld [vmem:[%s3 + $0x188] sm:$0xff]
  %v370 = vld [vmem:[%s3 + $0x190] sm:$0xff]
  %v371 = vld [vmem:[%s3 + $0x198] sm:$0xff]
  %v372 = vld [vmem:[%s3 + $0x1a0] sm:$0xff]
  %v373 = vld [vmem:[%s3 + $0x1a8] sm:$0xff]
  %v374 = vld [vmem:[%s3 + $0x1b0] sm:$0xff]
  %v375 = vld [vmem:[%s3 + $0x1b8] sm:$0xff]
  %v376 = vld [vmem:[%s3 + $0x1c0] sm:$0xff]
  %v377 = vld [vmem:[%s3 + $0x1c8] sm:$0xff]
  %v378 = vld [vmem:[%s3 + $0x1d0] sm:$0xff]
  %v379 = vld [vmem:[%s3 + $0x1d8] sm:$0xff]
  %v380 = vld [vmem:[%s3 + $0x1e0] sm:$0xff]
  %v381 = vld [vmem:[%s3 + $0x1e8] sm:$0xff]
  %v382 = vld [vmem:[%s3 + $0x1f0] sm:$0xff]
  %v383 = vld [vmem:[%s3 + $0x1f8] sm:$0xff]
  %v384 = vld [vmem:[%s3 + $0x200] sm:$0xff]
  %v385 = vld [vmem:[%s3 + $0x208] sm:$0xff]
  %v386 = vld [vmem:[%s3 + $0x210] sm:$0xff]
  %v387 = vld [vmem:[%s3 + $0x218] sm:$0xff]
  %v388 = vld [vmem:[%s3 + $0x220] sm:$0xff]
  %v389 = vld [vmem:[%s3 + $0x228] sm:$0xff]
  %v390 = vld [vmem:[%s3 + $0x230] sm:$0xff]
  %v391 = vld [vmem:[%s3 + $0x238] sm:$0xff]
  %v392 = vld [vmem:[%s3 + $0x240] sm:$0xff]
  %v393 = vld [vmem:[%s3 + $0x248] sm:$0xff]
  %v394 = vld [vmem:[%s3 + $0x250] sm:$0xff]
  %v395 = vld [vmem:[%s3 + $0x258] sm:$0xff]
  %v396 = vld [vmem:[%s3 + $0x260] sm:$0xff]
  %v397 = vld [vmem:[%s3 + $0x268] sm:$0xff]
  %v398 = vld [vmem:[%s3 + $0x270] sm:$0xff]
  %v399 = vld [vmem:[%s3 + $0x278] sm:$0xff]
  %v400 = vld [vmem:[%s3 + $0x280] sm:$0xff]
  %v401 = vld [vmem:[%s3 + $0x288] sm:$0xff]
  %v402 = vld [vmem:[%s3 + $0x290] sm:$0xff]
  %v403 = vld [vmem:[%s3 + $0x298] sm:$0xff]
  %v404 = vld [vmem:[%s3 + $0x2a0] sm:$0xff]
  %v405 = vld [vmem:[%s3 + $0x2a8] sm:$0xff]
  %v406 = vld [vmem:[%s3 + $0x2b0] sm:$0xff]
  %v407 = vld [vmem:[%s3 + $0x2b8] sm:$0xff]
  %v408 = vld [vmem:[%s3 + $0x2c0] sm:$0xff]
  %v409 = vld [vmem:[%s3 + $0x2c8] sm:$0xff]
  %v410 = vld [vmem:[%s3 + $0x2d0] sm:$0xff]
  %v411 = vld [vmem:[%s3 + $0x2d8] sm:$0xff]
  %v412 = vld [vmem:[%s3 + $0x2e0] sm:$0xff]
  %v413 = vld [vmem:[%s3 + $0x2e8] sm:$0xff]
  %v414 = vld [vmem:[%s3 + $0x2f0] sm:$0xff]
  %v415 = vld [vmem:[%s3 + $0x2f8] sm:$0xff]
  %v416 = vld [vmem:[%s3 + $0x300] sm:$0xff]
  %v417 = vld [vmem:[%s3 + $0x308] sm:$0xff]
  %v418 = vld [vmem:[%s3 + $0x310] sm:$0xff]
  %v419 = vld [vmem:[%s3 + $0x318] sm:$0xff]
  %v420 = vld [vmem:[%s3 + $0x320] sm:$0xff]
  %v421 = vld [vmem:[%s3 + $0x328] sm:$0xff]
  %v422 = vld [vmem:[%s3 + $0x330] sm:$0xff]
  %v423 = vld [vmem:[%s3 + $0x338] sm:$0xff]
  %v424 = vld [vmem:[%s3 + $0x340] sm:$0xff]
  %v425 = vld [vmem:[%s3 + $0x348] sm:$0xff]
  %v426 = vld [vmem:[%s3 + $0x350] sm:$0xff]
  %v427 = vld [vmem:[%s3 + $0x358] sm:$0xff]
  %v428 = vld [vmem:[%s3 + $0x360] sm:$0xff]
  %v429 = vld [vmem:[%s3 + $0x368] sm:$0xff]
  %v430 = vld [vmem:[%s3 + $0x370] sm:$0xff]
  %v431 = vld [vmem:[%s3 + $0x378] sm:$0xff]
  %v432 = vld [vmem:[%s3 + $0x380] sm:$0xff]
  %v433 = vld [vmem:[%s3 + $0x388] sm:$0xff]
  %v434 = vld [vmem:[%s3 + $0x390] sm:$0xff]
  %v435 = vld [vmem:[%s3 + $0x398] sm:$0xff]
  %v436 = vld [vmem:[%s3 + $0x3a0] sm:$0xff]
  %v437 = vld [vmem:[%s3 + $0x3a8] sm:$0xff]
  %v438 = vld [vmem:[%s3 + $0x3b0] sm:$0xff]
  %v439 = vld [vmem:[%s3 + $0x3b8] sm:$0xff]
  %v440 = vld [vmem:[%s3 + $0x3c0] sm:$0xff]
  %v441 = vld [vmem:[%s3 + $0x3c8] sm:$0xff]
  %v442 = vld [vmem:[%s3 + $0x3d0] sm:$0xff]
  %v443 = vld [vmem:[%s3 + $0x3d8] sm:$0xff]
  %v444 = vld [vmem:[%s3 + $0x3e0] sm:$0xff]
  %v445 = vld [vmem:[%s3 + $0x3e8] sm:$0xff]
  %v446 = vld [vmem:[%s3 + $0x3f0] sm:$0xff]
  %v447 = vld [vmem:[%s3 + $0x3f8] sm:$0xff]
  %v448 = vld [vmem:[%s4] sm:$0xf]
  %v450 = vlaneseq
  %v451 = vshrl.u32 %v450, 7
  %v452 = vsub.s32 0, %v451
  %v453 = vrot.slane %v448, %v452
  %v454 = vlaneseq
  %v455 = vshrl.u32 %v454, 7
  %v456 = vsub.s32 1, %v455
  %v457 = vrot.slane %v448, %v456
  %v458 = vlaneseq
  %v459 = vshrl.u32 %v458, 7
  %v460 = vsub.s32 2, %v459
  %v461 = vrot.slane %v448, %v460
  %v462 = vlaneseq
  %v463 = vshrl.u32 %v462, 7
  %v464 = vsub.s32 3, %v463
  %v465 = vrot.slane %v448, %v464
  %v478 = vunpack.c.l.b16 %v312
  %v479 = vunpack.c.l.b16 %v313
  %v480 = vunpack.c.l.b16 %v314
  %v481 = vunpack.c.l.b16 %v315
  %v482 = vunpack.c.l.b16 %v316
  %v483 = vunpack.c.l.b16 %v317
  %v484 = vunpack.c.l.b16 %v318
  %v485 = vunpack.c.l.b16 %v319
  %v486 = vrot.slane %v482, 7
  %v487 = vsel %vm170, %v486, %v478
  %v488 = vrot.slane %v483, 7
  %v489 = vsel %vm170, %v488, %v479
  %v490 = vrot.slane %v484, 7
  %v491 = vsel %vm170, %v490, %v480
  %v492 = vrot.slane %v485, 7
  %v493 = vsel %vm170, %v492, %v481
  %v494 = vpack.c.b16 %v487, %v487
  %v495 = vpack.c.b16 %v489, %v489
  %v496 = vpack.c.b16 %v491, %v491
  %v497 = vpack.c.b16 %v493, %v493
  %v630 = vunpack.c.l.b16 %v320
  %v631 = vunpack.c.h.b16 %v320
  %v632 = vunpack.c.l.b16 %v321
  %v633 = vunpack.c.h.b16 %v321
  %v634 = vunpack.c.l.b16 %v322
  %v635 = vunpack.c.h.b16 %v322
  %v636 = vunpack.c.l.b16 %v323
  %v637 = vunpack.c.h.b16 %v323
  %v638 = vunpack.c.l.b16 %v324
  %v639 = vunpack.c.h.b16 %v324
  %v640 = vunpack.c.l.b16 %v325
  %v641 = vunpack.c.h.b16 %v325
  %v642 = vunpack.c.l.b16 %v326
  %v643 = vunpack.c.h.b16 %v326
  %v644 = vunpack.c.l.b16 %v327
  %v645 = vunpack.c.h.b16 %v327
  %v646 = vunpack.c.l.b16 %v328
  %v647 = vunpack.c.h.b16 %v328
  %v648 = vunpack.c.l.b16 %v329
  %v649 = vunpack.c.h.b16 %v329
  %v650 = vunpack.c.l.b16 %v330
  %v651 = vunpack.c.h.b16 %v330
  %v652 = vunpack.c.l.b16 %v331
  %v653 = vunpack.c.h.b16 %v331
  %v654 = vunpack.c.l.b16 %v332
  %v655 = vunpack.c.h.b16 %v332
  %v656 = vunpack.c.l.b16 %v333
  %v657 = vunpack.c.h.b16 %v333
  %v658 = vunpack.c.l.b16 %v334
  %v659 = vunpack.c.h.b16 %v334
  %v660 = vunpack.c.l.b16 %v335
  %v661 = vunpack.c.h.b16 %v335
  %v662 = vunpack.c.l.b16 %v336
  %v663 = vunpack.c.h.b16 %v336
  %v664 = vunpack.c.l.b16 %v337
  %v665 = vunpack.c.h.b16 %v337
  %v666 = vunpack.c.l.b16 %v338
  %v667 = vunpack.c.h.b16 %v338
  %v668 = vunpack.c.l.b16 %v339
  %v669 = vunpack.c.h.b16 %v339
  %v670 = vunpack.c.l.b16 %v340
  %v671 = vunpack.c.h.b16 %v340
  %v672 = vunpack.c.l.b16 %v341
  %v673 = vunpack.c.h.b16 %v341
  %v674 = vunpack.c.l.b16 %v342
  %v675 = vunpack.c.h.b16 %v342
  %v676 = vunpack.c.l.b16 %v343
  %v677 = vunpack.c.h.b16 %v343
  %v678 = vunpack.c.l.b16 %v344
  %v679 = vunpack.c.h.b16 %v344
  %v680 = vunpack.c.l.b16 %v345
  %v681 = vunpack.c.h.b16 %v345
  %v682 = vunpack.c.l.b16 %v346
  %v683 = vunpack.c.h.b16 %v346
  %v684 = vunpack.c.l.b16 %v347
  %v685 = vunpack.c.h.b16 %v347
  %v686 = vunpack.c.l.b16 %v348
  %v687 = vunpack.c.h.b16 %v348
  %v688 = vunpack.c.l.b16 %v349
  %v689 = vunpack.c.h.b16 %v349
  %v690 = vunpack.c.l.b16 %v350
  %v691 = vunpack.c.h.b16 %v350
  %v692 = vunpack.c.l.b16 %v351
  %v693 = vunpack.c.h.b16 %v351
  %v694 = vunpack.c.l.b16 %v352
  %v695 = vunpack.c.h.b16 %v352
  %v696 = vunpack.c.l.b16 %v353
  %v697 = vunpack.c.h.b16 %v353
  %v698 = vunpack.c.l.b16 %v354
  %v699 = vunpack.c.h.b16 %v354
  %v700 = vunpack.c.l.b16 %v355
  %v701 = vunpack.c.h.b16 %v355
  %v702 = vunpack.c.l.b16 %v356
  %v703 = vunpack.c.h.b16 %v356
  %v704 = vunpack.c.l.b16 %v357
  %v705 = vunpack.c.h.b16 %v357
  %v706 = vunpack.c.l.b16 %v358
  %v707 = vunpack.c.h.b16 %v358
  %v708 = vunpack.c.l.b16 %v359
  %v709 = vunpack.c.h.b16 %v359
  %v710 = vunpack.c.l.b16 %v360
  %v711 = vunpack.c.h.b16 %v360
  %v712 = vunpack.c.l.b16 %v361
  %v713 = vunpack.c.h.b16 %v361
  %v714 = vunpack.c.l.b16 %v362
  %v715 = vunpack.c.h.b16 %v362
  %v716 = vunpack.c.l.b16 %v363
  %v717 = vunpack.c.h.b16 %v363
  %v718 = vunpack.c.l.b16 %v364
  %v719 = vunpack.c.h.b16 %v364
  %v720 = vunpack.c.l.b16 %v365
  %v721 = vunpack.c.h.b16 %v365
  %v722 = vunpack.c.l.b16 %v366
  %v723 = vunpack.c.h.b16 %v366
  %v724 = vunpack.c.l.b16 %v367
  %v725 = vunpack.c.h.b16 %v367
  %v726 = vunpack.c.l.b16 %v368
  %v727 = vunpack.c.h.b16 %v368
  %v728 = vunpack.c.l.b16 %v369
  %v729 = vunpack.c.h.b16 %v369
  %v730 = vunpack.c.l.b16 %v370
  %v731 = vunpack.c.h.b16 %v370
  %v732 = vunpack.c.l.b16 %v371
  %v733 = vunpack.c.h.b16 %v371
  %v734 = vunpack.c.l.b16 %v372
  %v735 = vunpack.c.h.b16 %v372
  %v736 = vunpack.c.l.b16 %v373
  %v737 = vunpack.c.h.b16 %v373
  %v738 = vunpack.c.l.b16 %v374
  %v739 = vunpack.c.h.b16 %v374
  %v740 = vunpack.c.l.b16 %v375
  %v741 = vunpack.c.h.b16 %v375
  %v742 = vunpack.c.l.b16 %v376
  %v743 = vunpack.c.h.b16 %v376
  %v744 = vunpack.c.l.b16 %v377
  %v745 = vunpack.c.h.b16 %v377
  %v746 = vunpack.c.l.b16 %v378
  %v747 = vunpack.c.h.b16 %v378
  %v748 = vunpack.c.l.b16 %v379
  %v749 = vunpack.c.h.b16 %v379
  %v750 = vunpack.c.l.b16 %v380
  %v751 = vunpack.c.h.b16 %v380
  %v752 = vunpack.c.l.b16 %v381
  %v753 = vunpack.c.h.b16 %v381
  %v754 = vunpack.c.l.b16 %v382
  %v755 = vunpack.c.h.b16 %v382
  %v756 = vunpack.c.l.b16 %v383
  %v757 = vunpack.c.h.b16 %v383
  %v758 = vunpack.c.l.b16 %v384
  %v759 = vunpack.c.h.b16 %v384
  %v760 = vunpack.c.l.b16 %v385
  %v761 = vunpack.c.h.b16 %v385
  %v762 = vunpack.c.l.b16 %v386
  %v763 = vunpack.c.h.b16 %v386
  %v764 = vunpack.c.l.b16 %v387
  %v765 = vunpack.c.h.b16 %v387
  %v766 = vunpack.c.l.b16 %v388
  %v767 = vunpack.c.h.b16 %v388
  %v768 = vunpack.c.l.b16 %v389
  %v769 = vunpack.c.h.b16 %v389
  %v770 = vunpack.c.l.b16 %v390
  %v771 = vunpack.c.h.b16 %v390
  %v772 = vunpack.c.l.b16 %v391
  %v773 = vunpack.c.h.b16 %v391
  %v774 = vunpack.c.l.b16 %v392
  %v775 = vunpack.c.h.b16 %v392
  %v776 = vunpack.c.l.b16 %v393
  %v777 = vunpack.c.h.b16 %v393
  %v778 = vunpack.c.l.b16 %v394
  %v779 = vunpack.c.h.b16 %v394
  %v780 = vunpack.c.l.b16 %v395
  %v781 = vunpack.c.h.b16 %v395
  %v782 = vunpack.c.l.b16 %v396
  %v783 = vunpack.c.h.b16 %v396
  %v784 = vunpack.c.l.b16 %v397
  %v785 = vunpack.c.h.b16 %v397
  %v786 = vunpack.c.l.b16 %v398
  %v787 = vunpack.c.h.b16 %v398
  %v788 = vunpack.c.l.b16 %v399
  %v789 = vunpack.c.h.b16 %v399
  %v790 = vunpack.c.l.b16 %v400
  %v791 = vunpack.c.h.b16 %v400
  %v792 = vunpack.c.l.b16 %v401
  %v793 = vunpack.c.h.b16 %v401
  %v794 = vunpack.c.l.b16 %v402
  %v795 = vunpack.c.h.b16 %v402
  %v796 = vunpack.c.l.b16 %v403
  %v797 = vunpack.c.h.b16 %v403
  %v798 = vunpack.c.l.b16 %v404
  %v799 = vunpack.c.h.b16 %v404
  %v800 = vunpack.c.l.b16 %v405
  %v801 = vunpack.c.h.b16 %v405
  %v802 = vunpack.c.l.b16 %v406
  %v803 = vunpack.c.h.b16 %v406
  %v804 = vunpack.c.l.b16 %v407
  %v805 = vunpack.c.h.b16 %v407
  %v806 = vunpack.c.l.b16 %v408
  %v807 = vunpack.c.h.b16 %v408
  %v808 = vunpack.c.l.b16 %v409
  %v809 = vunpack.c.h.b16 %v409
  %v810 = vunpack.c.l.b16 %v410
  %v811 = vunpack.c.h.b16 %v410
  %v812 = vunpack.c.l.b16 %v411
  %v813 = vunpack.c.h.b16 %v411
  %v814 = vunpack.c.l.b16 %v412
  %v815 = vunpack.c.h.b16 %v412
  %v816 = vunpack.c.l.b16 %v413
  %v817 = vunpack.c.h.b16 %v413
  %v818 = vunpack.c.l.b16 %v414
  %v819 = vunpack.c.h.b16 %v414
  %v820 = vunpack.c.l.b16 %v415
  %v821 = vunpack.c.h.b16 %v415
  %v822 = vunpack.c.l.b16 %v416
  %v823 = vunpack.c.h.b16 %v416
  %v824 = vunpack.c.l.b16 %v417
  %v825 = vunpack.c.h.b16 %v417
  %v826 = vunpack.c.l.b16 %v418
  %v827 = vunpack.c.h.b16 %v418
  %v828 = vunpack.c.l.b16 %v419
  %v829 = vunpack.c.h.b16 %v419
  %v830 = vunpack.c.l.b16 %v420
  %v831 = vunpack.c.h.b16 %v420
  %v832 = vunpack.c.l.b16 %v421
  %v833 = vunpack.c.h.b16 %v421
  %v834 = vunpack.c.l.b16 %v422
  %v835 = vunpack.c.h.b16 %v422
  %v836 = vunpack.c.l.b16 %v423
  %v837 = vunpack.c.h.b16 %v423
  %v838 = vunpack.c.l.b16 %v424
  %v839 = vunpack.c.h.b16 %v424
  %v840 = vunpack.c.l.b16 %v425
  %v841 = vunpack.c.h.b16 %v425
  %v842 = vunpack.c.l.b16 %v426
  %v843 = vunpack.c.h.b16 %v426
  %v844 = vunpack.c.l.b16 %v427
  %v845 = vunpack.c.h.b16 %v427
  %v846 = vunpack.c.l.b16 %v428
  %v847 = vunpack.c.h.b16 %v428
  %v848 = vunpack.c.l.b16 %v429
  %v849 = vunpack.c.h.b16 %v429
  %v850 = vunpack.c.l.b16 %v430
  %v851 = vunpack.c.h.b16 %v430
  %v852 = vunpack.c.l.b16 %v431
  %v853 = vunpack.c.h.b16 %v431
  %v854 = vunpack.c.l.b16 %v432
  %v855 = vunpack.c.h.b16 %v432
  %v856 = vunpack.c.l.b16 %v433
  %v857 = vunpack.c.h.b16 %v433
  %v858 = vunpack.c.l.b16 %v434
  %v859 = vunpack.c.h.b16 %v434
  %v860 = vunpack.c.l.b16 %v435
  %v861 = vunpack.c.h.b16 %v435
  %v862 = vunpack.c.l.b16 %v436
  %v863 = vunpack.c.h.b16 %v436
  %v864 = vunpack.c.l.b16 %v437
  %v865 = vunpack.c.h.b16 %v437
  %v866 = vunpack.c.l.b16 %v438
  %v867 = vunpack.c.h.b16 %v438
  %v868 = vunpack.c.l.b16 %v439
  %v869 = vunpack.c.h.b16 %v439
  %v870 = vunpack.c.l.b16 %v440
  %v871 = vunpack.c.h.b16 %v440
  %v872 = vunpack.c.l.b16 %v441
  %v873 = vunpack.c.h.b16 %v441
  %v874 = vunpack.c.l.b16 %v442
  %v875 = vunpack.c.h.b16 %v442
  %v876 = vunpack.c.l.b16 %v443
  %v877 = vunpack.c.h.b16 %v443
  %v878 = vunpack.c.l.b16 %v444
  %v879 = vunpack.c.h.b16 %v444
  %v880 = vunpack.c.l.b16 %v445
  %v881 = vunpack.c.h.b16 %v445
  %v882 = vunpack.c.l.b16 %v446
  %v883 = vunpack.c.h.b16 %v446
  %v884 = vunpack.c.l.b16 %v447
  %v885 = vunpack.c.h.b16 %v447
  %v886 = vpack.c.b16 %v634, %v630
  %v887 = vpack.c.b16 %v635, %v631
  %v888 = vpack.c.b16 %v636, %v632
  %v889 = vpack.c.b16 %v637, %v633
  %v890 = vpack.c.b16 %v642, %v638
  %v891 = vpack.c.b16 %v643, %v639
  %v892 = vpack.c.b16 %v644, %v640
  %v893 = vpack.c.b16 %v645, %v641
  %v894 = vpack.c.b16 %v650, %v646
  %v895 = vpack.c.b16 %v651, %v647
  %v896 = vpack.c.b16 %v652, %v648
  %v897 = vpack.c.b16 %v653, %v649
  %v898 = vpack.c.b16 %v658, %v654
  %v899 = vpack.c.b16 %v659, %v655
  %v900 = vpack.c.b16 %v660, %v656
  %v901 = vpack.c.b16 %v661, %v657
  %v902 = vpack.c.b16 %v666, %v662
  %v903 = vpack.c.b16 %v667, %v663
  %v904 = vpack.c.b16 %v668, %v664
  %v905 = vpack.c.b16 %v669, %v665
  %v906 = vpack.c.b16 %v674, %v670
  %v907 = vpack.c.b16 %v675, %v671
  %v908 = vpack.c.b16 %v676, %v672
  %v909 = vpack.c.b16 %v677, %v673
  %v910 = vpack.c.b16 %v682, %v678
  %v911 = vpack.c.b16 %v683, %v679
  %v912 = vpack.c.b16 %v684, %v680
  %v913 = vpack.c.b16 %v685, %v681
  %v914 = vpack.c.b16 %v690, %v686
  %v915 = vpack.c.b16 %v691, %v687
  %v916 = vpack.c.b16 %v692, %v688
  %v917 = vpack.c.b16 %v693, %v689
  %v918 = vpack.c.b16 %v698, %v694
  %v919 = vpack.c.b16 %v699, %v695
  %v920 = vpack.c.b16 %v700, %v696
  %v921 = vpack.c.b16 %v701, %v697
  %v922 = vpack.c.b16 %v706, %v702
  %v923 = vpack.c.b16 %v707, %v703
  %v924 = vpack.c.b16 %v708, %v704
  %v925 = vpack.c.b16 %v709, %v705
  %v926 = vpack.c.b16 %v714, %v710
  %v927 = vpack.c.b16 %v715, %v711
  %v928 = vpack.c.b16 %v716, %v712
  %v929 = vpack.c.b16 %v717, %v713
  %v930 = vpack.c.b16 %v722, %v718
  %v931 = vpack.c.b16 %v723, %v719
  %v932 = vpack.c.b16 %v724, %v720
  %v933 = vpack.c.b16 %v725, %v721
  %v934 = vpack.c.b16 %v730, %v726
  %v935 = vpack.c.b16 %v731, %v727
  %v936 = vpack.c.b16 %v732, %v728
  %v937 = vpack.c.b16 %v733, %v729
  %v938 = vpack.c.b16 %v738, %v734
  %v939 = vpack.c.b16 %v739, %v735
  %v940 = vpack.c.b16 %v740, %v736
  %v941 = vpack.c.b16 %v741, %v737
  %v942 = vpack.c.b16 %v746, %v742
  %v943 = vpack.c.b16 %v747, %v743
  %v944 = vpack.c.b16 %v748, %v744
  %v945 = vpack.c.b16 %v749, %v745
  %v946 = vpack.c.b16 %v754, %v750
  %v947 = vpack.c.b16 %v755, %v751
  %v948 = vpack.c.b16 %v756, %v752
  %v949 = vpack.c.b16 %v757, %v753
  %v950 = vpack.c.b16 %v762, %v758
  %v951 = vpack.c.b16 %v763, %v759
  %v952 = vpack.c.b16 %v764, %v760
  %v953 = vpack.c.b16 %v765, %v761
  %v954 = vpack.c.b16 %v770, %v766
  %v955 = vpack.c.b16 %v771, %v767
  %v956 = vpack.c.b16 %v772, %v768
  %v957 = vpack.c.b16 %v773, %v769
  %v958 = vpack.c.b16 %v778, %v774
  %v959 = vpack.c.b16 %v779, %v775
  %v960 = vpack.c.b16 %v780, %v776
  %v961 = vpack.c.b16 %v781, %v777
  %v962 = vpack.c.b16 %v786, %v782
  %v963 = vpack.c.b16 %v787, %v783
  %v964 = vpack.c.b16 %v788, %v784
  %v965 = vpack.c.b16 %v789, %v785
  %v966 = vpack.c.b16 %v794, %v790
  %v967 = vpack.c.b16 %v795, %v791
  %v968 = vpack.c.b16 %v796, %v792
  %v969 = vpack.c.b16 %v797, %v793
  %v970 = vpack.c.b16 %v802, %v798
  %v971 = vpack.c.b16 %v803, %v799
  %v972 = vpack.c.b16 %v804, %v800
  %v973 = vpack.c.b16 %v805, %v801
  %v974 = vpack.c.b16 %v810, %v806
  %v975 = vpack.c.b16 %v811, %v807
  %v976 = vpack.c.b16 %v812, %v808
  %v977 = vpack.c.b16 %v813, %v809
  %v978 = vpack.c.b16 %v818, %v814
  %v979 = vpack.c.b16 %v819, %v815
  %v980 = vpack.c.b16 %v820, %v816
  %v981 = vpack.c.b16 %v821, %v817
  %v982 = vpack.c.b16 %v826, %v822
  %v983 = vpack.c.b16 %v827, %v823
  %v984 = vpack.c.b16 %v828, %v824
  %v985 = vpack.c.b16 %v829, %v825
  %v986 = vpack.c.b16 %v834, %v830
  %v987 = vpack.c.b16 %v835, %v831
  %v988 = vpack.c.b16 %v836, %v832
  %v989 = vpack.c.b16 %v837, %v833
  %v990 = vpack.c.b16 %v842, %v838
  %v991 = vpack.c.b16 %v843, %v839
  %v992 = vpack.c.b16 %v844, %v840
  %v993 = vpack.c.b16 %v845, %v841
  %v994 = vpack.c.b16 %v850, %v846
  %v995 = vpack.c.b16 %v851, %v847
  %v996 = vpack.c.b16 %v852, %v848
  %v997 = vpack.c.b16 %v853, %v849
  %v998 = vpack.c.b16 %v858, %v854
  %v999 = vpack.c.b16 %v859, %v855
  %v1000 = vpack.c.b16 %v860, %v856
  %v1001 = vpack.c.b16 %v861, %v857
  %v1002 = vpack.c.b16 %v866, %v862
  %v1003 = vpack.c.b16 %v867, %v863
  %v1004 = vpack.c.b16 %v868, %v864
  %v1005 = vpack.c.b16 %v869, %v865
  %v1006 = vpack.c.b16 %v874, %v870
  %v1007 = vpack.c.b16 %v875, %v871
  %v1008 = vpack.c.b16 %v876, %v872
  %v1009 = vpack.c.b16 %v877, %v873
  %v1010 = vpack.c.b16 %v882, %v878
  %v1011 = vpack.c.b16 %v883, %v879
  %v1012 = vpack.c.b16 %v884, %v880
  %v1013 = vpack.c.b16 %v885, %v881
  %1142 = vmatprep.subr.bf16.mxu0 %v887
  %1143 = vmatpush1.bf16.msra.mxu0 %v886
  %1144 = vmatprep.subr.bf16.mxu0 %v891
  %1145 = vmatpush1.bf16.msra.mxu0 %v890
  %1146 = vmatprep.subr.bf16.mxu0 %v895
  %1147 = vmatpush1.bf16.msra.mxu0 %v894
  %1148 = vmatprep.subr.bf16.mxu0 %v899
  %1149 = vmatpush1.bf16.msra.mxu0 %v898
  %1150 = vmatprep.subr.bf16.mxu0 %v903
  %1151 = vmatpush1.bf16.msra.mxu0 %v902
  %1152 = vmatprep.subr.bf16.mxu0 %v907
  %1153 = vmatpush1.bf16.msra.mxu0 %v906
  %1154 = vmatprep.subr.bf16.mxu0 %v911
  %1155 = vmatpush1.bf16.msra.mxu0 %v910
  %1156 = vmatprep.subr.bf16.mxu0 %v915
  %1157 = vmatpush1.bf16.msra.mxu0 %v914
  %1158 = vmatprep.subr.bf16.mxu0 %v919
  %1159 = vmatpush1.bf16.msra.mxu0 %v918
  %1160 = vmatprep.subr.bf16.mxu0 %v923
  %1161 = vmatpush1.bf16.msra.mxu0 %v922
  %1162 = vmatprep.subr.bf16.mxu0 %v927
  %1163 = vmatpush1.bf16.msra.mxu0 %v926
  %1164 = vmatprep.subr.bf16.mxu0 %v931
  %1165 = vmatpush1.bf16.msra.mxu0 %v930
  %1166 = vmatprep.subr.bf16.mxu0 %v935
  %1167 = vmatpush1.bf16.msra.mxu0 %v934
  %1168 = vmatprep.subr.bf16.mxu0 %v939
  %1169 = vmatpush1.bf16.msra.mxu0 %v938
  %1170 = vmatprep.subr.bf16.mxu0 %v943
  %1171 = vmatpush1.bf16.msra.mxu0 %v942
  %1172 = vmatprep.subr.bf16.mxu0 %v947
  %1173 = vmatpush1.bf16.msra.mxu0 %v946
  %1174 = vmatprep.mubr.bf16.mxu0 %v495
  %1175 = vmatmul.mubr.bf16.gmra.mrb[0].mxu0 %v494
  %v1176 = vpop.f32.mrb[0].mxu0
  %v1177 = vadd.f32 %v453, %v1176
  %v1178 = vpop.f32.mrb[0].mxu0
  %v1179 = vadd.f32 %v457, %v1178
  %v1180 = vpop.f32.mrb[0].mxu0
  %v1181 = vpop.f32.mrb[0].mxu0
  %1182 = vdwg.mxu0
  %1183 = vmatprep.subr.bf16.mxu0 %v951
  %1184 = vmatpush1.bf16.msra.mxu0 %v950
  %1185 = vmatprep.subr.bf16.mxu0 %v955
  %1186 = vmatpush1.bf16.msra.mxu0 %v954
  %1187 = vmatprep.subr.bf16.mxu0 %v959
  %1188 = vmatpush1.bf16.msra.mxu0 %v958
  %1189 = vmatprep.subr.bf16.mxu0 %v963
  %1190 = vmatpush1.bf16.msra.mxu0 %v962
  %1191 = vmatprep.subr.bf16.mxu0 %v967
  %1192 = vmatpush1.bf16.msra.mxu0 %v966
  %1193 = vmatprep.subr.bf16.mxu0 %v971
  %1194 = vmatpush1.bf16.msra.mxu0 %v970
  %1195 = vmatprep.subr.bf16.mxu0 %v975
  %1196 = vmatpush1.bf16.msra.mxu0 %v974
  %1197 = vmatprep.subr.bf16.mxu0 %v979
  %1198 = vmatpush1.bf16.msra.mxu0 %v978
  %1199 = vmatprep.subr.bf16.mxu0 %v983
  %1200 = vmatpush1.bf16.msra.mxu0 %v982
  %1201 = vmatprep.subr.bf16.mxu0 %v987
  %1202 = vmatpush1.bf16.msra.mxu0 %v986
  %1203 = vmatprep.subr.bf16.mxu0 %v991
  %1204 = vmatpush1.bf16.msra.mxu0 %v990
  %1205 = vmatprep.subr.bf16.mxu0 %v995
  %1206 = vmatpush1.bf16.msra.mxu0 %v994
  %1207 = vmatprep.subr.bf16.mxu0 %v999
  %1208 = vmatpush1.bf16.msra.mxu0 %v998
  %1209 = vmatprep.subr.bf16.mxu0 %v1003
  %1210 = vmatpush1.bf16.msra.mxu0 %v1002
  %1211 = vmatprep.subr.bf16.mxu0 %v1007
  %1212 = vmatpush1.bf16.msra.mxu0 %v1006
  %1213 = vmatprep.subr.bf16.mxu0 %v1011
  %1214 = vmatpush1.bf16.msra.mxu0 %v1010
  %1215 = vmatprep.mubr.bf16.mxu0 %v497
  %1216 = vmatmul.mubr.bf16.gmra.mrb[0].mxu0 %v496
  %v1217 = vpop.f32.mrb[0].mxu0
  %v1218 = vadd.f32 %v1177, %v1217
  %v1219 = vpop.f32.mrb[0].mxu0
  %v1220 = vadd.f32 %v1179, %v1219
  %v1221 = vpop.f32.mrb[0].mxu0
  %v1222 = vpop.f32.mrb[0].mxu0
  %1223 = vdwg.mxu0
  %1224 = vmatprep.subr.bf16.mxu0 %v889
  %1225 = vmatpush1.bf16.msra.mxu0 %v888
  %1226 = vmatprep.subr.bf16.mxu0 %v893
  %1227 = vmatpush1.bf16.msra.mxu0 %v892
  %1228 = vmatprep.subr.bf16.mxu0 %v897
  %1229 = vmatpush1.bf16.msra.mxu0 %v896
  %1230 = vmatprep.subr.bf16.mxu0 %v901
  %1231 = vmatpush1.bf16.msra.mxu0 %v900
  %1232 = vmatprep.subr.bf16.mxu0 %v905
  %1233 = vmatpush1.bf16.msra.mxu0 %v904
  %1234 = vmatprep.subr.bf16.mxu0 %v909
  %1235 = vmatpush1.bf16.msra.mxu0 %v908
  %1236 = vmatprep.subr.bf16.mxu0 %v913
  %1237 = vmatpush1.bf16.msra.mxu0 %v912
  %1238 = vmatprep.subr.bf16.mxu0 %v917
  %1239 = vmatpush1.bf16.msra.mxu0 %v916
  %1240 = vmatprep.subr.bf16.mxu0 %v921
  %1241 = vmatpush1.bf16.msra.mxu0 %v920
  %1242 = vmatprep.subr.bf16.mxu0 %v925
  %1243 = vmatpush1.bf16.msra.mxu0 %v924
  %1244 = vmatprep.subr.bf16.mxu0 %v929
  %1245 = vmatpush1.bf16.msra.mxu0 %v928
  %1246 = vmatprep.subr.bf16.mxu0 %v933
  %1247 = vmatpush1.bf16.msra.mxu0 %v932
  %1248 = vmatprep.subr.bf16.mxu0 %v937
  %1249 = vmatpush1.bf16.msra.mxu0 %v936
  %1250 = vmatprep.subr.bf16.mxu0 %v941
  %1251 = vmatpush1.bf16.msra.mxu0 %v940
  %1252 = vmatprep.subr.bf16.mxu0 %v945
  %1253 = vmatpush1.bf16.msra.mxu0 %v944
  %1254 = vmatprep.subr.bf16.mxu0 %v949
  %1255 = vmatpush1.bf16.msra.mxu0 %v948
  %1256 = vmatprep.mubr.bf16.mxu0 %v495
  %1257 = vmatmul.mubr.bf16.gmra.mrb[0].mxu0 %v494
  %v1258 = vpop.f32.mrb[0].mxu0
  %v1259 = vadd.f32 %v461, %v1258
  %v1260 = vpop.f32.mrb[0].mxu0
  %v1261 = vadd.f32 %v465, %v1260
  %v1262 = vpop.f32.mrb[0].mxu0
  %v1263 = vpop.f32.mrb[0].mxu0
  %1264 = vdwg.mxu0
  %1265 = vmatprep.subr.bf16.mxu0 %v953
  %1266 = vmatpush1.bf16.msra.mxu0 %v952
  %1267 = vmatprep.subr.bf16.mxu0 %v957
  %1268 = vmatpush1.bf16.msra.mxu0 %v956
  %1269 = vmatprep.subr.bf16.mxu0 %v961
  %1270 = vmatpush1.bf16.msra.mxu0 %v960
  %1271 = vmatprep.subr.bf16.mxu0 %v965
  %1272 = vmatpush1.bf16.msra.mxu0 %v964
  %1273 = vmatprep.subr.bf16.mxu0 %v969
  %1274 = vmatpush1.bf16.msra.mxu0 %v968
  %1275 = vmatprep.subr.bf16.mxu0 %v973
  %1276 = vmatpush1.bf16.msra.mxu0 %v972
  %1277 = vmatprep.subr.bf16.mxu0 %v977
  %1278 = vmatpush1.bf16.msra.mxu0 %v976
  %1279 = vmatprep.subr.bf16.mxu0 %v981
  %1280 = vmatpush1.bf16.msra.mxu0 %v980
  %1281 = vmatprep.subr.bf16.mxu0 %v985
  %1282 = vmatpush1.bf16.msra.mxu0 %v984
  %1283 = vmatprep.subr.bf16.mxu0 %v989
  %1284 = vmatpush1.bf16.msra.mxu0 %v988
  %1285 = vmatprep.subr.bf16.mxu0 %v993
  %1286 = vmatpush1.bf16.msra.mxu0 %v992
  %1287 = vmatprep.subr.bf16.mxu0 %v997
  %1288 = vmatpush1.bf16.msra.mxu0 %v996
  %1289 = vmatprep.subr.bf16.mxu0 %v1001
  %1290 = vmatpush1.bf16.msra.mxu0 %v1000
  %1291 = vmatprep.subr.bf16.mxu0 %v1005
  %1292 = vmatpush1.bf16.msra.mxu0 %v1004
  %1293 = vmatprep.subr.bf16.mxu0 %v1009
  %1294 = vmatpush1.bf16.msra.mxu0 %v1008
  %1295 = vmatprep.subr.bf16.mxu0 %v1013
  %1296 = vmatpush1.bf16.msra.mxu0 %v1012
  %1297 = vmatprep.mubr.bf16.mxu0 %v497
  %1298 = vmatmul.mubr.bf16.gmra.mrb[0].mxu0 %v496
  %v1299 = vpop.f32.mrb[0].mxu0
  %v1300 = vadd.f32 %v1259, %v1299
  %v1301 = vpop.f32.mrb[0].mxu0
  %v1302 = vadd.f32 %v1261, %v1301
  %v1303 = vpop.f32.mrb[0].mxu0
  %v1304 = vpop.f32.mrb[0].mxu0
  %1305 = vdwg.mxu0
  %v1306 = vpack.c.bf16 %v1218, %v1218
  %v1307 = vpack.c.bf16 %v1220, %v1220
  %v1308 = vpack.c.bf16 %v1300, %v1300
  %v1309 = vpack.c.bf16 %v1302, %v1302
  %v1310 = vld [vmem:[%s5] sm:$0xff]
  %v1311 = vld [vmem:[%s5 + $0x8] sm:$0xff]
  %v1312 = vld [vmem:[%s5 + $0x10] sm:$0xff]
  %v1313 = vld [vmem:[%s5 + $0x18] sm:$0xff]
  %v1314 = vld [vmem:[%s5 + $0x20] sm:$0xff]
  %v1315 = vld [vmem:[%s5 + $0x28] sm:$0xff]
  %v1316 = vld [vmem:[%s5 + $0x30] sm:$0xff]
  %v1317 = vld [vmem:[%s5 + $0x38] sm:$0xff]
  %v1318 = vld [vmem:[%s5 + $0x40] sm:$0xff]
  %v1319 = vld [vmem:[%s5 + $0x48] sm:$0xff]
  %v1320 = vld [vmem:[%s5 + $0x50] sm:$0xff]
  %v1321 = vld [vmem:[%s5 + $0x58] sm:$0xff]
  %v1322 = vld [vmem:[%s5 + $0x60] sm:$0xff]
  %v1323 = vld [vmem:[%s5 + $0x68] sm:$0xff]
  %v1324 = vld [vmem:[%s5 + $0x70] sm:$0xff]
  %v1325 = vld [vmem:[%s5 + $0x78] sm:$0xff]
  %v1326 = vld [vmem:[%s5 + $0x80] sm:$0xff]
  %v1327 = vld [vmem:[%s5 + $0x88] sm:$0xff]
  %v1328 = vld [vmem:[%s5 + $0x90] sm:$0xff]
  %v1329 = vld [vmem:[%s5 + $0x98] sm:$0xff]
  %v1330 = vld [vmem:[%s5 + $0xa0] sm:$0xff]
  %v1331 = vld [vmem:[%s5 + $0xa8] sm:$0xff]
  %v1332 = vld [vmem:[%s5 + $0xb0] sm:$0xff]
  %v1333 = vld [vmem:[%s5 + $0xb8] sm:$0xff]
  %v1334 = vld [vmem:[%s5 + $0xc0] sm:$0xff]
  %v1335 = vld [vmem:[%s5 + $0xc8] sm:$0xff]
  %v1336 = vld [vmem:[%s5 + $0xd0] sm:$0xff]
  %v1337 = vld [vmem:[%s5 + $0xd8] sm:$0xff]
  %v1338 = vld [vmem:[%s5 + $0xe0] sm:$0xff]
  %v1339 = vld [vmem:[%s5 + $0xe8] sm:$0xff]
  %v1340 = vld [vmem:[%s5 + $0xf0] sm:$0xff]
  %v1341 = vld [vmem:[%s5 + $0xf8] sm:$0xff]
  %v1342 = vld [vmem:[%s5 + $0x100] sm:$0xff]
  %v1343 = vld [vmem:[%s5 + $0x108] sm:$0xff]
  %v1344 = vld [vmem:[%s5 + $0x110] sm:$0xff]
  %v1345 = vld [vmem:[%s5 + $0x118] sm:$0xff]
  %v1346 = vld [vmem:[%s5 + $0x120] sm:$0xff]
  %v1347 = vld [vmem:[%s5 + $0x128] sm:$0xff]
  %v1348 = vld [vmem:[%s5 + $0x130] sm:$0xff]
  %v1349 = vld [vmem:[%s5 + $0x138] sm:$0xff]
  %v1350 = vld [vmem:[%s5 + $0x140] sm:$0xff]
  %v1351 = vld [vmem:[%s5 + $0x148] sm:$0xff]
  %v1352 = vld [vmem:[%s5 + $0x150] sm:$0xff]
  %v1353 = vld [vmem:[%s5 + $0x158] sm:$0xff]
  %v1354 = vld [vmem:[%s5 + $0x160] sm:$0xff]
  %v1355 = vld [vmem:[%s5 + $0x168] sm:$0xff]
  %v1356 = vld [vmem:[%s5 + $0x170] sm:$0xff]
  %v1357 = vld [vmem:[%s5 + $0x178] sm:$0xff]
  %v1358 = vld [vmem:[%s5 + $0x180] sm:$0xff]
  %v1359 = vld [vmem:[%s5 + $0x188] sm:$0xff]
  %v1360 = vld [vmem:[%s5 + $0x190] sm:$0xff]
  %v1361 = vld [vmem:[%s5 + $0x198] sm:$0xff]
  %v1362 = vld [vmem:[%s5 + $0x1a0] sm:$0xff]
  %v1363 = vld [vmem:[%s5 + $0x1a8] sm:$0xff]
  %v1364 = vld [vmem:[%s5 + $0x1b0] sm:$0xff]
  %v1365 = vld [vmem:[%s5 + $0x1b8] sm:$0xff]
  %v1366 = vld [vmem:[%s5 + $0x1c0] sm:$0xff]
  %v1367 = vld [vmem:[%s5 + $0x1c8] sm:$0xff]
  %v1368 = vld [vmem:[%s5 + $0x1d0] sm:$0xff]
  %v1369 = vld [vmem:[%s5 + $0x1d8] sm:$0xff]
  %v1370 = vld [vmem:[%s5 + $0x1e0] sm:$0xff]
  %v1371 = vld [vmem:[%s5 + $0x1e8] sm:$0xff]
  %v1372 = vld [vmem:[%s5 + $0x1f0] sm:$0xff]
  %v1373 = vld [vmem:[%s5 + $0x1f8] sm:$0xff]
  %v1374 = vld [vmem:[%s5 + $0x200] sm:$0xff]
  %v1375 = vld [vmem:[%s5 + $0x208] sm:$0xff]
  %v1376 = vld [vmem:[%s5 + $0x210] sm:$0xff]
  %v1377 = vld [vmem:[%s5 + $0x218] sm:$0xff]
  %v1378 = vld [vmem:[%s5 + $0x220] sm:$0xff]
  %v1379 = vld [vmem:[%s5 + $0x228] sm:$0xff]
  %v1380 = vld [vmem:[%s5 + $0x230] sm:$0xff]
  %v1381 = vld [vmem:[%s5 + $0x238] sm:$0xff]
  %v1382 = vld [vmem:[%s5 + $0x240] sm:$0xff]
  %v1383 = vld [vmem:[%s5 + $0x248] sm:$0xff]
  %v1384 = vld [vmem:[%s5 + $0x250] sm:$0xff]
  %v1385 = vld [vmem:[%s5 + $0x258] sm:$0xff]
  %v1386 = vld [vmem:[%s5 + $0x260] sm:$0xff]
  %v1387 = vld [vmem:[%s5 + $0x268] sm:$0xff]
  %v1388 = vld [vmem:[%s5 + $0x270] sm:$0xff]
  %v1389 = vld [vmem:[%s5 + $0x278] sm:$0xff]
  %v1390 = vld [vmem:[%s5 + $0x280] sm:$0xff]
  %v1391 = vld [vmem:[%s5 + $0x288] sm:$0xff]
  %v1392 = vld [vmem:[%s5 + $0x290] sm:$0xff]
  %v1393 = vld [vmem:[%s5 + $0x298] sm:$0xff]
  %v1394 = vld [vmem:[%s5 + $0x2a0] sm:$0xff]
  %v1395 = vld [vmem:[%s5 + $0x2a8] sm:$0xff]
  %v1396 = vld [vmem:[%s5 + $0x2b0] sm:$0xff]
  %v1397 = vld [vmem:[%s5 + $0x2b8] sm:$0xff]
  %v1398 = vld [vmem:[%s5 + $0x2c0] sm:$0xff]
  %v1399 = vld [vmem:[%s5 + $0x2c8] sm:$0xff]
  %v1400 = vld [vmem:[%s5 + $0x2d0] sm:$0xff]
  %v1401 = vld [vmem:[%s5 + $0x2d8] sm:$0xff]
  %v1402 = vld [vmem:[%s5 + $0x2e0] sm:$0xff]
  %v1403 = vld [vmem:[%s5 + $0x2e8] sm:$0xff]
  %v1404 = vld [vmem:[%s5 + $0x2f0] sm:$0xff]
  %v1405 = vld [vmem:[%s5 + $0x2f8] sm:$0xff]
  %v1406 = vld [vmem:[%s5 + $0x300] sm:$0xff]
  %v1407 = vld [vmem:[%s5 + $0x308] sm:$0xff]
  %v1408 = vld [vmem:[%s5 + $0x310] sm:$0xff]
  %v1409 = vld [vmem:[%s5 + $0x318] sm:$0xff]
  %v1410 = vld [vmem:[%s5 + $0x320] sm:$0xff]
  %v1411 = vld [vmem:[%s5 + $0x328] sm:$0xff]
  %v1412 = vld [vmem:[%s5 + $0x330] sm:$0xff]
  %v1413 = vld [vmem:[%s5 + $0x338] sm:$0xff]
  %v1414 = vld [vmem:[%s5 + $0x340] sm:$0xff]
  %v1415 = vld [vmem:[%s5 + $0x348] sm:$0xff]
  %v1416 = vld [vmem:[%s5 + $0x350] sm:$0xff]
  %v1417 = vld [vmem:[%s5 + $0x358] sm:$0xff]
  %v1418 = vld [vmem:[%s5 + $0x360] sm:$0xff]
  %v1419 = vld [vmem:[%s5 + $0x368] sm:$0xff]
  %v1420 = vld [vmem:[%s5 + $0x370] sm:$0xff]
  %v1421 = vld [vmem:[%s5 + $0x378] sm:$0xff]
  %v1422 = vld [vmem:[%s5 + $0x380] sm:$0xff]
  %v1423 = vld [vmem:[%s5 + $0x388] sm:$0xff]
  %v1424 = vld [vmem:[%s5 + $0x390] sm:$0xff]
  %v1425 = vld [vmem:[%s5 + $0x398] sm:$0xff]
  %v1426 = vld [vmem:[%s5 + $0x3a0] sm:$0xff]
  %v1427 = vld [vmem:[%s5 + $0x3a8] sm:$0xff]
  %v1428 = vld [vmem:[%s5 + $0x3b0] sm:$0xff]
  %v1429 = vld [vmem:[%s5 + $0x3b8] sm:$0xff]
  %v1430 = vld [vmem:[%s5 + $0x3c0] sm:$0xff]
  %v1431 = vld [vmem:[%s5 + $0x3c8] sm:$0xff]
  %v1432 = vld [vmem:[%s5 + $0x3d0] sm:$0xff]
  %v1433 = vld [vmem:[%s5 + $0x3d8] sm:$0xff]
  %v1434 = vld [vmem:[%s5 + $0x3e0] sm:$0xff]
  %v1435 = vld [vmem:[%s5 + $0x3e8] sm:$0xff]
  %v1436 = vld [vmem:[%s5 + $0x3f0] sm:$0xff]
  %v1437 = vld [vmem:[%s5 + $0x3f8] sm:$0xff]
  %v1438 = vld [vmem:[%s6] sm:$0xf]
  %v1440 = vlaneseq
  %v1441 = vshrl.u32 %v1440, 7
  %v1442 = vsub.s32 0, %v1441
  %v1443 = vrot.slane %v1438, %v1442
  %v1444 = vlaneseq
  %v1445 = vshrl.u32 %v1444, 7
  %v1446 = vsub.s32 1, %v1445
  %v1447 = vrot.slane %v1438, %v1446
  %v1448 = vlaneseq
  %v1449 = vshrl.u32 %v1448, 7
  %v1450 = vsub.s32 2, %v1449
  %v1451 = vrot.slane %v1438, %v1450
  %v1452 = vlaneseq
  %v1453 = vshrl.u32 %v1452, 7
  %v1454 = vsub.s32 3, %v1453
  %v1455 = vrot.slane %v1438, %v1454
  %v1588 = vunpack.c.l.b16 %v1310
  %v1589 = vunpack.c.h.b16 %v1310
  %v1590 = vunpack.c.l.b16 %v1311
  %v1591 = vunpack.c.h.b16 %v1311
  %v1592 = vunpack.c.l.b16 %v1312
  %v1593 = vunpack.c.h.b16 %v1312
  %v1594 = vunpack.c.l.b16 %v1313
  %v1595 = vunpack.c.h.b16 %v1313
  %v1596 = vunpack.c.l.b16 %v1314
  %v1597 = vunpack.c.h.b16 %v1314
  %v1598 = vunpack.c.l.b16 %v1315
  %v1599 = vunpack.c.h.b16 %v1315
  %v1600 = vunpack.c.l.b16 %v1316
  %v1601 = vunpack.c.h.b16 %v1316
  %v1602 = vunpack.c.l.b16 %v1317
  %v1603 = vunpack.c.h.b16 %v1317
  %v1604 = vunpack.c.l.b16 %v1318
  %v1605 = vunpack.c.h.b16 %v1318
  %v1606 = vunpack.c.l.b16 %v1319
  %v1607 = vunpack.c.h.b16 %v1319
  %v1608 = vunpack.c.l.b16 %v1320
  %v1609 = vunpack.c.h.b16 %v1320
  %v1610 = vunpack.c.l.b16 %v1321
  %v1611 = vunpack.c.h.b16 %v1321
  %v1612 = vunpack.c.l.b16 %v1322
  %v1613 = vunpack.c.h.b16 %v1322
  %v1614 = vunpack.c.l.b16 %v1323
  %v1615 = vunpack.c.h.b16 %v1323
  %v1616 = vunpack.c.l.b16 %v1324
  %v1617 = vunpack.c.h.b16 %v1324
  %v1618 = vunpack.c.l.b16 %v1325
  %v1619 = vunpack.c.h.b16 %v1325
  %v1620 = vunpack.c.l.b16 %v1326
  %v1621 = vunpack.c.h.b16 %v1326
  %v1622 = vunpack.c.l.b16 %v1327
  %v1623 = vunpack.c.h.b16 %v1327
  %v1624 = vunpack.c.l.b16 %v1328
  %v1625 = vunpack.c.h.b16 %v1328
  %v1626 = vunpack.c.l.b16 %v1329
  %v1627 = vunpack.c.h.b16 %v1329
  %v1628 = vunpack.c.l.b16 %v1330
  %v1629 = vunpack.c.h.b16 %v1330
  %v1630 = vunpack.c.l.b16 %v1331
  %v1631 = vunpack.c.h.b16 %v1331
  %v1632 = vunpack.c.l.b16 %v1332
  %v1633 = vunpack.c.h.b16 %v1332
  %v1634 = vunpack.c.l.b16 %v1333
  %v1635 = vunpack.c.h.b16 %v1333
  %v1636 = vunpack.c.l.b16 %v1334
  %v1637 = vunpack.c.h.b16 %v1334
  %v1638 = vunpack.c.l.b16 %v1335
  %v1639 = vunpack.c.h.b16 %v1335
  %v1640 = vunpack.c.l.b16 %v1336
  %v1641 = vunpack.c.h.b16 %v1336
  %v1642 = vunpack.c.l.b16 %v1337
  %v1643 = vunpack.c.h.b16 %v1337
  %v1644 = vunpack.c.l.b16 %v1338
  %v1645 = vunpack.c.h.b16 %v1338
  %v1646 = vunpack.c.l.b16 %v1339
  %v1647 = vunpack.c.h.b16 %v1339
  %v1648 = vunpack.c.l.b16 %v1340
  %v1649 = vunpack.c.h.b16 %v1340
  %v1650 = vunpack.c.l.b16 %v1341
  %v1651 = vunpack.c.h.b16 %v1341
  %v1652 = vunpack.c.l.b16 %v1342
  %v1653 = vunpack.c.h.b16 %v1342
  %v1654 = vunpack.c.l.b16 %v1343
  %v1655 = vunpack.c.h.b16 %v1343
  %v1656 = vunpack.c.l.b16 %v1344
  %v1657 = vunpack.c.h.b16 %v1344
  %v1658 = vunpack.c.l.b16 %v1345
  %v1659 = vunpack.c.h.b16 %v1345
  %v1660 = vunpack.c.l.b16 %v1346
  %v1661 = vunpack.c.h.b16 %v1346
  %v1662 = vunpack.c.l.b16 %v1347
  %v1663 = vunpack.c.h.b16 %v1347
  %v1664 = vunpack.c.l.b16 %v1348
  %v1665 = vunpack.c.h.b16 %v1348
  %v1666 = vunpack.c.l.b16 %v1349
  %v1667 = vunpack.c.h.b16 %v1349
  %v1668 = vunpack.c.l.b16 %v1350
  %v1669 = vunpack.c.h.b16 %v1350
  %v1670 = vunpack.c.l.b16 %v1351
  %v1671 = vunpack.c.h.b16 %v1351
  %v1672 = vunpack.c.l.b16 %v1352
  %v1673 = vunpack.c.h.b16 %v1352
  %v1674 = vunpack.c.l.b16 %v1353
  %v1675 = vunpack.c.h.b16 %v1353
  %v1676 = vunpack.c.l.b16 %v1354
  %v1677 = vunpack.c.h.b16 %v1354
  %v1678 = vunpack.c.l.b16 %v1355
  %v1679 = vunpack.c.h.b16 %v1355
  %v1680 = vunpack.c.l.b16 %v1356
  %v1681 = vunpack.c.h.b16 %v1356
  %v1682 = vunpack.c.l.b16 %v1357
  %v1683 = vunpack.c.h.b16 %v1357
  %v1684 = vunpack.c.l.b16 %v1358
  %v1685 = vunpack.c.h.b16 %v1358
  %v1686 = vunpack.c.l.b16 %v1359
  %v1687 = vunpack.c.h.b16 %v1359
  %v1688 = vunpack.c.l.b16 %v1360
  %v1689 = vunpack.c.h.b16 %v1360
  %v1690 = vunpack.c.l.b16 %v1361
  %v1691 = vunpack.c.h.b16 %v1361
  %v1692 = vunpack.c.l.b16 %v1362
  %v1693 = vunpack.c.h.b16 %v1362
  %v1694 = vunpack.c.l.b16 %v1363
  %v1695 = vunpack.c.h.b16 %v1363
  %v1696 = vunpack.c.l.b16 %v1364
  %v1697 = vunpack.c.h.b16 %v1364
  %v1698 = vunpack.c.l.b16 %v1365
  %v1699 = vunpack.c.h.b16 %v1365
  %v1700 = vunpack.c.l.b16 %v1366
  %v1701 = vunpack.c.h.b16 %v1366
  %v1702 = vunpack.c.l.b16 %v1367
  %v1703 = vunpack.c.h.b16 %v1367
  %v1704 = vunpack.c.l.b16 %v1368
  %v1705 = vunpack.c.h.b16 %v1368
  %v1706 = vunpack.c.l.b16 %v1369
  %v1707 = vunpack.c.h.b16 %v1369
  %v1708 = vunpack.c.l.b16 %v1370
  %v1709 = vunpack.c.h.b16 %v1370
  %v1710 = vunpack.c.l.b16 %v1371
  %v1711 = vunpack.c.h.b16 %v1371
  %v1712 = vunpack.c.l.b16 %v1372
  %v1713 = vunpack.c.h.b16 %v1372
  %v1714 = vunpack.c.l.b16 %v1373
  %v1715 = vunpack.c.h.b16 %v1373
  %v1716 = vunpack.c.l.b16 %v1374
  %v1717 = vunpack.c.h.b16 %v1374
  %v1718 = vunpack.c.l.b16 %v1375
  %v1719 = vunpack.c.h.b16 %v1375
  %v1720 = vunpack.c.l.b16 %v1376
  %v1721 = vunpack.c.h.b16 %v1376
  %v1722 = vunpack.c.l.b16 %v1377
  %v1723 = vunpack.c.h.b16 %v1377
  %v1724 = vunpack.c.l.b16 %v1378
  %v1725 = vunpack.c.h.b16 %v1378
  %v1726 = vunpack.c.l.b16 %v1379
  %v1727 = vunpack.c.h.b16 %v1379
  %v1728 = vunpack.c.l.b16 %v1380
  %v1729 = vunpack.c.h.b16 %v1380
  %v1730 = vunpack.c.l.b16 %v1381
  %v1731 = vunpack.c.h.b16 %v1381
  %v1732 = vunpack.c.l.b16 %v1382
  %v1733 = vunpack.c.h.b16 %v1382
  %v1734 = vunpack.c.l.b16 %v1383
  %v1735 = vunpack.c.h.b16 %v1383
  %v1736 = vunpack.c.l.b16 %v1384
  %v1737 = vunpack.c.h.b16 %v1384
  %v1738 = vunpack.c.l.b16 %v1385
  %v1739 = vunpack.c.h.b16 %v1385
  %v1740 = vunpack.c.l.b16 %v1386
  %v1741 = vunpack.c.h.b16 %v1386
  %v1742 = vunpack.c.l.b16 %v1387
  %v1743 = vunpack.c.h.b16 %v1387
  %v1744 = vunpack.c.l.b16 %v1388
  %v1745 = vunpack.c.h.b16 %v1388
  %v1746 = vunpack.c.l.b16 %v1389
  %v1747 = vunpack.c.h.b16 %v1389
  %v1748 = vunpack.c.l.b16 %v1390
  %v1749 = vunpack.c.h.b16 %v1390
  %v1750 = vunpack.c.l.b16 %v1391
  %v1751 = vunpack.c.h.b16 %v1391
  %v1752 = vunpack.c.l.b16 %v1392
  %v1753 = vunpack.c.h.b16 %v1392
  %v1754 = vunpack.c.l.b16 %v1393
  %v1755 = vunpack.c.h.b16 %v1393
  %v1756 = vunpack.c.l.b16 %v1394
  %v1757 = vunpack.c.h.b16 %v1394
  %v1758 = vunpack.c.l.b16 %v1395
  %v1759 = vunpack.c.h.b16 %v1395
  %v1760 = vunpack.c.l.b16 %v1396
  %v1761 = vunpack.c.h.b16 %v1396
  %v1762 = vunpack.c.l.b16 %v1397
  %v1763 = vunpack.c.h.b16 %v1397
  %v1764 = vunpack.c.l.b16 %v1398
  %v1765 = vunpack.c.h.b16 %v1398
  %v1766 = vunpack.c.l.b16 %v1399
  %v1767 = vunpack.c.h.b16 %v1399
  %v1768 = vunpack.c.l.b16 %v1400
  %v1769 = vunpack.c.h.b16 %v1400
  %v1770 = vunpack.c.l.b16 %v1401
  %v1771 = vunpack.c.h.b16 %v1401
  %v1772 = vunpack.c.l.b16 %v1402
  %v1773 = vunpack.c.h.b16 %v1402
  %v1774 = vunpack.c.l.b16 %v1403
  %v1775 = vunpack.c.h.b16 %v1403
  %v1776 = vunpack.c.l.b16 %v1404
  %v1777 = vunpack.c.h.b16 %v1404
  %v1778 = vunpack.c.l.b16 %v1405
  %v1779 = vunpack.c.h.b16 %v1405
  %v1780 = vunpack.c.l.b16 %v1406
  %v1781 = vunpack.c.h.b16 %v1406
  %v1782 = vunpack.c.l.b16 %v1407
  %v1783 = vunpack.c.h.b16 %v1407
  %v1784 = vunpack.c.l.b16 %v1408
  %v1785 = vunpack.c.h.b16 %v1408
  %v1786 = vunpack.c.l.b16 %v1409
  %v1787 = vunpack.c.h.b16 %v1409
  %v1788 = vunpack.c.l.b16 %v1410
  %v1789 = vunpack.c.h.b16 %v1410
  %v1790 = vunpack.c.l.b16 %v1411
  %v1791 = vunpack.c.h.b16 %v1411
  %v1792 = vunpack.c.l.b16 %v1412
  %v1793 = vunpack.c.h.b16 %v1412
  %v1794 = vunpack.c.l.b16 %v1413
  %v1795 = vunpack.c.h.b16 %v1413
  %v1796 = vunpack.c.l.b16 %v1414
  %v1797 = vunpack.c.h.b16 %v1414
  %v1798 = vunpack.c.l.b16 %v1415
  %v1799 = vunpack.c.h.b16 %v1415
  %v1800 = vunpack.c.l.b16 %v1416
  %v1801 = vunpack.c.h.b16 %v1416
  %v1802 = vunpack.c.l.b16 %v1417
  %v1803 = vunpack.c.h.b16 %v1417
  %v1804 = vunpack.c.l.b16 %v1418
  %v1805 = vunpack.c.h.b16 %v1418
  %v1806 = vunpack.c.l.b16 %v1419
  %v1807 = vunpack.c.h.b16 %v1419
  %v1808 = vunpack.c.l.b16 %v1420
  %v1809 = vunpack.c.h.b16 %v1420
  %v1810 = vunpack.c.l.b16 %v1421
  %v1811 = vunpack.c.h.b16 %v1421
  %v1812 = vunpack.c.l.b16 %v1422
  %v1813 = vunpack.c.h.b16 %v1422
  %v1814 = vunpack.c.l.b16 %v1423
  %v1815 = vunpack.c.h.b16 %v1423
  %v1816 = vunpack.c.l.b16 %v1424
  %v1817 = vunpack.c.h.b16 %v1424
  %v1818 = vunpack.c.l.b16 %v1425
  %v1819 = vunpack.c.h.b16 %v1425
  %v1820 = vunpack.c.l.b16 %v1426
  %v1821 = vunpack.c.h.b16 %v1426
  %v1822 = vunpack.c.l.b16 %v1427
  %v1823 = vunpack.c.h.b16 %v1427
  %v1824 = vunpack.c.l.b16 %v1428
  %v1825 = vunpack.c.h.b16 %v1428
  %v1826 = vunpack.c.l.b16 %v1429
  %v1827 = vunpack.c.h.b16 %v1429
  %v1828 = vunpack.c.l.b16 %v1430
  %v1829 = vunpack.c.h.b16 %v1430
  %v1830 = vunpack.c.l.b16 %v1431
  %v1831 = vunpack.c.h.b16 %v1431
  %v1832 = vunpack.c.l.b16 %v1432
  %v1833 = vunpack.c.h.b16 %v1432
  %v1834 = vunpack.c.l.b16 %v1433
  %v1835 = vunpack.c.h.b16 %v1433
  %v1836 = vunpack.c.l.b16 %v1434
  %v1837 = vunpack.c.h.b16 %v1434
  %v1838 = vunpack.c.l.b16 %v1435
  %v1839 = vunpack.c.h.b16 %v1435
  %v1840 = vunpack.c.l.b16 %v1436
  %v1841 = vunpack.c.h.b16 %v1436
  %v1842 = vunpack.c.l.b16 %v1437
  %v1843 = vunpack.c.h.b16 %v1437
  %v1844 = vpack.c.b16 %v1592, %v1588
  %v1845 = vpack.c.b16 %v1593, %v1589
  %v1846 = vpack.c.b16 %v1594, %v1590
  %v1847 = vpack.c.b16 %v1595, %v1591
  %v1848 = vpack.c.b16 %v1600, %v1596
  %v1849 = vpack.c.b16 %v1601, %v1597
  %v1850 = vpack.c.b16 %v1602, %v1598
  %v1851 = vpack.c.b16 %v1603, %v1599
  %v1852 = vpack.c.b16 %v1608, %v1604
  %v1853 = vpack.c.b16 %v1609, %v1605
  %v1854 = vpack.c.b16 %v1610, %v1606
  %v1855 = vpack.c.b16 %v1611, %v1607
  %v1856 = vpack.c.b16 %v1616, %v1612
  %v1857 = vpack.c.b16 %v1617, %v1613
  %v1858 = vpack.c.b16 %v1618, %v1614
  %v1859 = vpack.c.b16 %v1619, %v1615
  %v1860 = vpack.c.b16 %v1624, %v1620
  %v1861 = vpack.c.b16 %v1625, %v1621
  %v1862 = vpack.c.b16 %v1626, %v1622
  %v1863 = vpack.c.b16 %v1627, %v1623
  %v1864 = vpack.c.b16 %v1632, %v1628
  %v1865 = vpack.c.b16 %v1633, %v1629
  %v1866 = vpack.c.b16 %v1634, %v1630
  %v1867 = vpack.c.b16 %v1635, %v1631
  %v1868 = vpack.c.b16 %v1640, %v1636
  %v1869 = vpack.c.b16 %v1641, %v1637
  %v1870 = vpack.c.b16 %v1642, %v1638
  %v1871 = vpack.c.b16 %v1643, %v1639
  %v1872 = vpack.c.b16 %v1648, %v1644
  %v1873 = vpack.c.b16 %v1649, %v1645
  %v1874 = vpack.c.b16 %v1650, %v1646
  %v1875 = vpack.c.b16 %v1651, %v1647
  %v1876 = vpack.c.b16 %v1656, %v1652
  %v1877 = vpack.c.b16 %v1657, %v1653
  %v1878 = vpack.c.b16 %v1658, %v1654
  %v1879 = vpack.c.b16 %v1659, %v1655
  %v1880 = vpack.c.b16 %v1664, %v1660
  %v1881 = vpack.c.b16 %v1665, %v1661
  %v1882 = vpack.c.b16 %v1666, %v1662
  %v1883 = vpack.c.b16 %v1667, %v1663
  %v1884 = vpack.c.b16 %v1672, %v1668
  %v1885 = vpack.c.b16 %v1673, %v1669
  %v1886 = vpack.c.b16 %v1674, %v1670
  %v1887 = vpack.c.b16 %v1675, %v1671
  %v1888 = vpack.c.b16 %v1680, %v1676
  %v1889 = vpack.c.b16 %v1681, %v1677
  %v1890 = vpack.c.b16 %v1682, %v1678
  %v1891 = vpack.c.b16 %v1683, %v1679
  %v1892 = vpack.c.b16 %v1688, %v1684
  %v1893 = vpack.c.b16 %v1689, %v1685
  %v1894 = vpack.c.b16 %v1690, %v1686
  %v1895 = vpack.c.b16 %v1691, %v1687
  %v1896 = vpack.c.b16 %v1696, %v1692
  %v1897 = vpack.c.b16 %v1697, %v1693
  %v1898 = vpack.c.b16 %v1698, %v1694
  %v1899 = vpack.c.b16 %v1699, %v1695
  %v1900 = vpack.c.b16 %v1704, %v1700
  %v1901 = vpack.c.b16 %v1705, %v1701
  %v1902 = vpack.c.b16 %v1706, %v1702
  %v1903 = vpack.c.b16 %v1707, %v1703
  %v1904 = vpack.c.b16 %v1712, %v1708
  %v1905 = vpack.c.b16 %v1713, %v1709
  %v1906 = vpack.c.b16 %v1714, %v1710
  %v1907 = vpack.c.b16 %v1715, %v1711
  %v1908 = vpack.c.b16 %v1720, %v1716
  %v1909 = vpack.c.b16 %v1721, %v1717
  %v1910 = vpack.c.b16 %v1722, %v1718
  %v1911 = vpack.c.b16 %v1723, %v1719
  %v1912 = vpack.c.b16 %v1728, %v1724
  %v1913 = vpack.c.b16 %v1729, %v1725
  %v1914 = vpack.c.b16 %v1730, %v1726
  %v1915 = vpack.c.b16 %v1731, %v1727
  %v1916 = vpack.c.b16 %v1736, %v1732
  %v1917 = vpack.c.b16 %v1737, %v1733
  %v1918 = vpack.c.b16 %v1738, %v1734
  %v1919 = vpack.c.b16 %v1739, %v1735
  %v1920 = vpack.c.b16 %v1744, %v1740
  %v1921 = vpack.c.b16 %v1745, %v1741
  %v1922 = vpack.c.b16 %v1746, %v1742
  %v1923 = vpack.c.b16 %v1747, %v1743
  %v1924 = vpack.c.b16 %v1752, %v1748
  %v1925 = vpack.c.b16 %v1753, %v1749
  %v1926 = vpack.c.b16 %v1754, %v1750
  %v1927 = vpack.c.b16 %v1755, %v1751
  %v1928 = vpack.c.b16 %v1760, %v1756
  %v1929 = vpack.c.b16 %v1761, %v1757
  %v1930 = vpack.c.b16 %v1762, %v1758
  %v1931 = vpack.c.b16 %v1763, %v1759
  %v1932 = vpack.c.b16 %v1768, %v1764
  %v1933 = vpack.c.b16 %v1769, %v1765
  %v1934 = vpack.c.b16 %v1770, %v1766
  %v1935 = vpack.c.b16 %v1771, %v1767
  %v1936 = vpack.c.b16 %v1776, %v1772
  %v1937 = vpack.c.b16 %v1777, %v1773
  %v1938 = vpack.c.b16 %v1778, %v1774
  %v1939 = vpack.c.b16 %v1779, %v1775
  %v1940 = vpack.c.b16 %v1784, %v1780
  %v1941 = vpack.c.b16 %v1785, %v1781
  %v1942 = vpack.c.b16 %v1786, %v1782
  %v1943 = vpack.c.b16 %v1787, %v1783
  %v1944 = vpack.c.b16 %v1792, %v1788
  %v1945 = vpack.c.b16 %v1793, %v1789
  %v1946 = vpack.c.b16 %v1794, %v1790
  %v1947 = vpack.c.b16 %v1795, %v1791
  %v1948 = vpack.c.b16 %v1800, %v1796
  %v1949 = vpack.c.b16 %v1801, %v1797
  %v1950 = vpack.c.b16 %v1802, %v1798
  %v1951 = vpack.c.b16 %v1803, %v1799
  %v1952 = vpack.c.b16 %v1808, %v1804
  %v1953 = vpack.c.b16 %v1809, %v1805
  %v1954 = vpack.c.b16 %v1810, %v1806
  %v1955 = vpack.c.b16 %v1811, %v1807
  %v1956 = vpack.c.b16 %v1816, %v1812
  %v1957 = vpack.c.b16 %v1817, %v1813
  %v1958 = vpack.c.b16 %v1818, %v1814
  %v1959 = vpack.c.b16 %v1819, %v1815
  %v1960 = vpack.c.b16 %v1824, %v1820
  %v1961 = vpack.c.b16 %v1825, %v1821
  %v1962 = vpack.c.b16 %v1826, %v1822
  %v1963 = vpack.c.b16 %v1827, %v1823
  %v1964 = vpack.c.b16 %v1832, %v1828
  %v1965 = vpack.c.b16 %v1833, %v1829
  %v1966 = vpack.c.b16 %v1834, %v1830
  %v1967 = vpack.c.b16 %v1835, %v1831
  %v1968 = vpack.c.b16 %v1840, %v1836
  %v1969 = vpack.c.b16 %v1841, %v1837
  %v1970 = vpack.c.b16 %v1842, %v1838
  %v1971 = vpack.c.b16 %v1843, %v1839
  %2100 = vmatprep.subr.bf16.mxu0 %v1845
  %2101 = vmatpush1.bf16.msra.mxu0 %v1844
  %2102 = vmatprep.subr.bf16.mxu0 %v1849
  %2103 = vmatpush1.bf16.msra.mxu0 %v1848
  %2104 = vmatprep.subr.bf16.mxu0 %v1853
  %2105 = vmatpush1.bf16.msra.mxu0 %v1852
  %2106 = vmatprep.subr.bf16.mxu0 %v1857
  %2107 = vmatpush1.bf16.msra.mxu0 %v1856
  %2108 = vmatprep.subr.bf16.mxu0 %v1861
  %2109 = vmatpush1.bf16.msra.mxu0 %v1860
  %2110 = vmatprep.subr.bf16.mxu0 %v1865
  %2111 = vmatpush1.bf16.msra.mxu0 %v1864
  %2112 = vmatprep.subr.bf16.mxu0 %v1869
  %2113 = vmatpush1.bf16.msra.mxu0 %v1868
  %2114 = vmatprep.subr.bf16.mxu0 %v1873
  %2115 = vmatpush1.bf16.msra.mxu0 %v1872
  %2116 = vmatprep.subr.bf16.mxu0 %v1877
  %2117 = vmatpush1.bf16.msra.mxu0 %v1876
  %2118 = vmatprep.subr.bf16.mxu0 %v1881
  %2119 = vmatpush1.bf16.msra.mxu0 %v1880
  %2120 = vmatprep.subr.bf16.mxu0 %v1885
  %2121 = vmatpush1.bf16.msra.mxu0 %v1884
  %2122 = vmatprep.subr.bf16.mxu0 %v1889
  %2123 = vmatpush1.bf16.msra.mxu0 %v1888
  %2124 = vmatprep.subr.bf16.mxu0 %v1893
  %2125 = vmatpush1.bf16.msra.mxu0 %v1892
  %2126 = vmatprep.subr.bf16.mxu0 %v1897
  %2127 = vmatpush1.bf16.msra.mxu0 %v1896
  %2128 = vmatprep.subr.bf16.mxu0 %v1901
  %2129 = vmatpush1.bf16.msra.mxu0 %v1900
  %2130 = vmatprep.subr.bf16.mxu0 %v1905
  %2131 = vmatpush1.bf16.msra.mxu0 %v1904
  %2132 = vmatprep.mubr.bf16.mxu0 %v1307
  %2133 = vmatmul.mubr.bf16.gmra.mrb[0].mxu0 %v1306
  %v2134 = vpop.f32.mrb[0].mxu0
  %v2135 = vadd.f32 %v1443, %v2134
  %v2136 = vpop.f32.mrb[0].mxu0
  %v2137 = vadd.f32 %v1447, %v2136
  %v2138 = vpop.f32.mrb[0].mxu0
  %v2139 = vpop.f32.mrb[0].mxu0
  %2140 = vdwg.mxu0
  %2141 = vmatprep.subr.bf16.mxu0 %v1909
  %2142 = vmatpush1.bf16.msra.mxu0 %v1908
  %2143 = vmatprep.subr.bf16.mxu0 %v1913
  %2144 = vmatpush1.bf16.msra.mxu0 %v1912
  %2145 = vmatprep.subr.bf16.mxu0 %v1917
  %2146 = vmatpush1.bf16.msra.mxu0 %v1916
  %2147 = vmatprep.subr.bf16.mxu0 %v1921
  %2148 = vmatpush1.bf16.msra.mxu0 %v1920
  %2149 = vmatprep.subr.bf16.mxu0 %v1925
  %2150 = vmatpush1.bf16.msra.mxu0 %v1924
  %2151 = vmatprep.subr.bf16.mxu0 %v1929
  %2152 = vmatpush1.bf16.msra.mxu0 %v1928
  %2153 = vmatprep.subr.bf16.mxu0 %v1933
  %2154 = vmatpush1.bf16.msra.mxu0 %v1932
  %2155 = vmatprep.subr.bf16.mxu0 %v1937
  %2156 = vmatpush1.bf16.msra.mxu0 %v1936
  %2157 = vmatprep.subr.bf16.mxu0 %v1941
  %2158 = vmatpush1.bf16.msra.mxu0 %v1940
  %2159 = vmatprep.subr.bf16.mxu0 %v1945
  %2160 = vmatpush1.bf16.msra.mxu0 %v1944
  %2161 = vmatprep.subr.bf16.mxu0 %v1949
  %2162 = vmatpush1.bf16.msra.mxu0 %v1948
  %2163 = vmatprep.subr.bf16.mxu0 %v1953
  %2164 = vmatpush1.bf16.msra.mxu0 %v1952
  %2165 = vmatprep.subr.bf16.mxu0 %v1957
  %2166 = vmatpush1.bf16.msra.mxu0 %v1956
  %2167 = vmatprep.subr.bf16.mxu0 %v1961
  %2168 = vmatpush1.bf16.msra.mxu0 %v1960
  %2169 = vmatprep.subr.bf16.mxu0 %v1965
  %2170 = vmatpush1.bf16.msra.mxu0 %v1964
  %2171 = vmatprep.subr.bf16.mxu0 %v1969
  %2172 = vmatpush1.bf16.msra.mxu0 %v1968
  %2173 = vmatprep.mubr.bf16.mxu0 %v1309
  %2174 = vmatmul.mubr.bf16.gmra.mrb[0].mxu0 %v1308
  %v2175 = vpop.f32.mrb[0].mxu0
  %v2176 = vadd.f32 %v2135, %v2175
  %v2177 = vpop.f32.mrb[0].mxu0
  %v2178 = vadd.f32 %v2137, %v2177
  %v2179 = vpop.f32.mrb[0].mxu0
  %v2180 = vpop.f32.mrb[0].mxu0
  %2181 = vdwg.mxu0
  %2182 = vmatprep.subr.bf16.mxu0 %v1847
  %2183 = vmatpush1.bf16.msra.mxu0 %v1846
  %2184 = vmatprep.subr.bf16.mxu0 %v1851
  %2185 = vmatpush1.bf16.msra.mxu0 %v1850
  %2186 = vmatprep.subr.bf16.mxu0 %v1855
  %2187 = vmatpush1.bf16.msra.mxu0 %v1854
  %2188 = vmatprep.subr.bf16.mxu0 %v1859
  %2189 = vmatpush1.bf16.msra.mxu0 %v1858
  %2190 = vmatprep.subr.bf16.mxu0 %v1863
  %2191 = vmatpush1.bf16.msra.mxu0 %v1862
  %2192 = vmatprep.subr.bf16.mxu0 %v1867
  %2193 = vmatpush1.bf16.msra.mxu0 %v1866
  %2194 = vmatprep.subr.bf16.mxu0 %v1871
  %2195 = vmatpush1.bf16.msra.mxu0 %v1870
  %2196 = vmatprep.subr.bf16.mxu0 %v1875
  %2197 = vmatpush1.bf16.msra.mxu0 %v1874
  %2198 = vmatprep.subr.bf16.mxu0 %v1879
  %2199 = vmatpush1.bf16.msra.mxu0 %v1878
  %2200 = vmatprep.subr.bf16.mxu0 %v1883
  %2201 = vmatpush1.bf16.msra.mxu0 %v1882
  %2202 = vmatprep.subr.bf16.mxu0 %v1887
  %2203 = vmatpush1.bf16.msra.mxu0 %v1886
  %2204 = vmatprep.subr.bf16.mxu0 %v1891
  %2205 = vmatpush1.bf16.msra.mxu0 %v1890
  %2206 = vmatprep.subr.bf16.mxu0 %v1895
  %2207 = vmatpush1.bf16.msra.mxu0 %v1894
  %2208 = vmatprep.subr.bf16.mxu0 %v1899
  %2209 = vmatpush1.bf16.msra.mxu0 %v1898
  %2210 = vmatprep.subr.bf16.mxu0 %v1903
  %2211 = vmatpush1.bf16.msra.mxu0 %v1902
  %2212 = vmatprep.subr.bf16.mxu0 %v1907
  %2213 = vmatpush1.bf16.msra.mxu0 %v1906
  %2214 = vmatprep.mubr.bf16.mxu0 %v1307
  %2215 = vmatmul.mubr.bf16.gmra.mrb[0].mxu0 %v1306
  %v2216 = vpop.f32.mrb[0].mxu0
  %v2217 = vadd.f32 %v1451, %v2216
  %v2218 = vpop.f32.mrb[0].mxu0
  %v2219 = vadd.f32 %v1455, %v2218
  %v2220 = vpop.f32.mrb[0].mxu0
  %v2221 = vpop.f32.mrb[0].mxu0
  %2222 = vdwg.mxu0
  %2223 = vmatprep.subr.bf16.mxu0 %v1911
  %2224 = vmatpush1.bf16.msra.mxu0 %v1910
  %2225 = vmatprep.subr.bf16.mxu0 %v1915
  %2226 = vmatpush1.bf16.msra.mxu0 %v1914
  %2227 = vmatprep.subr.bf16.mxu0 %v1919
  %2228 = vmatpush1.bf16.msra.mxu0 %v1918
  %2229 = vmatprep.subr.bf16.mxu0 %v1923
  %2230 = vmatpush1.bf16.msra.mxu0 %v1922
  %2231 = vmatprep.subr.bf16.mxu0 %v1927
  %2232 = vmatpush1.bf16.msra.mxu0 %v1926
  %2233 = vmatprep.subr.bf16.mxu0 %v1931
  %2234 = vmatpush1.bf16.msra.mxu0 %v1930
  %2235 = vmatprep.subr.bf16.mxu0 %v1935
  %2236 = vmatpush1.bf16.msra.mxu0 %v1934
  %2237 = vmatprep.subr.bf16.mxu0 %v1939
  %2238 = vmatpush1.bf16.msra.mxu0 %v1938
  %2239 = vmatprep.subr.bf16.mxu0 %v1943
  %2240 = vmatpush1.bf16.msra.mxu0 %v1942
  %2241 = vmatprep.subr.bf16.mxu0 %v1947
  %2242 = vmatpush1.bf16.msra.mxu0 %v1946
  %2243 = vmatprep.subr.bf16.mxu0 %v1951
  %2244 = vmatpush1.bf16.msra.mxu0 %v1950
  %2245 = vmatprep.subr.bf16.mxu0 %v1955
  %2246 = vmatpush1.bf16.msra.mxu0 %v1954
  %2247 = vmatprep.subr.bf16.mxu0 %v1959
  %2248 = vmatpush1.bf16.msra.mxu0 %v1958
  %2249 = vmatprep.subr.bf16.mxu0 %v1963
  %2250 = vmatpush1.bf16.msra.mxu0 %v1962
  %2251 = vmatprep.subr.bf16.mxu0 %v1967
  %2252 = vmatpush1.bf16.msra.mxu0 %v1966
  %2253 = vmatprep.subr.bf16.mxu0 %v1971
  %2254 = vmatpush1.bf16.msra.mxu0 %v1970
  %2255 = vmatprep.mubr.bf16.mxu0 %v1309
  %2256 = vmatmul.mubr.bf16.gmra.mrb[0].mxu0 %v1308
  %v2257 = vpop.f32.mrb[0].mxu0
  %v2258 = vadd.f32 %v2217, %v2257
  %v2259 = vpop.f32.mrb[0].mxu0
  %v2260 = vadd.f32 %v2219, %v2259
  %v2261 = vpop.f32.mrb[0].mxu0
  %v2262 = vpop.f32.mrb[0].mxu0
  %2263 = vdwg.mxu0
  %v2264 = vld [vmem:[%s7] sm:$0xf]
  %v2265 = vld [vmem:[%s8] sm:$0xf]
  %v2266 = vsel %vm103, %v2176, 0.0
  %v2267 = vsel %vm103, %v2178, 0.0
  %v2268 = vadd.f32 %v2266, %v2267
  %v2269 = vsel %vm103, %v2258, 0.0
  %v2270 = vadd.f32 %v2268, %v2269
  %v2271 = vsel %vm103, %v2260, 0.0
  %v2272 = vadd.f32 %v2270, %v2271
  %2273 = vadd.xlane.f32.xlu0 %v2272
  %v2274 = vpop.xlane.xlu0 %2273
  %v2275 = vmul.f32 %v2274, %v188
  %v2276 = vsub.f32 %v2176, %v2275
  %v2277 = vsub.f32 %v2178, %v2275
  %v2278 = vsub.f32 %v2258, %v2275
  %v2279 = vsub.f32 %v2260, %v2275
  %v2280 = vmul.f32 %v2276, %v2276
  %v2281 = vmul.f32 %v2277, %v2277
  %v2282 = vmul.f32 %v2278, %v2278
  %v2283 = vmul.f32 %v2279, %v2279
  %v2284 = vsel %vm103, %v2280, 0.0
  %v2285 = vsel %vm103, %v2281, 0.0
  %v2286 = vadd.f32 %v2284, %v2285
  %v2287 = vsel %vm103, %v2282, 0.0
  %v2288 = vadd.f32 %v2286, %v2287
  %v2289 = vsel %vm103, %v2283, 0.0
  %v2290 = vadd.f32 %v2288, %v2289
  %2291 = vadd.xlane.f32.xlu0 %v2290
  %v2292 = vpop.xlane.xlu0 %2291
  %v2293 = vmul.f32 %v2292, %v188
  %v2294 = vadd.f32 %v2293, 1e-05
  %v2295 = vrsqrt.pop %v2294
  %v2296 = vmul.f32 %v2276, %v2295
  %v2297 = vmul.f32 %v2277, %v2295
  %v2298 = vmul.f32 %v2278, %v2295
  %v2299 = vmul.f32 %v2279, %v2295
  %v2301 = vlaneseq
  %v2302 = vshrl.u32 %v2301, 7
  %v2303 = vsub.s32 0, %v2302
  %v2304 = vrot.slane %v2264, %v2303
  %v2305 = vlaneseq
  %v2306 = vshrl.u32 %v2305, 7
  %v2307 = vsub.s32 1, %v2306
  %v2308 = vrot.slane %v2264, %v2307
  %v2309 = vlaneseq
  %v2310 = vshrl.u32 %v2309, 7
  %v2311 = vsub.s32 2, %v2310
  %v2312 = vrot.slane %v2264, %v2311
  %v2313 = vlaneseq
  %v2314 = vshrl.u32 %v2313, 7
  %v2315 = vsub.s32 3, %v2314
  %v2316 = vrot.slane %v2264, %v2315
  %v2321 = vmul.f32 %v2296, %v2304
  %v2322 = vmul.f32 %v2297, %v2308
  %v2323 = vmul.f32 %v2298, %v2312
  %v2324 = vmul.f32 %v2299, %v2316
  %v2326 = vlaneseq
  %v2327 = vshrl.u32 %v2326, 7
  %v2328 = vsub.s32 0, %v2327
  %v2329 = vrot.slane %v2265, %v2328
  %v2330 = vlaneseq
  %v2331 = vshrl.u32 %v2330, 7
  %v2332 = vsub.s32 1, %v2331
  %v2333 = vrot.slane %v2265, %v2332
  %v2334 = vlaneseq
  %v2335 = vshrl.u32 %v2334, 7
  %v2336 = vsub.s32 2, %v2335
  %v2337 = vrot.slane %v2265, %v2336
  %v2338 = vlaneseq
  %v2339 = vshrl.u32 %v2338, 7
  %v2340 = vsub.s32 3, %v2339
  %v2341 = vrot.slane %v2265, %v2340
  %v2346 = vadd.f32 %v2321, %v2329
  %v2347 = vadd.f32 %v2322, %v2333
  %v2348 = vadd.f32 %v2323, %v2337
  %v2349 = vadd.f32 %v2324, %v2341
  %v2350 = vpack.c.bf16 %v2346, %v2346
  %v2351 = vpack.c.bf16 %v2347, %v2347
  %v2352 = vpack.c.bf16 %v2348, %v2348
  %v2353 = vpack.c.bf16 %v2349, %v2349
  %v2354 = vld [vmem:[%s9] sm:$0xff]
  %v2355 = vld [vmem:[%s9 + $0x8] sm:$0xff]
  %v2356 = vld [vmem:[%s9 + $0x10] sm:$0xff]
  %v2357 = vld [vmem:[%s9 + $0x18] sm:$0xff]
  %v2358 = vld [vmem:[%s9 + $0x20] sm:$0xff]
  %v2359 = vld [vmem:[%s9 + $0x28] sm:$0xff]
  %v2360 = vld [vmem:[%s9 + $0x30] sm:$0xff]
  %v2361 = vld [vmem:[%s9 + $0x38] sm:$0xff]
  %v2362 = vld [vmem:[%s9 + $0x40] sm:$0xff]
  %v2363 = vld [vmem:[%s9 + $0x48] sm:$0xff]
  %v2364 = vld [vmem:[%s9 + $0x50] sm:$0xff]
  %v2365 = vld [vmem:[%s9 + $0x58] sm:$0xff]
  %v2366 = vld [vmem:[%s9 + $0x60] sm:$0xff]
  %v2367 = vld [vmem:[%s9 + $0x68] sm:$0xff]
  %v2368 = vld [vmem:[%s9 + $0x70] sm:$0xff]
  %v2369 = vld [vmem:[%s9 + $0x78] sm:$0xff]
  %v2370 = vld [vmem:[%s9 + $0x80] sm:$0xff]
  %v2371 = vld [vmem:[%s9 + $0x88] sm:$0xff]
  %v2372 = vld [vmem:[%s9 + $0x90] sm:$0xff]
  %v2373 = vld [vmem:[%s9 + $0x98] sm:$0xff]
  %v2374 = vld [vmem:[%s9 + $0xa0] sm:$0xff]
  %v2375 = vld [vmem:[%s9 + $0xa8] sm:$0xff]
  %v2376 = vld [vmem:[%s9 + $0xb0] sm:$0xff]
  %v2377 = vld [vmem:[%s9 + $0xb8] sm:$0xff]
  %v2378 = vld [vmem:[%s9 + $0xc0] sm:$0xff]
  %v2379 = vld [vmem:[%s9 + $0xc8] sm:$0xff]
  %v2380 = vld [vmem:[%s9 + $0xd0] sm:$0xff]
  %v2381 = vld [vmem:[%s9 + $0xd8] sm:$0xff]
  %v2382 = vld [vmem:[%s9 + $0xe0] sm:$0xff]
  %v2383 = vld [vmem:[%s9 + $0xe8] sm:$0xff]
  %v2384 = vld [vmem:[%s9 + $0xf0] sm:$0xff]
  %v2385 = vld [vmem:[%s9 + $0xf8] sm:$0xff]
  %v2386 = vld [vmem:[%s9 + $0x100] sm:$0xff]
  %v2387 = vld [vmem:[%s9 + $0x108] sm:$0xff]
  %v2388 = vld [vmem:[%s9 + $0x110] sm:$0xff]
  %v2389 = vld [vmem:[%s9 + $0x118] sm:$0xff]
  %v2390 = vld [vmem:[%s9 + $0x120] sm:$0xff]
  %v2391 = vld [vmem:[%s9 + $0x128] sm:$0xff]
  %v2392 = vld [vmem:[%s9 + $0x130] sm:$0xff]
  %v2393 = vld [vmem:[%s9 + $0x138] sm:$0xff]
  %v2394 = vld [vmem:[%s9 + $0x140] sm:$0xff]
  %v2395 = vld [vmem:[%s9 + $0x148] sm:$0xff]
  %v2396 = vld [vmem:[%s9 + $0x150] sm:$0xff]
  %v2397 = vld [vmem:[%s9 + $0x158] sm:$0xff]
  %v2398 = vld [vmem:[%s9 + $0x160] sm:$0xff]
  %v2399 = vld [vmem:[%s9 + $0x168] sm:$0xff]
  %v2400 = vld [vmem:[%s9 + $0x170] sm:$0xff]
  %v2401 = vld [vmem:[%s9 + $0x178] sm:$0xff]
  %v2402 = vld [vmem:[%s9 + $0x180] sm:$0xff]
  %v2403 = vld [vmem:[%s9 + $0x188] sm:$0xff]
  %v2404 = vld [vmem:[%s9 + $0x190] sm:$0xff]
  %v2405 = vld [vmem:[%s9 + $0x198] sm:$0xff]
  %v2406 = vld [vmem:[%s9 + $0x1a0] sm:$0xff]
  %v2407 = vld [vmem:[%s9 + $0x1a8] sm:$0xff]
  %v2408 = vld [vmem:[%s9 + $0x1b0] sm:$0xff]
  %v2409 = vld [vmem:[%s9 + $0x1b8] sm:$0xff]
  %v2410 = vld [vmem:[%s9 + $0x1c0] sm:$0xff]
  %v2411 = vld [vmem:[%s9 + $0x1c8] sm:$0xff]
  %v2412 = vld [vmem:[%s9 + $0x1d0] sm:$0xff]
  %v2413 = vld [vmem:[%s9 + $0x1d8] sm:$0xff]
  %v2414 = vld [vmem:[%s9 + $0x1e0] sm:$0xff]
  %v2415 = vld [vmem:[%s9 + $0x1e8] sm:$0xff]
  %v2416 = vld [vmem:[%s9 + $0x1f0] sm:$0xff]
  %v2417 = vld [vmem:[%s9 + $0x1f8] sm:$0xff]
  %v2418 = vld [vmem:[%s9 + $0x200] sm:$0xff]
  %v2419 = vld [vmem:[%s9 + $0x208] sm:$0xff]
  %v2420 = vld [vmem:[%s9 + $0x210] sm:$0xff]
  %v2421 = vld [vmem:[%s9 + $0x218] sm:$0xff]
  %v2422 = vld [vmem:[%s9 + $0x220] sm:$0xff]
  %v2423 = vld [vmem:[%s9 + $0x228] sm:$0xff]
  %v2424 = vld [vmem:[%s9 + $0x230] sm:$0xff]
  %v2425 = vld [vmem:[%s9 + $0x238] sm:$0xff]
  %v2426 = vld [vmem:[%s9 + $0x240] sm:$0xff]
  %v2427 = vld [vmem:[%s9 + $0x248] sm:$0xff]
  %v2428 = vld [vmem:[%s9 + $0x250] sm:$0xff]
  %v2429 = vld [vmem:[%s9 + $0x258] sm:$0xff]
  %v2430 = vld [vmem:[%s9 + $0x260] sm:$0xff]
  %v2431 = vld [vmem:[%s9 + $0x268] sm:$0xff]
  %v2432 = vld [vmem:[%s9 + $0x270] sm:$0xff]
  %v2433 = vld [vmem:[%s9 + $0x278] sm:$0xff]
  %v2434 = vld [vmem:[%s9 + $0x280] sm:$0xff]
  %v2435 = vld [vmem:[%s9 + $0x288] sm:$0xff]
  %v2436 = vld [vmem:[%s9 + $0x290] sm:$0xff]
  %v2437 = vld [vmem:[%s9 + $0x298] sm:$0xff]
  %v2438 = vld [vmem:[%s9 + $0x2a0] sm:$0xff]
  %v2439 = vld [vmem:[%s9 + $0x2a8] sm:$0xff]
  %v2440 = vld [vmem:[%s9 + $0x2b0] sm:$0xff]
  %v2441 = vld [vmem:[%s9 + $0x2b8] sm:$0xff]
  %v2442 = vld [vmem:[%s9 + $0x2c0] sm:$0xff]
  %v2443 = vld [vmem:[%s9 + $0x2c8] sm:$0xff]
  %v2444 = vld [vmem:[%s9 + $0x2d0] sm:$0xff]
  %v2445 = vld [vmem:[%s9 + $0x2d8] sm:$0xff]
  %v2446 = vld [vmem:[%s9 + $0x2e0] sm:$0xff]
  %v2447 = vld [vmem:[%s9 + $0x2e8] sm:$0xff]
  %v2448 = vld [vmem:[%s9 + $0x2f0] sm:$0xff]
  %v2449 = vld [vmem:[%s9 + $0x2f8] sm:$0xff]
  %v2450 = vld [vmem:[%s9 + $0x300] sm:$0xff]
  %v2451 = vld [vmem:[%s9 + $0x308] sm:$0xff]
  %v2452 = vld [vmem:[%s9 + $0x310] sm:$0xff]
  %v2453 = vld [vmem:[%s9 + $0x318] sm:$0xff]
  %v2454 = vld [vmem:[%s9 + $0x320] sm:$0xff]
  %v2455 = vld [vmem:[%s9 + $0x328] sm:$0xff]
  %v2456 = vld [vmem:[%s9 + $0x330] sm:$0xff]
  %v2457 = vld [vmem:[%s9 + $0x338] sm:$0xff]
  %v2458 = vld [vmem:[%s9 + $0x340] sm:$0xff]
  %v2459 = vld [vmem:[%s9 + $0x348] sm:$0xff]
  %v2460 = vld [vmem:[%s9 + $0x350] sm:$0xff]
  %v2461 = vld [vmem:[%s9 + $0x358] sm:$0xff]
  %v2462 = vld [vmem:[%s9 + $0x360] sm:$0xff]
  %v2463 = vld [vmem:[%s9 + $0x368] sm:$0xff]
  %v2464 = vld [vmem:[%s9 + $0x370] sm:$0xff]
  %v2465 = vld [vmem:[%s9 + $0x378] sm:$0xff]
  %v2466 = vld [vmem:[%s9 + $0x380] sm:$0xff]
  %v2467 = vld [vmem:[%s9 + $0x388] sm:$0xff]
  %v2468 = vld [vmem:[%s9 + $0x390] sm:$0xff]
  %v2469 = vld [vmem:[%s9 + $0x398] sm:$0xff]
  %v2470 = vld [vmem:[%s9 + $0x3a0] sm:$0xff]
  %v2471 = vld [vmem:[%s9 + $0x3a8] sm:$0xff]
  %v2472 = vld [vmem:[%s9 + $0x3b0] sm:$0xff]
  %v2473 = vld [vmem:[%s9 + $0x3b8] sm:$0xff]
  %v2474 = vld [vmem:[%s9 + $0x3c0] sm:$0xff]
  %v2475 = vld [vmem:[%s9 + $0x3c8] sm:$0xff]
  %v2476 = vld [vmem:[%s9 + $0x3d0] sm:$0xff]
  %v2477 = vld [vmem:[%s9 + $0x3d8] sm:$0xff]
  %v2478 = vld [vmem:[%s9 + $0x3e0] sm:$0xff]
  %v2479 = vld [vmem:[%s9 + $0x3e8] sm:$0xff]
  %v2480 = vld [vmem:[%s9 + $0x3f0] sm:$0xff]
  %v2481 = vld [vmem:[%s9 + $0x3f8] sm:$0xff]
  %v2482 = vld [vmem:[%s10] sm:$0xf]
  %v2484 = vlaneseq
  %v2485 = vshrl.u32 %v2484, 7
  %v2486 = vsub.s32 0, %v2485
  %v2487 = vrot.slane %v2482, %v2486
  %v2488 = vlaneseq
  %v2489 = vshrl.u32 %v2488, 7
  %v2490 = vsub.s32 1, %v2489
  %v2491 = vrot.slane %v2482, %v2490
  %v2492 = vlaneseq
  %v2493 = vshrl.u32 %v2492, 7
  %v2494 = vsub.s32 2, %v2493
  %v2495 = vrot.slane %v2482, %v2494
  %v2496 = vlaneseq
  %v2497 = vshrl.u32 %v2496, 7
  %v2498 = vsub.s32 3, %v2497
  %v2499 = vrot.slane %v2482, %v2498
  %v2632 = vunpack.c.l.b16 %v2354
  %v2633 = vunpack.c.h.b16 %v2354
  %v2634 = vunpack.c.l.b16 %v2355
  %v2635 = vunpack.c.h.b16 %v2355
  %v2636 = vunpack.c.l.b16 %v2356
  %v2637 = vunpack.c.h.b16 %v2356
  %v2638 = vunpack.c.l.b16 %v2357
  %v2639 = vunpack.c.h.b16 %v2357
  %v2640 = vunpack.c.l.b16 %v2358
  %v2641 = vunpack.c.h.b16 %v2358
  %v2642 = vunpack.c.l.b16 %v2359
  %v2643 = vunpack.c.h.b16 %v2359
  %v2644 = vunpack.c.l.b16 %v2360
  %v2645 = vunpack.c.h.b16 %v2360
  %v2646 = vunpack.c.l.b16 %v2361
  %v2647 = vunpack.c.h.b16 %v2361
  %v2648 = vunpack.c.l.b16 %v2362
  %v2649 = vunpack.c.h.b16 %v2362
  %v2650 = vunpack.c.l.b16 %v2363
  %v2651 = vunpack.c.h.b16 %v2363
  %v2652 = vunpack.c.l.b16 %v2364
  %v2653 = vunpack.c.h.b16 %v2364
  %v2654 = vunpack.c.l.b16 %v2365
  %v2655 = vunpack.c.h.b16 %v2365
  %v2656 = vunpack.c.l.b16 %v2366
  %v2657 = vunpack.c.h.b16 %v2366
  %v2658 = vunpack.c.l.b16 %v2367
  %v2659 = vunpack.c.h.b16 %v2367
  %v2660 = vunpack.c.l.b16 %v2368
  %v2661 = vunpack.c.h.b16 %v2368
  %v2662 = vunpack.c.l.b16 %v2369
  %v2663 = vunpack.c.h.b16 %v2369
  %v2664 = vunpack.c.l.b16 %v2370
  %v2665 = vunpack.c.h.b16 %v2370
  %v2666 = vunpack.c.l.b16 %v2371
  %v2667 = vunpack.c.h.b16 %v2371
  %v2668 = vunpack.c.l.b16 %v2372
  %v2669 = vunpack.c.h.b16 %v2372
  %v2670 = vunpack.c.l.b16 %v2373
  %v2671 = vunpack.c.h.b16 %v2373
  %v2672 = vunpack.c.l.b16 %v2374
  %v2673 = vunpack.c.h.b16 %v2374
  %v2674 = vunpack.c.l.b16 %v2375
  %v2675 = vunpack.c.h.b16 %v2375
  %v2676 = vunpack.c.l.b16 %v2376
  %v2677 = vunpack.c.h.b16 %v2376
  %v2678 = vunpack.c.l.b16 %v2377
  %v2679 = vunpack.c.h.b16 %v2377
  %v2680 = vunpack.c.l.b16 %v2378
  %v2681 = vunpack.c.h.b16 %v2378
  %v2682 = vunpack.c.l.b16 %v2379
  %v2683 = vunpack.c.h.b16 %v2379
  %v2684 = vunpack.c.l.b16 %v2380
  %v2685 = vunpack.c.h.b16 %v2380
  %v2686 = vunpack.c.l.b16 %v2381
  %v2687 = vunpack.c.h.b16 %v2381
  %v2688 = vunpack.c.l.b16 %v2382
  %v2689 = vunpack.c.h.b16 %v2382
  %v2690 = vunpack.c.l.b16 %v2383
  %v2691 = vunpack.c.h.b16 %v2383
  %v2692 = vunpack.c.l.b16 %v2384
  %v2693 = vunpack.c.h.b16 %v2384
  %v2694 = vunpack.c.l.b16 %v2385
  %v2695 = vunpack.c.h.b16 %v2385
  %v2696 = vunpack.c.l.b16 %v2386
  %v2697 = vunpack.c.h.b16 %v2386
  %v2698 = vunpack.c.l.b16 %v2387
  %v2699 = vunpack.c.h.b16 %v2387
  %v2700 = vunpack.c.l.b16 %v2388
  %v2701 = vunpack.c.h.b16 %v2388
  %v2702 = vunpack.c.l.b16 %v2389
  %v2703 = vunpack.c.h.b16 %v2389
  %v2704 = vunpack.c.l.b16 %v2390
  %v2705 = vunpack.c.h.b16 %v2390
  %v2706 = vunpack.c.l.b16 %v2391
  %v2707 = vunpack.c.h.b16 %v2391
  %v2708 = vunpack.c.l.b16 %v2392
  %v2709 = vunpack.c.h.b16 %v2392
  %v2710 = vunpack.c.l.b16 %v2393
  %v2711 = vunpack.c.h.b16 %v2393
  %v2712 = vunpack.c.l.b16 %v2394
  %v2713 = vunpack.c.h.b16 %v2394
  %v2714 = vunpack.c.l.b16 %v2395
  %v2715 = vunpack.c.h.b16 %v2395
  %v2716 = vunpack.c.l.b16 %v2396
  %v2717 = vunpack.c.h.b16 %v2396
  %v2718 = vunpack.c.l.b16 %v2397
  %v2719 = vunpack.c.h.b16 %v2397
  %v2720 = vunpack.c.l.b16 %v2398
  %v2721 = vunpack.c.h.b16 %v2398
  %v2722 = vunpack.c.l.b16 %v2399
  %v2723 = vunpack.c.h.b16 %v2399
  %v2724 = vunpack.c.l.b16 %v2400
  %v2725 = vunpack.c.h.b16 %v2400
  %v2726 = vunpack.c.l.b16 %v2401
  %v2727 = vunpack.c.h.b16 %v2401
  %v2728 = vunpack.c.l.b16 %v2402
  %v2729 = vunpack.c.h.b16 %v2402
  %v2730 = vunpack.c.l.b16 %v2403
  %v2731 = vunpack.c.h.b16 %v2403
  %v2732 = vunpack.c.l.b16 %v2404
  %v2733 = vunpack.c.h.b16 %v2404
  %v2734 = vunpack.c.l.b16 %v2405
  %v2735 = vunpack.c.h.b16 %v2405
  %v2736 = vunpack.c.l.b16 %v2406
  %v2737 = vunpack.c.h.b16 %v2406
  %v2738 = vunpack.c.l.b16 %v2407
  %v2739 = vunpack.c.h.b16 %v2407
  %v2740 = vunpack.c.l.b16 %v2408
  %v2741 = vunpack.c.h.b16 %v2408
  %v2742 = vunpack.c.l.b16 %v2409
  %v2743 = vunpack.c.h.b16 %v2409
  %v2744 = vunpack.c.l.b16 %v2410
  %v2745 = vunpack.c.h.b16 %v2410
  %v2746 = vunpack.c.l.b16 %v2411
  %v2747 = vunpack.c.h.b16 %v2411
  %v2748 = vunpack.c.l.b16 %v2412
  %v2749 = vunpack.c.h.b16 %v2412
  %v2750 = vunpack.c.l.b16 %v2413
  %v2751 = vunpack.c.h.b16 %v2413
  %v2752 = vunpack.c.l.b16 %v2414
  %v2753 = vunpack.c.h.b16 %v2414
  %v2754 = vunpack.c.l.b16 %v2415
  %v2755 = vunpack.c.h.b16 %v2415
  %v2756 = vunpack.c.l.b16 %v2416
  %v2757 = vunpack.c.h.b16 %v2416
  %v2758 = vunpack.c.l.b16 %v2417
  %v2759 = vunpack.c.h.b16 %v2417
  %v2760 = vunpack.c.l.b16 %v2418
  %v2761 = vunpack.c.h.b16 %v2418
  %v2762 = vunpack.c.l.b16 %v2419
  %v2763 = vunpack.c.h.b16 %v2419
  %v2764 = vunpack.c.l.b16 %v2420
  %v2765 = vunpack.c.h.b16 %v2420
  %v2766 = vunpack.c.l.b16 %v2421
  %v2767 = vunpack.c.h.b16 %v2421
  %v2768 = vunpack.c.l.b16 %v2422
  %v2769 = vunpack.c.h.b16 %v2422
  %v2770 = vunpack.c.l.b16 %v2423
  %v2771 = vunpack.c.h.b16 %v2423
  %v2772 = vunpack.c.l.b16 %v2424
  %v2773 = vunpack.c.h.b16 %v2424
  %v2774 = vunpack.c.l.b16 %v2425
  %v2775 = vunpack.c.h.b16 %v2425
  %v2776 = vunpack.c.l.b16 %v2426
  %v2777 = vunpack.c.h.b16 %v2426
  %v2778 = vunpack.c.l.b16 %v2427
  %v2779 = vunpack.c.h.b16 %v2427
  %v2780 = vunpack.c.l.b16 %v2428
  %v2781 = vunpack.c.h.b16 %v2428
  %v2782 = vunpack.c.l.b16 %v2429
  %v2783 = vunpack.c.h.b16 %v2429
  %v2784 = vunpack.c.l.b16 %v2430
  %v2785 = vunpack.c.h.b16 %v2430
  %v2786 = vunpack.c.l.b16 %v2431
  %v2787 = vunpack.c.h.b16 %v2431
  %v2788 = vunpack.c.l.b16 %v2432
  %v2789 = vunpack.c.h.b16 %v2432
  %v2790 = vunpack.c.l.b16 %v2433
  %v2791 = vunpack.c.h.b16 %v2433
  %v2792 = vunpack.c.l.b16 %v2434
  %v2793 = vunpack.c.h.b16 %v2434
  %v2794 = vunpack.c.l.b16 %v2435
  %v2795 = vunpack.c.h.b16 %v2435
  %v2796 = vunpack.c.l.b16 %v2436
  %v2797 = vunpack.c.h.b16 %v2436
  %v2798 = vunpack.c.l.b16 %v2437
  %v2799 = vunpack.c.h.b16 %v2437
  %v2800 = vunpack.c.l.b16 %v2438
  %v2801 = vunpack.c.h.b16 %v2438
  %v2802 = vunpack.c.l.b16 %v2439
  %v2803 = vunpack.c.h.b16 %v2439
  %v2804 = vunpack.c.l.b16 %v2440
  %v2805 = vunpack.c.h.b16 %v2440
  %v2806 = vunpack.c.l.b16 %v2441
  %v2807 = vunpack.c.h.b16 %v2441
  %v2808 = vunpack.c.l.b16 %v2442
  %v2809 = vunpack.c.h.b16 %v2442
  %v2810 = vunpack.c.l.b16 %v2443
  %v2811 = vunpack.c.h.b16 %v2443
  %v2812 = vunpack.c.l.b16 %v2444
  %v2813 = vunpack.c.h.b16 %v2444
  %v2814 = vunpack.c.l.b16 %v2445
  %v2815 = vunpack.c.h.b16 %v2445
  %v2816 = vunpack.c.l.b16 %v2446
  %v2817 = vunpack.c.h.b16 %v2446
  %v2818 = vunpack.c.l.b16 %v2447
  %v2819 = vunpack.c.h.b16 %v2447
  %v2820 = vunpack.c.l.b16 %v2448
  %v2821 = vunpack.c.h.b16 %v2448
  %v2822 = vunpack.c.l.b16 %v2449
  %v2823 = vunpack.c.h.b16 %v2449
  %v2824 = vunpack.c.l.b16 %v2450
  %v2825 = vunpack.c.h.b16 %v2450
  %v2826 = vunpack.c.l.b16 %v2451
  %v2827 = vunpack.c.h.b16 %v2451
  %v2828 = vunpack.c.l.b16 %v2452
  %v2829 = vunpack.c.h.b16 %v2452
  %v2830 = vunpack.c.l.b16 %v2453
  %v2831 = vunpack.c.h.b16 %v2453
  %v2832 = vunpack.c.l.b16 %v2454
  %v2833 = vunpack.c.h.b16 %v2454
  %v2834 = vunpack.c.l.b16 %v2455
  %v2835 = vunpack.c.h.b16 %v2455
  %v2836 = vunpack.c.l.b16 %v2456
  %v2837 = vunpack.c.h.b16 %v2456
  %v2838 = vunpack.c.l.b16 %v2457
  %v2839 = vunpack.c.h.b16 %v2457
  %v2840 = vunpack.c.l.b16 %v2458
  %v2841 = vunpack.c.h.b16 %v2458
  %v2842 = vunpack.c.l.b16 %v2459
  %v2843 = vunpack.c.h.b16 %v2459
  %v2844 = vunpack.c.l.b16 %v2460
  %v2845 = vunpack.c.h.b16 %v2460
  %v2846 = vunpack.c.l.b16 %v2461
  %v2847 = vunpack.c.h.b16 %v2461
  %v2848 = vunpack.c.l.b16 %v2462
  %v2849 = vunpack.c.h.b16 %v2462
  %v2850 = vunpack.c.l.b16 %v2463
  %v2851 = vunpack.c.h.b16 %v2463
  %v2852 = vunpack.c.l.b16 %v2464
  %v2853 = vunpack.c.h.b16 %v2464
  %v2854 = vunpack.c.l.b16 %v2465
  %v2855 = vunpack.c.h.b16 %v2465
  %v2856 = vunpack.c.l.b16 %v2466
  %v2857 = vunpack.c.h.b16 %v2466
  %v2858 = vunpack.c.l.b16 %v2467
  %v2859 = vunpack.c.h.b16 %v2467
  %v2860 = vunpack.c.l.b16 %v2468
  %v2861 = vunpack.c.h.b16 %v2468
  %v2862 = vunpack.c.l.b16 %v2469
  %v2863 = vunpack.c.h.b16 %v2469
  %v2864 = vunpack.c.l.b16 %v2470
  %v2865 = vunpack.c.h.b16 %v2470
  %v2866 = vunpack.c.l.b16 %v2471
  %v2867 = vunpack.c.h.b16 %v2471
  %v2868 = vunpack.c.l.b16 %v2472
  %v2869 = vunpack.c.h.b16 %v2472
  %v2870 = vunpack.c.l.b16 %v2473
  %v2871 = vunpack.c.h.b16 %v2473
  %v2872 = vunpack.c.l.b16 %v2474
  %v2873 = vunpack.c.h.b16 %v2474
  %v2874 = vunpack.c.l.b16 %v2475
  %v2875 = vunpack.c.h.b16 %v2475
  %v2876 = vunpack.c.l.b16 %v2476
  %v2877 = vunpack.c.h.b16 %v2476
  %v2878 = vunpack.c.l.b16 %v2477
  %v2879 = vunpack.c.h.b16 %v2477
  %v2880 = vunpack.c.l.b16 %v2478
  %v2881 = vunpack.c.h.b16 %v2478
  %v2882 = vunpack.c.l.b16 %v2479
  %v2883 = vunpack.c.h.b16 %v2479
  %v2884 = vunpack.c.l.b16 %v2480
  %v2885 = vunpack.c.h.b16 %v2480
  %v2886 = vunpack.c.l.b16 %v2481
  %v2887 = vunpack.c.h.b16 %v2481
  %v2888 = vpack.c.b16 %v2636, %v2632
  %v2889 = vpack.c.b16 %v2637, %v2633
  %v2890 = vpack.c.b16 %v2638, %v2634
  %v2891 = vpack.c.b16 %v2639, %v2635
  %v2892 = vpack.c.b16 %v2644, %v2640
  %v2893 = vpack.c.b16 %v2645, %v2641
  %v2894 = vpack.c.b16 %v2646, %v2642
  %v2895 = vpack.c.b16 %v2647, %v2643
  %v2896 = vpack.c.b16 %v2652, %v2648
  %v2897 = vpack.c.b16 %v2653, %v2649
  %v2898 = vpack.c.b16 %v2654, %v2650
  %v2899 = vpack.c.b16 %v2655, %v2651
  %v2900 = vpack.c.b16 %v2660, %v2656
  %v2901 = vpack.c.b16 %v2661, %v2657
  %v2902 = vpack.c.b16 %v2662, %v2658
  %v2903 = vpack.c.b16 %v2663, %v2659
  %v2904 = vpack.c.b16 %v2668, %v2664
  %v2905 = vpack.c.b16 %v2669, %v2665
  %v2906 = vpack.c.b16 %v2670, %v2666
  %v2907 = vpack.c.b16 %v2671, %v2667
  %v2908 = vpack.c.b16 %v2676, %v2672
  %v2909 = vpack.c.b16 %v2677, %v2673
  %v2910 = vpack.c.b16 %v2678, %v2674
  %v2911 = vpack.c.b16 %v2679, %v2675
  %v2912 = vpack.c.b16 %v2684, %v2680
  %v2913 = vpack.c.b16 %v2685, %v2681
  %v2914 = vpack.c.b16 %v2686, %v2682
  %v2915 = vpack.c.b16 %v2687, %v2683
  %v2916 = vpack.c.b16 %v2692, %v2688
  %v2917 = vpack.c.b16 %v2693, %v2689
  %v2918 = vpack.c.b16 %v2694, %v2690
  %v2919 = vpack.c.b16 %v2695, %v2691
  %v2920 = vpack.c.b16 %v2700, %v2696
  %v2921 = vpack.c.b16 %v2701, %v2697
  %v2922 = vpack.c.b16 %v2702, %v2698
  %v2923 = vpack.c.b16 %v2703, %v2699
  %v2924 = vpack.c.b16 %v2708, %v2704
  %v2925 = vpack.c.b16 %v2709, %v2705
  %v2926 = vpack.c.b16 %v2710, %v2706
  %v2927 = vpack.c.b16 %v2711, %v2707
  %v2928 = vpack.c.b16 %v2716, %v2712
  %v2929 = vpack.c.b16 %v2717, %v2713
  %v2930 = vpack.c.b16 %v2718, %v2714
  %v2931 = vpack.c.b16 %v2719, %v2715
  %v2932 = vpack.c.b16 %v2724, %v2720
  %v2933 = vpack.c.b16 %v2725, %v2721
  %v2934 = vpack.c.b16 %v2726, %v2722
  %v2935 = vpack.c.b16 %v2727, %v2723
  %v2936 = vpack.c.b16 %v2732, %v2728
  %v2937 = vpack.c.b16 %v2733, %v2729
  %v2938 = vpack.c.b16 %v2734, %v2730
  %v2939 = vpack.c.b16 %v2735, %v2731
  %v2940 = vpack.c.b16 %v2740, %v2736
  %v2941 = vpack.c.b16 %v2741, %v2737
  %v2942 = vpack.c.b16 %v2742, %v2738
  %v2943 = vpack.c.b16 %v2743, %v2739
  %v2944 = vpack.c.b16 %v2748, %v2744
  %v2945 = vpack.c.b16 %v2749, %v2745
  %v2946 = vpack.c.b16 %v2750, %v2746
  %v2947 = vpack.c.b16 %v2751, %v2747
  %v2948 = vpack.c.b16 %v2756, %v2752
  %v2949 = vpack.c.b16 %v2757, %v2753
  %v2950 = vpack.c.b16 %v2758, %v2754
  %v2951 = vpack.c.b16 %v2759, %v2755
  %v2952 = vpack.c.b16 %v2764, %v2760
  %v2953 = vpack.c.b16 %v2765, %v2761
  %v2954 = vpack.c.b16 %v2766, %v2762
  %v2955 = vpack.c.b16 %v2767, %v2763
  %v2956 = vpack.c.b16 %v2772, %v2768
  %v2957 = vpack.c.b16 %v2773, %v2769
  %v2958 = vpack.c.b16 %v2774, %v2770
  %v2959 = vpack.c.b16 %v2775, %v2771
  %v2960 = vpack.c.b16 %v2780, %v2776
  %v2961 = vpack.c.b16 %v2781, %v2777
  %v2962 = vpack.c.b16 %v2782, %v2778
  %v2963 = vpack.c.b16 %v2783, %v2779
  %v2964 = vpack.c.b16 %v2788, %v2784
  %v2965 = vpack.c.b16 %v2789, %v2785
  %v2966 = vpack.c.b16 %v2790, %v2786
  %v2967 = vpack.c.b16 %v2791, %v2787
  %v2968 = vpack.c.b16 %v2796, %v2792
  %v2969 = vpack.c.b16 %v2797, %v2793
  %v2970 = vpack.c.b16 %v2798, %v2794
  %v2971 = vpack.c.b16 %v2799, %v2795
  %v2972 = vpack.c.b16 %v2804, %v2800
  %v2973 = vpack.c.b16 %v2805, %v2801
  %v2974 = vpack.c.b16 %v2806, %v2802
  %v2975 = vpack.c.b16 %v2807, %v2803
  %v2976 = vpack.c.b16 %v2812, %v2808
  %v2977 = vpack.c.b16 %v2813, %v2809
  %v2978 = vpack.c.b16 %v2814, %v2810
  %v2979 = vpack.c.b16 %v2815, %v2811
  %v2980 = vpack.c.b16 %v2820, %v2816
  %v2981 = vpack.c.b16 %v2821, %v2817
  %v2982 = vpack.c.b16 %v2822, %v2818
  %v2983 = vpack.c.b16 %v2823, %v2819
  %v2984 = vpack.c.b16 %v2828, %v2824
  %v2985 = vpack.c.b16 %v2829, %v2825
  %v2986 = vpack.c.b16 %v2830, %v2826
  %v2987 = vpack.c.b16 %v2831, %v2827
  %v2988 = vpack.c.b16 %v2836, %v2832
  %v2989 = vpack.c.b16 %v2837, %v2833
  %v2990 = vpack.c.b16 %v2838, %v2834
  %v2991 = vpack.c.b16 %v2839, %v2835
  %v2992 = vpack.c.b16 %v2844, %v2840
  %v2993 = vpack.c.b16 %v2845, %v2841
  %v2994 = vpack.c.b16 %v2846, %v2842
  %v2995 = vpack.c.b16 %v2847, %v2843
  %v2996 = vpack.c.b16 %v2852, %v2848
  %v2997 = vpack.c.b16 %v2853, %v2849
  %v2998 = vpack.c.b16 %v2854, %v2850
  %v2999 = vpack.c.b16 %v2855, %v2851
  %v3000 = vpack.c.b16 %v2860, %v2856
  %v3001 = vpack.c.b16 %v2861, %v2857
  %v3002 = vpack.c.b16 %v2862, %v2858
  %v3003 = vpack.c.b16 %v2863, %v2859
  %v3004 = vpack.c.b16 %v2868, %v2864
  %v3005 = vpack.c.b16 %v2869, %v2865
  %v3006 = vpack.c.b16 %v2870, %v2866
  %v3007 = vpack.c.b16 %v2871, %v2867
  %v3008 = vpack.c.b16 %v2876, %v2872
  %v3009 = vpack.c.b16 %v2877, %v2873
  %v3010 = vpack.c.b16 %v2878, %v2874
  %v3011 = vpack.c.b16 %v2879, %v2875
  %v3012 = vpack.c.b16 %v2884, %v2880
  %v3013 = vpack.c.b16 %v2885, %v2881
  %v3014 = vpack.c.b16 %v2886, %v2882
  %v3015 = vpack.c.b16 %v2887, %v2883
  %3144 = vmatprep.subr.bf16.mxu0 %v2889
  %3145 = vmatpush1.bf16.msra.mxu0 %v2888
  %3146 = vmatprep.subr.bf16.mxu0 %v2893
  %3147 = vmatpush1.bf16.msra.mxu0 %v2892
  %3148 = vmatprep.subr.bf16.mxu0 %v2897
  %3149 = vmatpush1.bf16.msra.mxu0 %v2896
  %3150 = vmatprep.subr.bf16.mxu0 %v2901
  %3151 = vmatpush1.bf16.msra.mxu0 %v2900
  %3152 = vmatprep.subr.bf16.mxu0 %v2905
  %3153 = vmatpush1.bf16.msra.mxu0 %v2904
  %3154 = vmatprep.subr.bf16.mxu0 %v2909
  %3155 = vmatpush1.bf16.msra.mxu0 %v2908
  %3156 = vmatprep.subr.bf16.mxu0 %v2913
  %3157 = vmatpush1.bf16.msra.mxu0 %v2912
  %3158 = vmatprep.subr.bf16.mxu0 %v2917
  %3159 = vmatpush1.bf16.msra.mxu0 %v2916
  %3160 = vmatprep.subr.bf16.mxu0 %v2921
  %3161 = vmatpush1.bf16.msra.mxu0 %v2920
  %3162 = vmatprep.subr.bf16.mxu0 %v2925
  %3163 = vmatpush1.bf16.msra.mxu0 %v2924
  %3164 = vmatprep.subr.bf16.mxu0 %v2929
  %3165 = vmatpush1.bf16.msra.mxu0 %v2928
  %3166 = vmatprep.subr.bf16.mxu0 %v2933
  %3167 = vmatpush1.bf16.msra.mxu0 %v2932
  %3168 = vmatprep.subr.bf16.mxu0 %v2937
  %3169 = vmatpush1.bf16.msra.mxu0 %v2936
  %3170 = vmatprep.subr.bf16.mxu0 %v2941
  %3171 = vmatpush1.bf16.msra.mxu0 %v2940
  %3172 = vmatprep.subr.bf16.mxu0 %v2945
  %3173 = vmatpush1.bf16.msra.mxu0 %v2944
  %3174 = vmatprep.subr.bf16.mxu0 %v2949
  %3175 = vmatpush1.bf16.msra.mxu0 %v2948
  %3176 = vmatprep.mubr.bf16.mxu0 %v2351
  %3177 = vmatmul.mubr.bf16.gmra.mrb[0].mxu0 %v2350
  %v3178 = vpop.f32.mrb[0].mxu0
  %v3179 = vadd.f32 %v2487, %v3178
  %v3180 = vpop.f32.mrb[0].mxu0
  %v3181 = vadd.f32 %v2491, %v3180
  %v3182 = vpop.f32.mrb[0].mxu0
  %v3183 = vpop.f32.mrb[0].mxu0
  %3184 = vdwg.mxu0
  %3185 = vmatprep.subr.bf16.mxu0 %v2953
  %3186 = vmatpush1.bf16.msra.mxu0 %v2952
  %3187 = vmatprep.subr.bf16.mxu0 %v2957
  %3188 = vmatpush1.bf16.msra.mxu0 %v2956
  %3189 = vmatprep.subr.bf16.mxu0 %v2961
  %3190 = vmatpush1.bf16.msra.mxu0 %v2960
  %3191 = vmatprep.subr.bf16.mxu0 %v2965
  %3192 = vmatpush1.bf16.msra.mxu0 %v2964
  %3193 = vmatprep.subr.bf16.mxu0 %v2969
  %3194 = vmatpush1.bf16.msra.mxu0 %v2968
  %3195 = vmatprep.subr.bf16.mxu0 %v2973
  %3196 = vmatpush1.bf16.msra.mxu0 %v2972
  %3197 = vmatprep.subr.bf16.mxu0 %v2977
  %3198 = vmatpush1.bf16.msra.mxu0 %v2976
  %3199 = vmatprep.subr.bf16.mxu0 %v2981
  %3200 = vmatpush1.bf16.msra.mxu0 %v2980
  %3201 = vmatprep.subr.bf16.mxu0 %v2985
  %3202 = vmatpush1.bf16.msra.mxu0 %v2984
  %3203 = vmatprep.subr.bf16.mxu0 %v2989
  %3204 = vmatpush1.bf16.msra.mxu0 %v2988
  %3205 = vmatprep.subr.bf16.mxu0 %v2993
  %3206 = vmatpush1.bf16.msra.mxu0 %v2992
  %3207 = vmatprep.subr.bf16.mxu0 %v2997
  %3208 = vmatpush1.bf16.msra.mxu0 %v2996
  %3209 = vmatprep.subr.bf16.mxu0 %v3001
  %3210 = vmatpush1.bf16.msra.mxu0 %v3000
  %3211 = vmatprep.subr.bf16.mxu0 %v3005
  %3212 = vmatpush1.bf16.msra.mxu0 %v3004
  %3213 = vmatprep.subr.bf16.mxu0 %v3009
  %3214 = vmatpush1.bf16.msra.mxu0 %v3008
  %3215 = vmatprep.subr.bf16.mxu0 %v3013
  %3216 = vmatpush1.bf16.msra.mxu0 %v3012
  %3217 = vmatprep.mubr.bf16.mxu0 %v2353
  %3218 = vmatmul.mubr.bf16.gmra.mrb[0].mxu0 %v2352
  %v3219 = vpop.f32.mrb[0].mxu0
  %v3220 = vadd.f32 %v3179, %v3219
  %v3221 = vpop.f32.mrb[0].mxu0
  %v3222 = vadd.f32 %v3181, %v3221
  %v3223 = vpop.f32.mrb[0].mxu0
  %v3224 = vpop.f32.mrb[0].mxu0
  %3225 = vdwg.mxu0
  %3226 = vmatprep.subr.bf16.mxu0 %v2891
  %3227 = vmatpush1.bf16.msra.mxu0 %v2890
  %3228 = vmatprep.subr.bf16.mxu0 %v2895
  %3229 = vmatpush1.bf16.msra.mxu0 %v2894
  %3230 = vmatprep.subr.bf16.mxu0 %v2899
  %3231 = vmatpush1.bf16.msra.mxu0 %v2898
  %3232 = vmatprep.subr.bf16.mxu0 %v2903
  %3233 = vmatpush1.bf16.msra.mxu0 %v2902
  %3234 = vmatprep.subr.bf16.mxu0 %v2907
  %3235 = vmatpush1.bf16.msra.mxu0 %v2906
  %3236 = vmatprep.subr.bf16.mxu0 %v2911
  %3237 = vmatpush1.bf16.msra.mxu0 %v2910
  %3238 = vmatprep.subr.bf16.mxu0 %v2915
  %3239 = vmatpush1.bf16.msra.mxu0 %v2914
  %3240 = vmatprep.subr.bf16.mxu0 %v2919
  %3241 = vmatpush1.bf16.msra.mxu0 %v2918
  %3242 = vmatprep.subr.bf16.mxu0 %v2923
  %3243 = vmatpush1.bf16.msra.mxu0 %v2922
  %3244 = vmatprep.subr.bf16.mxu0 %v2927
  %3245 = vmatpush1.bf16.msra.mxu0 %v2926
  %3246 = vmatprep.subr.bf16.mxu0 %v2931
  %3247 = vmatpush1.bf16.msra.mxu0 %v2930
  %3248 = vmatprep.subr.bf16.mxu0 %v2935
  %3249 = vmatpush1.bf16.msra.mxu0 %v2934
  %3250 = vmatprep.subr.bf16.mxu0 %v2939
  %3251 = vmatpush1.bf16.msra.mxu0 %v2938
  %3252 = vmatprep.subr.bf16.mxu0 %v2943
  %3253 = vmatpush1.bf16.msra.mxu0 %v2942
  %3254 = vmatprep.subr.bf16.mxu0 %v2947
  %3255 = vmatpush1.bf16.msra.mxu0 %v2946
  %3256 = vmatprep.subr.bf16.mxu0 %v2951
  %3257 = vmatpush1.bf16.msra.mxu0 %v2950
  %3258 = vmatprep.mubr.bf16.mxu0 %v2351
  %3259 = vmatmul.mubr.bf16.gmra.mrb[0].mxu0 %v2350
  %v3260 = vpop.f32.mrb[0].mxu0
  %v3261 = vadd.f32 %v2495, %v3260
  %v3262 = vpop.f32.mrb[0].mxu0
  %v3263 = vadd.f32 %v2499, %v3262
  %v3264 = vpop.f32.mrb[0].mxu0
  %v3265 = vpop.f32.mrb[0].mxu0
  %3266 = vdwg.mxu0
  %3267 = vmatprep.subr.bf16.mxu0 %v2955
  %3268 = vmatpush1.bf16.msra.mxu0 %v2954
  %3269 = vmatprep.subr.bf16.mxu0 %v2959
  %3270 = vmatpush1.bf16.msra.mxu0 %v2958
  %3271 = vmatprep.subr.bf16.mxu0 %v2963
  %3272 = vmatpush1.bf16.msra.mxu0 %v2962
  %3273 = vmatprep.subr.bf16.mxu0 %v2967
  %3274 = vmatpush1.bf16.msra.mxu0 %v2966
  %3275 = vmatprep.subr.bf16.mxu0 %v2971
  %3276 = vmatpush1.bf16.msra.mxu0 %v2970
  %3277 = vmatprep.subr.bf16.mxu0 %v2975
  %3278 = vmatpush1.bf16.msra.mxu0 %v2974
  %3279 = vmatprep.subr.bf16.mxu0 %v2979
  %3280 = vmatpush1.bf16.msra.mxu0 %v2978
  %3281 = vmatprep.subr.bf16.mxu0 %v2983
  %3282 = vmatpush1.bf16.msra.mxu0 %v2982
  %3283 = vmatprep.subr.bf16.mxu0 %v2987
  %3284 = vmatpush1.bf16.msra.mxu0 %v2986
  %3285 = vmatprep.subr.bf16.mxu0 %v2991
  %3286 = vmatpush1.bf16.msra.mxu0 %v2990
  %3287 = vmatprep.subr.bf16.mxu0 %v2995
  %3288 = vmatpush1.bf16.msra.mxu0 %v2994
  %3289 = vmatprep.subr.bf16.mxu0 %v2999
  %3290 = vmatpush1.bf16.msra.mxu0 %v2998
  %3291 = vmatprep.subr.bf16.mxu0 %v3003
  %3292 = vmatpush1.bf16.msra.mxu0 %v3002
  %3293 = vmatprep.subr.bf16.mxu0 %v3007
  %3294 = vmatpush1.bf16.msra.mxu0 %v3006
  %3295 = vmatprep.subr.bf16.mxu0 %v3011
  %3296 = vmatpush1.bf16.msra.mxu0 %v3010
  %3297 = vmatprep.subr.bf16.mxu0 %v3015
  %3298 = vmatpush1.bf16.msra.mxu0 %v3014
  %3299 = vmatprep.mubr.bf16.mxu0 %v2353
  %3300 = vmatmul.mubr.bf16.gmra.mrb[0].mxu0 %v2352
  %v3301 = vpop.f32.mrb[0].mxu0
  %v3302 = vadd.f32 %v3261, %v3301
  %v3303 = vpop.f32.mrb[0].mxu0
  %v3304 = vadd.f32 %v3263, %v3303
  %v3305 = vpop.f32.mrb[0].mxu0
  %v3306 = vpop.f32.mrb[0].mxu0
  %3307 = vdwg.mxu0
  %v3308 = vld [vmem:[%s11] sm:$0xf]
  %v3309 = vld [vmem:[%s12] sm:$0xf]
  %v3311 = vlaneseq
  %v3312 = vshrl.u32 %v3311, 7
  %v3313 = vsub.s32 0, %v3312
  %v3314 = vrot.slane %v3308, %v3313
  %v3315 = vlaneseq
  %v3316 = vshrl.u32 %v3315, 7
  %v3317 = vsub.s32 1, %v3316
  %v3318 = vrot.slane %v3308, %v3317
  %v3319 = vlaneseq
  %v3320 = vshrl.u32 %v3319, 7
  %v3321 = vsub.s32 2, %v3320
  %v3322 = vrot.slane %v3308, %v3321
  %v3323 = vlaneseq
  %v3324 = vshrl.u32 %v3323, 7
  %v3325 = vsub.s32 3, %v3324
  %v3326 = vrot.slane %v3308, %v3325
  %v3331 = vmul.f32 %v2296, %v3314
  %v3332 = vmul.f32 %v2297, %v3318
  %v3333 = vmul.f32 %v2298, %v3322
  %v3334 = vmul.f32 %v2299, %v3326
  %v3336 = vlaneseq
  %v3337 = vshrl.u32 %v3336, 7
  %v3338 = vsub.s32 0, %v3337
  %v3339 = vrot.slane %v3309, %v3338
  %v3340 = vlaneseq
  %v3341 = vshrl.u32 %v3340, 7
  %v3342 = vsub.s32 1, %v3341
  %v3343 = vrot.slane %v3309, %v3342
  %v3344 = vlaneseq
  %v3345 = vshrl.u32 %v3344, 7
  %v3346 = vsub.s32 2, %v3345
  %v3347 = vrot.slane %v3309, %v3346
  %v3348 = vlaneseq
  %v3349 = vshrl.u32 %v3348, 7
  %v3350 = vsub.s32 3, %v3349
  %v3351 = vrot.slane %v3309, %v3350
  %v3356 = vadd.f32 %v3331, %v3339
  %v3357 = vadd.f32 %v3332, %v3343
  %v3358 = vadd.f32 %v3333, %v3347
  %v3359 = vadd.f32 %v3334, %v3351
  %v3360 = vpack.c.bf16 %v3356, %v3356
  %v3361 = vpack.c.bf16 %v3357, %v3357
  %v3362 = vpack.c.bf16 %v3358, %v3358
  %v3363 = vpack.c.bf16 %v3359, %v3359
  %v3364 = vld [vmem:[%s13] sm:$0xff]
  %v3365 = vld [vmem:[%s13 + $0x8] sm:$0xff]
  %v3366 = vld [vmem:[%s13 + $0x10] sm:$0xff]
  %v3367 = vld [vmem:[%s13 + $0x18] sm:$0xff]
  %v3368 = vld [vmem:[%s13 + $0x20] sm:$0xff]
  %v3369 = vld [vmem:[%s13 + $0x28] sm:$0xff]
  %v3370 = vld [vmem:[%s13 + $0x30] sm:$0xff]
  %v3371 = vld [vmem:[%s13 + $0x38] sm:$0xff]
  %v3372 = vld [vmem:[%s13 + $0x40] sm:$0xff]
  %v3373 = vld [vmem:[%s13 + $0x48] sm:$0xff]
  %v3374 = vld [vmem:[%s13 + $0x50] sm:$0xff]
  %v3375 = vld [vmem:[%s13 + $0x58] sm:$0xff]
  %v3376 = vld [vmem:[%s13 + $0x60] sm:$0xff]
  %v3377 = vld [vmem:[%s13 + $0x68] sm:$0xff]
  %v3378 = vld [vmem:[%s13 + $0x70] sm:$0xff]
  %v3379 = vld [vmem:[%s13 + $0x78] sm:$0xff]
  %v3380 = vld [vmem:[%s13 + $0x80] sm:$0xff]
  %v3381 = vld [vmem:[%s13 + $0x88] sm:$0xff]
  %v3382 = vld [vmem:[%s13 + $0x90] sm:$0xff]
  %v3383 = vld [vmem:[%s13 + $0x98] sm:$0xff]
  %v3384 = vld [vmem:[%s13 + $0xa0] sm:$0xff]
  %v3385 = vld [vmem:[%s13 + $0xa8] sm:$0xff]
  %v3386 = vld [vmem:[%s13 + $0xb0] sm:$0xff]
  %v3387 = vld [vmem:[%s13 + $0xb8] sm:$0xff]
  %v3388 = vld [vmem:[%s13 + $0xc0] sm:$0xff]
  %v3389 = vld [vmem:[%s13 + $0xc8] sm:$0xff]
  %v3390 = vld [vmem:[%s13 + $0xd0] sm:$0xff]
  %v3391 = vld [vmem:[%s13 + $0xd8] sm:$0xff]
  %v3392 = vld [vmem:[%s13 + $0xe0] sm:$0xff]
  %v3393 = vld [vmem:[%s13 + $0xe8] sm:$0xff]
  %v3394 = vld [vmem:[%s13 + $0xf0] sm:$0xff]
  %v3395 = vld [vmem:[%s13 + $0xf8] sm:$0xff]
  %v3396 = vld [vmem:[%s13 + $0x100] sm:$0xff]
  %v3397 = vld [vmem:[%s13 + $0x108] sm:$0xff]
  %v3398 = vld [vmem:[%s13 + $0x110] sm:$0xff]
  %v3399 = vld [vmem:[%s13 + $0x118] sm:$0xff]
  %v3400 = vld [vmem:[%s13 + $0x120] sm:$0xff]
  %v3401 = vld [vmem:[%s13 + $0x128] sm:$0xff]
  %v3402 = vld [vmem:[%s13 + $0x130] sm:$0xff]
  %v3403 = vld [vmem:[%s13 + $0x138] sm:$0xff]
  %v3404 = vld [vmem:[%s13 + $0x140] sm:$0xff]
  %v3405 = vld [vmem:[%s13 + $0x148] sm:$0xff]
  %v3406 = vld [vmem:[%s13 + $0x150] sm:$0xff]
  %v3407 = vld [vmem:[%s13 + $0x158] sm:$0xff]
  %v3408 = vld [vmem:[%s13 + $0x160] sm:$0xff]
  %v3409 = vld [vmem:[%s13 + $0x168] sm:$0xff]
  %v3410 = vld [vmem:[%s13 + $0x170] sm:$0xff]
  %v3411 = vld [vmem:[%s13 + $0x178] sm:$0xff]
  %v3412 = vld [vmem:[%s13 + $0x180] sm:$0xff]
  %v3413 = vld [vmem:[%s13 + $0x188] sm:$0xff]
  %v3414 = vld [vmem:[%s13 + $0x190] sm:$0xff]
  %v3415 = vld [vmem:[%s13 + $0x198] sm:$0xff]
  %v3416 = vld [vmem:[%s13 + $0x1a0] sm:$0xff]
  %v3417 = vld [vmem:[%s13 + $0x1a8] sm:$0xff]
  %v3418 = vld [vmem:[%s13 + $0x1b0] sm:$0xff]
  %v3419 = vld [vmem:[%s13 + $0x1b8] sm:$0xff]
  %v3420 = vld [vmem:[%s13 + $0x1c0] sm:$0xff]
  %v3421 = vld [vmem:[%s13 + $0x1c8] sm:$0xff]
  %v3422 = vld [vmem:[%s13 + $0x1d0] sm:$0xff]
  %v3423 = vld [vmem:[%s13 + $0x1d8] sm:$0xff]
  %v3424 = vld [vmem:[%s13 + $0x1e0] sm:$0xff]
  %v3425 = vld [vmem:[%s13 + $0x1e8] sm:$0xff]
  %v3426 = vld [vmem:[%s13 + $0x1f0] sm:$0xff]
  %v3427 = vld [vmem:[%s13 + $0x1f8] sm:$0xff]
  %v3428 = vld [vmem:[%s13 + $0x200] sm:$0xff]
  %v3429 = vld [vmem:[%s13 + $0x208] sm:$0xff]
  %v3430 = vld [vmem:[%s13 + $0x210] sm:$0xff]
  %v3431 = vld [vmem:[%s13 + $0x218] sm:$0xff]
  %v3432 = vld [vmem:[%s13 + $0x220] sm:$0xff]
  %v3433 = vld [vmem:[%s13 + $0x228] sm:$0xff]
  %v3434 = vld [vmem:[%s13 + $0x230] sm:$0xff]
  %v3435 = vld [vmem:[%s13 + $0x238] sm:$0xff]
  %v3436 = vld [vmem:[%s13 + $0x240] sm:$0xff]
  %v3437 = vld [vmem:[%s13 + $0x248] sm:$0xff]
  %v3438 = vld [vmem:[%s13 + $0x250] sm:$0xff]
  %v3439 = vld [vmem:[%s13 + $0x258] sm:$0xff]
  %v3440 = vld [vmem:[%s13 + $0x260] sm:$0xff]
  %v3441 = vld [vmem:[%s13 + $0x268] sm:$0xff]
  %v3442 = vld [vmem:[%s13 + $0x270] sm:$0xff]
  %v3443 = vld [vmem:[%s13 + $0x278] sm:$0xff]
  %v3444 = vld [vmem:[%s13 + $0x280] sm:$0xff]
  %v3445 = vld [vmem:[%s13 + $0x288] sm:$0xff]
  %v3446 = vld [vmem:[%s13 + $0x290] sm:$0xff]
  %v3447 = vld [vmem:[%s13 + $0x298] sm:$0xff]
  %v3448 = vld [vmem:[%s13 + $0x2a0] sm:$0xff]
  %v3449 = vld [vmem:[%s13 + $0x2a8] sm:$0xff]
  %v3450 = vld [vmem:[%s13 + $0x2b0] sm:$0xff]
  %v3451 = vld [vmem:[%s13 + $0x2b8] sm:$0xff]
  %v3452 = vld [vmem:[%s13 + $0x2c0] sm:$0xff]
  %v3453 = vld [vmem:[%s13 + $0x2c8] sm:$0xff]
  %v3454 = vld [vmem:[%s13 + $0x2d0] sm:$0xff]
  %v3455 = vld [vmem:[%s13 + $0x2d8] sm:$0xff]
  %v3456 = vld [vmem:[%s13 + $0x2e0] sm:$0xff]
  %v3457 = vld [vmem:[%s13 + $0x2e8] sm:$0xff]
  %v3458 = vld [vmem:[%s13 + $0x2f0] sm:$0xff]
  %v3459 = vld [vmem:[%s13 + $0x2f8] sm:$0xff]
  %v3460 = vld [vmem:[%s13 + $0x300] sm:$0xff]
  %v3461 = vld [vmem:[%s13 + $0x308] sm:$0xff]
  %v3462 = vld [vmem:[%s13 + $0x310] sm:$0xff]
  %v3463 = vld [vmem:[%s13 + $0x318] sm:$0xff]
  %v3464 = vld [vmem:[%s13 + $0x320] sm:$0xff]
  %v3465 = vld [vmem:[%s13 + $0x328] sm:$0xff]
  %v3466 = vld [vmem:[%s13 + $0x330] sm:$0xff]
  %v3467 = vld [vmem:[%s13 + $0x338] sm:$0xff]
  %v3468 = vld [vmem:[%s13 + $0x340] sm:$0xff]
  %v3469 = vld [vmem:[%s13 + $0x348] sm:$0xff]
  %v3470 = vld [vmem:[%s13 + $0x350] sm:$0xff]
  %v3471 = vld [vmem:[%s13 + $0x358] sm:$0xff]
  %v3472 = vld [vmem:[%s13 + $0x360] sm:$0xff]
  %v3473 = vld [vmem:[%s13 + $0x368] sm:$0xff]
  %v3474 = vld [vmem:[%s13 + $0x370] sm:$0xff]
  %v3475 = vld [vmem:[%s13 + $0x378] sm:$0xff]
  %v3476 = vld [vmem:[%s13 + $0x380] sm:$0xff]
  %v3477 = vld [vmem:[%s13 + $0x388] sm:$0xff]
  %v3478 = vld [vmem:[%s13 + $0x390] sm:$0xff]
  %v3479 = vld [vmem:[%s13 + $0x398] sm:$0xff]
  %v3480 = vld [vmem:[%s13 + $0x3a0] sm:$0xff]
  %v3481 = vld [vmem:[%s13 + $0x3a8] sm:$0xff]
  %v3482 = vld [vmem:[%s13 + $0x3b0] sm:$0xff]
  %v3483 = vld [vmem:[%s13 + $0x3b8] sm:$0xff]
  %v3484 = vld [vmem:[%s13 + $0x3c0] sm:$0xff]
  %v3485 = vld [vmem:[%s13 + $0x3c8] sm:$0xff]
  %v3486 = vld [vmem:[%s13 + $0x3d0] sm:$0xff]
  %v3487 = vld [vmem:[%s13 + $0x3d8] sm:$0xff]
  %v3488 = vld [vmem:[%s13 + $0x3e0] sm:$0xff]
  %v3489 = vld [vmem:[%s13 + $0x3e8] sm:$0xff]
  %v3490 = vld [vmem:[%s13 + $0x3f0] sm:$0xff]
  %v3491 = vld [vmem:[%s13 + $0x3f8] sm:$0xff]
  %v3492 = vld [vmem:[%s14] sm:$0xf]
  %v3494 = vlaneseq
  %v3495 = vshrl.u32 %v3494, 7
  %v3496 = vsub.s32 0, %v3495
  %v3497 = vrot.slane %v3492, %v3496
  %v3498 = vlaneseq
  %v3499 = vshrl.u32 %v3498, 7
  %v3500 = vsub.s32 1, %v3499
  %v3501 = vrot.slane %v3492, %v3500
  %v3502 = vlaneseq
  %v3503 = vshrl.u32 %v3502, 7
  %v3504 = vsub.s32 2, %v3503
  %v3505 = vrot.slane %v3492, %v3504
  %v3506 = vlaneseq
  %v3507 = vshrl.u32 %v3506, 7
  %v3508 = vsub.s32 3, %v3507
  %v3509 = vrot.slane %v3492, %v3508
  %v3642 = vunpack.c.l.b16 %v3364
  %v3643 = vunpack.c.h.b16 %v3364
  %v3644 = vunpack.c.l.b16 %v3365
  %v3645 = vunpack.c.h.b16 %v3365
  %v3646 = vunpack.c.l.b16 %v3366
  %v3647 = vunpack.c.h.b16 %v3366
  %v3648 = vunpack.c.l.b16 %v3367
  %v3649 = vunpack.c.h.b16 %v3367
  %v3650 = vunpack.c.l.b16 %v3368
  %v3651 = vunpack.c.h.b16 %v3368
  %v3652 = vunpack.c.l.b16 %v3369
  %v3653 = vunpack.c.h.b16 %v3369
  %v3654 = vunpack.c.l.b16 %v3370
  %v3655 = vunpack.c.h.b16 %v3370
  %v3656 = vunpack.c.l.b16 %v3371
  %v3657 = vunpack.c.h.b16 %v3371
  %v3658 = vunpack.c.l.b16 %v3372
  %v3659 = vunpack.c.h.b16 %v3372
  %v3660 = vunpack.c.l.b16 %v3373
  %v3661 = vunpack.c.h.b16 %v3373
  %v3662 = vunpack.c.l.b16 %v3374
  %v3663 = vunpack.c.h.b16 %v3374
  %v3664 = vunpack.c.l.b16 %v3375
  %v3665 = vunpack.c.h.b16 %v3375
  %v3666 = vunpack.c.l.b16 %v3376
  %v3667 = vunpack.c.h.b16 %v3376
  %v3668 = vunpack.c.l.b16 %v3377
  %v3669 = vunpack.c.h.b16 %v3377
  %v3670 = vunpack.c.l.b16 %v3378
  %v3671 = vunpack.c.h.b16 %v3378
  %v3672 = vunpack.c.l.b16 %v3379
  %v3673 = vunpack.c.h.b16 %v3379
  %v3674 = vunpack.c.l.b16 %v3380
  %v3675 = vunpack.c.h.b16 %v3380
  %v3676 = vunpack.c.l.b16 %v3381
  %v3677 = vunpack.c.h.b16 %v3381
  %v3678 = vunpack.c.l.b16 %v3382
  %v3679 = vunpack.c.h.b16 %v3382
  %v3680 = vunpack.c.l.b16 %v3383
  %v3681 = vunpack.c.h.b16 %v3383
  %v3682 = vunpack.c.l.b16 %v3384
  %v3683 = vunpack.c.h.b16 %v3384
  %v3684 = vunpack.c.l.b16 %v3385
  %v3685 = vunpack.c.h.b16 %v3385
  %v3686 = vunpack.c.l.b16 %v3386
  %v3687 = vunpack.c.h.b16 %v3386
  %v3688 = vunpack.c.l.b16 %v3387
  %v3689 = vunpack.c.h.b16 %v3387
  %v3690 = vunpack.c.l.b16 %v3388
  %v3691 = vunpack.c.h.b16 %v3388
  %v3692 = vunpack.c.l.b16 %v3389
  %v3693 = vunpack.c.h.b16 %v3389
  %v3694 = vunpack.c.l.b16 %v3390
  %v3695 = vunpack.c.h.b16 %v3390
  %v3696 = vunpack.c.l.b16 %v3391
  %v3697 = vunpack.c.h.b16 %v3391
  %v3698 = vunpack.c.l.b16 %v3392
  %v3699 = vunpack.c.h.b16 %v3392
  %v3700 = vunpack.c.l.b16 %v3393
  %v3701 = vunpack.c.h.b16 %v3393
  %v3702 = vunpack.c.l.b16 %v3394
  %v3703 = vunpack.c.h.b16 %v3394
  %v3704 = vunpack.c.l.b16 %v3395
  %v3705 = vunpack.c.h.b16 %v3395
  %v3706 = vunpack.c.l.b16 %v3396
  %v3707 = vunpack.c.h.b16 %v3396
  %v3708 = vunpack.c.l.b16 %v3397
  %v3709 = vunpack.c.h.b16 %v3397
  %v3710 = vunpack.c.l.b16 %v3398
  %v3711 = vunpack.c.h.b16 %v3398
  %v3712 = vunpack.c.l.b16 %v3399
  %v3713 = vunpack.c.h.b16 %v3399
  %v3714 = vunpack.c.l.b16 %v3400
  %v3715 = vunpack.c.h.b16 %v3400
  %v3716 = vunpack.c.l.b16 %v3401
  %v3717 = vunpack.c.h.b16 %v3401
  %v3718 = vunpack.c.l.b16 %v3402
  %v3719 = vunpack.c.h.b16 %v3402
  %v3720 = vunpack.c.l.b16 %v3403
  %v3721 = vunpack.c.h.b16 %v3403
  %v3722 = vunpack.c.l.b16 %v3404
  %v3723 = vunpack.c.h.b16 %v3404
  %v3724 = vunpack.c.l.b16 %v3405
  %v3725 = vunpack.c.h.b16 %v3405
  %v3726 = vunpack.c.l.b16 %v3406
  %v3727 = vunpack.c.h.b16 %v3406
  %v3728 = vunpack.c.l.b16 %v3407
  %v3729 = vunpack.c.h.b16 %v3407
  %v3730 = vunpack.c.l.b16 %v3408
  %v3731 = vunpack.c.h.b16 %v3408
  %v3732 = vunpack.c.l.b16 %v3409
  %v3733 = vunpack.c.h.b16 %v3409
  %v3734 = vunpack.c.l.b16 %v3410
  %v3735 = vunpack.c.h.b16 %v3410
  %v3736 = vunpack.c.l.b16 %v3411
  %v3737 = vunpack.c.h.b16 %v3411
  %v3738 = vunpack.c.l.b16 %v3412
  %v3739 = vunpack.c.h.b16 %v3412
  %v3740 = vunpack.c.l.b16 %v3413
  %v3741 = vunpack.c.h.b16 %v3413
  %v3742 = vunpack.c.l.b16 %v3414
  %v3743 = vunpack.c.h.b16 %v3414
  %v3744 = vunpack.c.l.b16 %v3415
  %v3745 = vunpack.c.h.b16 %v3415
  %v3746 = vunpack.c.l.b16 %v3416
  %v3747 = vunpack.c.h.b16 %v3416
  %v3748 = vunpack.c.l.b16 %v3417
  %v3749 = vunpack.c.h.b16 %v3417
  %v3750 = vunpack.c.l.b16 %v3418
  %v3751 = vunpack.c.h.b16 %v3418
  %v3752 = vunpack.c.l.b16 %v3419
  %v3753 = vunpack.c.h.b16 %v3419
  %v3754 = vunpack.c.l.b16 %v3420
  %v3755 = vunpack.c.h.b16 %v3420
  %v3756 = vunpack.c.l.b16 %v3421
  %v3757 = vunpack.c.h.b16 %v3421
  %v3758 = vunpack.c.l.b16 %v3422
  %v3759 = vunpack.c.h.b16 %v3422
  %v3760 = vunpack.c.l.b16 %v3423
  %v3761 = vunpack.c.h.b16 %v3423
  %v3762 = vunpack.c.l.b16 %v3424
  %v3763 = vunpack.c.h.b16 %v3424
  %v3764 = vunpack.c.l.b16 %v3425
  %v3765 = vunpack.c.h.b16 %v3425
  %v3766 = vunpack.c.l.b16 %v3426
  %v3767 = vunpack.c.h.b16 %v3426
  %v3768 = vunpack.c.l.b16 %v3427
  %v3769 = vunpack.c.h.b16 %v3427
  %v3770 = vunpack.c.l.b16 %v3428
  %v3771 = vunpack.c.h.b16 %v3428
  %v3772 = vunpack.c.l.b16 %v3429
  %v3773 = vunpack.c.h.b16 %v3429
  %v3774 = vunpack.c.l.b16 %v3430
  %v3775 = vunpack.c.h.b16 %v3430
  %v3776 = vunpack.c.l.b16 %v3431
  %v3777 = vunpack.c.h.b16 %v3431
  %v3778 = vunpack.c.l.b16 %v3432
  %v3779 = vunpack.c.h.b16 %v3432
  %v3780 = vunpack.c.l.b16 %v3433
  %v3781 = vunpack.c.h.b16 %v3433
  %v3782 = vunpack.c.l.b16 %v3434
  %v3783 = vunpack.c.h.b16 %v3434
  %v3784 = vunpack.c.l.b16 %v3435
  %v3785 = vunpack.c.h.b16 %v3435
  %v3786 = vunpack.c.l.b16 %v3436
  %v3787 = vunpack.c.h.b16 %v3436
  %v3788 = vunpack.c.l.b16 %v3437
  %v3789 = vunpack.c.h.b16 %v3437
  %v3790 = vunpack.c.l.b16 %v3438
  %v3791 = vunpack.c.h.b16 %v3438
  %v3792 = vunpack.c.l.b16 %v3439
  %v3793 = vunpack.c.h.b16 %v3439
  %v3794 = vunpack.c.l.b16 %v3440
  %v3795 = vunpack.c.h.b16 %v3440
  %v3796 = vunpack.c.l.b16 %v3441
  %v3797 = vunpack.c.h.b16 %v3441
  %v3798 = vunpack.c.l.b16 %v3442
  %v3799 = vunpack.c.h.b16 %v3442
  %v3800 = vunpack.c.l.b16 %v3443
  %v3801 = vunpack.c.h.b16 %v3443
  %v3802 = vunpack.c.l.b16 %v3444
  %v3803 = vunpack.c.h.b16 %v3444
  %v3804 = vunpack.c.l.b16 %v3445
  %v3805 = vunpack.c.h.b16 %v3445
  %v3806 = vunpack.c.l.b16 %v3446
  %v3807 = vunpack.c.h.b16 %v3446
  %v3808 = vunpack.c.l.b16 %v3447
  %v3809 = vunpack.c.h.b16 %v3447
  %v3810 = vunpack.c.l.b16 %v3448
  %v3811 = vunpack.c.h.b16 %v3448
  %v3812 = vunpack.c.l.b16 %v3449
  %v3813 = vunpack.c.h.b16 %v3449
  %v3814 = vunpack.c.l.b16 %v3450
  %v3815 = vunpack.c.h.b16 %v3450
  %v3816 = vunpack.c.l.b16 %v3451
  %v3817 = vunpack.c.h.b16 %v3451
  %v3818 = vunpack.c.l.b16 %v3452
  %v3819 = vunpack.c.h.b16 %v3452
  %v3820 = vunpack.c.l.b16 %v3453
  %v3821 = vunpack.c.h.b16 %v3453
  %v3822 = vunpack.c.l.b16 %v3454
  %v3823 = vunpack.c.h.b16 %v3454
  %v3824 = vunpack.c.l.b16 %v3455
  %v3825 = vunpack.c.h.b16 %v3455
  %v3826 = vunpack.c.l.b16 %v3456
  %v3827 = vunpack.c.h.b16 %v3456
  %v3828 = vunpack.c.l.b16 %v3457
  %v3829 = vunpack.c.h.b16 %v3457
  %v3830 = vunpack.c.l.b16 %v3458
  %v3831 = vunpack.c.h.b16 %v3458
  %v3832 = vunpack.c.l.b16 %v3459
  %v3833 = vunpack.c.h.b16 %v3459
  %v3834 = vunpack.c.l.b16 %v3460
  %v3835 = vunpack.c.h.b16 %v3460
  %v3836 = vunpack.c.l.b16 %v3461
  %v3837 = vunpack.c.h.b16 %v3461
  %v3838 = vunpack.c.l.b16 %v3462
  %v3839 = vunpack.c.h.b16 %v3462
  %v3840 = vunpack.c.l.b16 %v3463
  %v3841 = vunpack.c.h.b16 %v3463
  %v3842 = vunpack.c.l.b16 %v3464
  %v3843 = vunpack.c.h.b16 %v3464
  %v3844 = vunpack.c.l.b16 %v3465
  %v3845 = vunpack.c.h.b16 %v3465
  %v3846 = vunpack.c.l.b16 %v3466
  %v3847 = vunpack.c.h.b16 %v3466
  %v3848 = vunpack.c.l.b16 %v3467
  %v3849 = vunpack.c.h.b16 %v3467
  %v3850 = vunpack.c.l.b16 %v3468
  %v3851 = vunpack.c.h.b16 %v3468
  %v3852 = vunpack.c.l.b16 %v3469
  %v3853 = vunpack.c.h.b16 %v3469
  %v3854 = vunpack.c.l.b16 %v3470
  %v3855 = vunpack.c.h.b16 %v3470
  %v3856 = vunpack.c.l.b16 %v3471
  %v3857 = vunpack.c.h.b16 %v3471
  %v3858 = vunpack.c.l.b16 %v3472
  %v3859 = vunpack.c.h.b16 %v3472
  %v3860 = vunpack.c.l.b16 %v3473
  %v3861 = vunpack.c.h.b16 %v3473
  %v3862 = vunpack.c.l.b16 %v3474
  %v3863 = vunpack.c.h.b16 %v3474
  %v3864 = vunpack.c.l.b16 %v3475
  %v3865 = vunpack.c.h.b16 %v3475
  %v3866 = vunpack.c.l.b16 %v3476
  %v3867 = vunpack.c.h.b16 %v3476
  %v3868 = vunpack.c.l.b16 %v3477
  %v3869 = vunpack.c.h.b16 %v3477
  %v3870 = vunpack.c.l.b16 %v3478
  %v3871 = vunpack.c.h.b16 %v3478
  %v3872 = vunpack.c.l.b16 %v3479
  %v3873 = vunpack.c.h.b16 %v3479
  %v3874 = vunpack.c.l.b16 %v3480
  %v3875 = vunpack.c.h.b16 %v3480
  %v3876 = vunpack.c.l.b16 %v3481
  %v3877 = vunpack.c.h.b16 %v3481
  %v3878 = vunpack.c.l.b16 %v3482
  %v3879 = vunpack.c.h.b16 %v3482
  %v3880 = vunpack.c.l.b16 %v3483
  %v3881 = vunpack.c.h.b16 %v3483
  %v3882 = vunpack.c.l.b16 %v3484
  %v3883 = vunpack.c.h.b16 %v3484
  %v3884 = vunpack.c.l.b16 %v3485
  %v3885 = vunpack.c.h.b16 %v3485
  %v3886 = vunpack.c.l.b16 %v3486
  %v3887 = vunpack.c.h.b16 %v3486
  %v3888 = vunpack.c.l.b16 %v3487
  %v3889 = vunpack.c.h.b16 %v3487
  %v3890 = vunpack.c.l.b16 %v3488
  %v3891 = vunpack.c.h.b16 %v3488
  %v3892 = vunpack.c.l.b16 %v3489
  %v3893 = vunpack.c.h.b16 %v3489
  %v3894 = vunpack.c.l.b16 %v3490
  %v3895 = vunpack.c.h.b16 %v3490
  %v3896 = vunpack.c.l.b16 %v3491
  %v3897 = vunpack.c.h.b16 %v3491
  %v3898 = vpack.c.b16 %v3646, %v3642
  %v3899 = vpack.c.b16 %v3647, %v3643
  %v3900 = vpack.c.b16 %v3648, %v3644
  %v3901 = vpack.c.b16 %v3649, %v3645
  %v3902 = vpack.c.b16 %v3654, %v3650
  %v3903 = vpack.c.b16 %v3655, %v3651
  %v3904 = vpack.c.b16 %v3656, %v3652
  %v3905 = vpack.c.b16 %v3657, %v3653
  %v3906 = vpack.c.b16 %v3662, %v3658
  %v3907 = vpack.c.b16 %v3663, %v3659
  %v3908 = vpack.c.b16 %v3664, %v3660
  %v3909 = vpack.c.b16 %v3665, %v3661
  %v3910 = vpack.c.b16 %v3670, %v3666
  %v3911 = vpack.c.b16 %v3671, %v3667
  %v3912 = vpack.c.b16 %v3672, %v3668
  %v3913 = vpack.c.b16 %v3673, %v3669
  %v3914 = vpack.c.b16 %v3678, %v3674
  %v3915 = vpack.c.b16 %v3679, %v3675
  %v3916 = vpack.c.b16 %v3680, %v3676
  %v3917 = vpack.c.b16 %v3681, %v3677
  %v3918 = vpack.c.b16 %v3686, %v3682
  %v3919 = vpack.c.b16 %v3687, %v3683
  %v3920 = vpack.c.b16 %v3688, %v3684
  %v3921 = vpack.c.b16 %v3689, %v3685
  %v3922 = vpack.c.b16 %v3694, %v3690
  %v3923 = vpack.c.b16 %v3695, %v3691
  %v3924 = vpack.c.b16 %v3696, %v3692
  %v3925 = vpack.c.b16 %v3697, %v3693
  %v3926 = vpack.c.b16 %v3702, %v3698
  %v3927 = vpack.c.b16 %v3703, %v3699
  %v3928 = vpack.c.b16 %v3704, %v3700
  %v3929 = vpack.c.b16 %v3705, %v3701
  %v3930 = vpack.c.b16 %v3710, %v3706
  %v3931 = vpack.c.b16 %v3711, %v3707
  %v3932 = vpack.c.b16 %v3712, %v3708
  %v3933 = vpack.c.b16 %v3713, %v3709
  %v3934 = vpack.c.b16 %v3718, %v3714
  %v3935 = vpack.c.b16 %v3719, %v3715
  %v3936 = vpack.c.b16 %v3720, %v3716
  %v3937 = vpack.c.b16 %v3721, %v3717
  %v3938 = vpack.c.b16 %v3726, %v3722
  %v3939 = vpack.c.b16 %v3727, %v3723
  %v3940 = vpack.c.b16 %v3728, %v3724
  %v3941 = vpack.c.b16 %v3729, %v3725
  %v3942 = vpack.c.b16 %v3734, %v3730
  %v3943 = vpack.c.b16 %v3735, %v3731
  %v3944 = vpack.c.b16 %v3736, %v3732
  %v3945 = vpack.c.b16 %v3737, %v3733
  %v3946 = vpack.c.b16 %v3742, %v3738
  %v3947 = vpack.c.b16 %v3743, %v3739
  %v3948 = vpack.c.b16 %v3744, %v3740
  %v3949 = vpack.c.b16 %v3745, %v3741
  %v3950 = vpack.c.b16 %v3750, %v3746
  %v3951 = vpack.c.b16 %v3751, %v3747
  %v3952 = vpack.c.b16 %v3752, %v3748
  %v3953 = vpack.c.b16 %v3753, %v3749
  %v3954 = vpack.c.b16 %v3758, %v3754
  %v3955 = vpack.c.b16 %v3759, %v3755
  %v3956 = vpack.c.b16 %v3760, %v3756
  %v3957 = vpack.c.b16 %v3761, %v3757
  %v3958 = vpack.c.b16 %v3766, %v3762
  %v3959 = vpack.c.b16 %v3767, %v3763
  %v3960 = vpack.c.b16 %v3768, %v3764
  %v3961 = vpack.c.b16 %v3769, %v3765
  %v3962 = vpack.c.b16 %v3774, %v3770
  %v3963 = vpack.c.b16 %v3775, %v3771
  %v3964 = vpack.c.b16 %v3776, %v3772
  %v3965 = vpack.c.b16 %v3777, %v3773
  %v3966 = vpack.c.b16 %v3782, %v3778
  %v3967 = vpack.c.b16 %v3783, %v3779
  %v3968 = vpack.c.b16 %v3784, %v3780
  %v3969 = vpack.c.b16 %v3785, %v3781
  %v3970 = vpack.c.b16 %v3790, %v3786
  %v3971 = vpack.c.b16 %v3791, %v3787
  %v3972 = vpack.c.b16 %v3792, %v3788
  %v3973 = vpack.c.b16 %v3793, %v3789
  %v3974 = vpack.c.b16 %v3798, %v3794
  %v3975 = vpack.c.b16 %v3799, %v3795
  %v3976 = vpack.c.b16 %v3800, %v3796
  %v3977 = vpack.c.b16 %v3801, %v3797
  %v3978 = vpack.c.b16 %v3806, %v3802
  %v3979 = vpack.c.b16 %v3807, %v3803
  %v3980 = vpack.c.b16 %v3808, %v3804
  %v3981 = vpack.c.b16 %v3809, %v3805
  %v3982 = vpack.c.b16 %v3814, %v3810
  %v3983 = vpack.c.b16 %v3815, %v3811
  %v3984 = vpack.c.b16 %v3816, %v3812
  %v3985 = vpack.c.b16 %v3817, %v3813
  %v3986 = vpack.c.b16 %v3822, %v3818
  %v3987 = vpack.c.b16 %v3823, %v3819
  %v3988 = vpack.c.b16 %v3824, %v3820
  %v3989 = vpack.c.b16 %v3825, %v3821
  %v3990 = vpack.c.b16 %v3830, %v3826
  %v3991 = vpack.c.b16 %v3831, %v3827
  %v3992 = vpack.c.b16 %v3832, %v3828
  %v3993 = vpack.c.b16 %v3833, %v3829
  %v3994 = vpack.c.b16 %v3838, %v3834
  %v3995 = vpack.c.b16 %v3839, %v3835
  %v3996 = vpack.c.b16 %v3840, %v3836
  %v3997 = vpack.c.b16 %v3841, %v3837
  %v3998 = vpack.c.b16 %v3846, %v3842
  %v3999 = vpack.c.b16 %v3847, %v3843
  %v4000 = vpack.c.b16 %v3848, %v3844
  %v4001 = vpack.c.b16 %v3849, %v3845
  %v4002 = vpack.c.b16 %v3854, %v3850
  %v4003 = vpack.c.b16 %v3855, %v3851
  %v4004 = vpack.c.b16 %v3856, %v3852
  %v4005 = vpack.c.b16 %v3857, %v3853
  %v4006 = vpack.c.b16 %v3862, %v3858
  %v4007 = vpack.c.b16 %v3863, %v3859
  %v4008 = vpack.c.b16 %v3864, %v3860
  %v4009 = vpack.c.b16 %v3865, %v3861
  %v4010 = vpack.c.b16 %v3870, %v3866
  %v4011 = vpack.c.b16 %v3871, %v3867
  %v4012 = vpack.c.b16 %v3872, %v3868
  %v4013 = vpack.c.b16 %v3873, %v3869
  %v4014 = vpack.c.b16 %v3878, %v3874
  %v4015 = vpack.c.b16 %v3879, %v3875
  %v4016 = vpack.c.b16 %v3880, %v3876
  %v4017 = vpack.c.b16 %v3881, %v3877
  %v4018 = vpack.c.b16 %v3886, %v3882
  %v4019 = vpack.c.b16 %v3887, %v3883
  %v4020 = vpack.c.b16 %v3888, %v3884
  %v4021 = vpack.c.b16 %v3889, %v3885
  %v4022 = vpack.c.b16 %v3894, %v3890
  %v4023 = vpack.c.b16 %v3895, %v3891
  %v4024 = vpack.c.b16 %v3896, %v3892
  %v4025 = vpack.c.b16 %v3897, %v3893
  %4154 = vmatprep.subr.bf16.mxu0 %v3899
  %4155 = vmatpush1.bf16.msra.mxu0 %v3898
  %4156 = vmatprep.subr.bf16.mxu0 %v3903
  %4157 = vmatpush1.bf16.msra.mxu0 %v3902
  %4158 = vmatprep.subr.bf16.mxu0 %v3907
  %4159 = vmatpush1.bf16.msra.mxu0 %v3906
  %4160 = vmatprep.subr.bf16.mxu0 %v3911
  %4161 = vmatpush1.bf16.msra.mxu0 %v3910
  %4162 = vmatprep.subr.bf16.mxu0 %v3915
  %4163 = vmatpush1.bf16.msra.mxu0 %v3914
  %4164 = vmatprep.subr.bf16.mxu0 %v3919
  %4165 = vmatpush1.bf16.msra.mxu0 %v3918
  %4166 = vmatprep.subr.bf16.mxu0 %v3923
  %4167 = vmatpush1.bf16.msra.mxu0 %v3922
  %4168 = vmatprep.subr.bf16.mxu0 %v3927
  %4169 = vmatpush1.bf16.msra.mxu0 %v3926
  %4170 = vmatprep.subr.bf16.mxu0 %v3931
  %4171 = vmatpush1.bf16.msra.mxu0 %v3930
  %4172 = vmatprep.subr.bf16.mxu0 %v3935
  %4173 = vmatpush1.bf16.msra.mxu0 %v3934
  %4174 = vmatprep.subr.bf16.mxu0 %v3939
  %4175 = vmatpush1.bf16.msra.mxu0 %v3938
  %4176 = vmatprep.subr.bf16.mxu0 %v3943
  %4177 = vmatpush1.bf16.msra.mxu0 %v3942
  %4178 = vmatprep.subr.bf16.mxu0 %v3947
  %4179 = vmatpush1.bf16.msra.mxu0 %v3946
  %4180 = vmatprep.subr.bf16.mxu0 %v3951
  %4181 = vmatpush1.bf16.msra.mxu0 %v3950
  %4182 = vmatprep.subr.bf16.mxu0 %v3955
  %4183 = vmatpush1.bf16.msra.mxu0 %v3954
  %4184 = vmatprep.subr.bf16.mxu0 %v3959
  %4185 = vmatpush1.bf16.msra.mxu0 %v3958
  %4186 = vmatprep.mubr.bf16.mxu0 %v3361
  %4187 = vmatmul.mubr.bf16.gmra.mrb[0].mxu0 %v3360
  %v4188 = vpop.f32.mrb[0].mxu0
  %v4189 = vadd.f32 %v3497, %v4188
  %v4190 = vpop.f32.mrb[0].mxu0
  %v4191 = vadd.f32 %v3501, %v4190
  %v4192 = vpop.f32.mrb[0].mxu0
  %v4193 = vpop.f32.mrb[0].mxu0
  %4194 = vdwg.mxu0
  %4195 = vmatprep.subr.bf16.mxu0 %v3963
  %4196 = vmatpush1.bf16.msra.mxu0 %v3962
  %4197 = vmatprep.subr.bf16.mxu0 %v3967
  %4198 = vmatpush1.bf16.msra.mxu0 %v3966
  %4199 = vmatprep.subr.bf16.mxu0 %v3971
  %4200 = vmatpush1.bf16.msra.mxu0 %v3970
  %4201 = vmatprep.subr.bf16.mxu0 %v3975
  %4202 = vmatpush1.bf16.msra.mxu0 %v3974
  %4203 = vmatprep.subr.bf16.mxu0 %v3979
  %4204 = vmatpush1.bf16.msra.mxu0 %v3978
  %4205 = vmatprep.subr.bf16.mxu0 %v3983
  %4206 = vmatpush1.bf16.msra.mxu0 %v3982
  %4207 = vmatprep.subr.bf16.mxu0 %v3987
  %4208 = vmatpush1.bf16.msra.mxu0 %v3986
  %4209 = vmatprep.subr.bf16.mxu0 %v3991
  %4210 = vmatpush1.bf16.msra.mxu0 %v3990
  %4211 = vmatprep.subr.bf16.mxu0 %v3995
  %4212 = vmatpush1.bf16.msra.mxu0 %v3994
  %4213 = vmatprep.subr.bf16.mxu0 %v3999
  %4214 = vmatpush1.bf16.msra.mxu0 %v3998
  %4215 = vmatprep.subr.bf16.mxu0 %v4003
  %4216 = vmatpush1.bf16.msra.mxu0 %v4002
  %4217 = vmatprep.subr.bf16.mxu0 %v4007
  %4218 = vmatpush1.bf16.msra.mxu0 %v4006
  %4219 = vmatprep.subr.bf16.mxu0 %v4011
  %4220 = vmatpush1.bf16.msra.mxu0 %v4010
  %4221 = vmatprep.subr.bf16.mxu0 %v4015
  %4222 = vmatpush1.bf16.msra.mxu0 %v4014
  %4223 = vmatprep.subr.bf16.mxu0 %v4019
  %4224 = vmatpush1.bf16.msra.mxu0 %v4018
  %4225 = vmatprep.subr.bf16.mxu0 %v4023
  %4226 = vmatpush1.bf16.msra.mxu0 %v4022
  %4227 = vmatprep.mubr.bf16.mxu0 %v3363
  %4228 = vmatmul.mubr.bf16.gmra.mrb[0].mxu0 %v3362
  %v4229 = vpop.f32.mrb[0].mxu0
  %v4230 = vadd.f32 %v4189, %v4229
  %v4231 = vpop.f32.mrb[0].mxu0
  %v4232 = vadd.f32 %v4191, %v4231
  %v4233 = vpop.f32.mrb[0].mxu0
  %v4234 = vpop.f32.mrb[0].mxu0
  %4235 = vdwg.mxu0
  %4236 = vmatprep.subr.bf16.mxu0 %v3901
  %4237 = vmatpush1.bf16.msra.mxu0 %v3900
  %4238 = vmatprep.subr.bf16.mxu0 %v3905
  %4239 = vmatpush1.bf16.msra.mxu0 %v3904
  %4240 = vmatprep.subr.bf16.mxu0 %v3909
  %4241 = vmatpush1.bf16.msra.mxu0 %v3908
  %4242 = vmatprep.subr.bf16.mxu0 %v3913
  %4243 = vmatpush1.bf16.msra.mxu0 %v3912
  %4244 = vmatprep.subr.bf16.mxu0 %v3917
  %4245 = vmatpush1.bf16.msra.mxu0 %v3916
  %4246 = vmatprep.subr.bf16.mxu0 %v3921
  %4247 = vmatpush1.bf16.msra.mxu0 %v3920
  %4248 = vmatprep.subr.bf16.mxu0 %v3925
  %4249 = vmatpush1.bf16.msra.mxu0 %v3924
  %4250 = vmatprep.subr.bf16.mxu0 %v3929
  %4251 = vmatpush1.bf16.msra.mxu0 %v3928
  %4252 = vmatprep.subr.bf16.mxu0 %v3933
  %4253 = vmatpush1.bf16.msra.mxu0 %v3932
  %4254 = vmatprep.subr.bf16.mxu0 %v3937
  %4255 = vmatpush1.bf16.msra.mxu0 %v3936
  %4256 = vmatprep.subr.bf16.mxu0 %v3941
  %4257 = vmatpush1.bf16.msra.mxu0 %v3940
  %4258 = vmatprep.subr.bf16.mxu0 %v3945
  %4259 = vmatpush1.bf16.msra.mxu0 %v3944
  %4260 = vmatprep.subr.bf16.mxu0 %v3949
  %4261 = vmatpush1.bf16.msra.mxu0 %v3948
  %4262 = vmatprep.subr.bf16.mxu0 %v3953
  %4263 = vmatpush1.bf16.msra.mxu0 %v3952
  %4264 = vmatprep.subr.bf16.mxu0 %v3957
  %4265 = vmatpush1.bf16.msra.mxu0 %v3956
  %4266 = vmatprep.subr.bf16.mxu0 %v3961
  %4267 = vmatpush1.bf16.msra.mxu0 %v3960
  %4268 = vmatprep.mubr.bf16.mxu0 %v3361
  %4269 = vmatmul.mubr.bf16.gmra.mrb[0].mxu0 %v3360
  %v4270 = vpop.f32.mrb[0].mxu0
  %v4271 = vadd.f32 %v3505, %v4270
  %v4272 = vpop.f32.mrb[0].mxu0
  %v4273 = vadd.f32 %v3509, %v4272
  %v4274 = vpop.f32.mrb[0].mxu0
  %v4275 = vpop.f32.mrb[0].mxu0
  %4276 = vdwg.mxu0
  %4277 = vmatprep.subr.bf16.mxu0 %v3965
  %4278 = vmatpush1.bf16.msra.mxu0 %v3964
  %4279 = vmatprep.subr.bf16.mxu0 %v3969
  %4280 = vmatpush1.bf16.msra.mxu0 %v3968
  %4281 = vmatprep.subr.bf16.mxu0 %v3973
  %4282 = vmatpush1.bf16.msra.mxu0 %v3972
  %4283 = vmatprep.subr.bf16.mxu0 %v3977
  %4284 = vmatpush1.bf16.msra.mxu0 %v3976
  %4285 = vmatprep.subr.bf16.mxu0 %v3981
  %4286 = vmatpush1.bf16.msra.mxu0 %v3980
  %4287 = vmatprep.subr.bf16.mxu0 %v3985
  %4288 = vmatpush1.bf16.msra.mxu0 %v3984
  %4289 = vmatprep.subr.bf16.mxu0 %v3989
  %4290 = vmatpush1.bf16.msra.mxu0 %v3988
  %4291 = vmatprep.subr.bf16.mxu0 %v3993
  %4292 = vmatpush1.bf16.msra.mxu0 %v3992
  %4293 = vmatprep.subr.bf16.mxu0 %v3997
  %4294 = vmatpush1.bf16.msra.mxu0 %v3996
  %4295 = vmatprep.subr.bf16.mxu0 %v4001
  %4296 = vmatpush1.bf16.msra.mxu0 %v4000
  %4297 = vmatprep.subr.bf16.mxu0 %v4005
  %4298 = vmatpush1.bf16.msra.mxu0 %v4004
  %4299 = vmatprep.subr.bf16.mxu0 %v4009
  %4300 = vmatpush1.bf16.msra.mxu0 %v4008
  %4301 = vmatprep.subr.bf16.mxu0 %v4013
  %4302 = vmatpush1.bf16.msra.mxu0 %v4012
  %4303 = vmatprep.subr.bf16.mxu0 %v4017
  %4304 = vmatpush1.bf16.msra.mxu0 %v4016
  %4305 = vmatprep.subr.bf16.mxu0 %v4021
  %4306 = vmatpush1.bf16.msra.mxu0 %v4020
  %4307 = vmatprep.subr.bf16.mxu0 %v4025
  %4308 = vmatpush1.bf16.msra.mxu0 %v4024
  %4309 = vmatprep.mubr.bf16.mxu0 %v3363
  %4310 = vmatmul.mubr.bf16.gmra.mrb[0].mxu0 %v3362
  %v4311 = vpop.f32.mrb[0].mxu0
  %v4312 = vadd.f32 %v4271, %v4311
  %v4313 = vpop.f32.mrb[0].mxu0
  %v4314 = vadd.f32 %v4273, %v4313
  %v4315 = vpop.f32.mrb[0].mxu0
  %v4316 = vpop.f32.mrb[0].mxu0
  %4317 = vdwg.mxu0
  %v4322 = vrot.slane %v4230, 6
  %v4323 = vrot.slane %v4232, 6
  %v4324 = vrot.slane %v4312, 6
  %v4325 = vrot.slane %v4314, 6
  %v4330 = vsel %vm103, %v3220, %v4322
  %v4331 = vsel %vm103, %v3222, %v4323
  %v4332 = vsel %vm103, %v3302, %v4324
  %v4333 = vsel %vm103, %v3304, %v4325
  %v4334 = vpack.c.bf16 %v4330, %v4330
  %v4335 = vpack.c.bf16 %v4331, %v4331
  %v4336 = vpack.c.bf16 %v4332, %v4332
  %v4337 = vpack.c.bf16 %v4333, %v4333
  %v4338 = vld [vmem:[%s15] sm:$0xf]
  %v4339 = vld [vmem:[%s15 + $0x4] sm:$0xf]
  %v4340 = vld [vmem:[%s15 + $0x8] sm:$0xf]
  %v4341 = vld [vmem:[%s15 + $0xc] sm:$0xf]
  %v4342 = vld [vmem:[%s15 + $0x10] sm:$0xf]
  %v4343 = vld [vmem:[%s15 + $0x14] sm:$0xf]
  %v4344 = vld [vmem:[%s15 + $0x18] sm:$0xf]
  %v4345 = vld [vmem:[%s15 + $0x1c] sm:$0xf]
  %v4346 = vld [vmem:[%s15 + $0x20] sm:$0xf]
  %v4347 = vld [vmem:[%s15 + $0x24] sm:$0xf]
  %v4348 = vld [vmem:[%s15 + $0x28] sm:$0xf]
  %v4349 = vld [vmem:[%s15 + $0x2c] sm:$0xf]
  %v4350 = vld [vmem:[%s15 + $0x30] sm:$0xf]
  %v4351 = vld [vmem:[%s15 + $0x34] sm:$0xf]
  %v4352 = vld [vmem:[%s15 + $0x38] sm:$0xf]
  %v4353 = vld [vmem:[%s15 + $0x3c] sm:$0xf]
  %v4354 = vld [vmem:[%s15 + $0x40] sm:$0xf]
  %v4355 = vld [vmem:[%s15 + $0x44] sm:$0xf]
  %v4356 = vld [vmem:[%s15 + $0x48] sm:$0xf]
  %v4357 = vld [vmem:[%s15 + $0x4c] sm:$0xf]
  %v4358 = vld [vmem:[%s15 + $0x50] sm:$0xf]
  %v4359 = vld [vmem:[%s15 + $0x54] sm:$0xf]
  %v4360 = vld [vmem:[%s15 + $0x58] sm:$0xf]
  %v4361 = vld [vmem:[%s15 + $0x5c] sm:$0xf]
  %v4362 = vld [vmem:[%s15 + $0x60] sm:$0xf]
  %v4363 = vld [vmem:[%s15 + $0x64] sm:$0xf]
  %v4364 = vld [vmem:[%s15 + $0x68] sm:$0xf]
  %v4365 = vld [vmem:[%s15 + $0x6c] sm:$0xf]
  %v4366 = vld [vmem:[%s15 + $0x70] sm:$0xf]
  %v4367 = vld [vmem:[%s15 + $0x74] sm:$0xf]
  %v4368 = vld [vmem:[%s15 + $0x78] sm:$0xf]
  %v4369 = vld [vmem:[%s15 + $0x7c] sm:$0xf]
  %v4370 = vld [vmem:[%s15 + $0x80] sm:$0xf]
  %v4371 = vld [vmem:[%s15 + $0x84] sm:$0xf]
  %v4372 = vld [vmem:[%s15 + $0x88] sm:$0xf]
  %v4373 = vld [vmem:[%s15 + $0x8c] sm:$0xf]
  %v4374 = vld [vmem:[%s15 + $0x90] sm:$0xf]
  %v4375 = vld [vmem:[%s15 + $0x94] sm:$0xf]
  %v4376 = vld [vmem:[%s15 + $0x98] sm:$0xf]
  %v4377 = vld [vmem:[%s15 + $0x9c] sm:$0xf]
  %v4378 = vld [vmem:[%s15 + $0xa0] sm:$0xf]
  %v4379 = vld [vmem:[%s15 + $0xa4] sm:$0xf]
  %v4380 = vld [vmem:[%s15 + $0xa8] sm:$0xf]
  %v4381 = vld [vmem:[%s15 + $0xac] sm:$0xf]
  %v4382 = vld [vmem:[%s15 + $0xb0] sm:$0xf]
  %v4383 = vld [vmem:[%s15 + $0xb4] sm:$0xf]
  %v4384 = vld [vmem:[%s15 + $0xb8] sm:$0xf]
  %v4385 = vld [vmem:[%s15 + $0xbc] sm:$0xf]
  %v4386 = vld [vmem:[%s15 + $0xc0] sm:$0xf]
  %v4387 = vld [vmem:[%s15 + $0xc4] sm:$0xf]
  %v4388 = vld [vmem:[%s15 + $0xc8] sm:$0xf]
  %v4389 = vld [vmem:[%s15 + $0xcc] sm:$0xf]
  %v4390 = vld [vmem:[%s15 + $0xd0] sm:$0xf]
  %v4391 = vld [vmem:[%s15 + $0xd4] sm:$0xf]
  %v4392 = vld [vmem:[%s15 + $0xd8] sm:$0xf]
  %v4393 = vld [vmem:[%s15 + $0xdc] sm:$0xf]
  %v4394 = vld [vmem:[%s15 + $0xe0] sm:$0xf]
  %v4395 = vld [vmem:[%s15 + $0xe4] sm:$0xf]
  %v4396 = vld [vmem:[%s15 + $0xe8] sm:$0xf]
  %v4397 = vld [vmem:[%s15 + $0xec] sm:$0xf]
  %v4398 = vld [vmem:[%s15 + $0xf0] sm:$0xf]
  %v4399 = vld [vmem:[%s15 + $0xf4] sm:$0xf]
  %v4400 = vld [vmem:[%s15 + $0xf8] sm:$0xf]
  %v4401 = vld [vmem:[%s15 + $0xfc] sm:$0xf]
  %v4402 = vld [vmem:[%s16] sm:$0x1]
  %v4404 = vlaneseq
  %v4405 = vshrl.u32 %v4404, 7
  %v4406 = vsub.s32 0, %v4405
  %v4407 = vrot.slane %v4402, %v4406
  %v4473 = vunpack.c.l.b16 %v4338
  %v4474 = vunpack.c.l.b16 %v4339
  %v4475 = vunpack.c.l.b16 %v4340
  %v4476 = vunpack.c.l.b16 %v4341
  %v4477 = vunpack.c.l.b16 %v4342
  %v4478 = vunpack.c.l.b16 %v4343
  %v4479 = vunpack.c.l.b16 %v4344
  %v4480 = vunpack.c.l.b16 %v4345
  %v4481 = vunpack.c.l.b16 %v4346
  %v4482 = vunpack.c.l.b16 %v4347
  %v4483 = vunpack.c.l.b16 %v4348
  %v4484 = vunpack.c.l.b16 %v4349
  %v4485 = vunpack.c.l.b16 %v4350
  %v4486 = vunpack.c.l.b16 %v4351
  %v4487 = vunpack.c.l.b16 %v4352
  %v4488 = vunpack.c.l.b16 %v4353
  %v4489 = vunpack.c.l.b16 %v4354
  %v4490 = vunpack.c.l.b16 %v4355
  %v4491 = vunpack.c.l.b16 %v4356
  %v4492 = vunpack.c.l.b16 %v4357
  %v4493 = vunpack.c.l.b16 %v4358
  %v4494 = vunpack.c.l.b16 %v4359
  %v4495 = vunpack.c.l.b16 %v4360
  %v4496 = vunpack.c.l.b16 %v4361
  %v4497 = vunpack.c.l.b16 %v4362
  %v4498 = vunpack.c.l.b16 %v4363
  %v4499 = vunpack.c.l.b16 %v4364
  %v4500 = vunpack.c.l.b16 %v4365
  %v4501 = vunpack.c.l.b16 %v4366
  %v4502 = vunpack.c.l.b16 %v4367
  %v4503 = vunpack.c.l.b16 %v4368
  %v4504 = vunpack.c.l.b16 %v4369
  %v4505 = vunpack.c.l.b16 %v4370
  %v4506 = vunpack.c.l.b16 %v4371
  %v4507 = vunpack.c.l.b16 %v4372
  %v4508 = vunpack.c.l.b16 %v4373
  %v4509 = vunpack.c.l.b16 %v4374
  %v4510 = vunpack.c.l.b16 %v4375
  %v4511 = vunpack.c.l.b16 %v4376
  %v4512 = vunpack.c.l.b16 %v4377
  %v4513 = vunpack.c.l.b16 %v4378
  %v4514 = vunpack.c.l.b16 %v4379
  %v4515 = vunpack.c.l.b16 %v4380
  %v4516 = vunpack.c.l.b16 %v4381
  %v4517 = vunpack.c.l.b16 %v4382
  %v4518 = vunpack.c.l.b16 %v4383
  %v4519 = vunpack.c.l.b16 %v4384
  %v4520 = vunpack.c.l.b16 %v4385
  %v4521 = vunpack.c.l.b16 %v4386
  %v4522 = vunpack.c.l.b16 %v4387
  %v4523 = vunpack.c.l.b16 %v4388
  %v4524 = vunpack.c.l.b16 %v4389
  %v4525 = vunpack.c.l.b16 %v4390
  %v4526 = vunpack.c.l.b16 %v4391
  %v4527 = vunpack.c.l.b16 %v4392
  %v4528 = vunpack.c.l.b16 %v4393
  %v4529 = vunpack.c.l.b16 %v4394
  %v4530 = vunpack.c.l.b16 %v4395
  %v4531 = vunpack.c.l.b16 %v4396
  %v4532 = vunpack.c.l.b16 %v4397
  %v4533 = vunpack.c.l.b16 %v4398
  %v4534 = vunpack.c.l.b16 %v4399
  %v4535 = vunpack.c.l.b16 %v4400
  %v4536 = vunpack.c.l.b16 %v4401
  %v4537 = vpack.c.b16 %v4474, %v4473
  %v4538 = vpack.c.b16 %v4476, %v4475
  %v4539 = vpack.c.b16 %v4478, %v4477
  %v4540 = vpack.c.b16 %v4480, %v4479
  %v4541 = vpack.c.b16 %v4482, %v4481
  %v4542 = vpack.c.b16 %v4484, %v4483
  %v4543 = vpack.c.b16 %v4486, %v4485
  %v4544 = vpack.c.b16 %v4488, %v4487
  %v4545 = vpack.c.b16 %v4490, %v4489
  %v4546 = vpack.c.b16 %v4492, %v4491
  %v4547 = vpack.c.b16 %v4494, %v4493
  %v4548 = vpack.c.b16 %v4496, %v4495
  %v4549 = vpack.c.b16 %v4498, %v4497
  %v4550 = vpack.c.b16 %v4500, %v4499
  %v4551 = vpack.c.b16 %v4502, %v4501
  %v4552 = vpack.c.b16 %v4504, %v4503
  %v4553 = vpack.c.b16 %v4506, %v4505
  %v4554 = vpack.c.b16 %v4508, %v4507
  %v4555 = vpack.c.b16 %v4510, %v4509
  %v4556 = vpack.c.b16 %v4512, %v4511
  %v4557 = vpack.c.b16 %v4514, %v4513
  %v4558 = vpack.c.b16 %v4516, %v4515
  %v4559 = vpack.c.b16 %v4518, %v4517
  %v4560 = vpack.c.b16 %v4520, %v4519
  %v4561 = vpack.c.b16 %v4522, %v4521
  %v4562 = vpack.c.b16 %v4524, %v4523
  %v4563 = vpack.c.b16 %v4526, %v4525
  %v4564 = vpack.c.b16 %v4528, %v4527
  %v4565 = vpack.c.b16 %v4530, %v4529
  %v4566 = vpack.c.b16 %v4532, %v4531
  %v4567 = vpack.c.b16 %v4534, %v4533
  %v4568 = vpack.c.b16 %v4536, %v4535
  %4601 = vmatprep.subr.bf16.mxu0 0
  %4602 = vmatpush1.bf16.msra.mxu0 %v4537
  %4603 = vmatprep.subr.bf16.mxu0 0
  %4604 = vmatpush1.bf16.msra.mxu0 %v4538
  %4605 = vmatprep.subr.bf16.mxu0 0
  %4606 = vmatpush1.bf16.msra.mxu0 %v4539
  %4607 = vmatprep.subr.bf16.mxu0 0
  %4608 = vmatpush1.bf16.msra.mxu0 %v4540
  %4609 = vmatprep.subr.bf16.mxu0 0
  %4610 = vmatpush1.bf16.msra.mxu0 %v4541
  %4611 = vmatprep.subr.bf16.mxu0 0
  %4612 = vmatpush1.bf16.msra.mxu0 %v4542
  %4613 = vmatprep.subr.bf16.mxu0 0
  %4614 = vmatpush1.bf16.msra.mxu0 %v4543
  %4615 = vmatprep.subr.bf16.mxu0 0
  %4616 = vmatpush1.bf16.msra.mxu0 %v4544
  %4617 = vmatprep.subr.bf16.mxu0 0
  %4618 = vmatpush1.bf16.msra.mxu0 %v4545
  %4619 = vmatprep.subr.bf16.mxu0 0
  %4620 = vmatpush1.bf16.msra.mxu0 %v4546
  %4621 = vmatprep.subr.bf16.mxu0 0
  %4622 = vmatpush1.bf16.msra.mxu0 %v4547
  %4623 = vmatprep.subr.bf16.mxu0 0
  %4624 = vmatpush1.bf16.msra.mxu0 %v4548
  %4625 = vmatprep.subr.bf16.mxu0 0
  %4626 = vmatpush1.bf16.msra.mxu0 %v4549
  %4627 = vmatprep.subr.bf16.mxu0 0
  %4628 = vmatpush1.bf16.msra.mxu0 %v4550
  %4629 = vmatprep.subr.bf16.mxu0 0
  %4630 = vmatpush1.bf16.msra.mxu0 %v4551
  %4631 = vmatprep.subr.bf16.mxu0 0
  %4632 = vmatpush1.bf16.msra.mxu0 %v4552
  %4633 = vmatprep.mubr.bf16.mxu0 %v4335
  %4634 = vmatmul.mubr.bf16.gmra.mrb[0].mxu0 %v4334
  %v4635 = vpop.f32.mrb[0].mxu0
  %v4636 = vadd.f32 %v4407, %v4635
  %v4637 = vpop.f32.mrb[0].mxu0
  %v4638 = vpop.f32.mrb[0].mxu0
  %v4639 = vpop.f32.mrb[0].mxu0
  %4640 = vdwg.mxu0
  %4641 = vmatprep.subr.bf16.mxu0 0
  %4642 = vmatpush1.bf16.msra.mxu0 %v4553
  %4643 = vmatprep.subr.bf16.mxu0 0
  %4644 = vmatpush1.bf16.msra.mxu0 %v4554
  %4645 = vmatprep.subr.bf16.mxu0 0
  %4646 = vmatpush1.bf16.msra.mxu0 %v4555
  %4647 = vmatprep.subr.bf16.mxu0 0
  %4648 = vmatpush1.bf16.msra.mxu0 %v4556
  %4649 = vmatprep.subr.bf16.mxu0 0
  %4650 = vmatpush1.bf16.msra.mxu0 %v4557
  %4651 = vmatprep.subr.bf16.mxu0 0
  %4652 = vmatpush1.bf16.msra.mxu0 %v4558
  %4653 = vmatprep.subr.bf16.mxu0 0
  %4654 = vmatpush1.bf16.msra.mxu0 %v4559
  %4655 = vmatprep.subr.bf16.mxu0 0
  %4656 = vmatpush1.bf16.msra.mxu0 %v4560
  %4657 = vmatprep.subr.bf16.mxu0 0
  %4658 = vmatpush1.bf16.msra.mxu0 %v4561
  %4659 = vmatprep.subr.bf16.mxu0 0
  %4660 = vmatpush1.bf16.msra.mxu0 %v4562
  %4661 = vmatprep.subr.bf16.mxu0 0
  %4662 = vmatpush1.bf16.msra.mxu0 %v4563
  %4663 = vmatprep.subr.bf16.mxu0 0
  %4664 = vmatpush1.bf16.msra.mxu0 %v4564
  %4665 = vmatprep.subr.bf16.mxu0 0
  %4666 = vmatpush1.bf16.msra.mxu0 %v4565
  %4667 = vmatprep.subr.bf16.mxu0 0
  %4668 = vmatpush1.bf16.msra.mxu0 %v4566
  %4669 = vmatprep.subr.bf16.mxu0 0
  %4670 = vmatpush1.bf16.msra.mxu0 %v4567
  %4671 = vmatprep.subr.bf16.mxu0 0
  %4672 = vmatpush1.bf16.msra.mxu0 %v4568
  %4673 = vmatprep.mubr.bf16.mxu0 %v4337
  %4674 = vmatmul.mubr.bf16.gmra.mrb[0].mxu0 %v4336
  %v4675 = vpop.f32.mrb[0].mxu0
  %v4676 = vadd.f32 %v4636, %v4675
  %v4677 = vpop.f32.mrb[0].mxu0
  %v4678 = vpop.f32.mrb[0].mxu0
  %v4679 = vpop.f32.mrb[0].mxu0
  %4680 = vdwg.mxu0
  %4681 = vst [vmem:[%s17] sm:$0xf] %v4676
  // Predicated region
  $region70: #{mv_network_forward.3} parent=0 // pred_check
    _
  $region71: #{mv_network_forward.3} parent=0 // pred_check_branch
    %4683 = sbr.rel (0) target = $region73
  $region72: #{mv_network_forward.3} parent=0 // pred_region
    _
  $region73: #{mv_network_forward.3} parent=0 // pred_fallthru
    _
  // Predicated region
  $region74: #{mv_network_forward.3} parent=0 // pred_check
    _
  $region75: #{mv_network_forward.3} parent=0 // pred_check_branch
    %4685 = sbr.rel (0) target = $region77
  $region76: #{mv_network_forward.3} parent=0 // pred_region
    _
  $region77: #{mv_network_forward.3} parent=0 // pred_fallthru
    _

</llo_original>
